<compile_context>
chip_gen: v7x
topology: tpu7x:2x2x1
jax: 0.10.0
libtpu: 0.0.40
codegen_flags: <defaults>
</compile_context>

<pallas_src>
import jax
import jax.numpy as jnp
from jax import lax
from jax.experimental import pallas as pl
from jax.experimental.pallas import tpu as pltpu

LANES = 128


# ----------------------------------------------------------------------------
# Kernel
# ----------------------------------------------------------------------------
def _zero_border(p_s, Nb, H, W, Cp):
    """Zero only the 1-pixel halo of a (Nb, H+2, W+2, Cp) scratch buffer.

    Four thin strips (the interior is fully overwritten every grid step).
    Done every iteration -- NOT gated on program_id -- so it is megacore-safe
    on v7x where each TensorCore owns its own scratch.
    """
    zrow = jnp.zeros((Nb, 1, W + 2, Cp), p_s.dtype)
    zcol = jnp.zeros((Nb, H + 2, 1, Cp), p_s.dtype)
    p_s[:, 0:1, :, :] = zrow
    p_s[:, H + 1:H + 2, :, :] = zrow
    p_s[:, :, 0:1, :] = zcol
    p_s[:, :, W + 1:W + 2, :] = zcol


def _conv3x3_acc(p_s, w_ref, Nb, H, W, Cp):
    """3x3 conv as 9 accumulated matmuls over shifted views (no patch matrix).

    p_s  : (Nb, H+2, W+2, Cp) bf16 zero-halo activation scratch
    w_ref: (9, Cp, Cp) bf16 tap-major weights (BN scale already folded in)
    returns (Nb*H*W, Cp) f32
    """
    acc = None
    for t in range(9):
        dy, dx = divmod(t, 3)
        tap = p_s[:, dy:dy + H, dx:dx + W, :].reshape(Nb * H * W, Cp)
        c = jnp.dot(tap, w_ref[t], preferred_element_type=jnp.float32)
        acc = c if acc is None else acc + c
    return acc


def basic_block_kernel(x_ref, w1_ref, b1_ref, w2_ref, b2_ref, o_ref,
                       xp_s, hp_s):
    """Fused BasicBlock for Nb images (channels pre-padded to Cp lanes).

    x_ref : (Nb, H, W, Cp)   input dtype (residual read at full precision)
    w1_ref, w2_ref: (9, Cp, Cp) bf16   (BN scale folded into columns)
    b1_ref, b2_ref: (1, Cp) f32        (folded BatchNorm biases)
    o_ref : (Nb, H, W, Cp)
    xp_s, hp_s: (Nb, H+2, W+2, Cp) bf16 zero-halo activation scratch
    """
    Nb, H, W, Cp = x_ref.shape
    M = Nb * H * W

    x = x_ref[...]                                          # (Nb, H, W, Cp)

    # conv1 (3x3, pad=1) + bn1 + relu -- intermediate stays in VMEM.
    _zero_border(xp_s, Nb, H, W, Cp)
    xp_s[:, 1:H + 1, 1:W + 1, :] = x.astype(jnp.bfloat16)
    h = _conv3x3_acc(xp_s, w1_ref, Nb, H, W, Cp)            # (M, Cp) f32
    h = jnp.maximum(h + b1_ref[...], 0.0)

    # conv2 (3x3, pad=1) + bn2 + identity residual + relu.
    _zero_border(hp_s, Nb, H, W, Cp)
    hp_s[:, 1:H + 1, 1:W + 1, :] = h.reshape(Nb, H, W, Cp).astype(jnp.bfloat16)
    y = _conv3x3_acc(hp_s, w2_ref, Nb, H, W, Cp)            # (M, Cp) f32
    y = y + b2_ref[...] + x.astype(jnp.float32).reshape(M, Cp)
    y = jnp.maximum(y, 0.0)

    o_ref[...] = y.reshape(Nb, H, W, Cp).astype(o_ref.dtype)


# ----------------------------------------------------------------------------
# Wrapper helpers
# ----------------------------------------------------------------------------
def _fold_bn(gamma, beta, mean, var, eps=1e-5):
    scale = (gamma / jnp.sqrt(var + eps)).astype(jnp.float32)
    bias = (beta.astype(jnp.float32) - mean.astype(jnp.float32) * scale)
    return scale, bias


def _pack_conv_bn(w_hwio, scale, bias, cin, cout, cp):
    """Fold BN scale into weight columns, pad channels to cp, tap-major bf16."""
    w = w_hwio.astype(jnp.float32) * scale[None, None, None, :]
    wp = jnp.zeros((3, 3, cp, cp), jnp.float32).at[:, :, :cin, :cout].set(w)
    wm = wp.reshape(9, cp, cp).astype(jnp.bfloat16)
    bp = jnp.zeros((1, cp), jnp.float32).at[0, :cout].set(bias)
    return wm, bp


def _pick_block_n(N, per_image_bytes, budget_bytes=8 << 20):
    """Largest divisor of N fitting the VMEM budget while keeping >= 2 grid
    blocks (so the batch axis can shard across TensorCores on v7x)."""
    if N <= 1:
        return 1
    max_nb = max(1, min(N // 2, budget_bytes // max(per_image_bytes, 1)))
    for nb in range(int(max_nb), 0, -1):
        if N % nb == 0:
            return nb
    return 1


# ----------------------------------------------------------------------------
# Forward wrappers
# ----------------------------------------------------------------------------
def basic_block_forward_nhwc(x_nhwc, params):
    """Fused BasicBlock forward, NHWC in / NHWC out."""
    N, H, W, Cin = x_nhwc.shape
    w1 = params["w1_hwio"]
    w2 = params["w2_hwio"]
    Cout = w1.shape[-1]
    assert Cin == Cout, "identity residual requires in_channel == out_channel"
    Cp = ((max(Cin, Cout) + LANES - 1) // LANES) * LANES    # lane-dense channels

    s1, b1 = _fold_bn(params["bn1_gamma"], params["bn1_beta"],
                      params["bn1_mean"], params["bn1_var"])
    s2, b2 = _fold_bn(params["bn2_gamma"], params["bn2_beta"],
                      params["bn2_mean"], params["bn2_var"])
    w1m, b1p = _pack_conv_bn(w1, s1, b1, Cin, Cout, Cp)
    w2m, b2p = _pack_conv_bn(w2, s2, b2, Cout, Cout, Cp)

    # Zero-pad channels to a full 128-lane width (unmasked stores, MXU K=N=128).
    xpad = jnp.pad(x_nhwc, ((0, 0), (0, 0), (0, 0), (0, Cp - Cin)))

    per_image = (2 * (H + 2) * (W + 2) * Cp * 2            # two bf16 scratch buffers
                 + 2 * 2 * H * W * Cp * 4)                  # double-buffered in + out
    Nb = _pick_block_n(N, per_image)

    weight_bytes = 2 * (w1m.size + w2m.size) * 2 + 2 * (b1p.size + b2p.size) * 4
    vmem_limit = min(int(2 * (Nb * per_image + weight_bytes)) + (4 << 20),
                     48 << 20)

    flops = 2 * 2 * N * H * W * 9 * Cp * Cp
    bytes_accessed = (xpad.size * 4 + N * H * W * Cp * 4
                      + (w1m.size + w2m.size) * 2 + (b1p.size + b2p.size) * 4)

    out = pl.pallas_call(
        basic_block_kernel,
        out_shape=jax.ShapeDtypeStruct((N, H, W, Cp), x_nhwc.dtype),
        grid=(N // Nb,),
        in_specs=[
            pl.BlockSpec((Nb, H, W, Cp), lambda n: (n, 0, 0, 0)),
            pl.BlockSpec((9, Cp, Cp), lambda n: (0, 0, 0)),
            pl.BlockSpec((1, Cp), lambda n: (0, 0)),
            pl.BlockSpec((9, Cp, Cp), lambda n: (0, 0, 0)),
            pl.BlockSpec((1, Cp), lambda n: (0, 0)),
        ],
        out_specs=pl.BlockSpec((Nb, H, W, Cp), lambda n: (n, 0, 0, 0)),
        scratch_shapes=[
            pltpu.VMEM((Nb, H + 2, W + 2, Cp), jnp.bfloat16),
            pltpu.VMEM((Nb, H + 2, W + 2, Cp), jnp.bfloat16),
        ],
        compiler_params=pltpu.CompilerParams(
            dimension_semantics=("parallel",),
            vmem_limit_bytes=vmem_limit),
        cost_estimate=pl.CostEstimate(flops=flops, transcendentals=0,
                                      bytes_accessed=bytes_accessed),
    )(xpad, w1m, b1p, w2m, b2p)

    return out[..., :Cout]                                  # drop padded channels


@jax.jit
def basic_block_forward(x_nchw, params):
    """PyTorch-convention entry point: NCHW in / NCHW out."""
    x = jnp.transpose(x_nchw, (0, 2, 3, 1))                 # NCHW -> NHWC
    y = basic_block_forward_nhwc(x, params)
    return jnp.transpose(y, (0, 3, 1, 2))                   # NHWC -> NCHW


# ----------------------------------------------------------------------------
# Pure-JAX reference (f32, correctness check)
# ----------------------------------------------------------------------------
def _ref_forward(x_nchw, params):
    x = jnp.transpose(x_nchw, (0, 2, 3, 1)).astype(jnp.float32)
    dn = lax.conv_dimension_numbers(x.shape, params["w1_hwio"].shape,
                                    ("NHWC", "HWIO", "NHWC"))

    def conv_bn(inp, w, gamma, beta, mean, var):
        c = lax.conv_general_dilated(inp, w, (1, 1), ((1, 1), (1, 1)),
                                     dimension_numbers=dn)
        scale = gamma / jnp.sqrt(var + 1e-5)
        return c * scale + (beta - mean * scale)

    h = jax.nn.relu(conv_bn(x, params["w1_hwio"], params["bn1_gamma"],
                            params["bn1_beta"], params["bn1_mean"],
                            params["bn1_var"]))
    y = conv_bn(h, params["w2_hwio"], params["bn2_gamma"],
                params["bn2_beta"], params["bn2_mean"], params["bn2_var"])
    y = jax.nn.relu(y + x)
    return jnp.transpose(y, (0, 3, 1, 2))


# ----------------------------------------------------------------------------
# Main
# ----------------------------------------------------------------------------
if __name__ == "__main__":
    N, C, H, W = 2, 4, 16, 16  # in_channel == out_channel, stride=1, no downsample
    key = jax.random.PRNGKey(0)
    k = jax.random.split(key, 10)

    x = jax.random.normal(k[0], (N, C, H, W), jnp.float32)

    # Conv weights in PyTorch OIHW convention, converted to HWIO.
    w1_oihw = 0.1 * jax.random.normal(k[1], (C, C, 3, 3), jnp.float32)
    w2_oihw = 0.1 * jax.random.normal(k[2], (C, C, 3, 3), jnp.float32)

    params = {
        "w1_hwio": jnp.transpose(w1_oihw, (2, 3, 1, 0)),
        "w2_hwio": jnp.transpose(w2_oihw, (2, 3, 1, 0)),
        "bn1_gamma": 1.0 + 0.1 * jax.random.normal(k[3], (C,), jnp.float32),
        "bn1_beta": 0.1 * jax.random.normal(k[4], (C,), jnp.float32),
        "bn1_mean": 0.1 * jax.random.normal(k[5], (C,), jnp.float32),
        "bn1_var": jnp.abs(1.0 + 0.1 * jax.random.normal(k[6], (C,), jnp.float32)),
        "bn2_gamma": 1.0 + 0.1 * jax.random.normal(k[7], (C,), jnp.float32),
        "bn2_beta": 0.1 * jax.random.normal(k[8], (C,), jnp.float32),
        "bn2_mean": 0.1 * jax.random.normal(k[9], (C,), jnp.float32),
        "bn2_var": jnp.abs(1.0 + 0.05 * jax.random.normal(k[0], (C,), jnp.float32)),
    }

    out = jax.block_until_ready(basic_block_forward(x, params))
    ref = jax.block_until_ready(_ref_forward(x, params))

    assert out.shape == (N, C, H, W), out.shape
    # bf16 MXU operands (f32 accumulation) vs. f32 reference -> relaxed tolerance.
    assert jnp.allclose(out, ref, atol=5e-2, rtol=5e-2), \
        float(jnp.max(jnp.abs(out - ref)))

    print("KERNEL_OK")
</pallas_src>

<mosaic_0001>
module attributes {stable_mosaic.version = 11 : i64} {
  func.func @basic_block_kernel(%arg0: i32, %arg1: memref<1x16x16x128xf32, #tpu.memory_space<vmem>>, %arg2: memref<9x128x128xbf16, #tpu.memory_space<vmem>>, %arg3: memref<1x128xf32, #tpu.memory_space<vmem>>, %arg4: memref<9x128x128xbf16, #tpu.memory_space<vmem>>, %arg5: memref<1x128xf32, #tpu.memory_space<vmem>>, %arg6: memref<1x16x16x128xf32, #tpu.memory_space<vmem>>, %arg7: memref<1x18x18x128xbf16, #tpu.memory_space<vmem>>, %arg8: memref<1x18x18x128xbf16, #tpu.memory_space<vmem>>) attributes {dimension_semantics = [#tpu.dimension_semantics<parallel>], iteration_bounds = array<i64: 2>, scalar_prefetch = 0 : i64, scratch_operands = 2 : i64, tpu.core_type = #tpu.core_type<tc>, window_params = [{transform_indices = @transform_0, window_bounds = array<i64: 1, 16, 16, 128>}, {pipeline_mode = #tpu.pipeline_mode<synchronous>, transform_indices = @transform_1, window_bounds = array<i64: 9, 128, 128>}, {pipeline_mode = #tpu.pipeline_mode<synchronous>, transform_indices = @transform_2, window_bounds = array<i64: 1, 128>}, {pipeline_mode = #tpu.pipeline_mode<synchronous>, transform_indices = @transform_3, window_bounds = array<i64: 9, 128, 128>}, {pipeline_mode = #tpu.pipeline_mode<synchronous>, transform_indices = @transform_4, window_bounds = array<i64: 1, 128>}, {transform_indices = @transform_5, window_bounds = array<i64: 1, 16, 16, 128>}]} {
    %c0 = arith.constant 0 : index
    %c0_0 = arith.constant 0 : index
    %c0_1 = arith.constant 0 : index
    %c0_2 = arith.constant 0 : index
    %0 = vector.load %arg1[%c0, %c0_0, %c0_1, %c0_2] : memref<1x16x16x128xf32, #tpu.memory_space<vmem>>, vector<1x16x16x128xf32>
    %cst = arith.constant 0.000000e+00 : bf16
    %1 = vector.broadcast %cst : bf16 to vector<1x1x18x128xbf16>
    %cst_3 = arith.constant 0.000000e+00 : bf16
    %2 = vector.broadcast %cst_3 : bf16 to vector<1x18x1x128xbf16>
    %c0_4 = arith.constant 0 : index
    %c0_5 = arith.constant 0 : index
    %c0_6 = arith.constant 0 : index
    %c0_7 = arith.constant 0 : index
    %3 = vector.load %arg7[%c0_4, %c0_5, %c0_6, %c0_7] : memref<1x18x18x128xbf16, #tpu.memory_space<vmem>>, vector<1x1x18x128xbf16>
    tpu.vector_store %arg7[%c0_4, %c0_5, %c0_6, %c0_7], %1 {strides = array<i32>} : memref<1x18x18x128xbf16, #tpu.memory_space<vmem>>, vector<1x1x18x128xbf16>,
    %c0_8 = arith.constant 0 : index
    %c17 = arith.constant 17 : index
    %c0_9 = arith.constant 0 : index
    %c0_10 = arith.constant 0 : index
    %4 = vector.load %arg7[%c0_8, %c17, %c0_9, %c0_10] : memref<1x18x18x128xbf16, #tpu.memory_space<vmem>>, vector<1x1x18x128xbf16>
    tpu.vector_store %arg7[%c0_8, %c17, %c0_9, %c0_10], %1 {strides = array<i32>} : memref<1x18x18x128xbf16, #tpu.memory_space<vmem>>, vector<1x1x18x128xbf16>,
    %c0_11 = arith.constant 0 : index
    %c0_12 = arith.constant 0 : index
    %c0_13 = arith.constant 0 : index
    %c0_14 = arith.constant 0 : index
    %5 = vector.load %arg7[%c0_11, %c0_12, %c0_13, %c0_14] : memref<1x18x18x128xbf16, #tpu.memory_space<vmem>>, vector<1x18x1x128xbf16>
    tpu.vector_store %arg7[%c0_11, %c0_12, %c0_13, %c0_14], %2 {strides = array<i32>} : memref<1x18x18x128xbf16, #tpu.memory_space<vmem>>, vector<1x18x1x128xbf16>,
    %c0_15 = arith.constant 0 : index
    %c0_16 = arith.constant 0 : index
    %c17_17 = arith.constant 17 : index
    %c0_18 = arith.constant 0 : index
    %6 = vector.load %arg7[%c0_15, %c0_16, %c17_17, %c0_18] : memref<1x18x18x128xbf16, #tpu.memory_space<vmem>>, vector<1x18x1x128xbf16>
    tpu.vector_store %arg7[%c0_15, %c0_16, %c17_17, %c0_18], %2 {strides = array<i32>} : memref<1x18x18x128xbf16, #tpu.memory_space<vmem>>, vector<1x18x1x128xbf16>,
    %7 = arith.truncf %0 : vector<1x16x16x128xf32> to vector<1x16x16x128xbf16>
    %c0_19 = arith.constant 0 : index
    %c1 = arith.constant 1 : index
    %c1_20 = arith.constant 1 : index
    %c0_21 = arith.constant 0 : index
    %8 = vector.load %arg7[%c0_19, %c1, %c1_20, %c0_21] : memref<1x18x18x128xbf16, #tpu.memory_space<vmem>>, vector<1x16x16x128xbf16>
    tpu.vector_store %arg7[%c0_19, %c1, %c1_20, %c0_21], %7 {strides = array<i32>} : memref<1x18x18x128xbf16, #tpu.memory_space<vmem>>, vector<1x16x16x128xbf16>,
    %c0_22 = arith.constant 0 : index
    %c0_23 = arith.constant 0 : index
    %c0_24 = arith.constant 0 : index
    %c0_25 = arith.constant 0 : index
    %9 = vector.load %arg7[%c0_22, %c0_23, %c0_24, %c0_25] : memref<1x18x18x128xbf16, #tpu.memory_space<vmem>>, vector<1x16x16x128xbf16>
    %10 = vector.shape_cast %9 : vector<1x16x16x128xbf16> to vector<256x128xbf16>
    %c0_26 = arith.constant 0 : index
    %c0_27 = arith.constant 0 : index
    %c0_28 = arith.constant 0 : index
    %11 = vector.load %arg2[%c0_26, %c0_27, %c0_28] : memref<9x128x128xbf16, #tpu.memory_space<vmem>>, vector<1x128x128xbf16>
    %12 = vector.shape_cast %11 : vector<1x128x128xbf16> to vector<128x128xbf16>
    %cst_29 = arith.constant dense<0.000000e+00> : vector<256x128xf32>
    %13 = tpu.matmul %10, %12, %cst_29 {dimension_numbers = #tpu.dot_dimension_numbers<[1], [0], [0], [1], [0, 0, 1, 1], [], []>} : vector<256x128xbf16>, vector<128x128xbf16>, vector<256x128xf32> -> vector<256x128xf32>
    %c0_30 = arith.constant 0 : index
    %c0_31 = arith.constant 0 : index
    %c1_32 = arith.constant 1 : index
    %c0_33 = arith.constant 0 : index
    %14 = vector.load %arg7[%c0_30, %c0_31, %c1_32, %c0_33] : memref<1x18x18x128xbf16, #tpu.memory_space<vmem>>, vector<1x16x16x128xbf16>
    %15 = vector.shape_cast %14 : vector<1x16x16x128xbf16> to vector<256x128xbf16>
    %c1_34 = arith.constant 1 : index
    %c0_35 = arith.constant 0 : index
    %c0_36 = arith.constant 0 : index
    %16 = vector.load %arg2[%c1_34, %c0_35, %c0_36] : memref<9x128x128xbf16, #tpu.memory_space<vmem>>, vector<1x128x128xbf16>
    %17 = vector.shape_cast %16 : vector<1x128x128xbf16> to vector<128x128xbf16>
    %cst_37 = arith.constant dense<0.000000e+00> : vector<256x128xf32>
    %18 = tpu.matmul %15, %17, %cst_37 {dimension_numbers = #tpu.dot_dimension_numbers<[1], [0], [0], [1], [0, 0, 1, 1], [], []>} : vector<256x128xbf16>, vector<128x128xbf16>, vector<256x128xf32> -> vector<256x128xf32>
    %19 = arith.addf %13, %18 : vector<256x128xf32>
    %c0_38 = arith.constant 0 : index
    %c0_39 = arith.constant 0 : index
    %c2 = arith.constant 2 : index
    %c0_40 = arith.constant 0 : index
    %20 = vector.load %arg7[%c0_38, %c0_39, %c2, %c0_40] : memref<1x18x18x128xbf16, #tpu.memory_space<vmem>>, vector<1x16x16x128xbf16>
    %21 = vector.shape_cast %20 : vector<1x16x16x128xbf16> to vector<256x128xbf16>
    %c2_41 = arith.constant 2 : index
    %c0_42 = arith.constant 0 : index
    %c0_43 = arith.constant 0 : index
    %22 = vector.load %arg2[%c2_41, %c0_42, %c0_43] : memref<9x128x128xbf16, #tpu.memory_space<vmem>>, vector<1x128x128xbf16>
    %23 = vector.shape_cast %22 : vector<1x128x128xbf16> to vector<128x128xbf16>
    %cst_44 = arith.constant dense<0.000000e+00> : vector<256x128xf32>
    %24 = tpu.matmul %21, %23, %cst_44 {dimension_numbers = #tpu.dot_dimension_numbers<[1], [0], [0], [1], [0, 0, 1, 1], [], []>} : vector<256x128xbf16>, vector<128x128xbf16>, vector<256x128xf32> -> vector<256x128xf32>
    %25 = arith.addf %19, %24 : vector<256x128xf32>
    %c0_45 = arith.constant 0 : index
    %c1_46 = arith.constant 1 : index
    %c0_47 = arith.constant 0 : index
    %c0_48 = arith.constant 0 : index
    %26 = vector.load %arg7[%c0_45, %c1_46, %c0_47, %c0_48] : memref<1x18x18x128xbf16, #tpu.memory_space<vmem>>, vector<1x16x16x128xbf16>
    %27 = vector.shape_cast %26 : vector<1x16x16x128xbf16> to vector<256x128xbf16>
    %c3 = arith.constant 3 : index
    %c0_49 = arith.constant 0 : index
    %c0_50 = arith.constant 0 : index
    %28 = vector.load %arg2[%c3, %c0_49, %c0_50] : memref<9x128x128xbf16, #tpu.memory_space<vmem>>, vector<1x128x128xbf16>
    %29 = vector.shape_cast %28 : vector<1x128x128xbf16> to vector<128x128xbf16>
    %cst_51 = arith.constant dense<0.000000e+00> : vector<256x128xf32>
    %30 = tpu.matmul %27, %29, %cst_51 {dimension_numbers = #tpu.dot_dimension_numbers<[1], [0], [0], [1], [0, 0, 1, 1], [], []>} : vector<256x128xbf16>, vector<128x128xbf16>, vector<256x128xf32> -> vector<256x128xf32>
    %31 = arith.addf %25, %30 : vector<256x128xf32>
    %c0_52 = arith.constant 0 : index
    %c1_53 = arith.constant 1 : index
    %c1_54 = arith.constant 1 : index
    %c0_55 = arith.constant 0 : index
    %32 = vector.load %arg7[%c0_52, %c1_53, %c1_54, %c0_55] : memref<1x18x18x128xbf16, #tpu.memory_space<vmem>>, vector<1x16x16x128xbf16>
    %33 = vector.shape_cast %32 : vector<1x16x16x128xbf16> to vector<256x128xbf16>
    %c4 = arith.constant 4 : index
    %c0_56 = arith.constant 0 : index
    %c0_57 = arith.constant 0 : index
    %34 = vector.load %arg2[%c4, %c0_56, %c0_57] : memref<9x128x128xbf16, #tpu.memory_space<vmem>>, vector<1x128x128xbf16>
    %35 = vector.shape_cast %34 : vector<1x128x128xbf16> to vector<128x128xbf16>
    %cst_58 = arith.constant dense<0.000000e+00> : vector<256x128xf32>
    %36 = tpu.matmul %33, %35, %cst_58 {dimension_numbers = #tpu.dot_dimension_numbers<[1], [0], [0], [1], [0, 0, 1, 1], [], []>} : vector<256x128xbf16>, vector<128x128xbf16>, vector<256x128xf32> -> vector<256x128xf32>
    %37 = arith.addf %31, %36 : vector<256x128xf32>
    %c0_59 = arith.constant 0 : index
    %c1_60 = arith.constant 1 : index
    %c2_61 = arith.constant 2 : index
    %c0_62 = arith.constant 0 : index
    %38 = vector.load %arg7[%c0_59, %c1_60, %c2_61, %c0_62] : memref<1x18x18x128xbf16, #tpu.memory_space<vmem>>, vector<1x16x16x128xbf16>
    %39 = vector.shape_cast %38 : vector<1x16x16x128xbf16> to vector<256x128xbf16>
    %c5 = arith.constant 5 : index
    %c0_63 = arith.constant 0 : index
    %c0_64 = arith.constant 0 : index
    %40 = vector.load %arg2[%c5, %c0_63, %c0_64] : memref<9x128x128xbf16, #tpu.memory_space<vmem>>, vector<1x128x128xbf16>
    %41 = vector.shape_cast %40 : vector<1x128x128xbf16> to vector<128x128xbf16>
    %cst_65 = arith.constant dense<0.000000e+00> : vector<256x128xf32>
    %42 = tpu.matmul %39, %41, %cst_65 {dimension_numbers = #tpu.dot_dimension_numbers<[1], [0], [0], [1], [0, 0, 1, 1], [], []>} : vector<256x128xbf16>, vector<128x128xbf16>, vector<256x128xf32> -> vector<256x128xf32>
    %43 = arith.addf %37, %42 : vector<256x128xf32>
    %c0_66 = arith.constant 0 : index
    %c2_67 = arith.constant 2 : index
    %c0_68 = arith.constant 0 : index
    %c0_69 = arith.constant 0 : index
    %44 = vector.load %arg7[%c0_66, %c2_67, %c0_68, %c0_69] : memref<1x18x18x128xbf16, #tpu.memory_space<vmem>>, vector<1x16x16x128xbf16>
    %45 = vector.shape_cast %44 : vector<1x16x16x128xbf16> to vector<256x128xbf16>
    %c6 = arith.constant 6 : index
    %c0_70 = arith.constant 0 : index
    %c0_71 = arith.constant 0 : index
    %46 = vector.load %arg2[%c6, %c0_70, %c0_71] : memref<9x128x128xbf16, #tpu.memory_space<vmem>>, vector<1x128x128xbf16>
    %47 = vector.shape_cast %46 : vector<1x128x128xbf16> to vector<128x128xbf16>
    %cst_72 = arith.constant dense<0.000000e+00> : vector<256x128xf32>
    %48 = tpu.matmul %45, %47, %cst_72 {dimension_numbers = #tpu.dot_dimension_numbers<[1], [0], [0], [1], [0, 0, 1, 1], [], []>} : vector<256x128xbf16>, vector<128x128xbf16>, vector<256x128xf32> -> vector<256x128xf32>
    %49 = arith.addf %43, %48 : vector<256x128xf32>
    %c0_73 = arith.constant 0 : index
    %c2_74 = arith.constant 2 : index
    %c1_75 = arith.constant 1 : index
    %c0_76 = arith.constant 0 : index
    %50 = vector.load %arg7[%c0_73, %c2_74, %c1_75, %c0_76] : memref<1x18x18x128xbf16, #tpu.memory_space<vmem>>, vector<1x16x16x128xbf16>
    %51 = vector.shape_cast %50 : vector<1x16x16x128xbf16> to vector<256x128xbf16>
    %c7 = arith.constant 7 : index
    %c0_77 = arith.constant 0 : index
    %c0_78 = arith.constant 0 : index
    %52 = vector.load %arg2[%c7, %c0_77, %c0_78] : memref<9x128x128xbf16, #tpu.memory_space<vmem>>, vector<1x128x128xbf16>
    %53 = vector.shape_cast %52 : vector<1x128x128xbf16> to vector<128x128xbf16>
    %cst_79 = arith.constant dense<0.000000e+00> : vector<256x128xf32>
    %54 = tpu.matmul %51, %53, %cst_79 {dimension_numbers = #tpu.dot_dimension_numbers<[1], [0], [0], [1], [0, 0, 1, 1], [], []>} : vector<256x128xbf16>, vector<128x128xbf16>, vector<256x128xf32> -> vector<256x128xf32>
    %55 = arith.addf %49, %54 : vector<256x128xf32>
    %c0_80 = arith.constant 0 : index
    %c2_81 = arith.constant 2 : index
    %c2_82 = arith.constant 2 : index
    %c0_83 = arith.constant 0 : index
    %56 = vector.load %arg7[%c0_80, %c2_81, %c2_82, %c0_83] : memref<1x18x18x128xbf16, #tpu.memory_space<vmem>>, vector<1x16x16x128xbf16>
    %57 = vector.shape_cast %56 : vector<1x16x16x128xbf16> to vector<256x128xbf16>
    %c8 = arith.constant 8 : index
    %c0_84 = arith.constant 0 : index
    %c0_85 = arith.constant 0 : index
    %58 = vector.load %arg2[%c8, %c0_84, %c0_85] : memref<9x128x128xbf16, #tpu.memory_space<vmem>>, vector<1x128x128xbf16>
    %59 = vector.shape_cast %58 : vector<1x128x128xbf16> to vector<128x128xbf16>
    %cst_86 = arith.constant dense<0.000000e+00> : vector<256x128xf32>
    %60 = tpu.matmul %57, %59, %cst_86 {dimension_numbers = #tpu.dot_dimension_numbers<[1], [0], [0], [1], [0, 0, 1, 1], [], []>} : vector<256x128xbf16>, vector<128x128xbf16>, vector<256x128xf32> -> vector<256x128xf32>
    %61 = arith.addf %55, %60 : vector<256x128xf32>
    %c0_87 = arith.constant 0 : index
    %c0_88 = arith.constant 0 : index
    %62 = vector.load %arg3[%c0_87, %c0_88] : memref<1x128xf32, #tpu.memory_space<vmem>>, vector<1x128xf32>
    %63 = vector.broadcast %62 : vector<1x128xf32> to vector<256x128xf32>
    %64 = arith.addf %61, %63 : vector<256x128xf32>
    %cst_89 = arith.constant 0.000000e+00 : f32
    %65 = vector.broadcast %cst_89 : f32 to vector<256x128xf32>
    %66 = arith.maximumf %64, %65 : vector<256x128xf32>
    %cst_90 = arith.constant 0.000000e+00 : bf16
    %67 = vector.broadcast %cst_90 : bf16 to vector<1x1x18x128xbf16>
    %cst_91 = arith.constant 0.000000e+00 : bf16
    %68 = vector.broadcast %cst_91 : bf16 to vector<1x18x1x128xbf16>
    %c0_92 = arith.constant 0 : index
    %c0_93 = arith.constant 0 : index
    %c0_94 = arith.constant 0 : index
    %c0_95 = arith.constant 0 : index
    %69 = vector.load %arg8[%c0_92, %c0_93, %c0_94, %c0_95] : memref<1x18x18x128xbf16, #tpu.memory_space<vmem>>, vector<1x1x18x128xbf16>
    tpu.vector_store %arg8[%c0_92, %c0_93, %c0_94, %c0_95], %67 {strides = array<i32>} : memref<1x18x18x128xbf16, #tpu.memory_space<vmem>>, vector<1x1x18x128xbf16>,
    %c0_96 = arith.constant 0 : index
    %c17_97 = arith.constant 17 : index
    %c0_98 = arith.constant 0 : index
    %c0_99 = arith.constant 0 : index
    %70 = vector.load %arg8[%c0_96, %c17_97, %c0_98, %c0_99] : memref<1x18x18x128xbf16, #tpu.memory_space<vmem>>, vector<1x1x18x128xbf16>
    tpu.vector_store %arg8[%c0_96, %c17_97, %c0_98, %c0_99], %67 {strides = array<i32>} : memref<1x18x18x128xbf16, #tpu.memory_space<vmem>>, vector<1x1x18x128xbf16>,
    %c0_100 = arith.constant 0 : index
    %c0_101 = arith.constant 0 : index
    %c0_102 = arith.constant 0 : index
    %c0_103 = arith.constant 0 : index
    %71 = vector.load %arg8[%c0_100, %c0_101, %c0_102, %c0_103] : memref<1x18x18x128xbf16, #tpu.memory_space<vmem>>, vector<1x18x1x128xbf16>
    tpu.vector_store %arg8[%c0_100, %c0_101, %c0_102, %c0_103], %68 {strides = array<i32>} : memref<1x18x18x128xbf16, #tpu.memory_space<vmem>>, vector<1x18x1x128xbf16>,
    %c0_104 = arith.constant 0 : index
    %c0_105 = arith.constant 0 : index
    %c17_106 = arith.constant 17 : index
    %c0_107 = arith.constant 0 : index
    %72 = vector.load %arg8[%c0_104, %c0_105, %c17_106, %c0_107] : memref<1x18x18x128xbf16, #tpu.memory_space<vmem>>, vector<1x18x1x128xbf16>
    tpu.vector_store %arg8[%c0_104, %c0_105, %c17_106, %c0_107], %68 {strides = array<i32>} : memref<1x18x18x128xbf16, #tpu.memory_space<vmem>>, vector<1x18x1x128xbf16>,
    %73 = vector.shape_cast %66 : vector<256x128xf32> to vector<1x16x16x128xf32>
    %74 = arith.truncf %73 : vector<1x16x16x128xf32> to vector<1x16x16x128xbf16>
    %c0_108 = arith.constant 0 : index
    %c1_109 = arith.constant 1 : index
    %c1_110 = arith.constant 1 : index
    %c0_111 = arith.constant 0 : index
    %75 = vector.load %arg8[%c0_108, %c1_109, %c1_110, %c0_111] : memref<1x18x18x128xbf16, #tpu.memory_space<vmem>>, vector<1x16x16x128xbf16>
    tpu.vector_store %arg8[%c0_108, %c1_109, %c1_110, %c0_111], %74 {strides = array<i32>} : memref<1x18x18x128xbf16, #tpu.memory_space<vmem>>, vector<1x16x16x128xbf16>,
    %c0_112 = arith.constant 0 : index
    %c0_113 = arith.constant 0 : index
    %c0_114 = arith.constant 0 : index
    %c0_115 = arith.constant 0 : index
    %76 = vector.load %arg8[%c0_112, %c0_113, %c0_114, %c0_115] : memref<1x18x18x128xbf16, #tpu.memory_space<vmem>>, vector<1x16x16x128xbf16>
    %77 = vector.shape_cast %76 : vector<1x16x16x128xbf16> to vector<256x128xbf16>
    %c0_116 = arith.constant 0 : index
    %c0_117 = arith.constant 0 : index
    %c0_118 = arith.constant 0 : index
    %78 = vector.load %arg4[%c0_116, %c0_117, %c0_118] : memref<9x128x128xbf16, #tpu.memory_space<vmem>>, vector<1x128x128xbf16>
    %79 = vector.shape_cast %78 : vector<1x128x128xbf16> to vector<128x128xbf16>
    %cst_119 = arith.constant dense<0.000000e+00> : vector<256x128xf32>
    %80 = tpu.matmul %77, %79, %cst_119 {dimension_numbers = #tpu.dot_dimension_numbers<[1], [0], [0], [1], [0, 0, 1, 1], [], []>} : vector<256x128xbf16>, vector<128x128xbf16>, vector<256x128xf32> -> vector<256x128xf32>
    %c0_120 = arith.constant 0 : index
    %c0_121 = arith.constant 0 : index
    %c1_122 = arith.constant 1 : index
    %c0_123 = arith.constant 0 : index
    %81 = vector.load %arg8[%c0_120, %c0_121, %c1_122, %c0_123] : memref<1x18x18x128xbf16, #tpu.memory_space<vmem>>, vector<1x16x16x128xbf16>
    %82 = vector.shape_cast %81 : vector<1x16x16x128xbf16> to vector<256x128xbf16>
    %c1_124 = arith.constant 1 : index
    %c0_125 = arith.constant 0 : index
    %c0_126 = arith.constant 0 : index
    %83 = vector.load %arg4[%c1_124, %c0_125, %c0_126] : memref<9x128x128xbf16, #tpu.memory_space<vmem>>, vector<1x128x128xbf16>
    %84 = vector.shape_cast %83 : vector<1x128x128xbf16> to vector<128x128xbf16>
    %cst_127 = arith.constant dense<0.000000e+00> : vector<256x128xf32>
    %85 = tpu.matmul %82, %84, %cst_127 {dimension_numbers = #tpu.dot_dimension_numbers<[1], [0], [0], [1], [0, 0, 1, 1], [], []>} : vector<256x128xbf16>, vector<128x128xbf16>, vector<256x128xf32> -> vector<256x128xf32>
    %86 = arith.addf %80, %85 : vector<256x128xf32>
    %c0_128 = arith.constant 0 : index
    %c0_129 = arith.constant 0 : index
    %c2_130 = arith.constant 2 : index
    %c0_131 = arith.constant 0 : index
    %87 = vector.load %arg8[%c0_128, %c0_129, %c2_130, %c0_131] : memref<1x18x18x128xbf16, #tpu.memory_space<vmem>>, vector<1x16x16x128xbf16>
    %88 = vector.shape_cast %87 : vector<1x16x16x128xbf16> to vector<256x128xbf16>
    %c2_132 = arith.constant 2 : index
    %c0_133 = arith.constant 0 : index
    %c0_134 = arith.constant 0 : index
    %89 = vector.load %arg4[%c2_132, %c0_133, %c0_134] : memref<9x128x128xbf16, #tpu.memory_space<vmem>>, vector<1x128x128xbf16>
    %90 = vector.shape_cast %89 : vector<1x128x128xbf16> to vector<128x128xbf16>
    %cst_135 = arith.constant dense<0.000000e+00> : vector<256x128xf32>
    %91 = tpu.matmul %88, %90, %cst_135 {dimension_numbers = #tpu.dot_dimension_numbers<[1], [0], [0], [1], [0, 0, 1, 1], [], []>} : vector<256x128xbf16>, vector<128x128xbf16>, vector<256x128xf32> -> vector<256x128xf32>
    %92 = arith.addf %86, %91 : vector<256x128xf32>
    %c0_136 = arith.constant 0 : index
    %c1_137 = arith.constant 1 : index
    %c0_138 = arith.constant 0 : index
    %c0_139 = arith.constant 0 : index
    %93 = vector.load %arg8[%c0_136, %c1_137, %c0_138, %c0_139] : memref<1x18x18x128xbf16, #tpu.memory_space<vmem>>, vector<1x16x16x128xbf16>
    %94 = vector.shape_cast %93 : vector<1x16x16x128xbf16> to vector<256x128xbf16>
    %c3_140 = arith.constant 3 : index
    %c0_141 = arith.constant 0 : index
    %c0_142 = arith.constant 0 : index
    %95 = vector.load %arg4[%c3_140, %c0_141, %c0_142] : memref<9x128x128xbf16, #tpu.memory_space<vmem>>, vector<1x128x128xbf16>
    %96 = vector.shape_cast %95 : vector<1x128x128xbf16> to vector<128x128xbf16>
    %cst_143 = arith.constant dense<0.000000e+00> : vector<256x128xf32>
    %97 = tpu.matmul %94, %96, %cst_143 {dimension_numbers = #tpu.dot_dimension_numbers<[1], [0], [0], [1], [0, 0, 1, 1], [], []>} : vector<256x128xbf16>, vector<128x128xbf16>, vector<256x128xf32> -> vector<256x128xf32>
    %98 = arith.addf %92, %97 : vector<256x128xf32>
    %c0_144 = arith.constant 0 : index
    %c1_145 = arith.constant 1 : index
    %c1_146 = arith.constant 1 : index
    %c0_147 = arith.constant 0 : index
    %99 = vector.load %arg8[%c0_144, %c1_145, %c1_146, %c0_147] : memref<1x18x18x128xbf16, #tpu.memory_space<vmem>>, vector<1x16x16x128xbf16>
    %100 = vector.shape_cast %99 : vector<1x16x16x128xbf16> to vector<256x128xbf16>
    %c4_148 = arith.constant 4 : index
    %c0_149 = arith.constant 0 : index
    %c0_150 = arith.constant 0 : index
    %101 = vector.load %arg4[%c4_148, %c0_149, %c0_150] : memref<9x128x128xbf16, #tpu.memory_space<vmem>>, vector<1x128x128xbf16>
    %102 = vector.shape_cast %101 : vector<1x128x128xbf16> to vector<128x128xbf16>
    %cst_151 = arith.constant dense<0.000000e+00> : vector<256x128xf32>
    %103 = tpu.matmul %100, %102, %cst_151 {dimension_numbers = #tpu.dot_dimension_numbers<[1], [0], [0], [1], [0, 0, 1, 1], [], []>} : vector<256x128xbf16>, vector<128x128xbf16>, vector<256x128xf32> -> vector<256x128xf32>
    %104 = arith.addf %98, %103 : vector<256x128xf32>
    %c0_152 = arith.constant 0 : index
    %c1_153 = arith.constant 1 : index
    %c2_154 = arith.constant 2 : index
    %c0_155 = arith.constant 0 : index
    %105 = vector.load %arg8[%c0_152, %c1_153, %c2_154, %c0_155] : memref<1x18x18x128xbf16, #tpu.memory_space<vmem>>, vector<1x16x16x128xbf16>
    %106 = vector.shape_cast %105 : vector<1x16x16x128xbf16> to vector<256x128xbf16>
    %c5_156 = arith.constant 5 : index
    %c0_157 = arith.constant 0 : index
    %c0_158 = arith.constant 0 : index
    %107 = vector.load %arg4[%c5_156, %c0_157, %c0_158] : memref<9x128x128xbf16, #tpu.memory_space<vmem>>, vector<1x128x128xbf16>
    %108 = vector.shape_cast %107 : vector<1x128x128xbf16> to vector<128x128xbf16>
    %cst_159 = arith.constant dense<0.000000e+00> : vector<256x128xf32>
    %109 = tpu.matmul %106, %108, %cst_159 {dimension_numbers = #tpu.dot_dimension_numbers<[1], [0], [0], [1], [0, 0, 1, 1], [], []>} : vector<256x128xbf16>, vector<128x128xbf16>, vector<256x128xf32> -> vector<256x128xf32>
    %110 = arith.addf %104, %109 : vector<256x128xf32>
    %c0_160 = arith.constant 0 : index
    %c2_161 = arith.constant 2 : index
    %c0_162 = arith.constant 0 : index
    %c0_163 = arith.constant 0 : index
    %111 = vector.load %arg8[%c0_160, %c2_161, %c0_162, %c0_163] : memref<1x18x18x128xbf16, #tpu.memory_space<vmem>>, vector<1x16x16x128xbf16>
    %112 = vector.shape_cast %111 : vector<1x16x16x128xbf16> to vector<256x128xbf16>
    %c6_164 = arith.constant 6 : index
    %c0_165 = arith.constant 0 : index
    %c0_166 = arith.constant 0 : index
    %113 = vector.load %arg4[%c6_164, %c0_165, %c0_166] : memref<9x128x128xbf16, #tpu.memory_space<vmem>>, vector<1x128x128xbf16>
    %114 = vector.shape_cast %113 : vector<1x128x128xbf16> to vector<128x128xbf16>
    %cst_167 = arith.constant dense<0.000000e+00> : vector<256x128xf32>
    %115 = tpu.matmul %112, %114, %cst_167 {dimension_numbers = #tpu.dot_dimension_numbers<[1], [0], [0], [1], [0, 0, 1, 1], [], []>} : vector<256x128xbf16>, vector<128x128xbf16>, vector<256x128xf32> -> vector<256x128xf32>
    %116 = arith.addf %110, %115 : vector<256x128xf32>
    %c0_168 = arith.constant 0 : index
    %c2_169 = arith.constant 2 : index
    %c1_170 = arith.constant 1 : index
    %c0_171 = arith.constant 0 : index
    %117 = vector.load %arg8[%c0_168, %c2_169, %c1_170, %c0_171] : memref<1x18x18x128xbf16, #tpu.memory_space<vmem>>, vector<1x16x16x128xbf16>
    %118 = vector.shape_cast %117 : vector<1x16x16x128xbf16> to vector<256x128xbf16>
    %c7_172 = arith.constant 7 : index
    %c0_173 = arith.constant 0 : index
    %c0_174 = arith.constant 0 : index
    %119 = vector.load %arg4[%c7_172, %c0_173, %c0_174] : memref<9x128x128xbf16, #tpu.memory_space<vmem>>, vector<1x128x128xbf16>
    %120 = vector.shape_cast %119 : vector<1x128x128xbf16> to vector<128x128xbf16>
    %cst_175 = arith.constant dense<0.000000e+00> : vector<256x128xf32>
    %121 = tpu.matmul %118, %120, %cst_175 {dimension_numbers = #tpu.dot_dimension_numbers<[1], [0], [0], [1], [0, 0, 1, 1], [], []>} : vector<256x128xbf16>, vector<128x128xbf16>, vector<256x128xf32> -> vector<256x128xf32>
    %122 = arith.addf %116, %121 : vector<256x128xf32>
    %c0_176 = arith.constant 0 : index
    %c2_177 = arith.constant 2 : index
    %c2_178 = arith.constant 2 : index
    %c0_179 = arith.constant 0 : index
    %123 = vector.load %arg8[%c0_176, %c2_177, %c2_178, %c0_179] : memref<1x18x18x128xbf16, #tpu.memory_space<vmem>>, vector<1x16x16x128xbf16>
    %124 = vector.shape_cast %123 : vector<1x16x16x128xbf16> to vector<256x128xbf16>
    %c8_180 = arith.constant 8 : index
    %c0_181 = arith.constant 0 : index
    %c0_182 = arith.constant 0 : index
    %125 = vector.load %arg4[%c8_180, %c0_181, %c0_182] : memref<9x128x128xbf16, #tpu.memory_space<vmem>>, vector<1x128x128xbf16>
    %126 = vector.shape_cast %125 : vector<1x128x128xbf16> to vector<128x128xbf16>
    %cst_183 = arith.constant dense<0.000000e+00> : vector<256x128xf32>
    %127 = tpu.matmul %124, %126, %cst_183 {dimension_numbers = #tpu.dot_dimension_numbers<[1], [0], [0], [1], [0, 0, 1, 1], [], []>} : vector<256x128xbf16>, vector<128x128xbf16>, vector<256x128xf32> -> vector<256x128xf32>
    %128 = arith.addf %122, %127 : vector<256x128xf32>
    %c0_184 = arith.constant 0 : index
    %c0_185 = arith.constant 0 : index
    %129 = vector.load %arg5[%c0_184, %c0_185] : memref<1x128xf32, #tpu.memory_space<vmem>>, vector<1x128xf32>
    %130 = vector.broadcast %129 : vector<1x128xf32> to vector<256x128xf32>
    %131 = arith.addf %128, %130 : vector<256x128xf32>
    %132 = vector.shape_cast %0 : vector<1x16x16x128xf32> to vector<256x128xf32>
    %133 = arith.addf %131, %132 : vector<256x128xf32>
    %cst_186 = arith.constant 0.000000e+00 : f32
    %134 = vector.broadcast %cst_186 : f32 to vector<256x128xf32>
    %135 = arith.maximumf %133, %134 : vector<256x128xf32>
    %136 = vector.shape_cast %135 : vector<256x128xf32> to vector<1x16x16x128xf32>
    %c0_187 = arith.constant 0 : index
    %c0_188 = arith.constant 0 : index
    %c0_189 = arith.constant 0 : index
    %c0_190 = arith.constant 0 : index
    %137 = vector.load %arg6[%c0_187, %c0_188, %c0_189, %c0_190] : memref<1x16x16x128xf32, #tpu.memory_space<vmem>>, vector<1x16x16x128xf32>
    tpu.vector_store %arg6[%c0_187, %c0_188, %c0_189, %c0_190], %136 {strides = array<i32>} : memref<1x16x16x128xf32, #tpu.memory_space<vmem>>, vector<1x16x16x128xf32>,
    return
  }
  func.func @transform_0(%arg0: i32) -> (i32, i32, i32, i32) {
    %c0_i32 = arith.constant 0 : i32
    %c0_i32_0 = arith.constant 0 : i32
    %c0_i32_1 = arith.constant 0 : i32
    %c0_i32_2 = arith.constant 0 : i32
    return %arg0, %c0_i32, %c0_i32_0, %c0_i32_1 : i32, i32, i32, i32
  }
  func.func @transform_1(%arg0: i32) -> (i32, i32, i32) {
    %c0_i32 = arith.constant 0 : i32
    %c0_i32_0 = arith.constant 0 : i32
    %c0_i32_1 = arith.constant 0 : i32
    %c0_i32_2 = arith.constant 0 : i32
    return %c0_i32, %c0_i32_0, %c0_i32_1 : i32, i32, i32
  }
  func.func @transform_2(%arg0: i32) -> (i32, i32) {
    %c0_i32 = arith.constant 0 : i32
    %c0_i32_0 = arith.constant 0 : i32
    %c0_i32_1 = arith.constant 0 : i32
    return %c0_i32, %c0_i32_0 : i32, i32
  }
  func.func @transform_3(%arg0: i32) -> (i32, i32, i32) {
    %c0_i32 = arith.constant 0 : i32
    %c0_i32_0 = arith.constant 0 : i32
    %c0_i32_1 = arith.constant 0 : i32
    %c0_i32_2 = arith.constant 0 : i32
    return %c0_i32, %c0_i32_0, %c0_i32_1 : i32, i32, i32
  }
  func.func @transform_4(%arg0: i32) -> (i32, i32) {
    %c0_i32 = arith.constant 0 : i32
    %c0_i32_0 = arith.constant 0 : i32
    %c0_i32_1 = arith.constant 0 : i32
    return %c0_i32, %c0_i32_0 : i32, i32
  }
  func.func @transform_5(%arg0: i32) -> (i32, i32, i32, i32) {
    %c0_i32 = arith.constant 0 : i32
    %c0_i32_0 = arith.constant 0 : i32
    %c0_i32_1 = arith.constant 0 : i32
    %c0_i32_2 = arith.constant 0 : i32
    return %arg0, %c0_i32, %c0_i32_0, %c0_i32_1 : i32, i32, i32, i32
  }
}

</mosaic_0001>

<llo_original>
// kernel: basic_block_forward.1
$region0: #{basic_block_forward.1}
  #allocation0 [shape = 'u32[]', space=smem, size = 0x4, offset = 0x4, fixed_abs, tag = 'smem constant byte address 0x4 - core index']
  #allocation1 [shape = 'u32[144,128]{1,0:T(1,128)}', space=vmem, size = 0x12000, scoped, tag = 'internal scratch']
  #allocation2 [shape = 'bf16[1,18,18,128]{3,2,1,0:T(8,128)(2,1)}', space=vmem, size = 0x1b000, scoped, tag = 'scratch operand']
  #allocation3 [shape = 'bf16[1,18,18,128]{3,2,1,0:T(8,128)(2,1)}', space=vmem, size = 0x1b000, scoped, tag = 'scratch operand']
  %s0 = inlined_call_operand.vmem [shape: f32[2,16,16,128], index: 0, kind: input, shape index: {}]
  %s1 = inlined_call_operand.vmem [shape: bf16[9,128,128], index: 1, kind: input, shape index: {}]
  %s2 = inlined_call_operand.vmem [shape: f32[1,128], index: 2, kind: input, shape index: {}]
  %s3 = inlined_call_operand.vmem [shape: bf16[9,128,128], index: 3, kind: input, shape index: {}]
  %s4 = inlined_call_operand.vmem [shape: f32[1,128], index: 4, kind: input, shape index: {}]
  %s5 = inlined_call_operand.vmem [shape: f32[2,16,16,128], index: 5, kind: output, shape index: {}]
  %s6 = sld [smem:[#allocation0]]
  $region53: #{basic_block_forward.1} parent=0
    _
  %s8 = ssub.s32 1, %s6
  %s9 = scalar_select 0, %s8, %s6
  loop: start=0, step=1, limit=4
  $region2: #{basic_block_forward.1} parent=0 // loop_pre_header
    _
  $region3: #{basic_block_forward.1} parent=0 // loop_header
    %s11 = sphi 0, %s15
    %p12 = scmp.ge.s32.totalorder %s11, 4
    %s21 = sphi 0, %s23
    %s24 = sphi 0, %s21
    %s25 = sphi 0, %s24
    %s41 = sphi 0, %s25
    %s45 = sphi 0, %s45
    %s47 = sphi 0, %s45
    %s48 = sphi 0, %s47
    %s62 = sphi 0, %s48
    %s66 = sphi 0, %s66
    %s68 = sphi 0, %s66
    %s69 = sphi 0, %s68
    %s83 = sphi 0, %s69
    %s87 = sphi 0, %s87
    %s89 = sphi 0, %s87
    %s90 = sphi 0, %s89
    %s104 = sphi 0, %s90
    %s108 = sphi 0, %s108
    %s110 = sphi 0, %s108
    %s111 = sphi 0, %s110
    %s125 = sphi 0, %s111
    %s131 = sphi 0, %s133
    %s134 = sphi 0, %s131
    %s135 = sphi 0, %s134
    %s151 = sphi 0, %s135
  $region4: #{basic_block_forward.1} parent=0 // loop_header_branch
    %14 = sbr.rel (%p12) target = $region8
  $region5: #{basic_block_forward.1} parent=0 // loop_body
    %s16 = ssub.s32 %s11, 1
    %s17 = ssub.s32 %s11, 2
    %s18 = sadd.s32 %s11, 1
    %s19 = ssub.s32 %s11, %s18
    %p20 = scmp.eq.s32.totalorder %s19, 0
    %s22 = sadd.s32 %s21, 1
    %s23 = scalar_select %p20, %s21, %s22
    %p26 = pneg %p20
    %p27 = scmp.eq.s32.totalorder %s11, 1
    %p28 = por %p26, %p27
    %p29 = scmp.ne.s32.totalorder %s21, %s24
    %p30 = scmp.eq.s32.totalorder %s11, 0
    %p31 = por %p29, %p30
    %p32 = scmp.ne.s32.totalorder %s21, %s24
    %p33 = scmp.eq.s32.totalorder %s16, 1
    %p34 = por %p32, %p33
    %p35 = scmp.ne.s32.totalorder %s24, %s25
    %p36 = scmp.eq.s32.totalorder %s16, 0
    %p37 = por %p35, %p36
    %p38 = scmp.ne.s32.totalorder %s24, %s25
    %p39 = scmp.eq.s32.totalorder %s17, 1
    %p40 = por %p38, %p39
    %p42 = scmp.ne.s32.totalorder %s25, %s41
    %p43 = scmp.eq.s32.totalorder %s17, 0
    %p44 = por %p42, %p43
    %s46 = sadd.s32 %s45, 1
    %p49 = scmp.eq.s32.totalorder %s11, 1
    %p50 = scmp.ne.s32.totalorder %s45, %s47
    %p51 = scmp.eq.s32.totalorder %s11, 0
    %p52 = por %p50, %p51
    %p53 = scmp.ne.s32.totalorder %s45, %s47
    %p54 = scmp.eq.s32.totalorder %s16, 1
    %p55 = por %p53, %p54
    %p56 = scmp.ne.s32.totalorder %s47, %s48
    %p57 = scmp.eq.s32.totalorder %s16, 0
    %p58 = por %p56, %p57
    %p59 = scmp.ne.s32.totalorder %s47, %s48
    %p60 = scmp.eq.s32.totalorder %s17, 1
    %p61 = por %p59, %p60
    %p63 = scmp.ne.s32.totalorder %s48, %s62
    %p64 = scmp.eq.s32.totalorder %s17, 0
    %p65 = por %p63, %p64
    %s67 = sadd.s32 %s66, 1
    %p70 = scmp.eq.s32.totalorder %s11, 1
    %p71 = scmp.ne.s32.totalorder %s66, %s68
    %p72 = scmp.eq.s32.totalorder %s11, 0
    %p73 = por %p71, %p72
    %p74 = scmp.ne.s32.totalorder %s66, %s68
    %p75 = scmp.eq.s32.totalorder %s16, 1
    %p76 = por %p74, %p75
    %p77 = scmp.ne.s32.totalorder %s68, %s69
    %p78 = scmp.eq.s32.totalorder %s16, 0
    %p79 = por %p77, %p78
    %p80 = scmp.ne.s32.totalorder %s68, %s69
    %p81 = scmp.eq.s32.totalorder %s17, 1
    %p82 = por %p80, %p81
    %p84 = scmp.ne.s32.totalorder %s69, %s83
    %p85 = scmp.eq.s32.totalorder %s17, 0
    %p86 = por %p84, %p85
    %s88 = sadd.s32 %s87, 1
    %p91 = scmp.eq.s32.totalorder %s11, 1
    %p92 = scmp.ne.s32.totalorder %s87, %s89
    %p93 = scmp.eq.s32.totalorder %s11, 0
    %p94 = por %p92, %p93
    %p95 = scmp.ne.s32.totalorder %s87, %s89
    %p96 = scmp.eq.s32.totalorder %s16, 1
    %p97 = por %p95, %p96
    %p98 = scmp.ne.s32.totalorder %s89, %s90
    %p99 = scmp.eq.s32.totalorder %s16, 0
    %p100 = por %p98, %p99
    %p101 = scmp.ne.s32.totalorder %s89, %s90
    %p102 = scmp.eq.s32.totalorder %s17, 1
    %p103 = por %p101, %p102
    %p105 = scmp.ne.s32.totalorder %s90, %s104
    %p106 = scmp.eq.s32.totalorder %s17, 0
    %p107 = por %p105, %p106
    %s109 = sadd.s32 %s108, 1
    %p112 = scmp.eq.s32.totalorder %s11, 1
    %p113 = scmp.ne.s32.totalorder %s108, %s110
    %p114 = scmp.eq.s32.totalorder %s11, 0
    %p115 = por %p113, %p114
    %p116 = scmp.ne.s32.totalorder %s108, %s110
    %p117 = scmp.eq.s32.totalorder %s16, 1
    %p118 = por %p116, %p117
    %p119 = scmp.ne.s32.totalorder %s110, %s111
    %p120 = scmp.eq.s32.totalorder %s16, 0
    %p121 = por %p119, %p120
    %p122 = scmp.ne.s32.totalorder %s110, %s111
    %p123 = scmp.eq.s32.totalorder %s17, 1
    %p124 = por %p122, %p123
    %p126 = scmp.ne.s32.totalorder %s111, %s125
    %p127 = scmp.eq.s32.totalorder %s17, 0
    %p128 = por %p126, %p127
    %s129 = ssub.s32 %s11, %s18
    %p130 = scmp.eq.s32.totalorder %s129, 0
    %s132 = sadd.s32 %s131, 1
    %s133 = scalar_select %p130, %s131, %s132
    %p136 = pneg %p130
    %p137 = scmp.eq.s32.totalorder %s11, 1
    %p138 = por %p136, %p137
    %p139 = scmp.ne.s32.totalorder %s131, %s134
    %p140 = scmp.eq.s32.totalorder %s11, 0
    %p141 = por %p139, %p140
    %p142 = scmp.ne.s32.totalorder %s131, %s134
    %p143 = scmp.eq.s32.totalorder %s16, 1
    %p144 = por %p142, %p143
    %p145 = scmp.ne.s32.totalorder %s134, %s135
    %p146 = scmp.eq.s32.totalorder %s16, 0
    %p147 = por %p145, %p146
    %p148 = scmp.ne.s32.totalorder %s134, %s135
    %p149 = scmp.eq.s32.totalorder %s17, 1
    %p150 = por %p148, %p149
    %p152 = scmp.ne.s32.totalorder %s135, %s151
    %p153 = scmp.eq.s32.totalorder %s17, 0
    %p154 = por %p152, %p153
    %p155 = scmp.le.s32.totalorder 1, %s11
    %p156 = scmp.lt.s32.totalorder %s11, 3
    %p157 = pnand %p155, %p156
    %p158 = pneg %p157
    // Predicated region
    $region9: #{basic_block_forward.1} parent=5 // pred_check
      _
    $region10: #{basic_block_forward.1} parent=5 // pred_check_branch
      %160 = sbr.rel (%p157) target = $region12
    $region11: #{basic_block_forward.1} parent=5 // pred_region
      %s161 = ssub.s32 %s11, 1
      // Predicated region
      $region13: #{basic_block_forward.1} parent=11 // pred_check
        %p162 = pneg %p58
      $region14: #{basic_block_forward.1} parent=11 // pred_check_branch
        %164 = sbr.rel (%p162) target = $region16
      $region15: #{basic_block_forward.1} parent=11 // pred_region
        _
      $region16: #{basic_block_forward.1} parent=11 // pred_fallthru
        _
      // Predicated region
      $region17: #{basic_block_forward.1} parent=11 // pred_check
        %p165 = pneg %p79
      $region18: #{basic_block_forward.1} parent=11 // pred_check_branch
        %167 = sbr.rel (%p165) target = $region20
      $region19: #{basic_block_forward.1} parent=11 // pred_region
        _
      $region20: #{basic_block_forward.1} parent=11 // pred_fallthru
        _
      // Predicated region
      $region21: #{basic_block_forward.1} parent=11 // pred_check
        %p168 = pneg %p100
      $region22: #{basic_block_forward.1} parent=11 // pred_check_branch
        %170 = sbr.rel (%p168) target = $region24
      $region23: #{basic_block_forward.1} parent=11 // pred_region
        _
      $region24: #{basic_block_forward.1} parent=11 // pred_fallthru
        _
      // Predicated region
      $region25: #{basic_block_forward.1} parent=11 // pred_check
        %p171 = pneg %p121
      $region26: #{basic_block_forward.1} parent=11 // pred_check_branch
        %173 = sbr.rel (%p171) target = $region28
      $region27: #{basic_block_forward.1} parent=11 // pred_region
        _
      $region28: #{basic_block_forward.1} parent=11 // pred_fallthru
        _
    $region12: #{basic_block_forward.1} parent=5 // pred_fallthru
      _
    %p174 = scmp.lt.s32.totalorder %s11, 2
    // Predicated region
    $region29: #{basic_block_forward.1} parent=5 // pred_check
      %p175 = pneg %p174
    $region30: #{basic_block_forward.1} parent=5 // pred_check_branch
      %177 = sbr.rel (%p175) target = $region32
    $region31: #{basic_block_forward.1} parent=5 // pred_region
      // Predicated region
      $region33: #{basic_block_forward.1} parent=31 // pred_check
        %p178 = pneg %p31
      $region34: #{basic_block_forward.1} parent=31 // pred_check_branch
        %180 = sbr.rel (%p178) target = $region36
      $region35: #{basic_block_forward.1} parent=31 // pred_region
        %p181 = scmp.lt.s32.totalorder %s11, 1
        %s182 = scalar_select %p181, %s11, 1
        %s183 = smul.addr %s182, 32
        %s184 = smul.addr %s183, 8
        %s185 = scalar_lea.vmem %s0, %s184
      $region36: #{basic_block_forward.1} parent=31 // pred_fallthru
        _
    $region32: #{basic_block_forward.1} parent=5 // pred_fallthru
      _
    %p186 = scmp.le.s32.totalorder 1, %s11
    %p187 = scmp.lt.s32.totalorder %s11, 3
    %p188 = pnand %p186, %p187
    %p189 = pneg %p188
    // Predicated region
    $region37: #{basic_block_forward.1} parent=5 // pred_check
      _
    $region38: #{basic_block_forward.1} parent=5 // pred_check_branch
      %191 = sbr.rel (%p188) target = $region40
    $region39: #{basic_block_forward.1} parent=5 // pred_region
      %s192 = ssub.s32 %s11, 1
      %p193 = scmp.lt.s32.totalorder %s16, 1
      %s194 = scalar_select %p193, %s16, 1
      %s195 = smul.addr %s194, 32
      %s196 = smul.addr %s195, 8
      %s197 = scalar_lea.vmem %s0, %s196
      %p198 = pneg %p37
      %p199 = pneg %p34
      %p200 = pneg %p58
      %p201 = pneg %p55
      %p202 = pneg %p79
      %p203 = pneg %p76
      %p204 = pneg %p100
      %p205 = pneg %p97
      %p206 = pneg %p121
      %p207 = pneg %p118
      %p208 = pneg %p147
      %p209 = pneg %p144
      %p210 = scmp.lt.s32.totalorder %s16, 1
      %s211 = scalar_select %p210, %s16, 1
      %s212 = smul.addr %s211, 32
      %s213 = smul.addr %s212, 8
      %s214 = scalar_lea.vmem %s5, %s213
      %p215 = scmp.lt.s32.totalorder %s16, 1
      %s216 = scalar_select %p215, %s16, 1
      %s217 = smul.addr %s216, 32
      %s218 = smul.addr %s217, 8
      %s219 = scalar_lea.vmem %s0, %s218
      %p220 = scmp.lt.s32.totalorder %s16, 1
      %s221 = scalar_select %p220, %s16, 1
      %s222 = smul.addr %s221, 32
      %s223 = smul.addr %s222, 8
      %s224 = scalar_lea.vmem %s5, %s223
      %v226 = vld [vmem:[%s219] sm:$0xff]
      %v227 = vld [vmem:[%s219 + $0x8] sm:$0xff]
      %v228 = vld [vmem:[%s219 + $0x10] sm:$0xff]
      %v229 = vld [vmem:[%s219 + $0x18] sm:$0xff]
      %v230 = vld [vmem:[%s219 + $0x20] sm:$0xff]
      %v231 = vld [vmem:[%s219 + $0x28] sm:$0xff]
      %v232 = vld [vmem:[%s219 + $0x30] sm:$0xff]
      %v233 = vld [vmem:[%s219 + $0x38] sm:$0xff]
      %v234 = vld [vmem:[%s219 + $0x40] sm:$0xff]
      %v235 = vld [vmem:[%s219 + $0x48] sm:$0xff]
      %v236 = vld [vmem:[%s219 + $0x50] sm:$0xff]
      %v237 = vld [vmem:[%s219 + $0x58] sm:$0xff]
      %v238 = vld [vmem:[%s219 + $0x60] sm:$0xff]
      %v239 = vld [vmem:[%s219 + $0x68] sm:$0xff]
      %v240 = vld [vmem:[%s219 + $0x70] sm:$0xff]
      %v241 = vld [vmem:[%s219 + $0x78] sm:$0xff]
      %v242 = vld [vmem:[%s219 + $0x80] sm:$0xff]
      %v243 = vld [vmem:[%s219 + $0x88] sm:$0xff]
      %v244 = vld [vmem:[%s219 + $0x90] sm:$0xff]
      %v245 = vld [vmem:[%s219 + $0x98] sm:$0xff]
      %v246 = vld [vmem:[%s219 + $0xa0] sm:$0xff]
      %v247 = vld [vmem:[%s219 + $0xa8] sm:$0xff]
      %v248 = vld [vmem:[%s219 + $0xb0] sm:$0xff]
      %v249 = vld [vmem:[%s219 + $0xb8] sm:$0xff]
      %v250 = vld [vmem:[%s219 + $0xc0] sm:$0xff]
      %v251 = vld [vmem:[%s219 + $0xc8] sm:$0xff]
      %v252 = vld [vmem:[%s219 + $0xd0] sm:$0xff]
      %v253 = vld [vmem:[%s219 + $0xd8] sm:$0xff]
      %v254 = vld [vmem:[%s219 + $0xe0] sm:$0xff]
      %v255 = vld [vmem:[%s219 + $0xe8] sm:$0xff]
      %v256 = vld [vmem:[%s219 + $0xf0] sm:$0xff]
      %v257 = vld [vmem:[%s219 + $0xf8] sm:$0xff]
      %258 = vst [vmem:[#allocation2] sm:$0xf] 0
      %259 = vst [vmem:[#allocation2 + $0x4] sm:$0xf] 0
      %260 = vst [vmem:[#allocation2 + $0x8] sm:$0x1] 0
      %s261 = scalar_lea.vmem [#allocation2], 204
      %262 = vst [vmem:[%s261] sm:$0xf] 0
      %263 = vst [vmem:[%s261 + $0x4] sm:$0xf] 0
      %264 = vst [vmem:[%s261 + $0x8] sm:$0x1] 0
      %vm265 = vcmask 1040384
      %vm266 = vsmask.f32 256
      %vm267 = vmand %vm265, %vm266
      %v268 = vld [vmem:[#allocation2] sm:$0x1]
      %v269 = vsel %vm267, 0, %v268
      %270 = vst [vmem:[#allocation2] sm:$0x1] %v269
      %v271 = vld [vmem:[#allocation2 + $0xc] sm:$0x1]
      %v272 = vsel %vm267, 0, %v271
      %273 = vst [vmem:[#allocation2 + $0xc] sm:$0x1] %v272
      %v274 = vld [vmem:[#allocation2 + $0x18] sm:$0x1]
      %v275 = vsel %vm267, 0, %v274
      %276 = vst [vmem:[#allocation2 + $0x18] sm:$0x1] %v275
      %v277 = vld [vmem:[#allocation2 + $0x24] sm:$0x1]
      %v278 = vsel %vm267, 0, %v277
      %279 = vst [vmem:[#allocation2 + $0x24] sm:$0x1] %v278
      %v280 = vld [vmem:[#allocation2 + $0x30] sm:$0x1]
      %v281 = vsel %vm267, 0, %v280
      %282 = vst [vmem:[#allocation2 + $0x30] sm:$0x1] %v281
      %v283 = vld [vmem:[#allocation2 + $0x3c] sm:$0x1]
      %v284 = vsel %vm267, 0, %v283
      %285 = vst [vmem:[#allocation2 + $0x3c] sm:$0x1] %v284
      %v286 = vld [vmem:[#allocation2 + $0x48] sm:$0x1]
      %v287 = vsel %vm267, 0, %v286
      %288 = vst [vmem:[#allocation2 + $0x48] sm:$0x1] %v287
      %v289 = vld [vmem:[#allocation2 + $0x54] sm:$0x1]
      %v290 = vsel %vm267, 0, %v289
      %291 = vst [vmem:[#allocation2 + $0x54] sm:$0x1] %v290
      %v292 = vld [vmem:[#allocation2 + $0x60] sm:$0x1]
      %v293 = vsel %vm267, 0, %v292
      %294 = vst [vmem:[#allocation2 + $0x60] sm:$0x1] %v293
      %v295 = vld [vmem:[#allocation2 + $0x6c] sm:$0x1]
      %v296 = vsel %vm267, 0, %v295
      %297 = vst [vmem:[#allocation2 + $0x6c] sm:$0x1] %v296
      %v298 = vld [vmem:[#allocation2 + $0x78] sm:$0x1]
      %v299 = vsel %vm267, 0, %v298
      %300 = vst [vmem:[#allocation2 + $0x78] sm:$0x1] %v299
      %v301 = vld [vmem:[#allocation2 + $0x84] sm:$0x1]
      %v302 = vsel %vm267, 0, %v301
      %303 = vst [vmem:[#allocation2 + $0x84] sm:$0x1] %v302
      %v304 = vld [vmem:[#allocation2 + $0x90] sm:$0x1]
      %v305 = vsel %vm267, 0, %v304
      %306 = vst [vmem:[#allocation2 + $0x90] sm:$0x1] %v305
      %v307 = vld [vmem:[#allocation2 + $0x9c] sm:$0x1]
      %v308 = vsel %vm267, 0, %v307
      %309 = vst [vmem:[#allocation2 + $0x9c] sm:$0x1] %v308
      %v310 = vld [vmem:[#allocation2 + $0xa8] sm:$0x1]
      %v311 = vsel %vm267, 0, %v310
      %312 = vst [vmem:[#allocation2 + $0xa8] sm:$0x1] %v311
      %v313 = vld [vmem:[#allocation2 + $0xb4] sm:$0x1]
      %v314 = vsel %vm267, 0, %v313
      %315 = vst [vmem:[#allocation2 + $0xb4] sm:$0x1] %v314
      %v316 = vld [vmem:[#allocation2 + $0xc0] sm:$0x1]
      %v317 = vsel %vm267, 0, %v316
      %318 = vst [vmem:[#allocation2 + $0xc0] sm:$0x1] %v317
      %v319 = vld [vmem:[#allocation2 + $0xcc] sm:$0x1]
      %v320 = vsel %vm267, 0, %v319
      %321 = vst [vmem:[#allocation2 + $0xcc] sm:$0x1] %v320
      %vm322 = vsmask.f32 7938
      %vm323 = vmand %vm265, %vm322
      %v324 = vld [vmem:[#allocation2 + $0x8] sm:$0x1]
      %v325 = vsel %vm323, 0, %v324
      %326 = vst [vmem:[#allocation2 + $0x8] sm:$0x1] %v325
      %v327 = vld [vmem:[#allocation2 + $0x14] sm:$0x1]
      %v328 = vsel %vm323, 0, %v327
      %329 = vst [vmem:[#allocation2 + $0x14] sm:$0x1] %v328
      %v330 = vld [vmem:[#allocation2 + $0x20] sm:$0x1]
      %v331 = vsel %vm323, 0, %v330
      %332 = vst [vmem:[#allocation2 + $0x20] sm:$0x1] %v331
      %v333 = vld [vmem:[#allocation2 + $0x2c] sm:$0x1]
      %v334 = vsel %vm323, 0, %v333
      %335 = vst [vmem:[#allocation2 + $0x2c] sm:$0x1] %v334
      %v336 = vld [vmem:[#allocation2 + $0x38] sm:$0x1]
      %v337 = vsel %vm323, 0, %v336
      %338 = vst [vmem:[#allocation2 + $0x38] sm:$0x1] %v337
      %v339 = vld [vmem:[#allocation2 + $0x44] sm:$0x1]
      %v340 = vsel %vm323, 0, %v339
      %341 = vst [vmem:[#allocation2 + $0x44] sm:$0x1] %v340
      %v342 = vld [vmem:[#allocation2 + $0x50] sm:$0x1]
      %v343 = vsel %vm323, 0, %v342
      %344 = vst [vmem:[#allocation2 + $0x50] sm:$0x1] %v343
      %v345 = vld [vmem:[#allocation2 + $0x5c] sm:$0x1]
      %v346 = vsel %vm323, 0, %v345
      %347 = vst [vmem:[#allocation2 + $0x5c] sm:$0x1] %v346
      %v348 = vld [vmem:[#allocation2 + $0x68] sm:$0x1]
      %v349 = vsel %vm323, 0, %v348
      %350 = vst [vmem:[#allocation2 + $0x68] sm:$0x1] %v349
      %v351 = vld [vmem:[#allocation2 + $0x74] sm:$0x1]
      %v352 = vsel %vm323, 0, %v351
      %353 = vst [vmem:[#allocation2 + $0x74] sm:$0x1] %v352
      %v354 = vld [vmem:[#allocation2 + $0x80] sm:$0x1]
      %v355 = vsel %vm323, 0, %v354
      %356 = vst [vmem:[#allocation2 + $0x80] sm:$0x1] %v355
      %v357 = vld [vmem:[#allocation2 + $0x8c] sm:$0x1]
      %v358 = vsel %vm323, 0, %v357
      %359 = vst [vmem:[#allocation2 + $0x8c] sm:$0x1] %v358
      %v360 = vld [vmem:[#allocation2 + $0x98] sm:$0x1]
      %v361 = vsel %vm323, 0, %v360
      %362 = vst [vmem:[#allocation2 + $0x98] sm:$0x1] %v361
      %v363 = vld [vmem:[#allocation2 + $0xa4] sm:$0x1]
      %v364 = vsel %vm323, 0, %v363
      %365 = vst [vmem:[#allocation2 + $0xa4] sm:$0x1] %v364
      %v366 = vld [vmem:[#allocation2 + $0xb0] sm:$0x1]
      %v367 = vsel %vm323, 0, %v366
      %368 = vst [vmem:[#allocation2 + $0xb0] sm:$0x1] %v367
      %v369 = vld [vmem:[#allocation2 + $0xbc] sm:$0x1]
      %v370 = vsel %vm323, 0, %v369
      %371 = vst [vmem:[#allocation2 + $0xbc] sm:$0x1] %v370
      %v372 = vld [vmem:[#allocation2 + $0xc8] sm:$0x1]
      %v373 = vsel %vm323, 0, %v372
      %374 = vst [vmem:[#allocation2 + $0xc8] sm:$0x1] %v373
      %v375 = vld [vmem:[#allocation2 + $0xd4] sm:$0x1]
      %v376 = vsel %vm323, 0, %v375
      %377 = vst [vmem:[#allocation2 + $0xd4] sm:$0x1] %v376
      %v378 = vpack.c.bf16 %v227, %v226
      %v379 = vpack.c.bf16 %v229, %v228
      %v380 = vpack.c.bf16 %v231, %v230
      %v381 = vpack.c.bf16 %v233, %v232
      %v382 = vpack.c.bf16 %v235, %v234
      %v383 = vpack.c.bf16 %v237, %v236
      %v384 = vpack.c.bf16 %v239, %v238
      %v385 = vpack.c.bf16 %v241, %v240
      %v386 = vpack.c.bf16 %v243, %v242
      %v387 = vpack.c.bf16 %v245, %v244
      %v388 = vpack.c.bf16 %v247, %v246
      %v389 = vpack.c.bf16 %v249, %v248
      %v390 = vpack.c.bf16 %v251, %v250
      %v391 = vpack.c.bf16 %v253, %v252
      %v392 = vpack.c.bf16 %v255, %v254
      %v393 = vpack.c.bf16 %v257, %v256
      %v410 = vunpack.c.l.b16 %v378
      %v411 = vunpack.c.h.b16 %v378
      %v412 = vunpack.c.l.b16 %v379
      %v413 = vunpack.c.h.b16 %v379
      %v414 = vunpack.c.l.b16 %v380
      %v415 = vunpack.c.h.b16 %v380
      %v416 = vunpack.c.l.b16 %v381
      %v417 = vunpack.c.h.b16 %v381
      %v418 = vunpack.c.l.b16 %v382
      %v419 = vunpack.c.h.b16 %v382
      %v420 = vunpack.c.l.b16 %v383
      %v421 = vunpack.c.h.b16 %v383
      %v422 = vunpack.c.l.b16 %v384
      %v423 = vunpack.c.h.b16 %v384
      %v424 = vunpack.c.l.b16 %v385
      %v425 = vunpack.c.h.b16 %v385
      %v426 = vunpack.c.l.b16 %v386
      %v427 = vunpack.c.h.b16 %v386
      %v428 = vunpack.c.l.b16 %v387
      %v429 = vunpack.c.h.b16 %v387
      %v430 = vunpack.c.l.b16 %v388
      %v431 = vunpack.c.h.b16 %v388
      %v432 = vunpack.c.l.b16 %v389
      %v433 = vunpack.c.h.b16 %v389
      %v434 = vunpack.c.l.b16 %v390
      %v435 = vunpack.c.h.b16 %v390
      %v436 = vunpack.c.l.b16 %v391
      %v437 = vunpack.c.h.b16 %v391
      %v438 = vunpack.c.l.b16 %v392
      %v439 = vunpack.c.h.b16 %v392
      %v440 = vunpack.c.l.b16 %v393
      %v441 = vunpack.c.h.b16 %v393
      %v442 = vpack.c.b16 %v410, %v410
      %v443 = vpack.c.b16 %v411, %v411
      %v444 = vpack.c.b16 %v412, %v412
      %v445 = vpack.c.b16 %v413, %v413
      %v446 = vpack.c.b16 %v414, %v414
      %v447 = vpack.c.b16 %v415, %v415
      %v448 = vpack.c.b16 %v416, %v416
      %v449 = vpack.c.b16 %v417, %v417
      %v450 = vpack.c.b16 %v418, %v418
      %v451 = vpack.c.b16 %v419, %v419
      %v452 = vpack.c.b16 %v420, %v420
      %v453 = vpack.c.b16 %v421, %v421
      %v454 = vpack.c.b16 %v422, %v422
      %v455 = vpack.c.b16 %v423, %v423
      %v456 = vpack.c.b16 %v424, %v424
      %v457 = vpack.c.b16 %v425, %v425
      %v458 = vpack.c.b16 %v426, %v426
      %v459 = vpack.c.b16 %v427, %v427
      %v460 = vpack.c.b16 %v428, %v428
      %v461 = vpack.c.b16 %v429, %v429
      %v462 = vpack.c.b16 %v430, %v430
      %v463 = vpack.c.b16 %v431, %v431
      %v464 = vpack.c.b16 %v432, %v432
      %v465 = vpack.c.b16 %v433, %v433
      %v466 = vpack.c.b16 %v434, %v434
      %v467 = vpack.c.b16 %v435, %v435
      %v468 = vpack.c.b16 %v436, %v436
      %v469 = vpack.c.b16 %v437, %v437
      %v470 = vpack.c.b16 %v438, %v438
      %v471 = vpack.c.b16 %v439, %v439
      %v472 = vpack.c.b16 %v440, %v440
      %v473 = vpack.c.b16 %v441, %v441
      %vm474 = vsmask.f32 4368
      %vm475 = vmor %vm266, %vm474
      %v477 = vshrl.u32 %v442, 16
      %v479 = vrot.slane %v477, 7
      %v480 = vshll.u32 %v442, 16
      %v482 = vor.u32 %v479, %v480
      %v483 = vrot.slane %v479, 4
      %v485 = vshrl.u32 %v443, 16
      %v487 = vrot.slane %v485, 7
      %v488 = vshll.u32 %v443, 16
      %v490 = vor.u32 %v487, %v488
      %v491 = vsel %vm475, %v483, %v490
      %v492 = vrot.slane %v487, 4
      %v494 = vshrl.u32 %v444, 16
      %v496 = vrot.slane %v494, 7
      %v497 = vshll.u32 %v444, 16
      %v499 = vor.u32 %v496, %v497
      %v500 = vrot.slane %v496, 4
      %v502 = vshrl.u32 %v445, 16
      %v504 = vrot.slane %v502, 7
      %v505 = vshll.u32 %v445, 16
      %v507 = vor.u32 %v504, %v505
      %v508 = vsel %vm475, %v500, %v507
      %v509 = vrot.slane %v504, 4
      %v511 = vshrl.u32 %v446, 16
      %v513 = vrot.slane %v511, 7
      %v514 = vshll.u32 %v446, 16
      %v516 = vor.u32 %v513, %v514
      %v517 = vrot.slane %v513, 4
      %v519 = vshrl.u32 %v447, 16
      %v521 = vrot.slane %v519, 7
      %v522 = vshll.u32 %v447, 16
      %v524 = vor.u32 %v521, %v522
      %v525 = vsel %vm475, %v517, %v524
      %v526 = vrot.slane %v521, 4
      %v528 = vshrl.u32 %v448, 16
      %v530 = vrot.slane %v528, 7
      %v531 = vshll.u32 %v448, 16
      %v533 = vor.u32 %v530, %v531
      %v534 = vrot.slane %v530, 4
      %v536 = vshrl.u32 %v449, 16
      %v538 = vrot.slane %v536, 7
      %v539 = vshll.u32 %v449, 16
      %v541 = vor.u32 %v538, %v539
      %v542 = vsel %vm475, %v534, %v541
      %v543 = vrot.slane %v538, 4
      %v545 = vshrl.u32 %v450, 16
      %v547 = vrot.slane %v545, 7
      %v548 = vshll.u32 %v450, 16
      %v550 = vor.u32 %v547, %v548
      %v551 = vrot.slane %v547, 4
      %v553 = vshrl.u32 %v451, 16
      %v555 = vrot.slane %v553, 7
      %v556 = vshll.u32 %v451, 16
      %v558 = vor.u32 %v555, %v556
      %v559 = vsel %vm475, %v551, %v558
      %v560 = vrot.slane %v555, 4
      %v562 = vshrl.u32 %v452, 16
      %v564 = vrot.slane %v562, 7
      %v565 = vshll.u32 %v452, 16
      %v567 = vor.u32 %v564, %v565
      %v568 = vrot.slane %v564, 4
      %v570 = vshrl.u32 %v453, 16
      %v572 = vrot.slane %v570, 7
      %v573 = vshll.u32 %v453, 16
      %v575 = vor.u32 %v572, %v573
      %v576 = vsel %vm475, %v568, %v575
      %v577 = vrot.slane %v572, 4
      %v579 = vshrl.u32 %v454, 16
      %v581 = vrot.slane %v579, 7
      %v582 = vshll.u32 %v454, 16
      %v584 = vor.u32 %v581, %v582
      %v585 = vrot.slane %v581, 4
      %v587 = vshrl.u32 %v455, 16
      %v589 = vrot.slane %v587, 7
      %v590 = vshll.u32 %v455, 16
      %v592 = vor.u32 %v589, %v590
      %v593 = vsel %vm475, %v585, %v592
      %v594 = vrot.slane %v589, 4
      %v596 = vshrl.u32 %v456, 16
      %v598 = vrot.slane %v596, 7
      %v599 = vshll.u32 %v456, 16
      %v601 = vor.u32 %v598, %v599
      %v602 = vrot.slane %v598, 4
      %v604 = vshrl.u32 %v457, 16
      %v606 = vrot.slane %v604, 7
      %v607 = vshll.u32 %v457, 16
      %v609 = vor.u32 %v606, %v607
      %v610 = vsel %vm475, %v602, %v609
      %v611 = vrot.slane %v606, 4
      %v613 = vshrl.u32 %v458, 16
      %v615 = vrot.slane %v613, 7
      %v616 = vshll.u32 %v458, 16
      %v618 = vor.u32 %v615, %v616
      %v619 = vrot.slane %v615, 4
      %v621 = vshrl.u32 %v459, 16
      %v623 = vrot.slane %v621, 7
      %v624 = vshll.u32 %v459, 16
      %v626 = vor.u32 %v623, %v624
      %v627 = vsel %vm475, %v619, %v626
      %v628 = vrot.slane %v623, 4
      %v630 = vshrl.u32 %v460, 16
      %v632 = vrot.slane %v630, 7
      %v633 = vshll.u32 %v460, 16
      %v635 = vor.u32 %v632, %v633
      %v636 = vrot.slane %v632, 4
      %v638 = vshrl.u32 %v461, 16
      %v640 = vrot.slane %v638, 7
      %v641 = vshll.u32 %v461, 16
      %v643 = vor.u32 %v640, %v641
      %v644 = vsel %vm475, %v636, %v643
      %v645 = vrot.slane %v640, 4
      %v647 = vshrl.u32 %v462, 16
      %v649 = vrot.slane %v647, 7
      %v650 = vshll.u32 %v462, 16
      %v652 = vor.u32 %v649, %v650
      %v653 = vrot.slane %v649, 4
      %v655 = vshrl.u32 %v463, 16
      %v657 = vrot.slane %v655, 7
      %v658 = vshll.u32 %v463, 16
      %v660 = vor.u32 %v657, %v658
      %v661 = vsel %vm475, %v653, %v660
      %v662 = vrot.slane %v657, 4
      %v664 = vshrl.u32 %v464, 16
      %v666 = vrot.slane %v664, 7
      %v667 = vshll.u32 %v464, 16
      %v669 = vor.u32 %v666, %v667
      %v670 = vrot.slane %v666, 4
      %v672 = vshrl.u32 %v465, 16
      %v674 = vrot.slane %v672, 7
      %v675 = vshll.u32 %v465, 16
      %v677 = vor.u32 %v674, %v675
      %v678 = vsel %vm475, %v670, %v677
      %v679 = vrot.slane %v674, 4
      %v681 = vshrl.u32 %v466, 16
      %v683 = vrot.slane %v681, 7
      %v684 = vshll.u32 %v466, 16
      %v686 = vor.u32 %v683, %v684
      %v687 = vrot.slane %v683, 4
      %v689 = vshrl.u32 %v467, 16
      %v691 = vrot.slane %v689, 7
      %v692 = vshll.u32 %v467, 16
      %v694 = vor.u32 %v691, %v692
      %v695 = vsel %vm475, %v687, %v694
      %v696 = vrot.slane %v691, 4
      %v698 = vshrl.u32 %v468, 16
      %v700 = vrot.slane %v698, 7
      %v701 = vshll.u32 %v468, 16
      %v703 = vor.u32 %v700, %v701
      %v704 = vrot.slane %v700, 4
      %v706 = vshrl.u32 %v469, 16
      %v708 = vrot.slane %v706, 7
      %v709 = vshll.u32 %v469, 16
      %v711 = vor.u32 %v708, %v709
      %v712 = vsel %vm475, %v704, %v711
      %v713 = vrot.slane %v708, 4
      %v715 = vshrl.u32 %v470, 16
      %v717 = vrot.slane %v715, 7
      %v718 = vshll.u32 %v470, 16
      %v720 = vor.u32 %v717, %v718
      %v721 = vrot.slane %v717, 4
      %v723 = vshrl.u32 %v471, 16
      %v725 = vrot.slane %v723, 7
      %v726 = vshll.u32 %v471, 16
      %v728 = vor.u32 %v725, %v726
      %v729 = vsel %vm475, %v721, %v728
      %v730 = vrot.slane %v725, 4
      %v732 = vshrl.u32 %v472, 16
      %v734 = vrot.slane %v732, 7
      %v735 = vshll.u32 %v472, 16
      %v737 = vor.u32 %v734, %v735
      %v738 = vrot.slane %v734, 4
      %v740 = vshrl.u32 %v473, 16
      %v742 = vrot.slane %v740, 7
      %v743 = vshll.u32 %v473, 16
      %v745 = vor.u32 %v742, %v743
      %v746 = vsel %vm475, %v738, %v745
      %v747 = vrot.slane %v742, 4
      %s796 = scalar_lea.vmem [#allocation2], 12
      %vm797 = vcmask 1043456
      %vm798 = vmand %vm797, %vm322
      %v799 = vld [vmem:[%s796] sm:$0xf]
      %v800 = vsel %vm798, %v482, %v799
      %801 = vst [vmem:[%s796] sm:$0xf] %v800
      %802 = vst [vmem:[%s796 + $0x4] sm:$0xf] %v491
      %v803 = vld [vmem:[%s796 + $0x8] sm:$0x1]
      %v804 = vsel %vm267, %v492, %v803
      %805 = vst [vmem:[%s796 + $0x8] sm:$0x1] %v804
      %v806 = vld [vmem:[%s796 + $0xc] sm:$0xf]
      %v807 = vsel %vm798, %v499, %v806
      %808 = vst [vmem:[%s796 + $0xc] sm:$0xf] %v807
      %809 = vst [vmem:[%s796 + $0x10] sm:$0xf] %v508
      %v810 = vld [vmem:[%s796 + $0x14] sm:$0x1]
      %v811 = vsel %vm267, %v509, %v810
      %812 = vst [vmem:[%s796 + $0x14] sm:$0x1] %v811
      %v813 = vld [vmem:[%s796 + $0x18] sm:$0xf]
      %v814 = vsel %vm798, %v516, %v813
      %815 = vst [vmem:[%s796 + $0x18] sm:$0xf] %v814
      %816 = vst [vmem:[%s796 + $0x1c] sm:$0xf] %v525
      %v817 = vld [vmem:[%s796 + $0x20] sm:$0x1]
      %v818 = vsel %vm267, %v526, %v817
      %819 = vst [vmem:[%s796 + $0x20] sm:$0x1] %v818
      %v820 = vld [vmem:[%s796 + $0x24] sm:$0xf]
      %v821 = vsel %vm798, %v533, %v820
      %822 = vst [vmem:[%s796 + $0x24] sm:$0xf] %v821
      %823 = vst [vmem:[%s796 + $0x28] sm:$0xf] %v542
      %v824 = vld [vmem:[%s796 + $0x2c] sm:$0x1]
      %v825 = vsel %vm267, %v543, %v824
      %826 = vst [vmem:[%s796 + $0x2c] sm:$0x1] %v825
      %v827 = vld [vmem:[%s796 + $0x30] sm:$0xf]
      %v828 = vsel %vm798, %v550, %v827
      %829 = vst [vmem:[%s796 + $0x30] sm:$0xf] %v828
      %830 = vst [vmem:[%s796 + $0x34] sm:$0xf] %v559
      %v831 = vld [vmem:[%s796 + $0x38] sm:$0x1]
      %v832 = vsel %vm267, %v560, %v831
      %833 = vst [vmem:[%s796 + $0x38] sm:$0x1] %v832
      %v834 = vld [vmem:[%s796 + $0x3c] sm:$0xf]
      %v835 = vsel %vm798, %v567, %v834
      %836 = vst [vmem:[%s796 + $0x3c] sm:$0xf] %v835
      %837 = vst [vmem:[%s796 + $0x40] sm:$0xf] %v576
      %v838 = vld [vmem:[%s796 + $0x44] sm:$0x1]
      %v839 = vsel %vm267, %v577, %v838
      %840 = vst [vmem:[%s796 + $0x44] sm:$0x1] %v839
      %v841 = vld [vmem:[%s796 + $0x48] sm:$0xf]
      %v842 = vsel %vm798, %v584, %v841
      %843 = vst [vmem:[%s796 + $0x48] sm:$0xf] %v842
      %844 = vst [vmem:[%s796 + $0x4c] sm:$0xf] %v593
      %v845 = vld [vmem:[%s796 + $0x50] sm:$0x1]
      %v846 = vsel %vm267, %v594, %v845
      %847 = vst [vmem:[%s796 + $0x50] sm:$0x1] %v846
      %v848 = vld [vmem:[%s796 + $0x54] sm:$0xf]
      %v849 = vsel %vm798, %v601, %v848
      %850 = vst [vmem:[%s796 + $0x54] sm:$0xf] %v849
      %851 = vst [vmem:[%s796 + $0x58] sm:$0xf] %v610
      %v852 = vld [vmem:[%s796 + $0x5c] sm:$0x1]
      %v853 = vsel %vm267, %v611, %v852
      %854 = vst [vmem:[%s796 + $0x5c] sm:$0x1] %v853
      %v855 = vld [vmem:[%s796 + $0x60] sm:$0xf]
      %v856 = vsel %vm798, %v618, %v855
      %857 = vst [vmem:[%s796 + $0x60] sm:$0xf] %v856
      %858 = vst [vmem:[%s796 + $0x64] sm:$0xf] %v627
      %v859 = vld [vmem:[%s796 + $0x68] sm:$0x1]
      %v860 = vsel %vm267, %v628, %v859
      %861 = vst [vmem:[%s796 + $0x68] sm:$0x1] %v860
      %v862 = vld [vmem:[%s796 + $0x6c] sm:$0xf]
      %v863 = vsel %vm798, %v635, %v862
      %864 = vst [vmem:[%s796 + $0x6c] sm:$0xf] %v863
      %865 = vst [vmem:[%s796 + $0x70] sm:$0xf] %v644
      %v866 = vld [vmem:[%s796 + $0x74] sm:$0x1]
      %v867 = vsel %vm267, %v645, %v866
      %868 = vst [vmem:[%s796 + $0x74] sm:$0x1] %v867
      %v869 = vld [vmem:[%s796 + $0x78] sm:$0xf]
      %v870 = vsel %vm798, %v652, %v869
      %871 = vst [vmem:[%s796 + $0x78] sm:$0xf] %v870
      %872 = vst [vmem:[%s796 + $0x7c] sm:$0xf] %v661
      %v873 = vld [vmem:[%s796 + $0x80] sm:$0x1]
      %v874 = vsel %vm267, %v662, %v873
      %875 = vst [vmem:[%s796 + $0x80] sm:$0x1] %v874
      %v876 = vld [vmem:[%s796 + $0x84] sm:$0xf]
      %v877 = vsel %vm798, %v669, %v876
      %878 = vst [vmem:[%s796 + $0x84] sm:$0xf] %v877
      %879 = vst [vmem:[%s796 + $0x88] sm:$0xf] %v678
      %v880 = vld [vmem:[%s796 + $0x8c] sm:$0x1]
      %v881 = vsel %vm267, %v679, %v880
      %882 = vst [vmem:[%s796 + $0x8c] sm:$0x1] %v881
      %v883 = vld [vmem:[%s796 + $0x90] sm:$0xf]
      %v884 = vsel %vm798, %v686, %v883
      %885 = vst [vmem:[%s796 + $0x90] sm:$0xf] %v884
      %886 = vst [vmem:[%s796 + $0x94] sm:$0xf] %v695
      %v887 = vld [vmem:[%s796 + $0x98] sm:$0x1]
      %v888 = vsel %vm267, %v696, %v887
      %889 = vst [vmem:[%s796 + $0x98] sm:$0x1] %v888
      %v890 = vld [vmem:[%s796 + $0x9c] sm:$0xf]
      %v891 = vsel %vm798, %v703, %v890
      %892 = vst [vmem:[%s796 + $0x9c] sm:$0xf] %v891
      %893 = vst [vmem:[%s796 + $0xa0] sm:$0xf] %v712
      %v894 = vld [vmem:[%s796 + $0xa4] sm:$0x1]
      %v895 = vsel %vm267, %v713, %v894
      %896 = vst [vmem:[%s796 + $0xa4] sm:$0x1] %v895
      %v897 = vld [vmem:[%s796 + $0xa8] sm:$0xf]
      %v898 = vsel %vm798, %v720, %v897
      %899 = vst [vmem:[%s796 + $0xa8] sm:$0xf] %v898
      %900 = vst [vmem:[%s796 + $0xac] sm:$0xf] %v729
      %v901 = vld [vmem:[%s796 + $0xb0] sm:$0x1]
      %v902 = vsel %vm267, %v730, %v901
      %903 = vst [vmem:[%s796 + $0xb0] sm:$0x1] %v902
      %v904 = vld [vmem:[%s796 + $0xb4] sm:$0xf]
      %v905 = vsel %vm798, %v737, %v904
      %906 = vst [vmem:[%s796 + $0xb4] sm:$0xf] %v905
      %907 = vst [vmem:[%s796 + $0xb8] sm:$0xf] %v746
      %v908 = vld [vmem:[%s796 + $0xbc] sm:$0x1]
      %v909 = vsel %vm267, %v747, %v908
      %910 = vst [vmem:[%s796 + $0xbc] sm:$0x1] %v909
      %v911 = vld [vmem:[#allocation2] sm:$0xf]
      %v912 = vld [vmem:[#allocation2 + $0x4] sm:$0xf]
      %v913 = vld [vmem:[#allocation2 + $0xc] sm:$0xf]
      %v914 = vld [vmem:[#allocation2 + $0x10] sm:$0xf]
      %v915 = vld [vmem:[#allocation2 + $0x18] sm:$0xf]
      %v916 = vld [vmem:[#allocation2 + $0x1c] sm:$0xf]
      %v917 = vld [vmem:[#allocation2 + $0x24] sm:$0xf]
      %v918 = vld [vmem:[#allocation2 + $0x28] sm:$0xf]
      %v919 = vld [vmem:[#allocation2 + $0x30] sm:$0xf]
      %v920 = vld [vmem:[#allocation2 + $0x34] sm:$0xf]
      %v921 = vld [vmem:[#allocation2 + $0x3c] sm:$0xf]
      %v922 = vld [vmem:[#allocation2 + $0x40] sm:$0xf]
      %v923 = vld [vmem:[#allocation2 + $0x48] sm:$0xf]
      %v924 = vld [vmem:[#allocation2 + $0x4c] sm:$0xf]
      %v925 = vld [vmem:[#allocation2 + $0x54] sm:$0xf]
      %v926 = vld [vmem:[#allocation2 + $0x58] sm:$0xf]
      %v927 = vld [vmem:[#allocation2 + $0x60] sm:$0xf]
      %v928 = vld [vmem:[#allocation2 + $0x64] sm:$0xf]
      %v929 = vld [vmem:[#allocation2 + $0x6c] sm:$0xf]
      %v930 = vld [vmem:[#allocation2 + $0x70] sm:$0xf]
      %v931 = vld [vmem:[#allocation2 + $0x78] sm:$0xf]
      %v932 = vld [vmem:[#allocation2 + $0x7c] sm:$0xf]
      %v933 = vld [vmem:[#allocation2 + $0x84] sm:$0xf]
      %v934 = vld [vmem:[#allocation2 + $0x88] sm:$0xf]
      %v935 = vld [vmem:[#allocation2 + $0x90] sm:$0xf]
      %v936 = vld [vmem:[#allocation2 + $0x94] sm:$0xf]
      %v937 = vld [vmem:[#allocation2 + $0x9c] sm:$0xf]
      %v938 = vld [vmem:[#allocation2 + $0xa0] sm:$0xf]
      %v939 = vld [vmem:[#allocation2 + $0xa8] sm:$0xf]
      %v940 = vld [vmem:[#allocation2 + $0xac] sm:$0xf]
      %v941 = vld [vmem:[#allocation2 + $0xb4] sm:$0xf]
      %v942 = vld [vmem:[#allocation2 + $0xb8] sm:$0xf]
      %v943 = vld [vmem:[%s1] sm:$0xf]
      %v944 = vld [vmem:[%s1 + $0x4] sm:$0xf]
      %v945 = vld [vmem:[%s1 + $0x8] sm:$0xf]
      %v946 = vld [vmem:[%s1 + $0xc] sm:$0xf]
      %v947 = vld [vmem:[%s1 + $0x10] sm:$0xf]
      %v948 = vld [vmem:[%s1 + $0x14] sm:$0xf]
      %v949 = vld [vmem:[%s1 + $0x18] sm:$0xf]
      %v950 = vld [vmem:[%s1 + $0x1c] sm:$0xf]
      %v951 = vld [vmem:[%s1 + $0x20] sm:$0xf]
      %v952 = vld [vmem:[%s1 + $0x24] sm:$0xf]
      %v953 = vld [vmem:[%s1 + $0x28] sm:$0xf]
      %v954 = vld [vmem:[%s1 + $0x2c] sm:$0xf]
      %v955 = vld [vmem:[%s1 + $0x30] sm:$0xf]
      %v956 = vld [vmem:[%s1 + $0x34] sm:$0xf]
      %v957 = vld [vmem:[%s1 + $0x38] sm:$0xf]
      %v958 = vld [vmem:[%s1 + $0x3c] sm:$0xf]
      %v959 = vld [vmem:[#allocation2 + $0x8] sm:$0x1]
      %v960 = vld [vmem:[#allocation2 + $0x14] sm:$0x1]
      %v961 = vld [vmem:[#allocation2 + $0x20] sm:$0x1]
      %v962 = vld [vmem:[#allocation2 + $0x2c] sm:$0x1]
      %v963 = vld [vmem:[#allocation2 + $0x38] sm:$0x1]
      %v964 = vld [vmem:[#allocation2 + $0x44] sm:$0x1]
      %v965 = vld [vmem:[#allocation2 + $0x50] sm:$0x1]
      %v966 = vld [vmem:[#allocation2 + $0x5c] sm:$0x1]
      %v967 = vld [vmem:[#allocation2 + $0x68] sm:$0x1]
      %v968 = vld [vmem:[#allocation2 + $0x74] sm:$0x1]
      %v969 = vld [vmem:[#allocation2 + $0x80] sm:$0x1]
      %v970 = vld [vmem:[#allocation2 + $0x8c] sm:$0x1]
      %v971 = vld [vmem:[#allocation2 + $0x98] sm:$0x1]
      %v972 = vld [vmem:[#allocation2 + $0xa4] sm:$0x1]
      %v973 = vld [vmem:[#allocation2 + $0xb0] sm:$0x1]
      %v974 = vld [vmem:[#allocation2 + $0xbc] sm:$0x1]
      %vm975 = vsmask.f32 3328
      %vm976 = vsmask.f32 7440
      %vm977 = vmor %vm975, %vm976
      %v979 = vshrl.u32 %v911, 16
      %v981 = vrot.slane %v979, 4
      %v982 = vshll.u32 %v911, 16
      %v984 = vrot.slane %v982, 5
      %v985 = vor.u32 %v981, %v984
      %v986 = vrot.slane %v985, 4
      %v988 = vshll.u32 %v912, 16
      %v990 = vrot.slane %v988, 5
      %v991 = vsel %vm977, %v986, %v990
      %v992 = vshrl.u32 %v912, 16
      %v994 = vrot.slane %v992, 4
      %v995 = vor.u32 %v994, %v990
      %v996 = vrot.slane %v995, 4
      %v998 = vshll.u32 %v959, 16
      %v1000 = vrot.slane %v998, 5
      %v1001 = vsel %vm977, %v996, %v1000
      %v1003 = vshrl.u32 %v913, 16
      %v1005 = vrot.slane %v1003, 4
      %v1006 = vshll.u32 %v913, 16
      %v1008 = vrot.slane %v1006, 5
      %v1009 = vor.u32 %v1005, %v1008
      %v1010 = vrot.slane %v1009, 4
      %v1012 = vshll.u32 %v914, 16
      %v1014 = vrot.slane %v1012, 5
      %v1015 = vsel %vm977, %v1010, %v1014
      %v1016 = vshrl.u32 %v914, 16
      %v1018 = vrot.slane %v1016, 4
      %v1019 = vor.u32 %v1018, %v1014
      %v1020 = vrot.slane %v1019, 4
      %v1022 = vshll.u32 %v960, 16
      %v1024 = vrot.slane %v1022, 5
      %v1025 = vsel %vm977, %v1020, %v1024
      %v1027 = vshrl.u32 %v915, 16
      %v1029 = vrot.slane %v1027, 4
      %v1030 = vshll.u32 %v915, 16
      %v1032 = vrot.slane %v1030, 5
      %v1033 = vor.u32 %v1029, %v1032
      %v1034 = vrot.slane %v1033, 4
      %v1036 = vshll.u32 %v916, 16
      %v1038 = vrot.slane %v1036, 5
      %v1039 = vsel %vm977, %v1034, %v1038
      %v1040 = vshrl.u32 %v916, 16
      %v1042 = vrot.slane %v1040, 4
      %v1043 = vor.u32 %v1042, %v1038
      %v1044 = vrot.slane %v1043, 4
      %v1046 = vshll.u32 %v961, 16
      %v1048 = vrot.slane %v1046, 5
      %v1049 = vsel %vm977, %v1044, %v1048
      %v1051 = vshrl.u32 %v917, 16
      %v1053 = vrot.slane %v1051, 4
      %v1054 = vshll.u32 %v917, 16
      %v1056 = vrot.slane %v1054, 5
      %v1057 = vor.u32 %v1053, %v1056
      %v1058 = vrot.slane %v1057, 4
      %v1060 = vshll.u32 %v918, 16
      %v1062 = vrot.slane %v1060, 5
      %v1063 = vsel %vm977, %v1058, %v1062
      %v1064 = vshrl.u32 %v918, 16
      %v1066 = vrot.slane %v1064, 4
      %v1067 = vor.u32 %v1066, %v1062
      %v1068 = vrot.slane %v1067, 4
      %v1070 = vshll.u32 %v962, 16
      %v1072 = vrot.slane %v1070, 5
      %v1073 = vsel %vm977, %v1068, %v1072
      %v1075 = vshrl.u32 %v919, 16
      %v1077 = vrot.slane %v1075, 4
      %v1078 = vshll.u32 %v919, 16
      %v1080 = vrot.slane %v1078, 5
      %v1081 = vor.u32 %v1077, %v1080
      %v1082 = vrot.slane %v1081, 4
      %v1084 = vshll.u32 %v920, 16
      %v1086 = vrot.slane %v1084, 5
      %v1087 = vsel %vm977, %v1082, %v1086
      %v1088 = vshrl.u32 %v920, 16
      %v1090 = vrot.slane %v1088, 4
      %v1091 = vor.u32 %v1090, %v1086
      %v1092 = vrot.slane %v1091, 4
      %v1094 = vshll.u32 %v963, 16
      %v1096 = vrot.slane %v1094, 5
      %v1097 = vsel %vm977, %v1092, %v1096
      %v1099 = vshrl.u32 %v921, 16
      %v1101 = vrot.slane %v1099, 4
      %v1102 = vshll.u32 %v921, 16
      %v1104 = vrot.slane %v1102, 5
      %v1105 = vor.u32 %v1101, %v1104
      %v1106 = vrot.slane %v1105, 4
      %v1108 = vshll.u32 %v922, 16
      %v1110 = vrot.slane %v1108, 5
      %v1111 = vsel %vm977, %v1106, %v1110
      %v1112 = vshrl.u32 %v922, 16
      %v1114 = vrot.slane %v1112, 4
      %v1115 = vor.u32 %v1114, %v1110
      %v1116 = vrot.slane %v1115, 4
      %v1118 = vshll.u32 %v964, 16
      %v1120 = vrot.slane %v1118, 5
      %v1121 = vsel %vm977, %v1116, %v1120
      %v1123 = vshrl.u32 %v923, 16
      %v1125 = vrot.slane %v1123, 4
      %v1126 = vshll.u32 %v923, 16
      %v1128 = vrot.slane %v1126, 5
      %v1129 = vor.u32 %v1125, %v1128
      %v1130 = vrot.slane %v1129, 4
      %v1132 = vshll.u32 %v924, 16
      %v1134 = vrot.slane %v1132, 5
      %v1135 = vsel %vm977, %v1130, %v1134
      %v1136 = vshrl.u32 %v924, 16
      %v1138 = vrot.slane %v1136, 4
      %v1139 = vor.u32 %v1138, %v1134
      %v1140 = vrot.slane %v1139, 4
      %v1142 = vshll.u32 %v965, 16
      %v1144 = vrot.slane %v1142, 5
      %v1145 = vsel %vm977, %v1140, %v1144
      %v1147 = vshrl.u32 %v925, 16
      %v1149 = vrot.slane %v1147, 4
      %v1150 = vshll.u32 %v925, 16
      %v1152 = vrot.slane %v1150, 5
      %v1153 = vor.u32 %v1149, %v1152
      %v1154 = vrot.slane %v1153, 4
      %v1156 = vshll.u32 %v926, 16
      %v1158 = vrot.slane %v1156, 5
      %v1159 = vsel %vm977, %v1154, %v1158
      %v1160 = vshrl.u32 %v926, 16
      %v1162 = vrot.slane %v1160, 4
      %v1163 = vor.u32 %v1162, %v1158
      %v1164 = vrot.slane %v1163, 4
      %v1166 = vshll.u32 %v966, 16
      %v1168 = vrot.slane %v1166, 5
      %v1169 = vsel %vm977, %v1164, %v1168
      %v1171 = vshrl.u32 %v927, 16
      %v1173 = vrot.slane %v1171, 4
      %v1174 = vshll.u32 %v927, 16
      %v1176 = vrot.slane %v1174, 5
      %v1177 = vor.u32 %v1173, %v1176
      %v1178 = vrot.slane %v1177, 4
      %v1180 = vshll.u32 %v928, 16
      %v1182 = vrot.slane %v1180, 5
      %v1183 = vsel %vm977, %v1178, %v1182
      %v1184 = vshrl.u32 %v928, 16
      %v1186 = vrot.slane %v1184, 4
      %v1187 = vor.u32 %v1186, %v1182
      %v1188 = vrot.slane %v1187, 4
      %v1190 = vshll.u32 %v967, 16
      %v1192 = vrot.slane %v1190, 5
      %v1193 = vsel %vm977, %v1188, %v1192
      %v1195 = vshrl.u32 %v929, 16
      %v1197 = vrot.slane %v1195, 4
      %v1198 = vshll.u32 %v929, 16
      %v1200 = vrot.slane %v1198, 5
      %v1201 = vor.u32 %v1197, %v1200
      %v1202 = vrot.slane %v1201, 4
      %v1204 = vshll.u32 %v930, 16
      %v1206 = vrot.slane %v1204, 5
      %v1207 = vsel %vm977, %v1202, %v1206
      %v1208 = vshrl.u32 %v930, 16
      %v1210 = vrot.slane %v1208, 4
      %v1211 = vor.u32 %v1210, %v1206
      %v1212 = vrot.slane %v1211, 4
      %v1214 = vshll.u32 %v968, 16
      %v1216 = vrot.slane %v1214, 5
      %v1217 = vsel %vm977, %v1212, %v1216
      %v1219 = vshrl.u32 %v931, 16
      %v1221 = vrot.slane %v1219, 4
      %v1222 = vshll.u32 %v931, 16
      %v1224 = vrot.slane %v1222, 5
      %v1225 = vor.u32 %v1221, %v1224
      %v1226 = vrot.slane %v1225, 4
      %v1228 = vshll.u32 %v932, 16
      %v1230 = vrot.slane %v1228, 5
      %v1231 = vsel %vm977, %v1226, %v1230
      %v1232 = vshrl.u32 %v932, 16
      %v1234 = vrot.slane %v1232, 4
      %v1235 = vor.u32 %v1234, %v1230
      %v1236 = vrot.slane %v1235, 4
      %v1238 = vshll.u32 %v969, 16
      %v1240 = vrot.slane %v1238, 5
      %v1241 = vsel %vm977, %v1236, %v1240
      %v1243 = vshrl.u32 %v933, 16
      %v1245 = vrot.slane %v1243, 4
      %v1246 = vshll.u32 %v933, 16
      %v1248 = vrot.slane %v1246, 5
      %v1249 = vor.u32 %v1245, %v1248
      %v1250 = vrot.slane %v1249, 4
      %v1252 = vshll.u32 %v934, 16
      %v1254 = vrot.slane %v1252, 5
      %v1255 = vsel %vm977, %v1250, %v1254
      %v1256 = vshrl.u32 %v934, 16
      %v1258 = vrot.slane %v1256, 4
      %v1259 = vor.u32 %v1258, %v1254
      %v1260 = vrot.slane %v1259, 4
      %v1262 = vshll.u32 %v970, 16
      %v1264 = vrot.slane %v1262, 5
      %v1265 = vsel %vm977, %v1260, %v1264
      %v1267 = vshrl.u32 %v935, 16
      %v1269 = vrot.slane %v1267, 4
      %v1270 = vshll.u32 %v935, 16
      %v1272 = vrot.slane %v1270, 5
      %v1273 = vor.u32 %v1269, %v1272
      %v1274 = vrot.slane %v1273, 4
      %v1276 = vshll.u32 %v936, 16
      %v1278 = vrot.slane %v1276, 5
      %v1279 = vsel %vm977, %v1274, %v1278
      %v1280 = vshrl.u32 %v936, 16
      %v1282 = vrot.slane %v1280, 4
      %v1283 = vor.u32 %v1282, %v1278
      %v1284 = vrot.slane %v1283, 4
      %v1286 = vshll.u32 %v971, 16
      %v1288 = vrot.slane %v1286, 5
      %v1289 = vsel %vm977, %v1284, %v1288
      %v1291 = vshrl.u32 %v937, 16
      %v1293 = vrot.slane %v1291, 4
      %v1294 = vshll.u32 %v937, 16
      %v1296 = vrot.slane %v1294, 5
      %v1297 = vor.u32 %v1293, %v1296
      %v1298 = vrot.slane %v1297, 4
      %v1300 = vshll.u32 %v938, 16
      %v1302 = vrot.slane %v1300, 5
      %v1303 = vsel %vm977, %v1298, %v1302
      %v1304 = vshrl.u32 %v938, 16
      %v1306 = vrot.slane %v1304, 4
      %v1307 = vor.u32 %v1306, %v1302
      %v1308 = vrot.slane %v1307, 4
      %v1310 = vshll.u32 %v972, 16
      %v1312 = vrot.slane %v1310, 5
      %v1313 = vsel %vm977, %v1308, %v1312
      %v1315 = vshrl.u32 %v939, 16
      %v1317 = vrot.slane %v1315, 4
      %v1318 = vshll.u32 %v939, 16
      %v1320 = vrot.slane %v1318, 5
      %v1321 = vor.u32 %v1317, %v1320
      %v1322 = vrot.slane %v1321, 4
      %v1324 = vshll.u32 %v940, 16
      %v1326 = vrot.slane %v1324, 5
      %v1327 = vsel %vm977, %v1322, %v1326
      %v1328 = vshrl.u32 %v940, 16
      %v1330 = vrot.slane %v1328, 4
      %v1331 = vor.u32 %v1330, %v1326
      %v1332 = vrot.slane %v1331, 4
      %v1334 = vshll.u32 %v973, 16
      %v1336 = vrot.slane %v1334, 5
      %v1337 = vsel %vm977, %v1332, %v1336
      %v1339 = vshrl.u32 %v941, 16
      %v1341 = vrot.slane %v1339, 4
      %v1342 = vshll.u32 %v941, 16
      %v1344 = vrot.slane %v1342, 5
      %v1345 = vor.u32 %v1341, %v1344
      %v1346 = vrot.slane %v1345, 4
      %v1348 = vshll.u32 %v942, 16
      %v1350 = vrot.slane %v1348, 5
      %v1351 = vsel %vm977, %v1346, %v1350
      %v1352 = vshrl.u32 %v942, 16
      %v1354 = vrot.slane %v1352, 4
      %v1355 = vor.u32 %v1354, %v1350
      %v1356 = vrot.slane %v1355, 4
      %v1358 = vshll.u32 %v974, 16
      %v1360 = vrot.slane %v1358, 5
      %v1361 = vsel %vm977, %v1356, %v1360
      %s1362 = scalar_lea.vmem %s1, 64
      %v1363 = vld [vmem:[%s1362] sm:$0xf]
      %v1364 = vld [vmem:[%s1362 + $0x4] sm:$0xf]
      %v1365 = vld [vmem:[%s1362 + $0x8] sm:$0xf]
      %v1366 = vld [vmem:[%s1362 + $0xc] sm:$0xf]
      %v1367 = vld [vmem:[%s1362 + $0x10] sm:$0xf]
      %v1368 = vld [vmem:[%s1362 + $0x14] sm:$0xf]
      %v1369 = vld [vmem:[%s1362 + $0x18] sm:$0xf]
      %v1370 = vld [vmem:[%s1362 + $0x1c] sm:$0xf]
      %v1371 = vld [vmem:[%s1362 + $0x20] sm:$0xf]
      %v1372 = vld [vmem:[%s1362 + $0x24] sm:$0xf]
      %v1373 = vld [vmem:[%s1362 + $0x28] sm:$0xf]
      %v1374 = vld [vmem:[%s1362 + $0x2c] sm:$0xf]
      %v1375 = vld [vmem:[%s1362 + $0x30] sm:$0xf]
      %v1376 = vld [vmem:[%s1362 + $0x34] sm:$0xf]
      %v1377 = vld [vmem:[%s1362 + $0x38] sm:$0xf]
      %v1378 = vld [vmem:[%s1362 + $0x3c] sm:$0xf]
      %v1379 = vunpack.c.l.b16 %v991
      %v1380 = vunpack.c.l.b16 %v1001
      %v1381 = vunpack.c.l.b16 %v1015
      %v1382 = vunpack.c.l.b16 %v1025
      %v1383 = vunpack.c.l.b16 %v1039
      %v1384 = vunpack.c.l.b16 %v1049
      %v1385 = vunpack.c.l.b16 %v1063
      %v1386 = vunpack.c.l.b16 %v1073
      %v1387 = vunpack.c.l.b16 %v1087
      %v1388 = vunpack.c.l.b16 %v1097
      %v1389 = vunpack.c.l.b16 %v1111
      %v1390 = vunpack.c.l.b16 %v1121
      %v1391 = vunpack.c.l.b16 %v1135
      %v1392 = vunpack.c.l.b16 %v1145
      %v1393 = vunpack.c.l.b16 %v1159
      %v1394 = vunpack.c.l.b16 %v1169
      %v1395 = vunpack.c.l.b16 %v1183
      %v1396 = vunpack.c.l.b16 %v1193
      %v1397 = vunpack.c.l.b16 %v1207
      %v1398 = vunpack.c.l.b16 %v1217
      %v1399 = vunpack.c.l.b16 %v1231
      %v1400 = vunpack.c.l.b16 %v1241
      %v1401 = vunpack.c.l.b16 %v1255
      %v1402 = vunpack.c.l.b16 %v1265
      %v1403 = vunpack.c.l.b16 %v1279
      %v1404 = vunpack.c.l.b16 %v1289
      %v1405 = vunpack.c.l.b16 %v1303
      %v1406 = vunpack.c.l.b16 %v1313
      %v1407 = vunpack.c.l.b16 %v1327
      %v1408 = vunpack.c.l.b16 %v1337
      %v1409 = vunpack.c.l.b16 %v1351
      %v1410 = vunpack.c.l.b16 %v1361
      %v1411 = vpack.c.b16 %v1380, %v1379
      %v1412 = vpack.c.b16 %v1382, %v1381
      %v1413 = vpack.c.b16 %v1384, %v1383
      %v1414 = vpack.c.b16 %v1386, %v1385
      %v1415 = vpack.c.b16 %v1388, %v1387
      %v1416 = vpack.c.b16 %v1390, %v1389
      %v1417 = vpack.c.b16 %v1392, %v1391
      %v1418 = vpack.c.b16 %v1394, %v1393
      %v1419 = vpack.c.b16 %v1396, %v1395
      %v1420 = vpack.c.b16 %v1398, %v1397
      %v1421 = vpack.c.b16 %v1400, %v1399
      %v1422 = vpack.c.b16 %v1402, %v1401
      %v1423 = vpack.c.b16 %v1404, %v1403
      %v1424 = vpack.c.b16 %v1406, %v1405
      %v1425 = vpack.c.b16 %v1408, %v1407
      %v1426 = vpack.c.b16 %v1410, %v1409
      %v1459 = vunpack.c.l.b16 %v1363
      %v1460 = vunpack.c.l.b16 %v1364
      %v1461 = vunpack.c.l.b16 %v1365
      %v1462 = vunpack.c.l.b16 %v1366
      %v1463 = vunpack.c.l.b16 %v1367
      %v1464 = vunpack.c.l.b16 %v1368
      %v1465 = vunpack.c.l.b16 %v1369
      %v1466 = vunpack.c.l.b16 %v1370
      %v1467 = vunpack.c.l.b16 %v1371
      %v1468 = vunpack.c.l.b16 %v1372
      %v1469 = vunpack.c.l.b16 %v1373
      %v1470 = vunpack.c.l.b16 %v1374
      %v1471 = vunpack.c.l.b16 %v1375
      %v1472 = vunpack.c.l.b16 %v1376
      %v1473 = vunpack.c.l.b16 %v1377
      %v1474 = vunpack.c.l.b16 %v1378
      %v1475 = vpack.c.b16 %v1460, %v1459
      %v1476 = vpack.c.b16 %v1462, %v1461
      %v1477 = vpack.c.b16 %v1464, %v1463
      %v1478 = vpack.c.b16 %v1466, %v1465
      %v1479 = vpack.c.b16 %v1468, %v1467
      %v1480 = vpack.c.b16 %v1470, %v1469
      %v1481 = vpack.c.b16 %v1472, %v1471
      %v1482 = vpack.c.b16 %v1474, %v1473
      %1491 = vmatprep.subr.bf16.mxu0 0
      %1492 = vmatpush1.bf16.msra.mxu0 %v1475
      %1493 = vmatprep.subr.bf16.mxu0 0
      %1494 = vmatpush1.bf16.msra.mxu0 %v1476
      %1495 = vmatprep.subr.bf16.mxu0 0
      %1496 = vmatpush1.bf16.msra.mxu0 %v1477
      %1497 = vmatprep.subr.bf16.mxu0 0
      %1498 = vmatpush1.bf16.msra.mxu0 %v1478
      %1499 = vmatprep.subr.bf16.mxu0 0
      %1500 = vmatpush1.bf16.msra.mxu0 %v1479
      %1501 = vmatprep.subr.bf16.mxu0 0
      %1502 = vmatpush1.bf16.msra.mxu0 %v1480
      %1503 = vmatprep.subr.bf16.mxu0 0
      %1504 = vmatpush1.bf16.msra.mxu0 %v1481
      %1505 = vmatprep.subr.bf16.mxu0 0
      %1506 = vmatpush1.bf16.msra.mxu0 %v1482
      %1507 = vmatprep.subr.bf16.mxu0 0
      %1508 = vmatpush1.bf16.msra.mxu0 0
      %1509 = vmatprep.subr.bf16.mxu0 0
      %1510 = vmatpush1.bf16.msra.mxu0 0
      %1511 = vmatprep.subr.bf16.mxu0 0
      %1512 = vmatpush1.bf16.msra.mxu0 0
      %1513 = vmatprep.subr.bf16.mxu0 0
      %1514 = vmatpush1.bf16.msra.mxu0 0
      %1515 = vmatprep.subr.bf16.mxu0 0
      %1516 = vmatpush1.bf16.msra.mxu0 0
      %1517 = vmatprep.subr.bf16.mxu0 0
      %1518 = vmatpush1.bf16.msra.mxu0 0
      %1519 = vmatprep.subr.bf16.mxu0 0
      %1520 = vmatpush1.bf16.msra.mxu0 0
      %1521 = vmatprep.subr.bf16.mxu0 0
      %1522 = vmatpush1.bf16.msra.mxu0 0
      %1523 = vmatprep.mubr.bf16.mxu0 0
      %1524 = vmatmul.mubr.bf16.gmra.mrb[0].mxu0 %v1411
      %v1525 = vpop.f32.mrb[0].mxu0
      %v1526 = vadd.f32 0.0, %v1525
      %v1527 = vpop.f32.mrb[0].mxu0
      %v1528 = vpop.f32.mrb[0].mxu0
      %v1529 = vadd.f32 0.0, %v1528
      %v1530 = vpop.f32.mrb[0].mxu0
      %1531 = vmatprep.mubr.bf16.mxu0 0
      %1532 = vmatmul.mubr.bf16.gmra.mrb[0].mxu0 %v1412
      %v1533 = vpop.f32.mrb[0].mxu0
      %v1534 = vadd.f32 0.0, %v1533
      %v1535 = vpop.f32.mrb[0].mxu0
      %v1536 = vpop.f32.mrb[0].mxu0
      %v1537 = vadd.f32 0.0, %v1536
      %v1538 = vpop.f32.mrb[0].mxu0
      %1539 = vmatprep.mubr.bf16.mxu0 0
      %1540 = vmatmul.mubr.bf16.gmra.mrb[0].mxu0 %v1413
      %v1541 = vpop.f32.mrb[0].mxu0
      %v1542 = vadd.f32 0.0, %v1541
      %v1543 = vpop.f32.mrb[0].mxu0
      %v1544 = vpop.f32.mrb[0].mxu0
      %v1545 = vadd.f32 0.0, %v1544
      %v1546 = vpop.f32.mrb[0].mxu0
      %1547 = vmatprep.mubr.bf16.mxu0 0
      %1548 = vmatmul.mubr.bf16.gmra.mrb[0].mxu0 %v1414
      %v1549 = vpop.f32.mrb[0].mxu0
      %v1550 = vadd.f32 0.0, %v1549
      %v1551 = vpop.f32.mrb[0].mxu0
      %v1552 = vpop.f32.mrb[0].mxu0
      %v1553 = vadd.f32 0.0, %v1552
      %v1554 = vpop.f32.mrb[0].mxu0
      %1555 = vmatprep.mubr.bf16.mxu0 0
      %1556 = vmatmul.mubr.bf16.gmra.mrb[0].mxu0 %v1415
      %v1557 = vpop.f32.mrb[0].mxu0
      %v1558 = vadd.f32 0.0, %v1557
      %v1559 = vpop.f32.mrb[0].mxu0
      %v1560 = vpop.f32.mrb[0].mxu0
      %v1561 = vadd.f32 0.0, %v1560
      %v1562 = vpop.f32.mrb[0].mxu0
      %1563 = vmatprep.mubr.bf16.mxu0 0
      %1564 = vmatmul.mubr.bf16.gmra.mrb[0].mxu0 %v1416
      %v1565 = vpop.f32.mrb[0].mxu0
      %v1566 = vadd.f32 0.0, %v1565
      %v1567 = vpop.f32.mrb[0].mxu0
      %v1568 = vpop.f32.mrb[0].mxu0
      %v1569 = vadd.f32 0.0, %v1568
      %v1570 = vpop.f32.mrb[0].mxu0
      %1571 = vmatprep.mubr.bf16.mxu0 0
      %1572 = vmatmul.mubr.bf16.gmra.mrb[0].mxu0 %v1417
      %v1573 = vpop.f32.mrb[0].mxu0
      %v1574 = vadd.f32 0.0, %v1573
      %v1575 = vpop.f32.mrb[0].mxu0
      %v1576 = vpop.f32.mrb[0].mxu0
      %v1577 = vadd.f32 0.0, %v1576
      %v1578 = vpop.f32.mrb[0].mxu0
      %1579 = vmatprep.mubr.bf16.mxu0 0
      %1580 = vmatmul.mubr.bf16.gmra.mrb[0].mxu0 %v1418
      %v1581 = vpop.f32.mrb[0].mxu0
      %v1582 = vadd.f32 0.0, %v1581
      %v1583 = vpop.f32.mrb[0].mxu0
      %v1584 = vpop.f32.mrb[0].mxu0
      %v1585 = vadd.f32 0.0, %v1584
      %v1586 = vpop.f32.mrb[0].mxu0
      %1587 = vmatprep.mubr.bf16.mxu0 0
      %1588 = vmatmul.mubr.bf16.gmra.mrb[0].mxu0 %v1419
      %v1589 = vpop.f32.mrb[0].mxu0
      %v1590 = vadd.f32 0.0, %v1589
      %v1591 = vpop.f32.mrb[0].mxu0
      %v1592 = vpop.f32.mrb[0].mxu0
      %v1593 = vadd.f32 0.0, %v1592
      %v1594 = vpop.f32.mrb[0].mxu0
      %1595 = vmatprep.mubr.bf16.mxu0 0
      %1596 = vmatmul.mubr.bf16.gmra.mrb[0].mxu0 %v1420
      %v1597 = vpop.f32.mrb[0].mxu0
      %v1598 = vadd.f32 0.0, %v1597
      %v1599 = vpop.f32.mrb[0].mxu0
      %v1600 = vpop.f32.mrb[0].mxu0
      %v1601 = vadd.f32 0.0, %v1600
      %v1602 = vpop.f32.mrb[0].mxu0
      %1603 = vmatprep.mubr.bf16.mxu0 0
      %1604 = vmatmul.mubr.bf16.gmra.mrb[0].mxu0 %v1421
      %v1605 = vpop.f32.mrb[0].mxu0
      %v1606 = vadd.f32 0.0, %v1605
      %v1607 = vpop.f32.mrb[0].mxu0
      %v1608 = vpop.f32.mrb[0].mxu0
      %v1609 = vadd.f32 0.0, %v1608
      %v1610 = vpop.f32.mrb[0].mxu0
      %1611 = vmatprep.mubr.bf16.mxu0 0
      %1612 = vmatmul.mubr.bf16.gmra.mrb[0].mxu0 %v1422
      %v1613 = vpop.f32.mrb[0].mxu0
      %v1614 = vadd.f32 0.0, %v1613
      %v1615 = vpop.f32.mrb[0].mxu0
      %v1616 = vpop.f32.mrb[0].mxu0
      %v1617 = vadd.f32 0.0, %v1616
      %v1618 = vpop.f32.mrb[0].mxu0
      %1619 = vmatprep.mubr.bf16.mxu0 0
      %1620 = vmatmul.mubr.bf16.gmra.mrb[0].mxu0 %v1423
      %v1621 = vpop.f32.mrb[0].mxu0
      %v1622 = vadd.f32 0.0, %v1621
      %v1623 = vpop.f32.mrb[0].mxu0
      %v1624 = vpop.f32.mrb[0].mxu0
      %v1625 = vadd.f32 0.0, %v1624
      %v1626 = vpop.f32.mrb[0].mxu0
      %1627 = vmatprep.mubr.bf16.mxu0 0
      %1628 = vmatmul.mubr.bf16.gmra.mrb[0].mxu0 %v1424
      %v1629 = vpop.f32.mrb[0].mxu0
      %v1630 = vadd.f32 0.0, %v1629
      %v1631 = vpop.f32.mrb[0].mxu0
      %v1632 = vpop.f32.mrb[0].mxu0
      %v1633 = vadd.f32 0.0, %v1632
      %v1634 = vpop.f32.mrb[0].mxu0
      %1635 = vmatprep.mubr.bf16.mxu0 0
      %1636 = vmatmul.mubr.bf16.gmra.mrb[0].mxu0 %v1425
      %v1637 = vpop.f32.mrb[0].mxu0
      %v1638 = vadd.f32 0.0, %v1637
      %v1639 = vpop.f32.mrb[0].mxu0
      %v1640 = vpop.f32.mrb[0].mxu0
      %v1641 = vadd.f32 0.0, %v1640
      %v1642 = vpop.f32.mrb[0].mxu0
      %1643 = vmatprep.mubr.bf16.mxu0 0
      %1644 = vmatmul.mubr.bf16.gmra.mrb[0].mxu0 %v1426
      %v1645 = vpop.f32.mrb[0].mxu0
      %v1646 = vadd.f32 0.0, %v1645
      %v1647 = vpop.f32.mrb[0].mxu0
      %v1648 = vpop.f32.mrb[0].mxu0
      %v1649 = vadd.f32 0.0, %v1648
      %v1650 = vpop.f32.mrb[0].mxu0
      %1651 = vdwg.mxu0
      %v1684 = vunpack.c.l.b16 %v911
      %v1685 = vunpack.c.l.b16 %v912
      %v1686 = vunpack.c.l.b16 %v913
      %v1687 = vunpack.c.l.b16 %v914
      %v1688 = vunpack.c.l.b16 %v915
      %v1689 = vunpack.c.l.b16 %v916
      %v1690 = vunpack.c.l.b16 %v917
      %v1691 = vunpack.c.l.b16 %v918
      %v1692 = vunpack.c.l.b16 %v919
      %v1693 = vunpack.c.l.b16 %v920
      %v1694 = vunpack.c.l.b16 %v921
      %v1695 = vunpack.c.l.b16 %v922
      %v1696 = vunpack.c.l.b16 %v923
      %v1697 = vunpack.c.l.b16 %v924
      %v1698 = vunpack.c.l.b16 %v925
      %v1699 = vunpack.c.l.b16 %v926
      %v1700 = vunpack.c.l.b16 %v927
      %v1701 = vunpack.c.l.b16 %v928
      %v1702 = vunpack.c.l.b16 %v929
      %v1703 = vunpack.c.l.b16 %v930
      %v1704 = vunpack.c.l.b16 %v931
      %v1705 = vunpack.c.l.b16 %v932
      %v1706 = vunpack.c.l.b16 %v933
      %v1707 = vunpack.c.l.b16 %v934
      %v1708 = vunpack.c.l.b16 %v935
      %v1709 = vunpack.c.l.b16 %v936
      %v1710 = vunpack.c.l.b16 %v937
      %v1711 = vunpack.c.l.b16 %v938
      %v1712 = vunpack.c.l.b16 %v939
      %v1713 = vunpack.c.l.b16 %v940
      %v1714 = vunpack.c.l.b16 %v941
      %v1715 = vunpack.c.l.b16 %v942
      %v1716 = vpack.c.b16 %v1685, %v1684
      %v1717 = vpack.c.b16 %v1687, %v1686
      %v1718 = vpack.c.b16 %v1689, %v1688
      %v1719 = vpack.c.b16 %v1691, %v1690
      %v1720 = vpack.c.b16 %v1693, %v1692
      %v1721 = vpack.c.b16 %v1695, %v1694
      %v1722 = vpack.c.b16 %v1697, %v1696
      %v1723 = vpack.c.b16 %v1699, %v1698
      %v1724 = vpack.c.b16 %v1701, %v1700
      %v1725 = vpack.c.b16 %v1703, %v1702
      %v1726 = vpack.c.b16 %v1705, %v1704
      %v1727 = vpack.c.b16 %v1707, %v1706
      %v1728 = vpack.c.b16 %v1709, %v1708
      %v1729 = vpack.c.b16 %v1711, %v1710
      %v1730 = vpack.c.b16 %v1713, %v1712
      %v1731 = vpack.c.b16 %v1715, %v1714
      %v1764 = vunpack.c.l.b16 %v943
      %v1765 = vunpack.c.l.b16 %v944
      %v1766 = vunpack.c.l.b16 %v945
      %v1767 = vunpack.c.l.b16 %v946
      %v1768 = vunpack.c.l.b16 %v947
      %v1769 = vunpack.c.l.b16 %v948
      %v1770 = vunpack.c.l.b16 %v949
      %v1771 = vunpack.c.l.b16 %v950
      %v1772 = vunpack.c.l.b16 %v951
      %v1773 = vunpack.c.l.b16 %v952
      %v1774 = vunpack.c.l.b16 %v953
      %v1775 = vunpack.c.l.b16 %v954
      %v1776 = vunpack.c.l.b16 %v955
      %v1777 = vunpack.c.l.b16 %v956
      %v1778 = vunpack.c.l.b16 %v957
      %v1779 = vunpack.c.l.b16 %v958
      %v1780 = vpack.c.b16 %v1765, %v1764
      %v1781 = vpack.c.b16 %v1767, %v1766
      %v1782 = vpack.c.b16 %v1769, %v1768
      %v1783 = vpack.c.b16 %v1771, %v1770
      %v1784 = vpack.c.b16 %v1773, %v1772
      %v1785 = vpack.c.b16 %v1775, %v1774
      %v1786 = vpack.c.b16 %v1777, %v1776
      %v1787 = vpack.c.b16 %v1779, %v1778
      %1796 = vmatprep.subr.bf16.mxu0 0
      %1797 = vmatpush1.bf16.msra.mxu0 %v1780
      %1798 = vmatprep.subr.bf16.mxu0 0
      %1799 = vmatpush1.bf16.msra.mxu0 %v1781
      %1800 = vmatprep.subr.bf16.mxu0 0
      %1801 = vmatpush1.bf16.msra.mxu0 %v1782
      %1802 = vmatprep.subr.bf16.mxu0 0
      %1803 = vmatpush1.bf16.msra.mxu0 %v1783
      %1804 = vmatprep.subr.bf16.mxu0 0
      %1805 = vmatpush1.bf16.msra.mxu0 %v1784
      %1806 = vmatprep.subr.bf16.mxu0 0
      %1807 = vmatpush1.bf16.msra.mxu0 %v1785
      %1808 = vmatprep.subr.bf16.mxu0 0
      %1809 = vmatpush1.bf16.msra.mxu0 %v1786
      %1810 = vmatprep.subr.bf16.mxu0 0
      %1811 = vmatpush1.bf16.msra.mxu0 %v1787
      %1812 = vmatprep.subr.bf16.mxu0 0
      %1813 = vmatpush1.bf16.msra.mxu0 0
      %1814 = vmatprep.subr.bf16.mxu0 0
      %1815 = vmatpush1.bf16.msra.mxu0 0
      %1816 = vmatprep.subr.bf16.mxu0 0
      %1817 = vmatpush1.bf16.msra.mxu0 0
      %1818 = vmatprep.subr.bf16.mxu0 0
      %1819 = vmatpush1.bf16.msra.mxu0 0
      %1820 = vmatprep.subr.bf16.mxu0 0
      %1821 = vmatpush1.bf16.msra.mxu0 0
      %1822 = vmatprep.subr.bf16.mxu0 0
      %1823 = vmatpush1.bf16.msra.mxu0 0
      %1824 = vmatprep.subr.bf16.mxu0 0
      %1825 = vmatpush1.bf16.msra.mxu0 0
      %1826 = vmatprep.subr.bf16.mxu0 0
      %1827 = vmatpush1.bf16.msra.mxu0 0
      %1828 = vmatprep.mubr.bf16.mxu0 0
      %1829 = vmatmul.mubr.bf16.gmra.mrb[0].mxu0 %v1716
      %v1830 = vpop.f32.mrb[0].mxu0
      %v1831 = vadd.f32 %v1526, %v1830
      %v1832 = vpop.f32.mrb[0].mxu0
      %v1833 = vpop.f32.mrb[0].mxu0
      %v1834 = vadd.f32 %v1529, %v1833
      %v1835 = vpop.f32.mrb[0].mxu0
      %1836 = vmatprep.mubr.bf16.mxu0 0
      %1837 = vmatmul.mubr.bf16.gmra.mrb[0].mxu0 %v1717
      %v1838 = vpop.f32.mrb[0].mxu0
      %v1839 = vadd.f32 %v1534, %v1838
      %v1840 = vpop.f32.mrb[0].mxu0
      %v1841 = vpop.f32.mrb[0].mxu0
      %v1842 = vadd.f32 %v1537, %v1841
      %v1843 = vpop.f32.mrb[0].mxu0
      %1844 = vmatprep.mubr.bf16.mxu0 0
      %1845 = vmatmul.mubr.bf16.gmra.mrb[0].mxu0 %v1718
      %v1846 = vpop.f32.mrb[0].mxu0
      %v1847 = vadd.f32 %v1542, %v1846
      %v1848 = vpop.f32.mrb[0].mxu0
      %v1849 = vpop.f32.mrb[0].mxu0
      %v1850 = vadd.f32 %v1545, %v1849
      %v1851 = vpop.f32.mrb[0].mxu0
      %1852 = vmatprep.mubr.bf16.mxu0 0
      %1853 = vmatmul.mubr.bf16.gmra.mrb[0].mxu0 %v1719
      %v1854 = vpop.f32.mrb[0].mxu0
      %v1855 = vadd.f32 %v1550, %v1854
      %v1856 = vpop.f32.mrb[0].mxu0
      %v1857 = vpop.f32.mrb[0].mxu0
      %v1858 = vadd.f32 %v1553, %v1857
      %v1859 = vpop.f32.mrb[0].mxu0
      %1860 = vmatprep.mubr.bf16.mxu0 0
      %1861 = vmatmul.mubr.bf16.gmra.mrb[0].mxu0 %v1720
      %v1862 = vpop.f32.mrb[0].mxu0
      %v1863 = vadd.f32 %v1558, %v1862
      %v1864 = vpop.f32.mrb[0].mxu0
      %v1865 = vpop.f32.mrb[0].mxu0
      %v1866 = vadd.f32 %v1561, %v1865
      %v1867 = vpop.f32.mrb[0].mxu0
      %1868 = vmatprep.mubr.bf16.mxu0 0
      %1869 = vmatmul.mubr.bf16.gmra.mrb[0].mxu0 %v1721
      %v1870 = vpop.f32.mrb[0].mxu0
      %v1871 = vadd.f32 %v1566, %v1870
      %v1872 = vpop.f32.mrb[0].mxu0
      %v1873 = vpop.f32.mrb[0].mxu0
      %v1874 = vadd.f32 %v1569, %v1873
      %v1875 = vpop.f32.mrb[0].mxu0
      %1876 = vmatprep.mubr.bf16.mxu0 0
      %1877 = vmatmul.mubr.bf16.gmra.mrb[0].mxu0 %v1722
      %v1878 = vpop.f32.mrb[0].mxu0
      %v1879 = vadd.f32 %v1574, %v1878
      %v1880 = vpop.f32.mrb[0].mxu0
      %v1881 = vpop.f32.mrb[0].mxu0
      %v1882 = vadd.f32 %v1577, %v1881
      %v1883 = vpop.f32.mrb[0].mxu0
      %1884 = vmatprep.mubr.bf16.mxu0 0
      %1885 = vmatmul.mubr.bf16.gmra.mrb[0].mxu0 %v1723
      %v1886 = vpop.f32.mrb[0].mxu0
      %v1887 = vadd.f32 %v1582, %v1886
      %v1888 = vpop.f32.mrb[0].mxu0
      %v1889 = vpop.f32.mrb[0].mxu0
      %v1890 = vadd.f32 %v1585, %v1889
      %v1891 = vpop.f32.mrb[0].mxu0
      %1892 = vmatprep.mubr.bf16.mxu0 0
      %1893 = vmatmul.mubr.bf16.gmra.mrb[0].mxu0 %v1724
      %v1894 = vpop.f32.mrb[0].mxu0
      %v1895 = vadd.f32 %v1590, %v1894
      %v1896 = vpop.f32.mrb[0].mxu0
      %v1897 = vpop.f32.mrb[0].mxu0
      %v1898 = vadd.f32 %v1593, %v1897
      %v1899 = vpop.f32.mrb[0].mxu0
      %1900 = vmatprep.mubr.bf16.mxu0 0
      %1901 = vmatmul.mubr.bf16.gmra.mrb[0].mxu0 %v1725
      %v1902 = vpop.f32.mrb[0].mxu0
      %v1903 = vadd.f32 %v1598, %v1902
      %v1904 = vpop.f32.mrb[0].mxu0
      %v1905 = vpop.f32.mrb[0].mxu0
      %v1906 = vadd.f32 %v1601, %v1905
      %v1907 = vpop.f32.mrb[0].mxu0
      %1908 = vmatprep.mubr.bf16.mxu0 0
      %1909 = vmatmul.mubr.bf16.gmra.mrb[0].mxu0 %v1726
      %v1910 = vpop.f32.mrb[0].mxu0
      %v1911 = vadd.f32 %v1606, %v1910
      %v1912 = vpop.f32.mrb[0].mxu0
      %v1913 = vpop.f32.mrb[0].mxu0
      %v1914 = vadd.f32 %v1609, %v1913
      %v1915 = vpop.f32.mrb[0].mxu0
      %1916 = vmatprep.mubr.bf16.mxu0 0
      %1917 = vmatmul.mubr.bf16.gmra.mrb[0].mxu0 %v1727
      %v1918 = vpop.f32.mrb[0].mxu0
      %v1919 = vadd.f32 %v1614, %v1918
      %v1920 = vpop.f32.mrb[0].mxu0
      %v1921 = vpop.f32.mrb[0].mxu0
      %v1922 = vadd.f32 %v1617, %v1921
      %v1923 = vpop.f32.mrb[0].mxu0
      %1924 = vmatprep.mubr.bf16.mxu0 0
      %1925 = vmatmul.mubr.bf16.gmra.mrb[0].mxu0 %v1728
      %v1926 = vpop.f32.mrb[0].mxu0
      %v1927 = vadd.f32 %v1622, %v1926
      %v1928 = vpop.f32.mrb[0].mxu0
      %v1929 = vpop.f32.mrb[0].mxu0
      %v1930 = vadd.f32 %v1625, %v1929
      %v1931 = vpop.f32.mrb[0].mxu0
      %1932 = vmatprep.mubr.bf16.mxu0 0
      %1933 = vmatmul.mubr.bf16.gmra.mrb[0].mxu0 %v1729
      %v1934 = vpop.f32.mrb[0].mxu0
      %v1935 = vadd.f32 %v1630, %v1934
      %v1936 = vpop.f32.mrb[0].mxu0
      %v1937 = vpop.f32.mrb[0].mxu0
      %v1938 = vadd.f32 %v1633, %v1937
      %v1939 = vpop.f32.mrb[0].mxu0
      %1940 = vmatprep.mubr.bf16.mxu0 0
      %1941 = vmatmul.mubr.bf16.gmra.mrb[0].mxu0 %v1730
      %v1942 = vpop.f32.mrb[0].mxu0
      %v1943 = vadd.f32 %v1638, %v1942
      %v1944 = vpop.f32.mrb[0].mxu0
      %v1945 = vpop.f32.mrb[0].mxu0
      %v1946 = vadd.f32 %v1641, %v1945
      %v1947 = vpop.f32.mrb[0].mxu0
      %1948 = vmatprep.mubr.bf16.mxu0 0
      %1949 = vmatmul.mubr.bf16.gmra.mrb[0].mxu0 %v1731
      %v1950 = vpop.f32.mrb[0].mxu0
      %v1951 = vadd.f32 %v1646, %v1950
      %v1952 = vpop.f32.mrb[0].mxu0
      %v1953 = vpop.f32.mrb[0].mxu0
      %v1954 = vadd.f32 %v1649, %v1953
      %v1955 = vpop.f32.mrb[0].mxu0
      %1956 = vdwg.mxu0
      %v1957 = vld [vmem:[#allocation2] sm:$0xe]
      %v1958 = vld [vmem:[#allocation2 + $0xc] sm:$0xe]
      %v1959 = vld [vmem:[#allocation2 + $0x18] sm:$0xe]
      %v1960 = vld [vmem:[#allocation2 + $0x24] sm:$0xe]
      %v1961 = vld [vmem:[#allocation2 + $0x30] sm:$0xe]
      %v1962 = vld [vmem:[#allocation2 + $0x3c] sm:$0xe]
      %v1963 = vld [vmem:[#allocation2 + $0x48] sm:$0xe]
      %v1964 = vld [vmem:[#allocation2 + $0x54] sm:$0xe]
      %v1965 = vld [vmem:[#allocation2 + $0x60] sm:$0xe]
      %v1966 = vld [vmem:[#allocation2 + $0x6c] sm:$0xe]
      %v1967 = vld [vmem:[#allocation2 + $0x78] sm:$0xe]
      %v1968 = vld [vmem:[#allocation2 + $0x84] sm:$0xe]
      %v1969 = vld [vmem:[#allocation2 + $0x90] sm:$0xe]
      %v1970 = vld [vmem:[#allocation2 + $0x9c] sm:$0xe]
      %v1971 = vld [vmem:[#allocation2 + $0xa8] sm:$0xe]
      %v1972 = vld [vmem:[#allocation2 + $0xb4] sm:$0xe]
      %vm2005 = vcmask 1042432
      %vm2006 = vcmask 1046532
      %vm2007 = vmor %vm2005, %vm2006
      %v2008 = vrot.slane %v1957, 5
      %v2009 = vrot.slane %v2008, 4
      %v2010 = vrot.slane %v912, 5
      %v2011 = vsel %vm2007, %v2009, %v2010
      %v2012 = vrot.slane %v2010, 4
      %v2013 = vrot.slane %v959, 5
      %v2014 = vsel %vm2007, %v2012, %v2013
      %v2015 = vrot.slane %v1958, 5
      %v2016 = vrot.slane %v2015, 4
      %v2017 = vrot.slane %v914, 5
      %v2018 = vsel %vm2007, %v2016, %v2017
      %v2019 = vrot.slane %v2017, 4
      %v2020 = vrot.slane %v960, 5
      %v2021 = vsel %vm2007, %v2019, %v2020
      %v2022 = vrot.slane %v1959, 5
      %v2023 = vrot.slane %v2022, 4
      %v2024 = vrot.slane %v916, 5
      %v2025 = vsel %vm2007, %v2023, %v2024
      %v2026 = vrot.slane %v2024, 4
      %v2027 = vrot.slane %v961, 5
      %v2028 = vsel %vm2007, %v2026, %v2027
      %v2029 = vrot.slane %v1960, 5
      %v2030 = vrot.slane %v2029, 4
      %v2031 = vrot.slane %v918, 5
      %v2032 = vsel %vm2007, %v2030, %v2031
      %v2033 = vrot.slane %v2031, 4
      %v2034 = vrot.slane %v962, 5
      %v2035 = vsel %vm2007, %v2033, %v2034
      %v2036 = vrot.slane %v1961, 5
      %v2037 = vrot.slane %v2036, 4
      %v2038 = vrot.slane %v920, 5
      %v2039 = vsel %vm2007, %v2037, %v2038
      %v2040 = vrot.slane %v2038, 4
      %v2041 = vrot.slane %v963, 5
      %v2042 = vsel %vm2007, %v2040, %v2041
      %v2043 = vrot.slane %v1962, 5
      %v2044 = vrot.slane %v2043, 4
      %v2045 = vrot.slane %v922, 5
      %v2046 = vsel %vm2007, %v2044, %v2045
      %v2047 = vrot.slane %v2045, 4
      %v2048 = vrot.slane %v964, 5
      %v2049 = vsel %vm2007, %v2047, %v2048
      %v2050 = vrot.slane %v1963, 5
      %v2051 = vrot.slane %v2050, 4
      %v2052 = vrot.slane %v924, 5
      %v2053 = vsel %vm2007, %v2051, %v2052
      %v2054 = vrot.slane %v2052, 4
      %v2055 = vrot.slane %v965, 5
      %v2056 = vsel %vm2007, %v2054, %v2055
      %v2057 = vrot.slane %v1964, 5
      %v2058 = vrot.slane %v2057, 4
      %v2059 = vrot.slane %v926, 5
      %v2060 = vsel %vm2007, %v2058, %v2059
      %v2061 = vrot.slane %v2059, 4
      %v2062 = vrot.slane %v966, 5
      %v2063 = vsel %vm2007, %v2061, %v2062
      %v2064 = vrot.slane %v1965, 5
      %v2065 = vrot.slane %v2064, 4
      %v2066 = vrot.slane %v928, 5
      %v2067 = vsel %vm2007, %v2065, %v2066
      %v2068 = vrot.slane %v2066, 4
      %v2069 = vrot.slane %v967, 5
      %v2070 = vsel %vm2007, %v2068, %v2069
      %v2071 = vrot.slane %v1966, 5
      %v2072 = vrot.slane %v2071, 4
      %v2073 = vrot.slane %v930, 5
      %v2074 = vsel %vm2007, %v2072, %v2073
      %v2075 = vrot.slane %v2073, 4
      %v2076 = vrot.slane %v968, 5
      %v2077 = vsel %vm2007, %v2075, %v2076
      %v2078 = vrot.slane %v1967, 5
      %v2079 = vrot.slane %v2078, 4
      %v2080 = vrot.slane %v932, 5
      %v2081 = vsel %vm2007, %v2079, %v2080
      %v2082 = vrot.slane %v2080, 4
      %v2083 = vrot.slane %v969, 5
      %v2084 = vsel %vm2007, %v2082, %v2083
      %v2085 = vrot.slane %v1968, 5
      %v2086 = vrot.slane %v2085, 4
      %v2087 = vrot.slane %v934, 5
      %v2088 = vsel %vm2007, %v2086, %v2087
      %v2089 = vrot.slane %v2087, 4
      %v2090 = vrot.slane %v970, 5
      %v2091 = vsel %vm2007, %v2089, %v2090
      %v2092 = vrot.slane %v1969, 5
      %v2093 = vrot.slane %v2092, 4
      %v2094 = vrot.slane %v936, 5
      %v2095 = vsel %vm2007, %v2093, %v2094
      %v2096 = vrot.slane %v2094, 4
      %v2097 = vrot.slane %v971, 5
      %v2098 = vsel %vm2007, %v2096, %v2097
      %v2099 = vrot.slane %v1970, 5
      %v2100 = vrot.slane %v2099, 4
      %v2101 = vrot.slane %v938, 5
      %v2102 = vsel %vm2007, %v2100, %v2101
      %v2103 = vrot.slane %v2101, 4
      %v2104 = vrot.slane %v972, 5
      %v2105 = vsel %vm2007, %v2103, %v2104
      %v2106 = vrot.slane %v1971, 5
      %v2107 = vrot.slane %v2106, 4
      %v2108 = vrot.slane %v940, 5
      %v2109 = vsel %vm2007, %v2107, %v2108
      %v2110 = vrot.slane %v2108, 4
      %v2111 = vrot.slane %v973, 5
      %v2112 = vsel %vm2007, %v2110, %v2111
      %v2113 = vrot.slane %v1972, 5
      %v2114 = vrot.slane %v2113, 4
      %v2115 = vrot.slane %v942, 5
      %v2116 = vsel %vm2007, %v2114, %v2115
      %v2117 = vrot.slane %v2115, 4
      %v2118 = vrot.slane %v974, 5
      %v2119 = vsel %vm2007, %v2117, %v2118
      %s2120 = scalar_lea.vmem %s1, 128
      %v2121 = vld [vmem:[%s2120] sm:$0xf]
      %v2122 = vld [vmem:[%s2120 + $0x4] sm:$0xf]
      %v2123 = vld [vmem:[%s2120 + $0x8] sm:$0xf]
      %v2124 = vld [vmem:[%s2120 + $0xc] sm:$0xf]
      %v2125 = vld [vmem:[%s2120 + $0x10] sm:$0xf]
      %v2126 = vld [vmem:[%s2120 + $0x14] sm:$0xf]
      %v2127 = vld [vmem:[%s2120 + $0x18] sm:$0xf]
      %v2128 = vld [vmem:[%s2120 + $0x1c] sm:$0xf]
      %v2129 = vld [vmem:[%s2120 + $0x20] sm:$0xf]
      %v2130 = vld [vmem:[%s2120 + $0x24] sm:$0xf]
      %v2131 = vld [vmem:[%s2120 + $0x28] sm:$0xf]
      %v2132 = vld [vmem:[%s2120 + $0x2c] sm:$0xf]
      %v2133 = vld [vmem:[%s2120 + $0x30] sm:$0xf]
      %v2134 = vld [vmem:[%s2120 + $0x34] sm:$0xf]
      %v2135 = vld [vmem:[%s2120 + $0x38] sm:$0xf]
      %v2136 = vld [vmem:[%s2120 + $0x3c] sm:$0xf]
      %v2137 = vunpack.c.l.b16 %v2011
      %v2138 = vunpack.c.l.b16 %v2014
      %v2139 = vunpack.c.l.b16 %v2018
      %v2140 = vunpack.c.l.b16 %v2021
      %v2141 = vunpack.c.l.b16 %v2025
      %v2142 = vunpack.c.l.b16 %v2028
      %v2143 = vunpack.c.l.b16 %v2032
      %v2144 = vunpack.c.l.b16 %v2035
      %v2145 = vunpack.c.l.b16 %v2039
      %v2146 = vunpack.c.l.b16 %v2042
      %v2147 = vunpack.c.l.b16 %v2046
      %v2148 = vunpack.c.l.b16 %v2049
      %v2149 = vunpack.c.l.b16 %v2053
      %v2150 = vunpack.c.l.b16 %v2056
      %v2151 = vunpack.c.l.b16 %v2060
      %v2152 = vunpack.c.l.b16 %v2063
      %v2153 = vunpack.c.l.b16 %v2067
      %v2154 = vunpack.c.l.b16 %v2070
      %v2155 = vunpack.c.l.b16 %v2074
      %v2156 = vunpack.c.l.b16 %v2077
      %v2157 = vunpack.c.l.b16 %v2081
      %v2158 = vunpack.c.l.b16 %v2084
      %v2159 = vunpack.c.l.b16 %v2088
      %v2160 = vunpack.c.l.b16 %v2091
      %v2161 = vunpack.c.l.b16 %v2095
      %v2162 = vunpack.c.l.b16 %v2098
      %v2163 = vunpack.c.l.b16 %v2102
      %v2164 = vunpack.c.l.b16 %v2105
      %v2165 = vunpack.c.l.b16 %v2109
      %v2166 = vunpack.c.l.b16 %v2112
      %v2167 = vunpack.c.l.b16 %v2116
      %v2168 = vunpack.c.l.b16 %v2119
      %v2169 = vpack.c.b16 %v2138, %v2137
      %v2170 = vpack.c.b16 %v2140, %v2139
      %v2171 = vpack.c.b16 %v2142, %v2141
      %v2172 = vpack.c.b16 %v2144, %v2143
      %v2173 = vpack.c.b16 %v2146, %v2145
      %v2174 = vpack.c.b16 %v2148, %v2147
      %v2175 = vpack.c.b16 %v2150, %v2149
      %v2176 = vpack.c.b16 %v2152, %v2151
      %v2177 = vpack.c.b16 %v2154, %v2153
      %v2178 = vpack.c.b16 %v2156, %v2155
      %v2179 = vpack.c.b16 %v2158, %v2157
      %v2180 = vpack.c.b16 %v2160, %v2159
      %v2181 = vpack.c.b16 %v2162, %v2161
      %v2182 = vpack.c.b16 %v2164, %v2163
      %v2183 = vpack.c.b16 %v2166, %v2165
      %v2184 = vpack.c.b16 %v2168, %v2167
      %v2217 = vunpack.c.l.b16 %v2121
      %v2218 = vunpack.c.l.b16 %v2122
      %v2219 = vunpack.c.l.b16 %v2123
      %v2220 = vunpack.c.l.b16 %v2124
      %v2221 = vunpack.c.l.b16 %v2125
      %v2222 = vunpack.c.l.b16 %v2126
      %v2223 = vunpack.c.l.b16 %v2127
      %v2224 = vunpack.c.l.b16 %v2128
      %v2225 = vunpack.c.l.b16 %v2129
      %v2226 = vunpack.c.l.b16 %v2130
      %v2227 = vunpack.c.l.b16 %v2131
      %v2228 = vunpack.c.l.b16 %v2132
      %v2229 = vunpack.c.l.b16 %v2133
      %v2230 = vunpack.c.l.b16 %v2134
      %v2231 = vunpack.c.l.b16 %v2135
      %v2232 = vunpack.c.l.b16 %v2136
      %v2233 = vpack.c.b16 %v2218, %v2217
      %v2234 = vpack.c.b16 %v2220, %v2219
      %v2235 = vpack.c.b16 %v2222, %v2221
      %v2236 = vpack.c.b16 %v2224, %v2223
      %v2237 = vpack.c.b16 %v2226, %v2225
      %v2238 = vpack.c.b16 %v2228, %v2227
      %v2239 = vpack.c.b16 %v2230, %v2229
      %v2240 = vpack.c.b16 %v2232, %v2231
      %2249 = vmatprep.subr.bf16.mxu0 0
      %2250 = vmatpush1.bf16.msra.mxu0 %v2233
      %2251 = vmatprep.subr.bf16.mxu0 0
      %2252 = vmatpush1.bf16.msra.mxu0 %v2234
      %2253 = vmatprep.subr.bf16.mxu0 0
      %2254 = vmatpush1.bf16.msra.mxu0 %v2235
      %2255 = vmatprep.subr.bf16.mxu0 0
      %2256 = vmatpush1.bf16.msra.mxu0 %v2236
      %2257 = vmatprep.subr.bf16.mxu0 0
      %2258 = vmatpush1.bf16.msra.mxu0 %v2237
      %2259 = vmatprep.subr.bf16.mxu0 0
      %2260 = vmatpush1.bf16.msra.mxu0 %v2238
      %2261 = vmatprep.subr.bf16.mxu0 0
      %2262 = vmatpush1.bf16.msra.mxu0 %v2239
      %2263 = vmatprep.subr.bf16.mxu0 0
      %2264 = vmatpush1.bf16.msra.mxu0 %v2240
      %2265 = vmatprep.subr.bf16.mxu0 0
      %2266 = vmatpush1.bf16.msra.mxu0 0
      %2267 = vmatprep.subr.bf16.mxu0 0
      %2268 = vmatpush1.bf16.msra.mxu0 0
      %2269 = vmatprep.subr.bf16.mxu0 0
      %2270 = vmatpush1.bf16.msra.mxu0 0
      %2271 = vmatprep.subr.bf16.mxu0 0
      %2272 = vmatpush1.bf16.msra.mxu0 0
      %2273 = vmatprep.subr.bf16.mxu0 0
      %2274 = vmatpush1.bf16.msra.mxu0 0
      %2275 = vmatprep.subr.bf16.mxu0 0
      %2276 = vmatpush1.bf16.msra.mxu0 0
      %2277 = vmatprep.subr.bf16.mxu0 0
      %2278 = vmatpush1.bf16.msra.mxu0 0
      %2279 = vmatprep.subr.bf16.mxu0 0
      %2280 = vmatpush1.bf16.msra.mxu0 0
      %2281 = vmatprep.mubr.bf16.mxu0 0
      %2282 = vmatmul.mubr.bf16.gmra.mrb[0].mxu0 %v2169
      %v2283 = vpop.f32.mrb[0].mxu0
      %v2284 = vadd.f32 0.0, %v2283
      %v2285 = vpop.f32.mrb[0].mxu0
      %v2286 = vpop.f32.mrb[0].mxu0
      %v2287 = vadd.f32 0.0, %v2286
      %v2288 = vpop.f32.mrb[0].mxu0
      %2289 = vmatprep.mubr.bf16.mxu0 0
      %2290 = vmatmul.mubr.bf16.gmra.mrb[0].mxu0 %v2170
      %v2291 = vpop.f32.mrb[0].mxu0
      %v2292 = vadd.f32 0.0, %v2291
      %v2293 = vpop.f32.mrb[0].mxu0
      %v2294 = vpop.f32.mrb[0].mxu0
      %v2295 = vadd.f32 0.0, %v2294
      %v2296 = vpop.f32.mrb[0].mxu0
      %2297 = vmatprep.mubr.bf16.mxu0 0
      %2298 = vmatmul.mubr.bf16.gmra.mrb[0].mxu0 %v2171
      %v2299 = vpop.f32.mrb[0].mxu0
      %v2300 = vadd.f32 0.0, %v2299
      %v2301 = vpop.f32.mrb[0].mxu0
      %v2302 = vpop.f32.mrb[0].mxu0
      %v2303 = vadd.f32 0.0, %v2302
      %v2304 = vpop.f32.mrb[0].mxu0
      %2305 = vmatprep.mubr.bf16.mxu0 0
      %2306 = vmatmul.mubr.bf16.gmra.mrb[0].mxu0 %v2172
      %v2307 = vpop.f32.mrb[0].mxu0
      %v2308 = vadd.f32 0.0, %v2307
      %v2309 = vpop.f32.mrb[0].mxu0
      %v2310 = vpop.f32.mrb[0].mxu0
      %v2311 = vadd.f32 0.0, %v2310
      %v2312 = vpop.f32.mrb[0].mxu0
      %2313 = vmatprep.mubr.bf16.mxu0 0
      %2314 = vmatmul.mubr.bf16.gmra.mrb[0].mxu0 %v2173
      %v2315 = vpop.f32.mrb[0].mxu0
      %v2316 = vadd.f32 0.0, %v2315
      %v2317 = vpop.f32.mrb[0].mxu0
      %v2318 = vpop.f32.mrb[0].mxu0
      %v2319 = vadd.f32 0.0, %v2318
      %v2320 = vpop.f32.mrb[0].mxu0
      %2321 = vmatprep.mubr.bf16.mxu0 0
      %2322 = vmatmul.mubr.bf16.gmra.mrb[0].mxu0 %v2174
      %v2323 = vpop.f32.mrb[0].mxu0
      %v2324 = vadd.f32 0.0, %v2323
      %v2325 = vpop.f32.mrb[0].mxu0
      %v2326 = vpop.f32.mrb[0].mxu0
      %v2327 = vadd.f32 0.0, %v2326
      %v2328 = vpop.f32.mrb[0].mxu0
      %2329 = vmatprep.mubr.bf16.mxu0 0
      %2330 = vmatmul.mubr.bf16.gmra.mrb[0].mxu0 %v2175
      %v2331 = vpop.f32.mrb[0].mxu0
      %v2332 = vadd.f32 0.0, %v2331
      %v2333 = vpop.f32.mrb[0].mxu0
      %v2334 = vpop.f32.mrb[0].mxu0
      %v2335 = vadd.f32 0.0, %v2334
      %v2336 = vpop.f32.mrb[0].mxu0
      %2337 = vmatprep.mubr.bf16.mxu0 0
      %2338 = vmatmul.mubr.bf16.gmra.mrb[0].mxu0 %v2176
      %v2339 = vpop.f32.mrb[0].mxu0
      %v2340 = vadd.f32 0.0, %v2339
      %v2341 = vpop.f32.mrb[0].mxu0
      %v2342 = vpop.f32.mrb[0].mxu0
      %v2343 = vadd.f32 0.0, %v2342
      %v2344 = vpop.f32.mrb[0].mxu0
      %2345 = vmatprep.mubr.bf16.mxu0 0
      %2346 = vmatmul.mubr.bf16.gmra.mrb[0].mxu0 %v2177
      %v2347 = vpop.f32.mrb[0].mxu0
      %v2348 = vadd.f32 0.0, %v2347
      %v2349 = vpop.f32.mrb[0].mxu0
      %v2350 = vpop.f32.mrb[0].mxu0
      %v2351 = vadd.f32 0.0, %v2350
      %v2352 = vpop.f32.mrb[0].mxu0
      %2353 = vmatprep.mubr.bf16.mxu0 0
      %2354 = vmatmul.mubr.bf16.gmra.mrb[0].mxu0 %v2178
      %v2355 = vpop.f32.mrb[0].mxu0
      %v2356 = vadd.f32 0.0, %v2355
      %v2357 = vpop.f32.mrb[0].mxu0
      %v2358 = vpop.f32.mrb[0].mxu0
      %v2359 = vadd.f32 0.0, %v2358
      %v2360 = vpop.f32.mrb[0].mxu0
      %2361 = vmatprep.mubr.bf16.mxu0 0
      %2362 = vmatmul.mubr.bf16.gmra.mrb[0].mxu0 %v2179
      %v2363 = vpop.f32.mrb[0].mxu0
      %v2364 = vadd.f32 0.0, %v2363
      %v2365 = vpop.f32.mrb[0].mxu0
      %v2366 = vpop.f32.mrb[0].mxu0
      %v2367 = vadd.f32 0.0, %v2366
      %v2368 = vpop.f32.mrb[0].mxu0
      %2369 = vmatprep.mubr.bf16.mxu0 0
      %2370 = vmatmul.mubr.bf16.gmra.mrb[0].mxu0 %v2180
      %v2371 = vpop.f32.mrb[0].mxu0
      %v2372 = vadd.f32 0.0, %v2371
      %v2373 = vpop.f32.mrb[0].mxu0
      %v2374 = vpop.f32.mrb[0].mxu0
      %v2375 = vadd.f32 0.0, %v2374
      %v2376 = vpop.f32.mrb[0].mxu0
      %2377 = vmatprep.mubr.bf16.mxu0 0
      %2378 = vmatmul.mubr.bf16.gmra.mrb[0].mxu0 %v2181
      %v2379 = vpop.f32.mrb[0].mxu0
      %v2380 = vadd.f32 0.0, %v2379
      %v2381 = vpop.f32.mrb[0].mxu0
      %v2382 = vpop.f32.mrb[0].mxu0
      %v2383 = vadd.f32 0.0, %v2382
      %v2384 = vpop.f32.mrb[0].mxu0
      %2385 = vmatprep.mubr.bf16.mxu0 0
      %2386 = vmatmul.mubr.bf16.gmra.mrb[0].mxu0 %v2182
      %v2387 = vpop.f32.mrb[0].mxu0
      %v2388 = vadd.f32 0.0, %v2387
      %v2389 = vpop.f32.mrb[0].mxu0
      %v2390 = vpop.f32.mrb[0].mxu0
      %v2391 = vadd.f32 0.0, %v2390
      %v2392 = vpop.f32.mrb[0].mxu0
      %2393 = vmatprep.mubr.bf16.mxu0 0
      %2394 = vmatmul.mubr.bf16.gmra.mrb[0].mxu0 %v2183
      %v2395 = vpop.f32.mrb[0].mxu0
      %v2396 = vadd.f32 0.0, %v2395
      %v2397 = vpop.f32.mrb[0].mxu0
      %v2398 = vpop.f32.mrb[0].mxu0
      %v2399 = vadd.f32 0.0, %v2398
      %v2400 = vpop.f32.mrb[0].mxu0
      %2401 = vmatprep.mubr.bf16.mxu0 0
      %2402 = vmatmul.mubr.bf16.gmra.mrb[0].mxu0 %v2184
      %v2403 = vpop.f32.mrb[0].mxu0
      %v2404 = vadd.f32 0.0, %v2403
      %v2405 = vpop.f32.mrb[0].mxu0
      %v2406 = vpop.f32.mrb[0].mxu0
      %v2407 = vadd.f32 0.0, %v2406
      %v2408 = vpop.f32.mrb[0].mxu0
      %2409 = vdwg.mxu0
      %v2410 = vadd.f32 %v1831, %v2284
      %v2411 = vadd.f32 %v1834, %v2287
      %v2412 = vadd.f32 %v1839, %v2292
      %v2413 = vadd.f32 %v1842, %v2295
      %v2414 = vadd.f32 %v1847, %v2300
      %v2415 = vadd.f32 %v1850, %v2303
      %v2416 = vadd.f32 %v1855, %v2308
      %v2417 = vadd.f32 %v1858, %v2311
      %v2418 = vadd.f32 %v1863, %v2316
      %v2419 = vadd.f32 %v1866, %v2319
      %v2420 = vadd.f32 %v1871, %v2324
      %v2421 = vadd.f32 %v1874, %v2327
      %v2422 = vadd.f32 %v1879, %v2332
      %v2423 = vadd.f32 %v1882, %v2335
      %v2424 = vadd.f32 %v1887, %v2340
      %v2425 = vadd.f32 %v1890, %v2343
      %v2426 = vadd.f32 %v1895, %v2348
      %v2427 = vadd.f32 %v1898, %v2351
      %v2428 = vadd.f32 %v1903, %v2356
      %v2429 = vadd.f32 %v1906, %v2359
      %v2430 = vadd.f32 %v1911, %v2364
      %v2431 = vadd.f32 %v1914, %v2367
      %v2432 = vadd.f32 %v1919, %v2372
      %v2433 = vadd.f32 %v1922, %v2375
      %v2434 = vadd.f32 %v1927, %v2380
      %v2435 = vadd.f32 %v1930, %v2383
      %v2436 = vadd.f32 %v1935, %v2388
      %v2437 = vadd.f32 %v1938, %v2391
      %v2438 = vadd.f32 %v1943, %v2396
      %v2439 = vadd.f32 %v1946, %v2399
      %v2440 = vadd.f32 %v1951, %v2404
      %v2441 = vadd.f32 %v1954, %v2407
      %v2442 = vld [vmem:[%s796] sm:$0xf]
      %v2443 = vld [vmem:[%s796 + $0x4] sm:$0xf]
      %v2444 = vld [vmem:[%s796 + $0xc] sm:$0xf]
      %v2445 = vld [vmem:[%s796 + $0x10] sm:$0xf]
      %v2446 = vld [vmem:[%s796 + $0x18] sm:$0xf]
      %v2447 = vld [vmem:[%s796 + $0x1c] sm:$0xf]
      %v2448 = vld [vmem:[%s796 + $0x24] sm:$0xf]
      %v2449 = vld [vmem:[%s796 + $0x28] sm:$0xf]
      %v2450 = vld [vmem:[%s796 + $0x30] sm:$0xf]
      %v2451 = vld [vmem:[%s796 + $0x34] sm:$0xf]
      %v2452 = vld [vmem:[%s796 + $0x3c] sm:$0xf]
      %v2453 = vld [vmem:[%s796 + $0x40] sm:$0xf]
      %v2454 = vld [vmem:[%s796 + $0x48] sm:$0xf]
      %v2455 = vld [vmem:[%s796 + $0x4c] sm:$0xf]
      %v2456 = vld [vmem:[%s796 + $0x54] sm:$0xf]
      %v2457 = vld [vmem:[%s796 + $0x58] sm:$0xf]
      %v2458 = vld [vmem:[%s796 + $0x60] sm:$0xf]
      %v2459 = vld [vmem:[%s796 + $0x64] sm:$0xf]
      %v2460 = vld [vmem:[%s796 + $0x6c] sm:$0xf]
      %v2461 = vld [vmem:[%s796 + $0x70] sm:$0xf]
      %v2462 = vld [vmem:[%s796 + $0x78] sm:$0xf]
      %v2463 = vld [vmem:[%s796 + $0x7c] sm:$0xf]
      %v2464 = vld [vmem:[%s796 + $0x84] sm:$0xf]
      %v2465 = vld [vmem:[%s796 + $0x88] sm:$0xf]
      %v2466 = vld [vmem:[%s796 + $0x90] sm:$0xf]
      %v2467 = vld [vmem:[%s796 + $0x94] sm:$0xf]
      %v2468 = vld [vmem:[%s796 + $0x9c] sm:$0xf]
      %v2469 = vld [vmem:[%s796 + $0xa0] sm:$0xf]
      %v2470 = vld [vmem:[%s796 + $0xa8] sm:$0xf]
      %v2471 = vld [vmem:[%s796 + $0xac] sm:$0xf]
      %v2472 = vld [vmem:[%s796 + $0xb4] sm:$0xf]
      %v2473 = vld [vmem:[%s796 + $0xb8] sm:$0xf]
      %s2474 = scalar_lea.vmem %s1, 192
      %v2475 = vld [vmem:[%s2474] sm:$0xf]
      %v2476 = vld [vmem:[%s2474 + $0x4] sm:$0xf]
      %v2477 = vld [vmem:[%s2474 + $0x8] sm:$0xf]
      %v2478 = vld [vmem:[%s2474 + $0xc] sm:$0xf]
      %v2479 = vld [vmem:[%s2474 + $0x10] sm:$0xf]
      %v2480 = vld [vmem:[%s2474 + $0x14] sm:$0xf]
      %v2481 = vld [vmem:[%s2474 + $0x18] sm:$0xf]
      %v2482 = vld [vmem:[%s2474 + $0x1c] sm:$0xf]
      %v2483 = vld [vmem:[%s2474 + $0x20] sm:$0xf]
      %v2484 = vld [vmem:[%s2474 + $0x24] sm:$0xf]
      %v2485 = vld [vmem:[%s2474 + $0x28] sm:$0xf]
      %v2486 = vld [vmem:[%s2474 + $0x2c] sm:$0xf]
      %v2487 = vld [vmem:[%s2474 + $0x30] sm:$0xf]
      %v2488 = vld [vmem:[%s2474 + $0x34] sm:$0xf]
      %v2489 = vld [vmem:[%s2474 + $0x38] sm:$0xf]
      %v2490 = vld [vmem:[%s2474 + $0x3c] sm:$0xf]
      %v2523 = vunpack.c.l.b16 %v2442
      %v2524 = vunpack.c.l.b16 %v2443
      %v2525 = vunpack.c.l.b16 %v2444
      %v2526 = vunpack.c.l.b16 %v2445
      %v2527 = vunpack.c.l.b16 %v2446
      %v2528 = vunpack.c.l.b16 %v2447
      %v2529 = vunpack.c.l.b16 %v2448
      %v2530 = vunpack.c.l.b16 %v2449
      %v2531 = vunpack.c.l.b16 %v2450
      %v2532 = vunpack.c.l.b16 %v2451
      %v2533 = vunpack.c.l.b16 %v2452
      %v2534 = vunpack.c.l.b16 %v2453
      %v2535 = vunpack.c.l.b16 %v2454
      %v2536 = vunpack.c.l.b16 %v2455
      %v2537 = vunpack.c.l.b16 %v2456
      %v2538 = vunpack.c.l.b16 %v2457
      %v2539 = vunpack.c.l.b16 %v2458
      %v2540 = vunpack.c.l.b16 %v2459
      %v2541 = vunpack.c.l.b16 %v2460
      %v2542 = vunpack.c.l.b16 %v2461
      %v2543 = vunpack.c.l.b16 %v2462
      %v2544 = vunpack.c.l.b16 %v2463
      %v2545 = vunpack.c.l.b16 %v2464
      %v2546 = vunpack.c.l.b16 %v2465
      %v2547 = vunpack.c.l.b16 %v2466
      %v2548 = vunpack.c.l.b16 %v2467
      %v2549 = vunpack.c.l.b16 %v2468
      %v2550 = vunpack.c.l.b16 %v2469
      %v2551 = vunpack.c.l.b16 %v2470
      %v2552 = vunpack.c.l.b16 %v2471
      %v2553 = vunpack.c.l.b16 %v2472
      %v2554 = vunpack.c.l.b16 %v2473
      %v2555 = vpack.c.b16 %v2524, %v2523
      %v2556 = vpack.c.b16 %v2526, %v2525
      %v2557 = vpack.c.b16 %v2528, %v2527
      %v2558 = vpack.c.b16 %v2530, %v2529
      %v2559 = vpack.c.b16 %v2532, %v2531
      %v2560 = vpack.c.b16 %v2534, %v2533
      %v2561 = vpack.c.b16 %v2536, %v2535
      %v2562 = vpack.c.b16 %v2538, %v2537
      %v2563 = vpack.c.b16 %v2540, %v2539
      %v2564 = vpack.c.b16 %v2542, %v2541
      %v2565 = vpack.c.b16 %v2544, %v2543
      %v2566 = vpack.c.b16 %v2546, %v2545
      %v2567 = vpack.c.b16 %v2548, %v2547
      %v2568 = vpack.c.b16 %v2550, %v2549
      %v2569 = vpack.c.b16 %v2552, %v2551
      %v2570 = vpack.c.b16 %v2554, %v2553
      %v2603 = vunpack.c.l.b16 %v2475
      %v2604 = vunpack.c.l.b16 %v2476
      %v2605 = vunpack.c.l.b16 %v2477
      %v2606 = vunpack.c.l.b16 %v2478
      %v2607 = vunpack.c.l.b16 %v2479
      %v2608 = vunpack.c.l.b16 %v2480
      %v2609 = vunpack.c.l.b16 %v2481
      %v2610 = vunpack.c.l.b16 %v2482
      %v2611 = vunpack.c.l.b16 %v2483
      %v2612 = vunpack.c.l.b16 %v2484
      %v2613 = vunpack.c.l.b16 %v2485
      %v2614 = vunpack.c.l.b16 %v2486
      %v2615 = vunpack.c.l.b16 %v2487
      %v2616 = vunpack.c.l.b16 %v2488
      %v2617 = vunpack.c.l.b16 %v2489
      %v2618 = vunpack.c.l.b16 %v2490
      %v2619 = vpack.c.b16 %v2604, %v2603
      %v2620 = vpack.c.b16 %v2606, %v2605
      %v2621 = vpack.c.b16 %v2608, %v2607
      %v2622 = vpack.c.b16 %v2610, %v2609
      %v2623 = vpack.c.b16 %v2612, %v2611
      %v2624 = vpack.c.b16 %v2614, %v2613
      %v2625 = vpack.c.b16 %v2616, %v2615
      %v2626 = vpack.c.b16 %v2618, %v2617
      %2635 = vmatprep.subr.bf16.mxu0 0
      %2636 = vmatpush1.bf16.msra.mxu0 %v2619
      %2637 = vmatprep.subr.bf16.mxu0 0
      %2638 = vmatpush1.bf16.msra.mxu0 %v2620
      %2639 = vmatprep.subr.bf16.mxu0 0
      %2640 = vmatpush1.bf16.msra.mxu0 %v2621
      %2641 = vmatprep.subr.bf16.mxu0 0
      %2642 = vmatpush1.bf16.msra.mxu0 %v2622
      %2643 = vmatprep.subr.bf16.mxu0 0
      %2644 = vmatpush1.bf16.msra.mxu0 %v2623
      %2645 = vmatprep.subr.bf16.mxu0 0
      %2646 = vmatpush1.bf16.msra.mxu0 %v2624
      %2647 = vmatprep.subr.bf16.mxu0 0
      %2648 = vmatpush1.bf16.msra.mxu0 %v2625
      %2649 = vmatprep.subr.bf16.mxu0 0
      %2650 = vmatpush1.bf16.msra.mxu0 %v2626
      %2651 = vmatprep.subr.bf16.mxu0 0
      %2652 = vmatpush1.bf16.msra.mxu0 0
      %2653 = vmatprep.subr.bf16.mxu0 0
      %2654 = vmatpush1.bf16.msra.mxu0 0
      %2655 = vmatprep.subr.bf16.mxu0 0
      %2656 = vmatpush1.bf16.msra.mxu0 0
      %2657 = vmatprep.subr.bf16.mxu0 0
      %2658 = vmatpush1.bf16.msra.mxu0 0
      %2659 = vmatprep.subr.bf16.mxu0 0
      %2660 = vmatpush1.bf16.msra.mxu0 0
      %2661 = vmatprep.subr.bf16.mxu0 0
      %2662 = vmatpush1.bf16.msra.mxu0 0
      %2663 = vmatprep.subr.bf16.mxu0 0
      %2664 = vmatpush1.bf16.msra.mxu0 0
      %2665 = vmatprep.subr.bf16.mxu0 0
      %2666 = vmatpush1.bf16.msra.mxu0 0
      %2667 = vmatprep.mubr.bf16.mxu0 0
      %2668 = vmatmul.mubr.bf16.gmra.mrb[0].mxu0 %v2555
      %v2669 = vpop.f32.mrb[0].mxu0
      %v2670 = vadd.f32 0.0, %v2669
      %v2671 = vpop.f32.mrb[0].mxu0
      %v2672 = vpop.f32.mrb[0].mxu0
      %v2673 = vadd.f32 0.0, %v2672
      %v2674 = vpop.f32.mrb[0].mxu0
      %2675 = vmatprep.mubr.bf16.mxu0 0
      %2676 = vmatmul.mubr.bf16.gmra.mrb[0].mxu0 %v2556
      %v2677 = vpop.f32.mrb[0].mxu0
      %v2678 = vadd.f32 0.0, %v2677
      %v2679 = vpop.f32.mrb[0].mxu0
      %v2680 = vpop.f32.mrb[0].mxu0
      %v2681 = vadd.f32 0.0, %v2680
      %v2682 = vpop.f32.mrb[0].mxu0
      %2683 = vmatprep.mubr.bf16.mxu0 0
      %2684 = vmatmul.mubr.bf16.gmra.mrb[0].mxu0 %v2557
      %v2685 = vpop.f32.mrb[0].mxu0
      %v2686 = vadd.f32 0.0, %v2685
      %v2687 = vpop.f32.mrb[0].mxu0
      %v2688 = vpop.f32.mrb[0].mxu0
      %v2689 = vadd.f32 0.0, %v2688
      %v2690 = vpop.f32.mrb[0].mxu0
      %2691 = vmatprep.mubr.bf16.mxu0 0
      %2692 = vmatmul.mubr.bf16.gmra.mrb[0].mxu0 %v2558
      %v2693 = vpop.f32.mrb[0].mxu0
      %v2694 = vadd.f32 0.0, %v2693
      %v2695 = vpop.f32.mrb[0].mxu0
      %v2696 = vpop.f32.mrb[0].mxu0
      %v2697 = vadd.f32 0.0, %v2696
      %v2698 = vpop.f32.mrb[0].mxu0
      %2699 = vmatprep.mubr.bf16.mxu0 0
      %2700 = vmatmul.mubr.bf16.gmra.mrb[0].mxu0 %v2559
      %v2701 = vpop.f32.mrb[0].mxu0
      %v2702 = vadd.f32 0.0, %v2701
      %v2703 = vpop.f32.mrb[0].mxu0
      %v2704 = vpop.f32.mrb[0].mxu0
      %v2705 = vadd.f32 0.0, %v2704
      %v2706 = vpop.f32.mrb[0].mxu0
      %2707 = vmatprep.mubr.bf16.mxu0 0
      %2708 = vmatmul.mubr.bf16.gmra.mrb[0].mxu0 %v2560
      %v2709 = vpop.f32.mrb[0].mxu0
      %v2710 = vadd.f32 0.0, %v2709
      %v2711 = vpop.f32.mrb[0].mxu0
      %v2712 = vpop.f32.mrb[0].mxu0
      %v2713 = vadd.f32 0.0, %v2712
      %v2714 = vpop.f32.mrb[0].mxu0
      %2715 = vmatprep.mubr.bf16.mxu0 0
      %2716 = vmatmul.mubr.bf16.gmra.mrb[0].mxu0 %v2561
      %v2717 = vpop.f32.mrb[0].mxu0
      %v2718 = vadd.f32 0.0, %v2717
      %v2719 = vpop.f32.mrb[0].mxu0
      %v2720 = vpop.f32.mrb[0].mxu0
      %v2721 = vadd.f32 0.0, %v2720
      %v2722 = vpop.f32.mrb[0].mxu0
      %2723 = vmatprep.mubr.bf16.mxu0 0
      %2724 = vmatmul.mubr.bf16.gmra.mrb[0].mxu0 %v2562
      %v2725 = vpop.f32.mrb[0].mxu0
      %v2726 = vadd.f32 0.0, %v2725
      %v2727 = vpop.f32.mrb[0].mxu0
      %v2728 = vpop.f32.mrb[0].mxu0
      %v2729 = vadd.f32 0.0, %v2728
      %v2730 = vpop.f32.mrb[0].mxu0
      %2731 = vmatprep.mubr.bf16.mxu0 0
      %2732 = vmatmul.mubr.bf16.gmra.mrb[0].mxu0 %v2563
      %v2733 = vpop.f32.mrb[0].mxu0
      %v2734 = vadd.f32 0.0, %v2733
      %v2735 = vpop.f32.mrb[0].mxu0
      %v2736 = vpop.f32.mrb[0].mxu0
      %v2737 = vadd.f32 0.0, %v2736
      %v2738 = vpop.f32.mrb[0].mxu0
      %2739 = vmatprep.mubr.bf16.mxu0 0
      %2740 = vmatmul.mubr.bf16.gmra.mrb[0].mxu0 %v2564
      %v2741 = vpop.f32.mrb[0].mxu0
      %v2742 = vadd.f32 0.0, %v2741
      %v2743 = vpop.f32.mrb[0].mxu0
      %v2744 = vpop.f32.mrb[0].mxu0
      %v2745 = vadd.f32 0.0, %v2744
      %v2746 = vpop.f32.mrb[0].mxu0
      %2747 = vmatprep.mubr.bf16.mxu0 0
      %2748 = vmatmul.mubr.bf16.gmra.mrb[0].mxu0 %v2565
      %v2749 = vpop.f32.mrb[0].mxu0
      %v2750 = vadd.f32 0.0, %v2749
      %v2751 = vpop.f32.mrb[0].mxu0
      %v2752 = vpop.f32.mrb[0].mxu0
      %v2753 = vadd.f32 0.0, %v2752
      %v2754 = vpop.f32.mrb[0].mxu0
      %2755 = vmatprep.mubr.bf16.mxu0 0
      %2756 = vmatmul.mubr.bf16.gmra.mrb[0].mxu0 %v2566
      %v2757 = vpop.f32.mrb[0].mxu0
      %v2758 = vadd.f32 0.0, %v2757
      %v2759 = vpop.f32.mrb[0].mxu0
      %v2760 = vpop.f32.mrb[0].mxu0
      %v2761 = vadd.f32 0.0, %v2760
      %v2762 = vpop.f32.mrb[0].mxu0
      %2763 = vmatprep.mubr.bf16.mxu0 0
      %2764 = vmatmul.mubr.bf16.gmra.mrb[0].mxu0 %v2567
      %v2765 = vpop.f32.mrb[0].mxu0
      %v2766 = vadd.f32 0.0, %v2765
      %v2767 = vpop.f32.mrb[0].mxu0
      %v2768 = vpop.f32.mrb[0].mxu0
      %v2769 = vadd.f32 0.0, %v2768
      %v2770 = vpop.f32.mrb[0].mxu0
      %2771 = vmatprep.mubr.bf16.mxu0 0
      %2772 = vmatmul.mubr.bf16.gmra.mrb[0].mxu0 %v2568
      %v2773 = vpop.f32.mrb[0].mxu0
      %v2774 = vadd.f32 0.0, %v2773
      %v2775 = vpop.f32.mrb[0].mxu0
      %v2776 = vpop.f32.mrb[0].mxu0
      %v2777 = vadd.f32 0.0, %v2776
      %v2778 = vpop.f32.mrb[0].mxu0
      %2779 = vmatprep.mubr.bf16.mxu0 0
      %2780 = vmatmul.mubr.bf16.gmra.mrb[0].mxu0 %v2569
      %v2781 = vpop.f32.mrb[0].mxu0
      %v2782 = vadd.f32 0.0, %v2781
      %v2783 = vpop.f32.mrb[0].mxu0
      %v2784 = vpop.f32.mrb[0].mxu0
      %v2785 = vadd.f32 0.0, %v2784
      %v2786 = vpop.f32.mrb[0].mxu0
      %2787 = vmatprep.mubr.bf16.mxu0 0
      %2788 = vmatmul.mubr.bf16.gmra.mrb[0].mxu0 %v2570
      %v2789 = vpop.f32.mrb[0].mxu0
      %v2790 = vadd.f32 0.0, %v2789
      %v2791 = vpop.f32.mrb[0].mxu0
      %v2792 = vpop.f32.mrb[0].mxu0
      %v2793 = vadd.f32 0.0, %v2792
      %v2794 = vpop.f32.mrb[0].mxu0
      %2795 = vdwg.mxu0
      %v2796 = vadd.f32 %v2410, %v2670
      %v2797 = vadd.f32 %v2411, %v2673
      %v2798 = vadd.f32 %v2412, %v2678
      %v2799 = vadd.f32 %v2413, %v2681
      %v2800 = vadd.f32 %v2414, %v2686
      %v2801 = vadd.f32 %v2415, %v2689
      %v2802 = vadd.f32 %v2416, %v2694
      %v2803 = vadd.f32 %v2417, %v2697
      %v2804 = vadd.f32 %v2418, %v2702
      %v2805 = vadd.f32 %v2419, %v2705
      %v2806 = vadd.f32 %v2420, %v2710
      %v2807 = vadd.f32 %v2421, %v2713
      %v2808 = vadd.f32 %v2422, %v2718
      %v2809 = vadd.f32 %v2423, %v2721
      %v2810 = vadd.f32 %v2424, %v2726
      %v2811 = vadd.f32 %v2425, %v2729
      %v2812 = vadd.f32 %v2426, %v2734
      %v2813 = vadd.f32 %v2427, %v2737
      %v2814 = vadd.f32 %v2428, %v2742
      %v2815 = vadd.f32 %v2429, %v2745
      %v2816 = vadd.f32 %v2430, %v2750
      %v2817 = vadd.f32 %v2431, %v2753
      %v2818 = vadd.f32 %v2432, %v2758
      %v2819 = vadd.f32 %v2433, %v2761
      %v2820 = vadd.f32 %v2434, %v2766
      %v2821 = vadd.f32 %v2435, %v2769
      %v2822 = vadd.f32 %v2436, %v2774
      %v2823 = vadd.f32 %v2437, %v2777
      %v2824 = vadd.f32 %v2438, %v2782
      %v2825 = vadd.f32 %v2439, %v2785
      %v2826 = vadd.f32 %v2440, %v2790
      %v2827 = vadd.f32 %v2441, %v2793
      %v2828 = vld [vmem:[%s796] sm:$0xf]
      %v2829 = vld [vmem:[%s796 + $0x4] sm:$0xf]
      %v2830 = vld [vmem:[%s796 + $0x8] sm:$0x1]
      %v2831 = vld [vmem:[%s796 + $0xc] sm:$0xf]
      %v2832 = vld [vmem:[%s796 + $0x10] sm:$0xf]
      %v2833 = vld [vmem:[%s796 + $0x14] sm:$0x1]
      %v2834 = vld [vmem:[%s796 + $0x18] sm:$0xf]
      %v2835 = vld [vmem:[%s796 + $0x1c] sm:$0xf]
      %v2836 = vld [vmem:[%s796 + $0x20] sm:$0x1]
      %v2837 = vld [vmem:[%s796 + $0x24] sm:$0xf]
      %v2838 = vld [vmem:[%s796 + $0x28] sm:$0xf]
      %v2839 = vld [vmem:[%s796 + $0x2c] sm:$0x1]
      %v2840 = vld [vmem:[%s796 + $0x30] sm:$0xf]
      %v2841 = vld [vmem:[%s796 + $0x34] sm:$0xf]
      %v2842 = vld [vmem:[%s796 + $0x38] sm:$0x1]
      %v2843 = vld [vmem:[%s796 + $0x3c] sm:$0xf]
      %v2844 = vld [vmem:[%s796 + $0x40] sm:$0xf]
      %v2845 = vld [vmem:[%s796 + $0x44] sm:$0x1]
      %v2846 = vld [vmem:[%s796 + $0x48] sm:$0xf]
      %v2847 = vld [vmem:[%s796 + $0x4c] sm:$0xf]
      %v2848 = vld [vmem:[%s796 + $0x50] sm:$0x1]
      %v2849 = vld [vmem:[%s796 + $0x54] sm:$0xf]
      %v2850 = vld [vmem:[%s796 + $0x58] sm:$0xf]
      %v2851 = vld [vmem:[%s796 + $0x5c] sm:$0x1]
      %v2852 = vld [vmem:[%s796 + $0x60] sm:$0xf]
      %v2853 = vld [vmem:[%s796 + $0x64] sm:$0xf]
      %v2854 = vld [vmem:[%s796 + $0x68] sm:$0x1]
      %v2855 = vld [vmem:[%s796 + $0x6c] sm:$0xf]
      %v2856 = vld [vmem:[%s796 + $0x70] sm:$0xf]
      %v2857 = vld [vmem:[%s796 + $0x74] sm:$0x1]
      %v2858 = vld [vmem:[%s796 + $0x78] sm:$0xf]
      %v2859 = vld [vmem:[%s796 + $0x7c] sm:$0xf]
      %v2860 = vld [vmem:[%s796 + $0x80] sm:$0x1]
      %v2861 = vld [vmem:[%s796 + $0x84] sm:$0xf]
      %v2862 = vld [vmem:[%s796 + $0x88] sm:$0xf]
      %v2863 = vld [vmem:[%s796 + $0x8c] sm:$0x1]
      %v2864 = vld [vmem:[%s796 + $0x90] sm:$0xf]
      %v2865 = vld [vmem:[%s796 + $0x94] sm:$0xf]
      %v2866 = vld [vmem:[%s796 + $0x98] sm:$0x1]
      %v2867 = vld [vmem:[%s796 + $0x9c] sm:$0xf]
      %v2868 = vld [vmem:[%s796 + $0xa0] sm:$0xf]
      %v2869 = vld [vmem:[%s796 + $0xa4] sm:$0x1]
      %v2870 = vld [vmem:[%s796 + $0xa8] sm:$0xf]
      %v2871 = vld [vmem:[%s796 + $0xac] sm:$0xf]
      %v2872 = vld [vmem:[%s796 + $0xb0] sm:$0x1]
      %v2873 = vld [vmem:[%s796 + $0xb4] sm:$0xf]
      %v2874 = vld [vmem:[%s796 + $0xb8] sm:$0xf]
      %v2875 = vld [vmem:[%s796 + $0xbc] sm:$0x1]
      %v2877 = vshrl.u32 %v2828, 16
      %v2879 = vrot.slane %v2877, 4
      %v2880 = vshll.u32 %v2828, 16
      %v2882 = vrot.slane %v2880, 5
      %v2883 = vor.u32 %v2879, %v2882
      %v2884 = vrot.slane %v2883, 4
      %v2886 = vshll.u32 %v2829, 16
      %v2888 = vrot.slane %v2886, 5
      %v2889 = vsel %vm977, %v2884, %v2888
      %v2890 = vshrl.u32 %v2829, 16
      %v2892 = vrot.slane %v2890, 4
      %v2893 = vor.u32 %v2892, %v2888
      %v2894 = vrot.slane %v2893, 4
      %v2896 = vshll.u32 %v2830, 16
      %v2898 = vrot.slane %v2896, 5
      %v2899 = vsel %vm977, %v2894, %v2898
      %v2901 = vshrl.u32 %v2831, 16
      %v2903 = vrot.slane %v2901, 4
      %v2904 = vshll.u32 %v2831, 16
      %v2906 = vrot.slane %v2904, 5
      %v2907 = vor.u32 %v2903, %v2906
      %v2908 = vrot.slane %v2907, 4
      %v2910 = vshll.u32 %v2832, 16
      %v2912 = vrot.slane %v2910, 5
      %v2913 = vsel %vm977, %v2908, %v2912
      %v2914 = vshrl.u32 %v2832, 16
      %v2916 = vrot.slane %v2914, 4
      %v2917 = vor.u32 %v2916, %v2912
      %v2918 = vrot.slane %v2917, 4
      %v2920 = vshll.u32 %v2833, 16
      %v2922 = vrot.slane %v2920, 5
      %v2923 = vsel %vm977, %v2918, %v2922
      %v2925 = vshrl.u32 %v2834, 16
      %v2927 = vrot.slane %v2925, 4
      %v2928 = vshll.u32 %v2834, 16
      %v2930 = vrot.slane %v2928, 5
      %v2931 = vor.u32 %v2927, %v2930
      %v2932 = vrot.slane %v2931, 4
      %v2934 = vshll.u32 %v2835, 16
      %v2936 = vrot.slane %v2934, 5
      %v2937 = vsel %vm977, %v2932, %v2936
      %v2938 = vshrl.u32 %v2835, 16
      %v2940 = vrot.slane %v2938, 4
      %v2941 = vor.u32 %v2940, %v2936
      %v2942 = vrot.slane %v2941, 4
      %v2944 = vshll.u32 %v2836, 16
      %v2946 = vrot.slane %v2944, 5
      %v2947 = vsel %vm977, %v2942, %v2946
      %v2949 = vshrl.u32 %v2837, 16
      %v2951 = vrot.slane %v2949, 4
      %v2952 = vshll.u32 %v2837, 16
      %v2954 = vrot.slane %v2952, 5
      %v2955 = vor.u32 %v2951, %v2954
      %v2956 = vrot.slane %v2955, 4
      %v2958 = vshll.u32 %v2838, 16
      %v2960 = vrot.slane %v2958, 5
      %v2961 = vsel %vm977, %v2956, %v2960
      %v2962 = vshrl.u32 %v2838, 16
      %v2964 = vrot.slane %v2962, 4
      %v2965 = vor.u32 %v2964, %v2960
      %v2966 = vrot.slane %v2965, 4
      %v2968 = vshll.u32 %v2839, 16
      %v2970 = vrot.slane %v2968, 5
      %v2971 = vsel %vm977, %v2966, %v2970
      %v2973 = vshrl.u32 %v2840, 16
      %v2975 = vrot.slane %v2973, 4
      %v2976 = vshll.u32 %v2840, 16
      %v2978 = vrot.slane %v2976, 5
      %v2979 = vor.u32 %v2975, %v2978
      %v2980 = vrot.slane %v2979, 4
      %v2982 = vshll.u32 %v2841, 16
      %v2984 = vrot.slane %v2982, 5
      %v2985 = vsel %vm977, %v2980, %v2984
      %v2986 = vshrl.u32 %v2841, 16
      %v2988 = vrot.slane %v2986, 4
      %v2989 = vor.u32 %v2988, %v2984
      %v2990 = vrot.slane %v2989, 4
      %v2992 = vshll.u32 %v2842, 16
      %v2994 = vrot.slane %v2992, 5
      %v2995 = vsel %vm977, %v2990, %v2994
      %v2997 = vshrl.u32 %v2843, 16
      %v2999 = vrot.slane %v2997, 4
      %v3000 = vshll.u32 %v2843, 16
      %v3002 = vrot.slane %v3000, 5
      %v3003 = vor.u32 %v2999, %v3002
      %v3004 = vrot.slane %v3003, 4
      %v3006 = vshll.u32 %v2844, 16
      %v3008 = vrot.slane %v3006, 5
      %v3009 = vsel %vm977, %v3004, %v3008
      %v3010 = vshrl.u32 %v2844, 16
      %v3012 = vrot.slane %v3010, 4
      %v3013 = vor.u32 %v3012, %v3008
      %v3014 = vrot.slane %v3013, 4
      %v3016 = vshll.u32 %v2845, 16
      %v3018 = vrot.slane %v3016, 5
      %v3019 = vsel %vm977, %v3014, %v3018
      %v3021 = vshrl.u32 %v2846, 16
      %v3023 = vrot.slane %v3021, 4
      %v3024 = vshll.u32 %v2846, 16
      %v3026 = vrot.slane %v3024, 5
      %v3027 = vor.u32 %v3023, %v3026
      %v3028 = vrot.slane %v3027, 4
      %v3030 = vshll.u32 %v2847, 16
      %v3032 = vrot.slane %v3030, 5
      %v3033 = vsel %vm977, %v3028, %v3032
      %v3034 = vshrl.u32 %v2847, 16
      %v3036 = vrot.slane %v3034, 4
      %v3037 = vor.u32 %v3036, %v3032
      %v3038 = vrot.slane %v3037, 4
      %v3040 = vshll.u32 %v2848, 16
      %v3042 = vrot.slane %v3040, 5
      %v3043 = vsel %vm977, %v3038, %v3042
      %v3045 = vshrl.u32 %v2849, 16
      %v3047 = vrot.slane %v3045, 4
      %v3048 = vshll.u32 %v2849, 16
      %v3050 = vrot.slane %v3048, 5
      %v3051 = vor.u32 %v3047, %v3050
      %v3052 = vrot.slane %v3051, 4
      %v3054 = vshll.u32 %v2850, 16
      %v3056 = vrot.slane %v3054, 5
      %v3057 = vsel %vm977, %v3052, %v3056
      %v3058 = vshrl.u32 %v2850, 16
      %v3060 = vrot.slane %v3058, 4
      %v3061 = vor.u32 %v3060, %v3056
      %v3062 = vrot.slane %v3061, 4
      %v3064 = vshll.u32 %v2851, 16
      %v3066 = vrot.slane %v3064, 5
      %v3067 = vsel %vm977, %v3062, %v3066
      %v3069 = vshrl.u32 %v2852, 16
      %v3071 = vrot.slane %v3069, 4
      %v3072 = vshll.u32 %v2852, 16
      %v3074 = vrot.slane %v3072, 5
      %v3075 = vor.u32 %v3071, %v3074
      %v3076 = vrot.slane %v3075, 4
      %v3078 = vshll.u32 %v2853, 16
      %v3080 = vrot.slane %v3078, 5
      %v3081 = vsel %vm977, %v3076, %v3080
      %v3082 = vshrl.u32 %v2853, 16
      %v3084 = vrot.slane %v3082, 4
      %v3085 = vor.u32 %v3084, %v3080
      %v3086 = vrot.slane %v3085, 4
      %v3088 = vshll.u32 %v2854, 16
      %v3090 = vrot.slane %v3088, 5
      %v3091 = vsel %vm977, %v3086, %v3090
      %v3093 = vshrl.u32 %v2855, 16
      %v3095 = vrot.slane %v3093, 4
      %v3096 = vshll.u32 %v2855, 16
      %v3098 = vrot.slane %v3096, 5
      %v3099 = vor.u32 %v3095, %v3098
      %v3100 = vrot.slane %v3099, 4
      %v3102 = vshll.u32 %v2856, 16
      %v3104 = vrot.slane %v3102, 5
      %v3105 = vsel %vm977, %v3100, %v3104
      %v3106 = vshrl.u32 %v2856, 16
      %v3108 = vrot.slane %v3106, 4
      %v3109 = vor.u32 %v3108, %v3104
      %v3110 = vrot.slane %v3109, 4
      %v3112 = vshll.u32 %v2857, 16
      %v3114 = vrot.slane %v3112, 5
      %v3115 = vsel %vm977, %v3110, %v3114
      %v3117 = vshrl.u32 %v2858, 16
      %v3119 = vrot.slane %v3117, 4
      %v3120 = vshll.u32 %v2858, 16
      %v3122 = vrot.slane %v3120, 5
      %v3123 = vor.u32 %v3119, %v3122
      %v3124 = vrot.slane %v3123, 4
      %v3126 = vshll.u32 %v2859, 16
      %v3128 = vrot.slane %v3126, 5
      %v3129 = vsel %vm977, %v3124, %v3128
      %v3130 = vshrl.u32 %v2859, 16
      %v3132 = vrot.slane %v3130, 4
      %v3133 = vor.u32 %v3132, %v3128
      %v3134 = vrot.slane %v3133, 4
      %v3136 = vshll.u32 %v2860, 16
      %v3138 = vrot.slane %v3136, 5
      %v3139 = vsel %vm977, %v3134, %v3138
      %v3141 = vshrl.u32 %v2861, 16
      %v3143 = vrot.slane %v3141, 4
      %v3144 = vshll.u32 %v2861, 16
      %v3146 = vrot.slane %v3144, 5
      %v3147 = vor.u32 %v3143, %v3146
      %v3148 = vrot.slane %v3147, 4
      %v3150 = vshll.u32 %v2862, 16
      %v3152 = vrot.slane %v3150, 5
      %v3153 = vsel %vm977, %v3148, %v3152
      %v3154 = vshrl.u32 %v2862, 16
      %v3156 = vrot.slane %v3154, 4
      %v3157 = vor.u32 %v3156, %v3152
      %v3158 = vrot.slane %v3157, 4
      %v3160 = vshll.u32 %v2863, 16
      %v3162 = vrot.slane %v3160, 5
      %v3163 = vsel %vm977, %v3158, %v3162
      %v3165 = vshrl.u32 %v2864, 16
      %v3167 = vrot.slane %v3165, 4
      %v3168 = vshll.u32 %v2864, 16
      %v3170 = vrot.slane %v3168, 5
      %v3171 = vor.u32 %v3167, %v3170
      %v3172 = vrot.slane %v3171, 4
      %v3174 = vshll.u32 %v2865, 16
      %v3176 = vrot.slane %v3174, 5
      %v3177 = vsel %vm977, %v3172, %v3176
      %v3178 = vshrl.u32 %v2865, 16
      %v3180 = vrot.slane %v3178, 4
      %v3181 = vor.u32 %v3180, %v3176
      %v3182 = vrot.slane %v3181, 4
      %v3184 = vshll.u32 %v2866, 16
      %v3186 = vrot.slane %v3184, 5
      %v3187 = vsel %vm977, %v3182, %v3186
      %v3189 = vshrl.u32 %v2867, 16
      %v3191 = vrot.slane %v3189, 4
      %v3192 = vshll.u32 %v2867, 16
      %v3194 = vrot.slane %v3192, 5
      %v3195 = vor.u32 %v3191, %v3194
      %v3196 = vrot.slane %v3195, 4
      %v3198 = vshll.u32 %v2868, 16
      %v3200 = vrot.slane %v3198, 5
      %v3201 = vsel %vm977, %v3196, %v3200
      %v3202 = vshrl.u32 %v2868, 16
      %v3204 = vrot.slane %v3202, 4
      %v3205 = vor.u32 %v3204, %v3200
      %v3206 = vrot.slane %v3205, 4
      %v3208 = vshll.u32 %v2869, 16
      %v3210 = vrot.slane %v3208, 5
      %v3211 = vsel %vm977, %v3206, %v3210
      %v3213 = vshrl.u32 %v2870, 16
      %v3215 = vrot.slane %v3213, 4
      %v3216 = vshll.u32 %v2870, 16
      %v3218 = vrot.slane %v3216, 5
      %v3219 = vor.u32 %v3215, %v3218
      %v3220 = vrot.slane %v3219, 4
      %v3222 = vshll.u32 %v2871, 16
      %v3224 = vrot.slane %v3222, 5
      %v3225 = vsel %vm977, %v3220, %v3224
      %v3226 = vshrl.u32 %v2871, 16
      %v3228 = vrot.slane %v3226, 4
      %v3229 = vor.u32 %v3228, %v3224
      %v3230 = vrot.slane %v3229, 4
      %v3232 = vshll.u32 %v2872, 16
      %v3234 = vrot.slane %v3232, 5
      %v3235 = vsel %vm977, %v3230, %v3234
      %v3237 = vshrl.u32 %v2873, 16
      %v3239 = vrot.slane %v3237, 4
      %v3240 = vshll.u32 %v2873, 16
      %v3242 = vrot.slane %v3240, 5
      %v3243 = vor.u32 %v3239, %v3242
      %v3244 = vrot.slane %v3243, 4
      %v3246 = vshll.u32 %v2874, 16
      %v3248 = vrot.slane %v3246, 5
      %v3249 = vsel %vm977, %v3244, %v3248
      %v3250 = vshrl.u32 %v2874, 16
      %v3252 = vrot.slane %v3250, 4
      %v3253 = vor.u32 %v3252, %v3248
      %v3254 = vrot.slane %v3253, 4
      %v3256 = vshll.u32 %v2875, 16
      %v3258 = vrot.slane %v3256, 5
      %v3259 = vsel %vm977, %v3254, %v3258
      %s3260 = scalar_lea.vmem %s1, 256
      %v3261 = vld [vmem:[%s3260] sm:$0xf]
      %v3262 = vld [vmem:[%s3260 + $0x4] sm:$0xf]
      %v3263 = vld [vmem:[%s3260 + $0x8] sm:$0xf]
      %v3264 = vld [vmem:[%s3260 + $0xc] sm:$0xf]
      %v3265 = vld [vmem:[%s3260 + $0x10] sm:$0xf]
      %v3266 = vld [vmem:[%s3260 + $0x14] sm:$0xf]
      %v3267 = vld [vmem:[%s3260 + $0x18] sm:$0xf]
      %v3268 = vld [vmem:[%s3260 + $0x1c] sm:$0xf]
      %v3269 = vld [vmem:[%s3260 + $0x20] sm:$0xf]
      %v3270 = vld [vmem:[%s3260 + $0x24] sm:$0xf]
      %v3271 = vld [vmem:[%s3260 + $0x28] sm:$0xf]
      %v3272 = vld [vmem:[%s3260 + $0x2c] sm:$0xf]
      %v3273 = vld [vmem:[%s3260 + $0x30] sm:$0xf]
      %v3274 = vld [vmem:[%s3260 + $0x34] sm:$0xf]
      %v3275 = vld [vmem:[%s3260 + $0x38] sm:$0xf]
      %v3276 = vld [vmem:[%s3260 + $0x3c] sm:$0xf]
      %v3277 = vunpack.c.l.b16 %v2889
      %v3278 = vunpack.c.l.b16 %v2899
      %v3279 = vunpack.c.l.b16 %v2913
      %v3280 = vunpack.c.l.b16 %v2923
      %v3281 = vunpack.c.l.b16 %v2937
      %v3282 = vunpack.c.l.b16 %v2947
      %v3283 = vunpack.c.l.b16 %v2961
      %v3284 = vunpack.c.l.b16 %v2971
      %v3285 = vunpack.c.l.b16 %v2985
      %v3286 = vunpack.c.l.b16 %v2995
      %v3287 = vunpack.c.l.b16 %v3009
      %v3288 = vunpack.c.l.b16 %v3019
      %v3289 = vunpack.c.l.b16 %v3033
      %v3290 = vunpack.c.l.b16 %v3043
      %v3291 = vunpack.c.l.b16 %v3057
      %v3292 = vunpack.c.l.b16 %v3067
      %v3293 = vunpack.c.l.b16 %v3081
      %v3294 = vunpack.c.l.b16 %v3091
      %v3295 = vunpack.c.l.b16 %v3105
      %v3296 = vunpack.c.l.b16 %v3115
      %v3297 = vunpack.c.l.b16 %v3129
      %v3298 = vunpack.c.l.b16 %v3139
      %v3299 = vunpack.c.l.b16 %v3153
      %v3300 = vunpack.c.l.b16 %v3163
      %v3301 = vunpack.c.l.b16 %v3177
      %v3302 = vunpack.c.l.b16 %v3187
      %v3303 = vunpack.c.l.b16 %v3201
      %v3304 = vunpack.c.l.b16 %v3211
      %v3305 = vunpack.c.l.b16 %v3225
      %v3306 = vunpack.c.l.b16 %v3235
      %v3307 = vunpack.c.l.b16 %v3249
      %v3308 = vunpack.c.l.b16 %v3259
      %v3309 = vpack.c.b16 %v3278, %v3277
      %v3310 = vpack.c.b16 %v3280, %v3279
      %v3311 = vpack.c.b16 %v3282, %v3281
      %v3312 = vpack.c.b16 %v3284, %v3283
      %v3313 = vpack.c.b16 %v3286, %v3285
      %v3314 = vpack.c.b16 %v3288, %v3287
      %v3315 = vpack.c.b16 %v3290, %v3289
      %v3316 = vpack.c.b16 %v3292, %v3291
      %v3317 = vpack.c.b16 %v3294, %v3293
      %v3318 = vpack.c.b16 %v3296, %v3295
      %v3319 = vpack.c.b16 %v3298, %v3297
      %v3320 = vpack.c.b16 %v3300, %v3299
      %v3321 = vpack.c.b16 %v3302, %v3301
      %v3322 = vpack.c.b16 %v3304, %v3303
      %v3323 = vpack.c.b16 %v3306, %v3305
      %v3324 = vpack.c.b16 %v3308, %v3307
      %v3357 = vunpack.c.l.b16 %v3261
      %v3358 = vunpack.c.l.b16 %v3262
      %v3359 = vunpack.c.l.b16 %v3263
      %v3360 = vunpack.c.l.b16 %v3264
      %v3361 = vunpack.c.l.b16 %v3265
      %v3362 = vunpack.c.l.b16 %v3266
      %v3363 = vunpack.c.l.b16 %v3267
      %v3364 = vunpack.c.l.b16 %v3268
      %v3365 = vunpack.c.l.b16 %v3269
      %v3366 = vunpack.c.l.b16 %v3270
      %v3367 = vunpack.c.l.b16 %v3271
      %v3368 = vunpack.c.l.b16 %v3272
      %v3369 = vunpack.c.l.b16 %v3273
      %v3370 = vunpack.c.l.b16 %v3274
      %v3371 = vunpack.c.l.b16 %v3275
      %v3372 = vunpack.c.l.b16 %v3276
      %v3373 = vpack.c.b16 %v3358, %v3357
      %v3374 = vpack.c.b16 %v3360, %v3359
      %v3375 = vpack.c.b16 %v3362, %v3361
      %v3376 = vpack.c.b16 %v3364, %v3363
      %v3377 = vpack.c.b16 %v3366, %v3365
      %v3378 = vpack.c.b16 %v3368, %v3367
      %v3379 = vpack.c.b16 %v3370, %v3369
      %v3380 = vpack.c.b16 %v3372, %v3371
      %3389 = vmatprep.subr.bf16.mxu0 0
      %3390 = vmatpush1.bf16.msra.mxu0 %v3373
      %3391 = vmatprep.subr.bf16.mxu0 0
      %3392 = vmatpush1.bf16.msra.mxu0 %v3374
      %3393 = vmatprep.subr.bf16.mxu0 0
      %3394 = vmatpush1.bf16.msra.mxu0 %v3375
      %3395 = vmatprep.subr.bf16.mxu0 0
      %3396 = vmatpush1.bf16.msra.mxu0 %v3376
      %3397 = vmatprep.subr.bf16.mxu0 0
      %3398 = vmatpush1.bf16.msra.mxu0 %v3377
      %3399 = vmatprep.subr.bf16.mxu0 0
      %3400 = vmatpush1.bf16.msra.mxu0 %v3378
      %3401 = vmatprep.subr.bf16.mxu0 0
      %3402 = vmatpush1.bf16.msra.mxu0 %v3379
      %3403 = vmatprep.subr.bf16.mxu0 0
      %3404 = vmatpush1.bf16.msra.mxu0 %v3380
      %3405 = vmatprep.subr.bf16.mxu0 0
      %3406 = vmatpush1.bf16.msra.mxu0 0
      %3407 = vmatprep.subr.bf16.mxu0 0
      %3408 = vmatpush1.bf16.msra.mxu0 0
      %3409 = vmatprep.subr.bf16.mxu0 0
      %3410 = vmatpush1.bf16.msra.mxu0 0
      %3411 = vmatprep.subr.bf16.mxu0 0
      %3412 = vmatpush1.bf16.msra.mxu0 0
      %3413 = vmatprep.subr.bf16.mxu0 0
      %3414 = vmatpush1.bf16.msra.mxu0 0
      %3415 = vmatprep.subr.bf16.mxu0 0
      %3416 = vmatpush1.bf16.msra.mxu0 0
      %3417 = vmatprep.subr.bf16.mxu0 0
      %3418 = vmatpush1.bf16.msra.mxu0 0
      %3419 = vmatprep.subr.bf16.mxu0 0
      %3420 = vmatpush1.bf16.msra.mxu0 0
      %3421 = vmatprep.mubr.bf16.mxu0 0
      %3422 = vmatmul.mubr.bf16.gmra.mrb[0].mxu0 %v3309
      %v3423 = vpop.f32.mrb[0].mxu0
      %v3424 = vadd.f32 0.0, %v3423
      %v3425 = vpop.f32.mrb[0].mxu0
      %v3426 = vpop.f32.mrb[0].mxu0
      %v3427 = vadd.f32 0.0, %v3426
      %v3428 = vpop.f32.mrb[0].mxu0
      %3429 = vmatprep.mubr.bf16.mxu0 0
      %3430 = vmatmul.mubr.bf16.gmra.mrb[0].mxu0 %v3310
      %v3431 = vpop.f32.mrb[0].mxu0
      %v3432 = vadd.f32 0.0, %v3431
      %v3433 = vpop.f32.mrb[0].mxu0
      %v3434 = vpop.f32.mrb[0].mxu0
      %v3435 = vadd.f32 0.0, %v3434
      %v3436 = vpop.f32.mrb[0].mxu0
      %3437 = vmatprep.mubr.bf16.mxu0 0
      %3438 = vmatmul.mubr.bf16.gmra.mrb[0].mxu0 %v3311
      %v3439 = vpop.f32.mrb[0].mxu0
      %v3440 = vadd.f32 0.0, %v3439
      %v3441 = vpop.f32.mrb[0].mxu0
      %v3442 = vpop.f32.mrb[0].mxu0
      %v3443 = vadd.f32 0.0, %v3442
      %v3444 = vpop.f32.mrb[0].mxu0
      %3445 = vmatprep.mubr.bf16.mxu0 0
      %3446 = vmatmul.mubr.bf16.gmra.mrb[0].mxu0 %v3312
      %v3447 = vpop.f32.mrb[0].mxu0
      %v3448 = vadd.f32 0.0, %v3447
      %v3449 = vpop.f32.mrb[0].mxu0
      %v3450 = vpop.f32.mrb[0].mxu0
      %v3451 = vadd.f32 0.0, %v3450
      %v3452 = vpop.f32.mrb[0].mxu0
      %3453 = vmatprep.mubr.bf16.mxu0 0
      %3454 = vmatmul.mubr.bf16.gmra.mrb[0].mxu0 %v3313
      %v3455 = vpop.f32.mrb[0].mxu0
      %v3456 = vadd.f32 0.0, %v3455
      %v3457 = vpop.f32.mrb[0].mxu0
      %v3458 = vpop.f32.mrb[0].mxu0
      %v3459 = vadd.f32 0.0, %v3458
      %v3460 = vpop.f32.mrb[0].mxu0
      %3461 = vmatprep.mubr.bf16.mxu0 0
      %3462 = vmatmul.mubr.bf16.gmra.mrb[0].mxu0 %v3314
      %v3463 = vpop.f32.mrb[0].mxu0
      %v3464 = vadd.f32 0.0, %v3463
      %v3465 = vpop.f32.mrb[0].mxu0
      %v3466 = vpop.f32.mrb[0].mxu0
      %v3467 = vadd.f32 0.0, %v3466
      %v3468 = vpop.f32.mrb[0].mxu0
      %3469 = vmatprep.mubr.bf16.mxu0 0
      %3470 = vmatmul.mubr.bf16.gmra.mrb[0].mxu0 %v3315
      %v3471 = vpop.f32.mrb[0].mxu0
      %v3472 = vadd.f32 0.0, %v3471
      %v3473 = vpop.f32.mrb[0].mxu0
      %v3474 = vpop.f32.mrb[0].mxu0
      %v3475 = vadd.f32 0.0, %v3474
      %v3476 = vpop.f32.mrb[0].mxu0
      %3477 = vmatprep.mubr.bf16.mxu0 0
      %3478 = vmatmul.mubr.bf16.gmra.mrb[0].mxu0 %v3316
      %v3479 = vpop.f32.mrb[0].mxu0
      %v3480 = vadd.f32 0.0, %v3479
      %v3481 = vpop.f32.mrb[0].mxu0
      %v3482 = vpop.f32.mrb[0].mxu0
      %v3483 = vadd.f32 0.0, %v3482
      %v3484 = vpop.f32.mrb[0].mxu0
      %3485 = vmatprep.mubr.bf16.mxu0 0
      %3486 = vmatmul.mubr.bf16.gmra.mrb[0].mxu0 %v3317
      %v3487 = vpop.f32.mrb[0].mxu0
      %v3488 = vadd.f32 0.0, %v3487
      %v3489 = vpop.f32.mrb[0].mxu0
      %v3490 = vpop.f32.mrb[0].mxu0
      %v3491 = vadd.f32 0.0, %v3490
      %v3492 = vpop.f32.mrb[0].mxu0
      %3493 = vmatprep.mubr.bf16.mxu0 0
      %3494 = vmatmul.mubr.bf16.gmra.mrb[0].mxu0 %v3318
      %v3495 = vpop.f32.mrb[0].mxu0
      %v3496 = vadd.f32 0.0, %v3495
      %v3497 = vpop.f32.mrb[0].mxu0
      %v3498 = vpop.f32.mrb[0].mxu0
      %v3499 = vadd.f32 0.0, %v3498
      %v3500 = vpop.f32.mrb[0].mxu0
      %3501 = vmatprep.mubr.bf16.mxu0 0
      %3502 = vmatmul.mubr.bf16.gmra.mrb[0].mxu0 %v3319
      %v3503 = vpop.f32.mrb[0].mxu0
      %v3504 = vadd.f32 0.0, %v3503
      %v3505 = vpop.f32.mrb[0].mxu0
      %v3506 = vpop.f32.mrb[0].mxu0
      %v3507 = vadd.f32 0.0, %v3506
      %v3508 = vpop.f32.mrb[0].mxu0
      %3509 = vmatprep.mubr.bf16.mxu0 0
      %3510 = vmatmul.mubr.bf16.gmra.mrb[0].mxu0 %v3320
      %v3511 = vpop.f32.mrb[0].mxu0
      %v3512 = vadd.f32 0.0, %v3511
      %v3513 = vpop.f32.mrb[0].mxu0
      %v3514 = vpop.f32.mrb[0].mxu0
      %v3515 = vadd.f32 0.0, %v3514
      %v3516 = vpop.f32.mrb[0].mxu0
      %3517 = vmatprep.mubr.bf16.mxu0 0
      %3518 = vmatmul.mubr.bf16.gmra.mrb[0].mxu0 %v3321
      %v3519 = vpop.f32.mrb[0].mxu0
      %v3520 = vadd.f32 0.0, %v3519
      %v3521 = vpop.f32.mrb[0].mxu0
      %v3522 = vpop.f32.mrb[0].mxu0
      %v3523 = vadd.f32 0.0, %v3522
      %v3524 = vpop.f32.mrb[0].mxu0
      %3525 = vmatprep.mubr.bf16.mxu0 0
      %3526 = vmatmul.mubr.bf16.gmra.mrb[0].mxu0 %v3322
      %v3527 = vpop.f32.mrb[0].mxu0
      %v3528 = vadd.f32 0.0, %v3527
      %v3529 = vpop.f32.mrb[0].mxu0
      %v3530 = vpop.f32.mrb[0].mxu0
      %v3531 = vadd.f32 0.0, %v3530
      %v3532 = vpop.f32.mrb[0].mxu0
      %3533 = vmatprep.mubr.bf16.mxu0 0
      %3534 = vmatmul.mubr.bf16.gmra.mrb[0].mxu0 %v3323
      %v3535 = vpop.f32.mrb[0].mxu0
      %v3536 = vadd.f32 0.0, %v3535
      %v3537 = vpop.f32.mrb[0].mxu0
      %v3538 = vpop.f32.mrb[0].mxu0
      %v3539 = vadd.f32 0.0, %v3538
      %v3540 = vpop.f32.mrb[0].mxu0
      %3541 = vmatprep.mubr.bf16.mxu0 0
      %3542 = vmatmul.mubr.bf16.gmra.mrb[0].mxu0 %v3324
      %v3543 = vpop.f32.mrb[0].mxu0
      %v3544 = vadd.f32 0.0, %v3543
      %v3545 = vpop.f32.mrb[0].mxu0
      %v3546 = vpop.f32.mrb[0].mxu0
      %v3547 = vadd.f32 0.0, %v3546
      %v3548 = vpop.f32.mrb[0].mxu0
      %3549 = vdwg.mxu0
      %v3550 = vadd.f32 %v2796, %v3424
      %v3551 = vadd.f32 %v2797, %v3427
      %v3552 = vadd.f32 %v2798, %v3432
      %v3553 = vadd.f32 %v2799, %v3435
      %v3554 = vadd.f32 %v2800, %v3440
      %v3555 = vadd.f32 %v2801, %v3443
      %v3556 = vadd.f32 %v2802, %v3448
      %v3557 = vadd.f32 %v2803, %v3451
      %v3558 = vadd.f32 %v2804, %v3456
      %v3559 = vadd.f32 %v2805, %v3459
      %v3560 = vadd.f32 %v2806, %v3464
      %v3561 = vadd.f32 %v2807, %v3467
      %v3562 = vadd.f32 %v2808, %v3472
      %v3563 = vadd.f32 %v2809, %v3475
      %v3564 = vadd.f32 %v2810, %v3480
      %v3565 = vadd.f32 %v2811, %v3483
      %v3566 = vadd.f32 %v2812, %v3488
      %v3567 = vadd.f32 %v2813, %v3491
      %v3568 = vadd.f32 %v2814, %v3496
      %v3569 = vadd.f32 %v2815, %v3499
      %v3570 = vadd.f32 %v2816, %v3504
      %v3571 = vadd.f32 %v2817, %v3507
      %v3572 = vadd.f32 %v2818, %v3512
      %v3573 = vadd.f32 %v2819, %v3515
      %v3574 = vadd.f32 %v2820, %v3520
      %v3575 = vadd.f32 %v2821, %v3523
      %v3576 = vadd.f32 %v2822, %v3528
      %v3577 = vadd.f32 %v2823, %v3531
      %v3578 = vadd.f32 %v2824, %v3536
      %v3579 = vadd.f32 %v2825, %v3539
      %v3580 = vadd.f32 %v2826, %v3544
      %v3581 = vadd.f32 %v2827, %v3547
      %v3582 = vld [vmem:[%s796] sm:$0xe]
      %v3583 = vld [vmem:[%s796 + $0xc] sm:$0xe]
      %v3584 = vld [vmem:[%s796 + $0x18] sm:$0xe]
      %v3585 = vld [vmem:[%s796 + $0x24] sm:$0xe]
      %v3586 = vld [vmem:[%s796 + $0x30] sm:$0xe]
      %v3587 = vld [vmem:[%s796 + $0x3c] sm:$0xe]
      %v3588 = vld [vmem:[%s796 + $0x48] sm:$0xe]
      %v3589 = vld [vmem:[%s796 + $0x54] sm:$0xe]
      %v3590 = vld [vmem:[%s796 + $0x60] sm:$0xe]
      %v3591 = vld [vmem:[%s796 + $0x6c] sm:$0xe]
      %v3592 = vld [vmem:[%s796 + $0x78] sm:$0xe]
      %v3593 = vld [vmem:[%s796 + $0x84] sm:$0xe]
      %v3594 = vld [vmem:[%s796 + $0x90] sm:$0xe]
      %v3595 = vld [vmem:[%s796 + $0x9c] sm:$0xe]
      %v3596 = vld [vmem:[%s796 + $0xa8] sm:$0xe]
      %v3597 = vld [vmem:[%s796 + $0xb4] sm:$0xe]
      %v3646 = vrot.slane %v3582, 5
      %v3647 = vrot.slane %v3646, 4
      %v3648 = vrot.slane %v2829, 5
      %v3649 = vsel %vm2007, %v3647, %v3648
      %v3650 = vrot.slane %v3648, 4
      %v3651 = vrot.slane %v2830, 5
      %v3652 = vsel %vm2007, %v3650, %v3651
      %v3653 = vrot.slane %v3583, 5
      %v3654 = vrot.slane %v3653, 4
      %v3655 = vrot.slane %v2832, 5
      %v3656 = vsel %vm2007, %v3654, %v3655
      %v3657 = vrot.slane %v3655, 4
      %v3658 = vrot.slane %v2833, 5
      %v3659 = vsel %vm2007, %v3657, %v3658
      %v3660 = vrot.slane %v3584, 5
      %v3661 = vrot.slane %v3660, 4
      %v3662 = vrot.slane %v2835, 5
      %v3663 = vsel %vm2007, %v3661, %v3662
      %v3664 = vrot.slane %v3662, 4
      %v3665 = vrot.slane %v2836, 5
      %v3666 = vsel %vm2007, %v3664, %v3665
      %v3667 = vrot.slane %v3585, 5
      %v3668 = vrot.slane %v3667, 4
      %v3669 = vrot.slane %v2838, 5
      %v3670 = vsel %vm2007, %v3668, %v3669
      %v3671 = vrot.slane %v3669, 4
      %v3672 = vrot.slane %v2839, 5
      %v3673 = vsel %vm2007, %v3671, %v3672
      %v3674 = vrot.slane %v3586, 5
      %v3675 = vrot.slane %v3674, 4
      %v3676 = vrot.slane %v2841, 5
      %v3677 = vsel %vm2007, %v3675, %v3676
      %v3678 = vrot.slane %v3676, 4
      %v3679 = vrot.slane %v2842, 5
      %v3680 = vsel %vm2007, %v3678, %v3679
      %v3681 = vrot.slane %v3587, 5
      %v3682 = vrot.slane %v3681, 4
      %v3683 = vrot.slane %v2844, 5
      %v3684 = vsel %vm2007, %v3682, %v3683
      %v3685 = vrot.slane %v3683, 4
      %v3686 = vrot.slane %v2845, 5
      %v3687 = vsel %vm2007, %v3685, %v3686
      %v3688 = vrot.slane %v3588, 5
      %v3689 = vrot.slane %v3688, 4
      %v3690 = vrot.slane %v2847, 5
      %v3691 = vsel %vm2007, %v3689, %v3690
      %v3692 = vrot.slane %v3690, 4
      %v3693 = vrot.slane %v2848, 5
      %v3694 = vsel %vm2007, %v3692, %v3693
      %v3695 = vrot.slane %v3589, 5
      %v3696 = vrot.slane %v3695, 4
      %v3697 = vrot.slane %v2850, 5
      %v3698 = vsel %vm2007, %v3696, %v3697
      %v3699 = vrot.slane %v3697, 4
      %v3700 = vrot.slane %v2851, 5
      %v3701 = vsel %vm2007, %v3699, %v3700
      %v3702 = vrot.slane %v3590, 5
      %v3703 = vrot.slane %v3702, 4
      %v3704 = vrot.slane %v2853, 5
      %v3705 = vsel %vm2007, %v3703, %v3704
      %v3706 = vrot.slane %v3704, 4
      %v3707 = vrot.slane %v2854, 5
      %v3708 = vsel %vm2007, %v3706, %v3707
      %v3709 = vrot.slane %v3591, 5
      %v3710 = vrot.slane %v3709, 4
      %v3711 = vrot.slane %v2856, 5
      %v3712 = vsel %vm2007, %v3710, %v3711
      %v3713 = vrot.slane %v3711, 4
      %v3714 = vrot.slane %v2857, 5
      %v3715 = vsel %vm2007, %v3713, %v3714
      %v3716 = vrot.slane %v3592, 5
      %v3717 = vrot.slane %v3716, 4
      %v3718 = vrot.slane %v2859, 5
      %v3719 = vsel %vm2007, %v3717, %v3718
      %v3720 = vrot.slane %v3718, 4
      %v3721 = vrot.slane %v2860, 5
      %v3722 = vsel %vm2007, %v3720, %v3721
      %v3723 = vrot.slane %v3593, 5
      %v3724 = vrot.slane %v3723, 4
      %v3725 = vrot.slane %v2862, 5
      %v3726 = vsel %vm2007, %v3724, %v3725
      %v3727 = vrot.slane %v3725, 4
      %v3728 = vrot.slane %v2863, 5
      %v3729 = vsel %vm2007, %v3727, %v3728
      %v3730 = vrot.slane %v3594, 5
      %v3731 = vrot.slane %v3730, 4
      %v3732 = vrot.slane %v2865, 5
      %v3733 = vsel %vm2007, %v3731, %v3732
      %v3734 = vrot.slane %v3732, 4
      %v3735 = vrot.slane %v2866, 5
      %v3736 = vsel %vm2007, %v3734, %v3735
      %v3737 = vrot.slane %v3595, 5
      %v3738 = vrot.slane %v3737, 4
      %v3739 = vrot.slane %v2868, 5
      %v3740 = vsel %vm2007, %v3738, %v3739
      %v3741 = vrot.slane %v3739, 4
      %v3742 = vrot.slane %v2869, 5
      %v3743 = vsel %vm2007, %v3741, %v3742
      %v3744 = vrot.slane %v3596, 5
      %v3745 = vrot.slane %v3744, 4
      %v3746 = vrot.slane %v2871, 5
      %v3747 = vsel %vm2007, %v3745, %v3746
      %v3748 = vrot.slane %v3746, 4
      %v3749 = vrot.slane %v2872, 5
      %v3750 = vsel %vm2007, %v3748, %v3749
      %v3751 = vrot.slane %v3597, 5
      %v3752 = vrot.slane %v3751, 4
      %v3753 = vrot.slane %v2874, 5
      %v3754 = vsel %vm2007, %v3752, %v3753
      %v3755 = vrot.slane %v3753, 4
      %v3756 = vrot.slane %v2875, 5
      %v3757 = vsel %vm2007, %v3755, %v3756
      %s3758 = scalar_lea.vmem %s1, 320
      %v3759 = vld [vmem:[%s3758] sm:$0xf]
      %v3760 = vld [vmem:[%s3758 + $0x4] sm:$0xf]
      %v3761 = vld [vmem:[%s3758 + $0x8] sm:$0xf]
      %v3762 = vld [vmem:[%s3758 + $0xc] sm:$0xf]
      %v3763 = vld [vmem:[%s3758 + $0x10] sm:$0xf]
      %v3764 = vld [vmem:[%s3758 + $0x14] sm:$0xf]
      %v3765 = vld [vmem:[%s3758 + $0x18] sm:$0xf]
      %v3766 = vld [vmem:[%s3758 + $0x1c] sm:$0xf]
      %v3767 = vld [vmem:[%s3758 + $0x20] sm:$0xf]
      %v3768 = vld [vmem:[%s3758 + $0x24] sm:$0xf]
      %v3769 = vld [vmem:[%s3758 + $0x28] sm:$0xf]
      %v3770 = vld [vmem:[%s3758 + $0x2c] sm:$0xf]
      %v3771 = vld [vmem:[%s3758 + $0x30] sm:$0xf]
      %v3772 = vld [vmem:[%s3758 + $0x34] sm:$0xf]
      %v3773 = vld [vmem:[%s3758 + $0x38] sm:$0xf]
      %v3774 = vld [vmem:[%s3758 + $0x3c] sm:$0xf]
      %v3775 = vunpack.c.l.b16 %v3649
      %v3776 = vunpack.c.l.b16 %v3652
      %v3777 = vunpack.c.l.b16 %v3656
      %v3778 = vunpack.c.l.b16 %v3659
      %v3779 = vunpack.c.l.b16 %v3663
      %v3780 = vunpack.c.l.b16 %v3666
      %v3781 = vunpack.c.l.b16 %v3670
      %v3782 = vunpack.c.l.b16 %v3673
      %v3783 = vunpack.c.l.b16 %v3677
      %v3784 = vunpack.c.l.b16 %v3680
      %v3785 = vunpack.c.l.b16 %v3684
      %v3786 = vunpack.c.l.b16 %v3687
      %v3787 = vunpack.c.l.b16 %v3691
      %v3788 = vunpack.c.l.b16 %v3694
      %v3789 = vunpack.c.l.b16 %v3698
      %v3790 = vunpack.c.l.b16 %v3701
      %v3791 = vunpack.c.l.b16 %v3705
      %v3792 = vunpack.c.l.b16 %v3708
      %v3793 = vunpack.c.l.b16 %v3712
      %v3794 = vunpack.c.l.b16 %v3715
      %v3795 = vunpack.c.l.b16 %v3719
      %v3796 = vunpack.c.l.b16 %v3722
      %v3797 = vunpack.c.l.b16 %v3726
      %v3798 = vunpack.c.l.b16 %v3729
      %v3799 = vunpack.c.l.b16 %v3733
      %v3800 = vunpack.c.l.b16 %v3736
      %v3801 = vunpack.c.l.b16 %v3740
      %v3802 = vunpack.c.l.b16 %v3743
      %v3803 = vunpack.c.l.b16 %v3747
      %v3804 = vunpack.c.l.b16 %v3750
      %v3805 = vunpack.c.l.b16 %v3754
      %v3806 = vunpack.c.l.b16 %v3757
      %v3807 = vpack.c.b16 %v3776, %v3775
      %v3808 = vpack.c.b16 %v3778, %v3777
      %v3809 = vpack.c.b16 %v3780, %v3779
      %v3810 = vpack.c.b16 %v3782, %v3781
      %v3811 = vpack.c.b16 %v3784, %v3783
      %v3812 = vpack.c.b16 %v3786, %v3785
      %v3813 = vpack.c.b16 %v3788, %v3787
      %v3814 = vpack.c.b16 %v3790, %v3789
      %v3815 = vpack.c.b16 %v3792, %v3791
      %v3816 = vpack.c.b16 %v3794, %v3793
      %v3817 = vpack.c.b16 %v3796, %v3795
      %v3818 = vpack.c.b16 %v3798, %v3797
      %v3819 = vpack.c.b16 %v3800, %v3799
      %v3820 = vpack.c.b16 %v3802, %v3801
      %v3821 = vpack.c.b16 %v3804, %v3803
      %v3822 = vpack.c.b16 %v3806, %v3805
      %v3855 = vunpack.c.l.b16 %v3759
      %v3856 = vunpack.c.l.b16 %v3760
      %v3857 = vunpack.c.l.b16 %v3761
      %v3858 = vunpack.c.l.b16 %v3762
      %v3859 = vunpack.c.l.b16 %v3763
      %v3860 = vunpack.c.l.b16 %v3764
      %v3861 = vunpack.c.l.b16 %v3765
      %v3862 = vunpack.c.l.b16 %v3766
      %v3863 = vunpack.c.l.b16 %v3767
      %v3864 = vunpack.c.l.b16 %v3768
      %v3865 = vunpack.c.l.b16 %v3769
      %v3866 = vunpack.c.l.b16 %v3770
      %v3867 = vunpack.c.l.b16 %v3771
      %v3868 = vunpack.c.l.b16 %v3772
      %v3869 = vunpack.c.l.b16 %v3773
      %v3870 = vunpack.c.l.b16 %v3774
      %v3871 = vpack.c.b16 %v3856, %v3855
      %v3872 = vpack.c.b16 %v3858, %v3857
      %v3873 = vpack.c.b16 %v3860, %v3859
      %v3874 = vpack.c.b16 %v3862, %v3861
      %v3875 = vpack.c.b16 %v3864, %v3863
      %v3876 = vpack.c.b16 %v3866, %v3865
      %v3877 = vpack.c.b16 %v3868, %v3867
      %v3878 = vpack.c.b16 %v3870, %v3869
      %3887 = vmatprep.subr.bf16.mxu0 0
      %3888 = vmatpush1.bf16.msra.mxu0 %v3871
      %3889 = vmatprep.subr.bf16.mxu0 0
      %3890 = vmatpush1.bf16.msra.mxu0 %v3872
      %3891 = vmatprep.subr.bf16.mxu0 0
      %3892 = vmatpush1.bf16.msra.mxu0 %v3873
      %3893 = vmatprep.subr.bf16.mxu0 0
      %3894 = vmatpush1.bf16.msra.mxu0 %v3874
      %3895 = vmatprep.subr.bf16.mxu0 0
      %3896 = vmatpush1.bf16.msra.mxu0 %v3875
      %3897 = vmatprep.subr.bf16.mxu0 0
      %3898 = vmatpush1.bf16.msra.mxu0 %v3876
      %3899 = vmatprep.subr.bf16.mxu0 0
      %3900 = vmatpush1.bf16.msra.mxu0 %v3877
      %3901 = vmatprep.subr.bf16.mxu0 0
      %3902 = vmatpush1.bf16.msra.mxu0 %v3878
      %3903 = vmatprep.subr.bf16.mxu0 0
      %3904 = vmatpush1.bf16.msra.mxu0 0
      %3905 = vmatprep.subr.bf16.mxu0 0
      %3906 = vmatpush1.bf16.msra.mxu0 0
      %3907 = vmatprep.subr.bf16.mxu0 0
      %3908 = vmatpush1.bf16.msra.mxu0 0
      %3909 = vmatprep.subr.bf16.mxu0 0
      %3910 = vmatpush1.bf16.msra.mxu0 0
      %3911 = vmatprep.subr.bf16.mxu0 0
      %3912 = vmatpush1.bf16.msra.mxu0 0
      %3913 = vmatprep.subr.bf16.mxu0 0
      %3914 = vmatpush1.bf16.msra.mxu0 0
      %3915 = vmatprep.subr.bf16.mxu0 0
      %3916 = vmatpush1.bf16.msra.mxu0 0
      %3917 = vmatprep.subr.bf16.mxu0 0
      %3918 = vmatpush1.bf16.msra.mxu0 0
      %3919 = vmatprep.mubr.bf16.mxu0 0
      %3920 = vmatmul.mubr.bf16.gmra.mrb[0].mxu0 %v3807
      %v3921 = vpop.f32.mrb[0].mxu0
      %v3922 = vadd.f32 0.0, %v3921
      %v3923 = vpop.f32.mrb[0].mxu0
      %v3924 = vpop.f32.mrb[0].mxu0
      %v3925 = vadd.f32 0.0, %v3924
      %v3926 = vpop.f32.mrb[0].mxu0
      %3927 = vmatprep.mubr.bf16.mxu0 0
      %3928 = vmatmul.mubr.bf16.gmra.mrb[0].mxu0 %v3808
      %v3929 = vpop.f32.mrb[0].mxu0
      %v3930 = vadd.f32 0.0, %v3929
      %v3931 = vpop.f32.mrb[0].mxu0
      %v3932 = vpop.f32.mrb[0].mxu0
      %v3933 = vadd.f32 0.0, %v3932
      %v3934 = vpop.f32.mrb[0].mxu0
      %3935 = vmatprep.mubr.bf16.mxu0 0
      %3936 = vmatmul.mubr.bf16.gmra.mrb[0].mxu0 %v3809
      %v3937 = vpop.f32.mrb[0].mxu0
      %v3938 = vadd.f32 0.0, %v3937
      %v3939 = vpop.f32.mrb[0].mxu0
      %v3940 = vpop.f32.mrb[0].mxu0
      %v3941 = vadd.f32 0.0, %v3940
      %v3942 = vpop.f32.mrb[0].mxu0
      %3943 = vmatprep.mubr.bf16.mxu0 0
      %3944 = vmatmul.mubr.bf16.gmra.mrb[0].mxu0 %v3810
      %v3945 = vpop.f32.mrb[0].mxu0
      %v3946 = vadd.f32 0.0, %v3945
      %v3947 = vpop.f32.mrb[0].mxu0
      %v3948 = vpop.f32.mrb[0].mxu0
      %v3949 = vadd.f32 0.0, %v3948
      %v3950 = vpop.f32.mrb[0].mxu0
      %3951 = vmatprep.mubr.bf16.mxu0 0
      %3952 = vmatmul.mubr.bf16.gmra.mrb[0].mxu0 %v3811
      %v3953 = vpop.f32.mrb[0].mxu0
      %v3954 = vadd.f32 0.0, %v3953
      %v3955 = vpop.f32.mrb[0].mxu0
      %v3956 = vpop.f32.mrb[0].mxu0
      %v3957 = vadd.f32 0.0, %v3956
      %v3958 = vpop.f32.mrb[0].mxu0
      %3959 = vmatprep.mubr.bf16.mxu0 0
      %3960 = vmatmul.mubr.bf16.gmra.mrb[0].mxu0 %v3812
      %v3961 = vpop.f32.mrb[0].mxu0
      %v3962 = vadd.f32 0.0, %v3961
      %v3963 = vpop.f32.mrb[0].mxu0
      %v3964 = vpop.f32.mrb[0].mxu0
      %v3965 = vadd.f32 0.0, %v3964
      %v3966 = vpop.f32.mrb[0].mxu0
      %3967 = vmatprep.mubr.bf16.mxu0 0
      %3968 = vmatmul.mubr.bf16.gmra.mrb[0].mxu0 %v3813
      %v3969 = vpop.f32.mrb[0].mxu0
      %v3970 = vadd.f32 0.0, %v3969
      %v3971 = vpop.f32.mrb[0].mxu0
      %v3972 = vpop.f32.mrb[0].mxu0
      %v3973 = vadd.f32 0.0, %v3972
      %v3974 = vpop.f32.mrb[0].mxu0
      %3975 = vmatprep.mubr.bf16.mxu0 0
      %3976 = vmatmul.mubr.bf16.gmra.mrb[0].mxu0 %v3814
      %v3977 = vpop.f32.mrb[0].mxu0
      %v3978 = vadd.f32 0.0, %v3977
      %v3979 = vpop.f32.mrb[0].mxu0
      %v3980 = vpop.f32.mrb[0].mxu0
      %v3981 = vadd.f32 0.0, %v3980
      %v3982 = vpop.f32.mrb[0].mxu0
      %3983 = vmatprep.mubr.bf16.mxu0 0
      %3984 = vmatmul.mubr.bf16.gmra.mrb[0].mxu0 %v3815
      %v3985 = vpop.f32.mrb[0].mxu0
      %v3986 = vadd.f32 0.0, %v3985
      %v3987 = vpop.f32.mrb[0].mxu0
      %v3988 = vpop.f32.mrb[0].mxu0
      %v3989 = vadd.f32 0.0, %v3988
      %v3990 = vpop.f32.mrb[0].mxu0
      %3991 = vmatprep.mubr.bf16.mxu0 0
      %3992 = vmatmul.mubr.bf16.gmra.mrb[0].mxu0 %v3816
      %v3993 = vpop.f32.mrb[0].mxu0
      %v3994 = vadd.f32 0.0, %v3993
      %v3995 = vpop.f32.mrb[0].mxu0
      %v3996 = vpop.f32.mrb[0].mxu0
      %v3997 = vadd.f32 0.0, %v3996
      %v3998 = vpop.f32.mrb[0].mxu0
      %3999 = vmatprep.mubr.bf16.mxu0 0
      %4000 = vmatmul.mubr.bf16.gmra.mrb[0].mxu0 %v3817
      %v4001 = vpop.f32.mrb[0].mxu0
      %v4002 = vadd.f32 0.0, %v4001
      %v4003 = vpop.f32.mrb[0].mxu0
      %v4004 = vpop.f32.mrb[0].mxu0
      %v4005 = vadd.f32 0.0, %v4004
      %v4006 = vpop.f32.mrb[0].mxu0
      %4007 = vmatprep.mubr.bf16.mxu0 0
      %4008 = vmatmul.mubr.bf16.gmra.mrb[0].mxu0 %v3818
      %v4009 = vpop.f32.mrb[0].mxu0
      %v4010 = vadd.f32 0.0, %v4009
      %v4011 = vpop.f32.mrb[0].mxu0
      %v4012 = vpop.f32.mrb[0].mxu0
      %v4013 = vadd.f32 0.0, %v4012
      %v4014 = vpop.f32.mrb[0].mxu0
      %4015 = vmatprep.mubr.bf16.mxu0 0
      %4016 = vmatmul.mubr.bf16.gmra.mrb[0].mxu0 %v3819
      %v4017 = vpop.f32.mrb[0].mxu0
      %v4018 = vadd.f32 0.0, %v4017
      %v4019 = vpop.f32.mrb[0].mxu0
      %v4020 = vpop.f32.mrb[0].mxu0
      %v4021 = vadd.f32 0.0, %v4020
      %v4022 = vpop.f32.mrb[0].mxu0
      %4023 = vmatprep.mubr.bf16.mxu0 0
      %4024 = vmatmul.mubr.bf16.gmra.mrb[0].mxu0 %v3820
      %v4025 = vpop.f32.mrb[0].mxu0
      %v4026 = vadd.f32 0.0, %v4025
      %v4027 = vpop.f32.mrb[0].mxu0
      %v4028 = vpop.f32.mrb[0].mxu0
      %v4029 = vadd.f32 0.0, %v4028
      %v4030 = vpop.f32.mrb[0].mxu0
      %4031 = vmatprep.mubr.bf16.mxu0 0
      %4032 = vmatmul.mubr.bf16.gmra.mrb[0].mxu0 %v3821
      %v4033 = vpop.f32.mrb[0].mxu0
      %v4034 = vadd.f32 0.0, %v4033
      %v4035 = vpop.f32.mrb[0].mxu0
      %v4036 = vpop.f32.mrb[0].mxu0
      %v4037 = vadd.f32 0.0, %v4036
      %v4038 = vpop.f32.mrb[0].mxu0
      %4039 = vmatprep.mubr.bf16.mxu0 0
      %4040 = vmatmul.mubr.bf16.gmra.mrb[0].mxu0 %v3822
      %v4041 = vpop.f32.mrb[0].mxu0
      %v4042 = vadd.f32 0.0, %v4041
      %v4043 = vpop.f32.mrb[0].mxu0
      %v4044 = vpop.f32.mrb[0].mxu0
      %v4045 = vadd.f32 0.0, %v4044
      %v4046 = vpop.f32.mrb[0].mxu0
      %4047 = vdwg.mxu0
      %v4048 = vadd.f32 %v3550, %v3922
      %v4049 = vadd.f32 %v3551, %v3925
      %v4050 = vadd.f32 %v3552, %v3930
      %v4051 = vadd.f32 %v3553, %v3933
      %v4052 = vadd.f32 %v3554, %v3938
      %v4053 = vadd.f32 %v3555, %v3941
      %v4054 = vadd.f32 %v3556, %v3946
      %v4055 = vadd.f32 %v3557, %v3949
      %v4056 = vadd.f32 %v3558, %v3954
      %v4057 = vadd.f32 %v3559, %v3957
      %v4058 = vadd.f32 %v3560, %v3962
      %v4059 = vadd.f32 %v3561, %v3965
      %v4060 = vadd.f32 %v3562, %v3970
      %v4061 = vadd.f32 %v3563, %v3973
      %v4062 = vadd.f32 %v3564, %v3978
      %v4063 = vadd.f32 %v3565, %v3981
      %v4064 = vadd.f32 %v3566, %v3986
      %v4065 = vadd.f32 %v3567, %v3989
      %v4066 = vadd.f32 %v3568, %v3994
      %v4067 = vadd.f32 %v3569, %v3997
      %v4068 = vadd.f32 %v3570, %v4002
      %v4069 = vadd.f32 %v3571, %v4005
      %v4070 = vadd.f32 %v3572, %v4010
      %v4071 = vadd.f32 %v3573, %v4013
      %v4072 = vadd.f32 %v3574, %v4018
      %v4073 = vadd.f32 %v3575, %v4021
      %v4074 = vadd.f32 %v3576, %v4026
      %v4075 = vadd.f32 %v3577, %v4029
      %v4076 = vadd.f32 %v3578, %v4034
      %v4077 = vadd.f32 %v3579, %v4037
      %v4078 = vadd.f32 %v3580, %v4042
      %v4079 = vadd.f32 %v3581, %v4045
      %s4080 = scalar_lea.vmem [#allocation2], 24
      %v4081 = vld [vmem:[%s4080] sm:$0xf]
      %v4082 = vld [vmem:[%s4080 + $0x4] sm:$0xf]
      %v4083 = vld [vmem:[%s4080 + $0xc] sm:$0xf]
      %v4084 = vld [vmem:[%s4080 + $0x10] sm:$0xf]
      %v4085 = vld [vmem:[%s4080 + $0x18] sm:$0xf]
      %v4086 = vld [vmem:[%s4080 + $0x1c] sm:$0xf]
      %v4087 = vld [vmem:[%s4080 + $0x24] sm:$0xf]
      %v4088 = vld [vmem:[%s4080 + $0x28] sm:$0xf]
      %v4089 = vld [vmem:[%s4080 + $0x30] sm:$0xf]
      %v4090 = vld [vmem:[%s4080 + $0x34] sm:$0xf]
      %v4091 = vld [vmem:[%s4080 + $0x3c] sm:$0xf]
      %v4092 = vld [vmem:[%s4080 + $0x40] sm:$0xf]
      %v4093 = vld [vmem:[%s4080 + $0x48] sm:$0xf]
      %v4094 = vld [vmem:[%s4080 + $0x4c] sm:$0xf]
      %v4095 = vld [vmem:[%s4080 + $0x54] sm:$0xf]
      %v4096 = vld [vmem:[%s4080 + $0x58] sm:$0xf]
      %v4097 = vld [vmem:[%s4080 + $0x60] sm:$0xf]
      %v4098 = vld [vmem:[%s4080 + $0x64] sm:$0xf]
      %v4099 = vld [vmem:[%s4080 + $0x6c] sm:$0xf]
      %v4100 = vld [vmem:[%s4080 + $0x70] sm:$0xf]
      %v4101 = vld [vmem:[%s4080 + $0x78] sm:$0xf]
      %v4102 = vld [vmem:[%s4080 + $0x7c] sm:$0xf]
      %v4103 = vld [vmem:[%s4080 + $0x84] sm:$0xf]
      %v4104 = vld [vmem:[%s4080 + $0x88] sm:$0xf]
      %v4105 = vld [vmem:[%s4080 + $0x90] sm:$0xf]
      %v4106 = vld [vmem:[%s4080 + $0x94] sm:$0xf]
      %v4107 = vld [vmem:[%s4080 + $0x9c] sm:$0xf]
      %v4108 = vld [vmem:[%s4080 + $0xa0] sm:$0xf]
      %v4109 = vld [vmem:[%s4080 + $0xa8] sm:$0xf]
      %v4110 = vld [vmem:[%s4080 + $0xac] sm:$0xf]
      %v4111 = vld [vmem:[%s4080 + $0xb4] sm:$0xf]
      %v4112 = vld [vmem:[%s4080 + $0xb8] sm:$0xf]
      %s4113 = scalar_lea.vmem %s1, 384
      %v4114 = vld [vmem:[%s4113] sm:$0xf]
      %v4115 = vld [vmem:[%s4113 + $0x4] sm:$0xf]
      %v4116 = vld [vmem:[%s4113 + $0x8] sm:$0xf]
      %v4117 = vld [vmem:[%s4113 + $0xc] sm:$0xf]
      %v4118 = vld [vmem:[%s4113 + $0x10] sm:$0xf]
      %v4119 = vld [vmem:[%s4113 + $0x14] sm:$0xf]
      %v4120 = vld [vmem:[%s4113 + $0x18] sm:$0xf]
      %v4121 = vld [vmem:[%s4113 + $0x1c] sm:$0xf]
      %v4122 = vld [vmem:[%s4113 + $0x20] sm:$0xf]
      %v4123 = vld [vmem:[%s4113 + $0x24] sm:$0xf]
      %v4124 = vld [vmem:[%s4113 + $0x28] sm:$0xf]
      %v4125 = vld [vmem:[%s4113 + $0x2c] sm:$0xf]
      %v4126 = vld [vmem:[%s4113 + $0x30] sm:$0xf]
      %v4127 = vld [vmem:[%s4113 + $0x34] sm:$0xf]
      %v4128 = vld [vmem:[%s4113 + $0x38] sm:$0xf]
      %v4129 = vld [vmem:[%s4113 + $0x3c] sm:$0xf]
      %v4162 = vunpack.c.l.b16 %v4081
      %v4163 = vunpack.c.l.b16 %v4082
      %v4164 = vunpack.c.l.b16 %v4083
      %v4165 = vunpack.c.l.b16 %v4084
      %v4166 = vunpack.c.l.b16 %v4085
      %v4167 = vunpack.c.l.b16 %v4086
      %v4168 = vunpack.c.l.b16 %v4087
      %v4169 = vunpack.c.l.b16 %v4088
      %v4170 = vunpack.c.l.b16 %v4089
      %v4171 = vunpack.c.l.b16 %v4090
      %v4172 = vunpack.c.l.b16 %v4091
      %v4173 = vunpack.c.l.b16 %v4092
      %v4174 = vunpack.c.l.b16 %v4093
      %v4175 = vunpack.c.l.b16 %v4094
      %v4176 = vunpack.c.l.b16 %v4095
      %v4177 = vunpack.c.l.b16 %v4096
      %v4178 = vunpack.c.l.b16 %v4097
      %v4179 = vunpack.c.l.b16 %v4098
      %v4180 = vunpack.c.l.b16 %v4099
      %v4181 = vunpack.c.l.b16 %v4100
      %v4182 = vunpack.c.l.b16 %v4101
      %v4183 = vunpack.c.l.b16 %v4102
      %v4184 = vunpack.c.l.b16 %v4103
      %v4185 = vunpack.c.l.b16 %v4104
      %v4186 = vunpack.c.l.b16 %v4105
      %v4187 = vunpack.c.l.b16 %v4106
      %v4188 = vunpack.c.l.b16 %v4107
      %v4189 = vunpack.c.l.b16 %v4108
      %v4190 = vunpack.c.l.b16 %v4109
      %v4191 = vunpack.c.l.b16 %v4110
      %v4192 = vunpack.c.l.b16 %v4111
      %v4193 = vunpack.c.l.b16 %v4112
      %v4194 = vpack.c.b16 %v4163, %v4162
      %v4195 = vpack.c.b16 %v4165, %v4164
      %v4196 = vpack.c.b16 %v4167, %v4166
      %v4197 = vpack.c.b16 %v4169, %v4168
      %v4198 = vpack.c.b16 %v4171, %v4170
      %v4199 = vpack.c.b16 %v4173, %v4172
      %v4200 = vpack.c.b16 %v4175, %v4174
      %v4201 = vpack.c.b16 %v4177, %v4176
      %v4202 = vpack.c.b16 %v4179, %v4178
      %v4203 = vpack.c.b16 %v4181, %v4180
      %v4204 = vpack.c.b16 %v4183, %v4182
      %v4205 = vpack.c.b16 %v4185, %v4184
      %v4206 = vpack.c.b16 %v4187, %v4186
      %v4207 = vpack.c.b16 %v4189, %v4188
      %v4208 = vpack.c.b16 %v4191, %v4190
      %v4209 = vpack.c.b16 %v4193, %v4192
      %v4242 = vunpack.c.l.b16 %v4114
      %v4243 = vunpack.c.l.b16 %v4115
      %v4244 = vunpack.c.l.b16 %v4116
      %v4245 = vunpack.c.l.b16 %v4117
      %v4246 = vunpack.c.l.b16 %v4118
      %v4247 = vunpack.c.l.b16 %v4119
      %v4248 = vunpack.c.l.b16 %v4120
      %v4249 = vunpack.c.l.b16 %v4121
      %v4250 = vunpack.c.l.b16 %v4122
      %v4251 = vunpack.c.l.b16 %v4123
      %v4252 = vunpack.c.l.b16 %v4124
      %v4253 = vunpack.c.l.b16 %v4125
      %v4254 = vunpack.c.l.b16 %v4126
      %v4255 = vunpack.c.l.b16 %v4127
      %v4256 = vunpack.c.l.b16 %v4128
      %v4257 = vunpack.c.l.b16 %v4129
      %v4258 = vpack.c.b16 %v4243, %v4242
      %v4259 = vpack.c.b16 %v4245, %v4244
      %v4260 = vpack.c.b16 %v4247, %v4246
      %v4261 = vpack.c.b16 %v4249, %v4248
      %v4262 = vpack.c.b16 %v4251, %v4250
      %v4263 = vpack.c.b16 %v4253, %v4252
      %v4264 = vpack.c.b16 %v4255, %v4254
      %v4265 = vpack.c.b16 %v4257, %v4256
      %4274 = vmatprep.subr.bf16.mxu0 0
      %4275 = vmatpush1.bf16.msra.mxu0 %v4258
      %4276 = vmatprep.subr.bf16.mxu0 0
      %4277 = vmatpush1.bf16.msra.mxu0 %v4259
      %4278 = vmatprep.subr.bf16.mxu0 0
      %4279 = vmatpush1.bf16.msra.mxu0 %v4260
      %4280 = vmatprep.subr.bf16.mxu0 0
      %4281 = vmatpush1.bf16.msra.mxu0 %v4261
      %4282 = vmatprep.subr.bf16.mxu0 0
      %4283 = vmatpush1.bf16.msra.mxu0 %v4262
      %4284 = vmatprep.subr.bf16.mxu0 0
      %4285 = vmatpush1.bf16.msra.mxu0 %v4263
      %4286 = vmatprep.subr.bf16.mxu0 0
      %4287 = vmatpush1.bf16.msra.mxu0 %v4264
      %4288 = vmatprep.subr.bf16.mxu0 0
      %4289 = vmatpush1.bf16.msra.mxu0 %v4265
      %4290 = vmatprep.subr.bf16.mxu0 0
      %4291 = vmatpush1.bf16.msra.mxu0 0
      %4292 = vmatprep.subr.bf16.mxu0 0
      %4293 = vmatpush1.bf16.msra.mxu0 0
      %4294 = vmatprep.subr.bf16.mxu0 0
      %4295 = vmatpush1.bf16.msra.mxu0 0
      %4296 = vmatprep.subr.bf16.mxu0 0
      %4297 = vmatpush1.bf16.msra.mxu0 0
      %4298 = vmatprep.subr.bf16.mxu0 0
      %4299 = vmatpush1.bf16.msra.mxu0 0
      %4300 = vmatprep.subr.bf16.mxu0 0
      %4301 = vmatpush1.bf16.msra.mxu0 0
      %4302 = vmatprep.subr.bf16.mxu0 0
      %4303 = vmatpush1.bf16.msra.mxu0 0
      %4304 = vmatprep.subr.bf16.mxu0 0
      %4305 = vmatpush1.bf16.msra.mxu0 0
      %4306 = vmatprep.mubr.bf16.mxu0 0
      %4307 = vmatmul.mubr.bf16.gmra.mrb[0].mxu0 %v4194
      %v4308 = vpop.f32.mrb[0].mxu0
      %v4309 = vadd.f32 0.0, %v4308
      %v4310 = vpop.f32.mrb[0].mxu0
      %v4311 = vpop.f32.mrb[0].mxu0
      %v4312 = vadd.f32 0.0, %v4311
      %v4313 = vpop.f32.mrb[0].mxu0
      %4314 = vmatprep.mubr.bf16.mxu0 0
      %4315 = vmatmul.mubr.bf16.gmra.mrb[0].mxu0 %v4195
      %v4316 = vpop.f32.mrb[0].mxu0
      %v4317 = vadd.f32 0.0, %v4316
      %v4318 = vpop.f32.mrb[0].mxu0
      %v4319 = vpop.f32.mrb[0].mxu0
      %v4320 = vadd.f32 0.0, %v4319
      %v4321 = vpop.f32.mrb[0].mxu0
      %4322 = vmatprep.mubr.bf16.mxu0 0
      %4323 = vmatmul.mubr.bf16.gmra.mrb[0].mxu0 %v4196
      %v4324 = vpop.f32.mrb[0].mxu0
      %v4325 = vadd.f32 0.0, %v4324
      %v4326 = vpop.f32.mrb[0].mxu0
      %v4327 = vpop.f32.mrb[0].mxu0
      %v4328 = vadd.f32 0.0, %v4327
      %v4329 = vpop.f32.mrb[0].mxu0
      %4330 = vmatprep.mubr.bf16.mxu0 0
      %4331 = vmatmul.mubr.bf16.gmra.mrb[0].mxu0 %v4197
      %v4332 = vpop.f32.mrb[0].mxu0
      %v4333 = vadd.f32 0.0, %v4332
      %v4334 = vpop.f32.mrb[0].mxu0
      %v4335 = vpop.f32.mrb[0].mxu0
      %v4336 = vadd.f32 0.0, %v4335
      %v4337 = vpop.f32.mrb[0].mxu0
      %4338 = vmatprep.mubr.bf16.mxu0 0
      %4339 = vmatmul.mubr.bf16.gmra.mrb[0].mxu0 %v4198
      %v4340 = vpop.f32.mrb[0].mxu0
      %v4341 = vadd.f32 0.0, %v4340
      %v4342 = vpop.f32.mrb[0].mxu0
      %v4343 = vpop.f32.mrb[0].mxu0
      %v4344 = vadd.f32 0.0, %v4343
      %v4345 = vpop.f32.mrb[0].mxu0
      %4346 = vmatprep.mubr.bf16.mxu0 0
      %4347 = vmatmul.mubr.bf16.gmra.mrb[0].mxu0 %v4199
      %v4348 = vpop.f32.mrb[0].mxu0
      %v4349 = vadd.f32 0.0, %v4348
      %v4350 = vpop.f32.mrb[0].mxu0
      %v4351 = vpop.f32.mrb[0].mxu0
      %v4352 = vadd.f32 0.0, %v4351
      %v4353 = vpop.f32.mrb[0].mxu0
      %4354 = vmatprep.mubr.bf16.mxu0 0
      %4355 = vmatmul.mubr.bf16.gmra.mrb[0].mxu0 %v4200
      %v4356 = vpop.f32.mrb[0].mxu0
      %v4357 = vadd.f32 0.0, %v4356
      %v4358 = vpop.f32.mrb[0].mxu0
      %v4359 = vpop.f32.mrb[0].mxu0
      %v4360 = vadd.f32 0.0, %v4359
      %v4361 = vpop.f32.mrb[0].mxu0
      %4362 = vmatprep.mubr.bf16.mxu0 0
      %4363 = vmatmul.mubr.bf16.gmra.mrb[0].mxu0 %v4201
      %v4364 = vpop.f32.mrb[0].mxu0
      %v4365 = vadd.f32 0.0, %v4364
      %v4366 = vpop.f32.mrb[0].mxu0
      %v4367 = vpop.f32.mrb[0].mxu0
      %v4368 = vadd.f32 0.0, %v4367
      %v4369 = vpop.f32.mrb[0].mxu0
      %4370 = vmatprep.mubr.bf16.mxu0 0
      %4371 = vmatmul.mubr.bf16.gmra.mrb[0].mxu0 %v4202
      %v4372 = vpop.f32.mrb[0].mxu0
      %v4373 = vadd.f32 0.0, %v4372
      %v4374 = vpop.f32.mrb[0].mxu0
      %v4375 = vpop.f32.mrb[0].mxu0
      %v4376 = vadd.f32 0.0, %v4375
      %v4377 = vpop.f32.mrb[0].mxu0
      %4378 = vmatprep.mubr.bf16.mxu0 0
      %4379 = vmatmul.mubr.bf16.gmra.mrb[0].mxu0 %v4203
      %v4380 = vpop.f32.mrb[0].mxu0
      %v4381 = vadd.f32 0.0, %v4380
      %v4382 = vpop.f32.mrb[0].mxu0
      %v4383 = vpop.f32.mrb[0].mxu0
      %v4384 = vadd.f32 0.0, %v4383
      %v4385 = vpop.f32.mrb[0].mxu0
      %4386 = vmatprep.mubr.bf16.mxu0 0
      %4387 = vmatmul.mubr.bf16.gmra.mrb[0].mxu0 %v4204
      %v4388 = vpop.f32.mrb[0].mxu0
      %v4389 = vadd.f32 0.0, %v4388
      %v4390 = vpop.f32.mrb[0].mxu0
      %v4391 = vpop.f32.mrb[0].mxu0
      %v4392 = vadd.f32 0.0, %v4391
      %v4393 = vpop.f32.mrb[0].mxu0
      %4394 = vmatprep.mubr.bf16.mxu0 0
      %4395 = vmatmul.mubr.bf16.gmra.mrb[0].mxu0 %v4205
      %v4396 = vpop.f32.mrb[0].mxu0
      %v4397 = vadd.f32 0.0, %v4396
      %v4398 = vpop.f32.mrb[0].mxu0
      %v4399 = vpop.f32.mrb[0].mxu0
      %v4400 = vadd.f32 0.0, %v4399
      %v4401 = vpop.f32.mrb[0].mxu0
      %4402 = vmatprep.mubr.bf16.mxu0 0
      %4403 = vmatmul.mubr.bf16.gmra.mrb[0].mxu0 %v4206
      %v4404 = vpop.f32.mrb[0].mxu0
      %v4405 = vadd.f32 0.0, %v4404
      %v4406 = vpop.f32.mrb[0].mxu0
      %v4407 = vpop.f32.mrb[0].mxu0
      %v4408 = vadd.f32 0.0, %v4407
      %v4409 = vpop.f32.mrb[0].mxu0
      %4410 = vmatprep.mubr.bf16.mxu0 0
      %4411 = vmatmul.mubr.bf16.gmra.mrb[0].mxu0 %v4207
      %v4412 = vpop.f32.mrb[0].mxu0
      %v4413 = vadd.f32 0.0, %v4412
      %v4414 = vpop.f32.mrb[0].mxu0
      %v4415 = vpop.f32.mrb[0].mxu0
      %v4416 = vadd.f32 0.0, %v4415
      %v4417 = vpop.f32.mrb[0].mxu0
      %4418 = vmatprep.mubr.bf16.mxu0 0
      %4419 = vmatmul.mubr.bf16.gmra.mrb[0].mxu0 %v4208
      %v4420 = vpop.f32.mrb[0].mxu0
      %v4421 = vadd.f32 0.0, %v4420
      %v4422 = vpop.f32.mrb[0].mxu0
      %v4423 = vpop.f32.mrb[0].mxu0
      %v4424 = vadd.f32 0.0, %v4423
      %v4425 = vpop.f32.mrb[0].mxu0
      %4426 = vmatprep.mubr.bf16.mxu0 0
      %4427 = vmatmul.mubr.bf16.gmra.mrb[0].mxu0 %v4209
      %v4428 = vpop.f32.mrb[0].mxu0
      %v4429 = vadd.f32 0.0, %v4428
      %v4430 = vpop.f32.mrb[0].mxu0
      %v4431 = vpop.f32.mrb[0].mxu0
      %v4432 = vadd.f32 0.0, %v4431
      %v4433 = vpop.f32.mrb[0].mxu0
      %4434 = vdwg.mxu0
      %v4435 = vadd.f32 %v4048, %v4309
      %v4436 = vadd.f32 %v4049, %v4312
      %v4437 = vadd.f32 %v4050, %v4317
      %v4438 = vadd.f32 %v4051, %v4320
      %v4439 = vadd.f32 %v4052, %v4325
      %v4440 = vadd.f32 %v4053, %v4328
      %v4441 = vadd.f32 %v4054, %v4333
      %v4442 = vadd.f32 %v4055, %v4336
      %v4443 = vadd.f32 %v4056, %v4341
      %v4444 = vadd.f32 %v4057, %v4344
      %v4445 = vadd.f32 %v4058, %v4349
      %v4446 = vadd.f32 %v4059, %v4352
      %v4447 = vadd.f32 %v4060, %v4357
      %v4448 = vadd.f32 %v4061, %v4360
      %v4449 = vadd.f32 %v4062, %v4365
      %v4450 = vadd.f32 %v4063, %v4368
      %v4451 = vadd.f32 %v4064, %v4373
      %v4452 = vadd.f32 %v4065, %v4376
      %v4453 = vadd.f32 %v4066, %v4381
      %v4454 = vadd.f32 %v4067, %v4384
      %v4455 = vadd.f32 %v4068, %v4389
      %v4456 = vadd.f32 %v4069, %v4392
      %v4457 = vadd.f32 %v4070, %v4397
      %v4458 = vadd.f32 %v4071, %v4400
      %v4459 = vadd.f32 %v4072, %v4405
      %v4460 = vadd.f32 %v4073, %v4408
      %v4461 = vadd.f32 %v4074, %v4413
      %v4462 = vadd.f32 %v4075, %v4416
      %v4463 = vadd.f32 %v4076, %v4421
      %v4464 = vadd.f32 %v4077, %v4424
      %v4465 = vadd.f32 %v4078, %v4429
      %v4466 = vadd.f32 %v4079, %v4432
      %v4467 = vld [vmem:[%s4080] sm:$0xf]
      %v4468 = vld [vmem:[%s4080 + $0x4] sm:$0xf]
      %v4469 = vld [vmem:[%s4080 + $0x8] sm:$0x1]
      %v4470 = vld [vmem:[%s4080 + $0xc] sm:$0xf]
      %v4471 = vld [vmem:[%s4080 + $0x10] sm:$0xf]
      %v4472 = vld [vmem:[%s4080 + $0x14] sm:$0x1]
      %v4473 = vld [vmem:[%s4080 + $0x18] sm:$0xf]
      %v4474 = vld [vmem:[%s4080 + $0x1c] sm:$0xf]
      %v4475 = vld [vmem:[%s4080 + $0x20] sm:$0x1]
      %v4476 = vld [vmem:[%s4080 + $0x24] sm:$0xf]
      %v4477 = vld [vmem:[%s4080 + $0x28] sm:$0xf]
      %v4478 = vld [vmem:[%s4080 + $0x2c] sm:$0x1]
      %v4479 = vld [vmem:[%s4080 + $0x30] sm:$0xf]
      %v4480 = vld [vmem:[%s4080 + $0x34] sm:$0xf]
      %v4481 = vld [vmem:[%s4080 + $0x38] sm:$0x1]
      %v4482 = vld [vmem:[%s4080 + $0x3c] sm:$0xf]
      %v4483 = vld [vmem:[%s4080 + $0x40] sm:$0xf]
      %v4484 = vld [vmem:[%s4080 + $0x44] sm:$0x1]
      %v4485 = vld [vmem:[%s4080 + $0x48] sm:$0xf]
      %v4486 = vld [vmem:[%s4080 + $0x4c] sm:$0xf]
      %v4487 = vld [vmem:[%s4080 + $0x50] sm:$0x1]
      %v4488 = vld [vmem:[%s4080 + $0x54] sm:$0xf]
      %v4489 = vld [vmem:[%s4080 + $0x58] sm:$0xf]
      %v4490 = vld [vmem:[%s4080 + $0x5c] sm:$0x1]
      %v4491 = vld [vmem:[%s4080 + $0x60] sm:$0xf]
      %v4492 = vld [vmem:[%s4080 + $0x64] sm:$0xf]
      %v4493 = vld [vmem:[%s4080 + $0x68] sm:$0x1]
      %v4494 = vld [vmem:[%s4080 + $0x6c] sm:$0xf]
      %v4495 = vld [vmem:[%s4080 + $0x70] sm:$0xf]
      %v4496 = vld [vmem:[%s4080 + $0x74] sm:$0x1]
      %v4497 = vld [vmem:[%s4080 + $0x78] sm:$0xf]
      %v4498 = vld [vmem:[%s4080 + $0x7c] sm:$0xf]
      %v4499 = vld [vmem:[%s4080 + $0x80] sm:$0x1]
      %v4500 = vld [vmem:[%s4080 + $0x84] sm:$0xf]
      %v4501 = vld [vmem:[%s4080 + $0x88] sm:$0xf]
      %v4502 = vld [vmem:[%s4080 + $0x8c] sm:$0x1]
      %v4503 = vld [vmem:[%s4080 + $0x90] sm:$0xf]
      %v4504 = vld [vmem:[%s4080 + $0x94] sm:$0xf]
      %v4505 = vld [vmem:[%s4080 + $0x98] sm:$0x1]
      %v4506 = vld [vmem:[%s4080 + $0x9c] sm:$0xf]
      %v4507 = vld [vmem:[%s4080 + $0xa0] sm:$0xf]
      %v4508 = vld [vmem:[%s4080 + $0xa4] sm:$0x1]
      %v4509 = vld [vmem:[%s4080 + $0xa8] sm:$0xf]
      %v4510 = vld [vmem:[%s4080 + $0xac] sm:$0xf]
      %v4511 = vld [vmem:[%s4080 + $0xb0] sm:$0x1]
      %v4512 = vld [vmem:[%s4080 + $0xb4] sm:$0xf]
      %v4513 = vld [vmem:[%s4080 + $0xb8] sm:$0xf]
      %v4514 = vld [vmem:[%s4080 + $0xbc] sm:$0x1]
      %v4516 = vshrl.u32 %v4467, 16
      %v4518 = vrot.slane %v4516, 4
      %v4519 = vshll.u32 %v4467, 16
      %v4521 = vrot.slane %v4519, 5
      %v4522 = vor.u32 %v4518, %v4521
      %v4523 = vrot.slane %v4522, 4
      %v4525 = vshll.u32 %v4468, 16
      %v4527 = vrot.slane %v4525, 5
      %v4528 = vsel %vm977, %v4523, %v4527
      %v4529 = vshrl.u32 %v4468, 16
      %v4531 = vrot.slane %v4529, 4
      %v4532 = vor.u32 %v4531, %v4527
      %v4533 = vrot.slane %v4532, 4
      %v4535 = vshll.u32 %v4469, 16
      %v4537 = vrot.slane %v4535, 5
      %v4538 = vsel %vm977, %v4533, %v4537
      %v4540 = vshrl.u32 %v4470, 16
      %v4542 = vrot.slane %v4540, 4
      %v4543 = vshll.u32 %v4470, 16
      %v4545 = vrot.slane %v4543, 5
      %v4546 = vor.u32 %v4542, %v4545
      %v4547 = vrot.slane %v4546, 4
      %v4549 = vshll.u32 %v4471, 16
      %v4551 = vrot.slane %v4549, 5
      %v4552 = vsel %vm977, %v4547, %v4551
      %v4553 = vshrl.u32 %v4471, 16
      %v4555 = vrot.slane %v4553, 4
      %v4556 = vor.u32 %v4555, %v4551
      %v4557 = vrot.slane %v4556, 4
      %v4559 = vshll.u32 %v4472, 16
      %v4561 = vrot.slane %v4559, 5
      %v4562 = vsel %vm977, %v4557, %v4561
      %v4564 = vshrl.u32 %v4473, 16
      %v4566 = vrot.slane %v4564, 4
      %v4567 = vshll.u32 %v4473, 16
      %v4569 = vrot.slane %v4567, 5
      %v4570 = vor.u32 %v4566, %v4569
      %v4571 = vrot.slane %v4570, 4
      %v4573 = vshll.u32 %v4474, 16
      %v4575 = vrot.slane %v4573, 5
      %v4576 = vsel %vm977, %v4571, %v4575
      %v4577 = vshrl.u32 %v4474, 16
      %v4579 = vrot.slane %v4577, 4
      %v4580 = vor.u32 %v4579, %v4575
      %v4581 = vrot.slane %v4580, 4
      %v4583 = vshll.u32 %v4475, 16
      %v4585 = vrot.slane %v4583, 5
      %v4586 = vsel %vm977, %v4581, %v4585
      %v4588 = vshrl.u32 %v4476, 16
      %v4590 = vrot.slane %v4588, 4
      %v4591 = vshll.u32 %v4476, 16
      %v4593 = vrot.slane %v4591, 5
      %v4594 = vor.u32 %v4590, %v4593
      %v4595 = vrot.slane %v4594, 4
      %v4597 = vshll.u32 %v4477, 16
      %v4599 = vrot.slane %v4597, 5
      %v4600 = vsel %vm977, %v4595, %v4599
      %v4601 = vshrl.u32 %v4477, 16
      %v4603 = vrot.slane %v4601, 4
      %v4604 = vor.u32 %v4603, %v4599
      %v4605 = vrot.slane %v4604, 4
      %v4607 = vshll.u32 %v4478, 16
      %v4609 = vrot.slane %v4607, 5
      %v4610 = vsel %vm977, %v4605, %v4609
      %v4612 = vshrl.u32 %v4479, 16
      %v4614 = vrot.slane %v4612, 4
      %v4615 = vshll.u32 %v4479, 16
      %v4617 = vrot.slane %v4615, 5
      %v4618 = vor.u32 %v4614, %v4617
      %v4619 = vrot.slane %v4618, 4
      %v4621 = vshll.u32 %v4480, 16
      %v4623 = vrot.slane %v4621, 5
      %v4624 = vsel %vm977, %v4619, %v4623
      %v4625 = vshrl.u32 %v4480, 16
      %v4627 = vrot.slane %v4625, 4
      %v4628 = vor.u32 %v4627, %v4623
      %v4629 = vrot.slane %v4628, 4
      %v4631 = vshll.u32 %v4481, 16
      %v4633 = vrot.slane %v4631, 5
      %v4634 = vsel %vm977, %v4629, %v4633
      %v4636 = vshrl.u32 %v4482, 16
      %v4638 = vrot.slane %v4636, 4
      %v4639 = vshll.u32 %v4482, 16
      %v4641 = vrot.slane %v4639, 5
      %v4642 = vor.u32 %v4638, %v4641
      %v4643 = vrot.slane %v4642, 4
      %v4645 = vshll.u32 %v4483, 16
      %v4647 = vrot.slane %v4645, 5
      %v4648 = vsel %vm977, %v4643, %v4647
      %v4649 = vshrl.u32 %v4483, 16
      %v4651 = vrot.slane %v4649, 4
      %v4652 = vor.u32 %v4651, %v4647
      %v4653 = vrot.slane %v4652, 4
      %v4655 = vshll.u32 %v4484, 16
      %v4657 = vrot.slane %v4655, 5
      %v4658 = vsel %vm977, %v4653, %v4657
      %v4660 = vshrl.u32 %v4485, 16
      %v4662 = vrot.slane %v4660, 4
      %v4663 = vshll.u32 %v4485, 16
      %v4665 = vrot.slane %v4663, 5
      %v4666 = vor.u32 %v4662, %v4665
      %v4667 = vrot.slane %v4666, 4
      %v4669 = vshll.u32 %v4486, 16
      %v4671 = vrot.slane %v4669, 5
      %v4672 = vsel %vm977, %v4667, %v4671
      %v4673 = vshrl.u32 %v4486, 16
      %v4675 = vrot.slane %v4673, 4
      %v4676 = vor.u32 %v4675, %v4671
      %v4677 = vrot.slane %v4676, 4
      %v4679 = vshll.u32 %v4487, 16
      %v4681 = vrot.slane %v4679, 5
      %v4682 = vsel %vm977, %v4677, %v4681
      %v4684 = vshrl.u32 %v4488, 16
      %v4686 = vrot.slane %v4684, 4
      %v4687 = vshll.u32 %v4488, 16
      %v4689 = vrot.slane %v4687, 5
      %v4690 = vor.u32 %v4686, %v4689
      %v4691 = vrot.slane %v4690, 4
      %v4693 = vshll.u32 %v4489, 16
      %v4695 = vrot.slane %v4693, 5
      %v4696 = vsel %vm977, %v4691, %v4695
      %v4697 = vshrl.u32 %v4489, 16
      %v4699 = vrot.slane %v4697, 4
      %v4700 = vor.u32 %v4699, %v4695
      %v4701 = vrot.slane %v4700, 4
      %v4703 = vshll.u32 %v4490, 16
      %v4705 = vrot.slane %v4703, 5
      %v4706 = vsel %vm977, %v4701, %v4705
      %v4708 = vshrl.u32 %v4491, 16
      %v4710 = vrot.slane %v4708, 4
      %v4711 = vshll.u32 %v4491, 16
      %v4713 = vrot.slane %v4711, 5
      %v4714 = vor.u32 %v4710, %v4713
      %v4715 = vrot.slane %v4714, 4
      %v4717 = vshll.u32 %v4492, 16
      %v4719 = vrot.slane %v4717, 5
      %v4720 = vsel %vm977, %v4715, %v4719
      %v4721 = vshrl.u32 %v4492, 16
      %v4723 = vrot.slane %v4721, 4
      %v4724 = vor.u32 %v4723, %v4719
      %v4725 = vrot.slane %v4724, 4
      %v4727 = vshll.u32 %v4493, 16
      %v4729 = vrot.slane %v4727, 5
      %v4730 = vsel %vm977, %v4725, %v4729
      %v4732 = vshrl.u32 %v4494, 16
      %v4734 = vrot.slane %v4732, 4
      %v4735 = vshll.u32 %v4494, 16
      %v4737 = vrot.slane %v4735, 5
      %v4738 = vor.u32 %v4734, %v4737
      %v4739 = vrot.slane %v4738, 4
      %v4741 = vshll.u32 %v4495, 16
      %v4743 = vrot.slane %v4741, 5
      %v4744 = vsel %vm977, %v4739, %v4743
      %v4745 = vshrl.u32 %v4495, 16
      %v4747 = vrot.slane %v4745, 4
      %v4748 = vor.u32 %v4747, %v4743
      %v4749 = vrot.slane %v4748, 4
      %v4751 = vshll.u32 %v4496, 16
      %v4753 = vrot.slane %v4751, 5
      %v4754 = vsel %vm977, %v4749, %v4753
      %v4756 = vshrl.u32 %v4497, 16
      %v4758 = vrot.slane %v4756, 4
      %v4759 = vshll.u32 %v4497, 16
      %v4761 = vrot.slane %v4759, 5
      %v4762 = vor.u32 %v4758, %v4761
      %v4763 = vrot.slane %v4762, 4
      %v4765 = vshll.u32 %v4498, 16
      %v4767 = vrot.slane %v4765, 5
      %v4768 = vsel %vm977, %v4763, %v4767
      %v4769 = vshrl.u32 %v4498, 16
      %v4771 = vrot.slane %v4769, 4
      %v4772 = vor.u32 %v4771, %v4767
      %v4773 = vrot.slane %v4772, 4
      %v4775 = vshll.u32 %v4499, 16
      %v4777 = vrot.slane %v4775, 5
      %v4778 = vsel %vm977, %v4773, %v4777
      %v4780 = vshrl.u32 %v4500, 16
      %v4782 = vrot.slane %v4780, 4
      %v4783 = vshll.u32 %v4500, 16
      %v4785 = vrot.slane %v4783, 5
      %v4786 = vor.u32 %v4782, %v4785
      %v4787 = vrot.slane %v4786, 4
      %v4789 = vshll.u32 %v4501, 16
      %v4791 = vrot.slane %v4789, 5
      %v4792 = vsel %vm977, %v4787, %v4791
      %v4793 = vshrl.u32 %v4501, 16
      %v4795 = vrot.slane %v4793, 4
      %v4796 = vor.u32 %v4795, %v4791
      %v4797 = vrot.slane %v4796, 4
      %v4799 = vshll.u32 %v4502, 16
      %v4801 = vrot.slane %v4799, 5
      %v4802 = vsel %vm977, %v4797, %v4801
      %v4804 = vshrl.u32 %v4503, 16
      %v4806 = vrot.slane %v4804, 4
      %v4807 = vshll.u32 %v4503, 16
      %v4809 = vrot.slane %v4807, 5
      %v4810 = vor.u32 %v4806, %v4809
      %v4811 = vrot.slane %v4810, 4
      %v4813 = vshll.u32 %v4504, 16
      %v4815 = vrot.slane %v4813, 5
      %v4816 = vsel %vm977, %v4811, %v4815
      %v4817 = vshrl.u32 %v4504, 16
      %v4819 = vrot.slane %v4817, 4
      %v4820 = vor.u32 %v4819, %v4815
      %v4821 = vrot.slane %v4820, 4
      %v4823 = vshll.u32 %v4505, 16
      %v4825 = vrot.slane %v4823, 5
      %v4826 = vsel %vm977, %v4821, %v4825
      %v4828 = vshrl.u32 %v4506, 16
      %v4830 = vrot.slane %v4828, 4
      %v4831 = vshll.u32 %v4506, 16
      %v4833 = vrot.slane %v4831, 5
      %v4834 = vor.u32 %v4830, %v4833
      %v4835 = vrot.slane %v4834, 4
      %v4837 = vshll.u32 %v4507, 16
      %v4839 = vrot.slane %v4837, 5
      %v4840 = vsel %vm977, %v4835, %v4839
      %v4841 = vshrl.u32 %v4507, 16
      %v4843 = vrot.slane %v4841, 4
      %v4844 = vor.u32 %v4843, %v4839
      %v4845 = vrot.slane %v4844, 4
      %v4847 = vshll.u32 %v4508, 16
      %v4849 = vrot.slane %v4847, 5
      %v4850 = vsel %vm977, %v4845, %v4849
      %v4852 = vshrl.u32 %v4509, 16
      %v4854 = vrot.slane %v4852, 4
      %v4855 = vshll.u32 %v4509, 16
      %v4857 = vrot.slane %v4855, 5
      %v4858 = vor.u32 %v4854, %v4857
      %v4859 = vrot.slane %v4858, 4
      %v4861 = vshll.u32 %v4510, 16
      %v4863 = vrot.slane %v4861, 5
      %v4864 = vsel %vm977, %v4859, %v4863
      %v4865 = vshrl.u32 %v4510, 16
      %v4867 = vrot.slane %v4865, 4
      %v4868 = vor.u32 %v4867, %v4863
      %v4869 = vrot.slane %v4868, 4
      %v4871 = vshll.u32 %v4511, 16
      %v4873 = vrot.slane %v4871, 5
      %v4874 = vsel %vm977, %v4869, %v4873
      %v4876 = vshrl.u32 %v4512, 16
      %v4878 = vrot.slane %v4876, 4
      %v4879 = vshll.u32 %v4512, 16
      %v4881 = vrot.slane %v4879, 5
      %v4882 = vor.u32 %v4878, %v4881
      %v4883 = vrot.slane %v4882, 4
      %v4885 = vshll.u32 %v4513, 16
      %v4887 = vrot.slane %v4885, 5
      %v4888 = vsel %vm977, %v4883, %v4887
      %v4889 = vshrl.u32 %v4513, 16
      %v4891 = vrot.slane %v4889, 4
      %v4892 = vor.u32 %v4891, %v4887
      %v4893 = vrot.slane %v4892, 4
      %v4895 = vshll.u32 %v4514, 16
      %v4897 = vrot.slane %v4895, 5
      %v4898 = vsel %vm977, %v4893, %v4897
      %s4899 = scalar_lea.vmem %s1, 448
      %v4900 = vld [vmem:[%s4899] sm:$0xf]
      %v4901 = vld [vmem:[%s4899 + $0x4] sm:$0xf]
      %v4902 = vld [vmem:[%s4899 + $0x8] sm:$0xf]
      %v4903 = vld [vmem:[%s4899 + $0xc] sm:$0xf]
      %v4904 = vld [vmem:[%s4899 + $0x10] sm:$0xf]
      %v4905 = vld [vmem:[%s4899 + $0x14] sm:$0xf]
      %v4906 = vld [vmem:[%s4899 + $0x18] sm:$0xf]
      %v4907 = vld [vmem:[%s4899 + $0x1c] sm:$0xf]
      %v4908 = vld [vmem:[%s4899 + $0x20] sm:$0xf]
      %v4909 = vld [vmem:[%s4899 + $0x24] sm:$0xf]
      %v4910 = vld [vmem:[%s4899 + $0x28] sm:$0xf]
      %v4911 = vld [vmem:[%s4899 + $0x2c] sm:$0xf]
      %v4912 = vld [vmem:[%s4899 + $0x30] sm:$0xf]
      %v4913 = vld [vmem:[%s4899 + $0x34] sm:$0xf]
      %v4914 = vld [vmem:[%s4899 + $0x38] sm:$0xf]
      %v4915 = vld [vmem:[%s4899 + $0x3c] sm:$0xf]
      %v4916 = vunpack.c.l.b16 %v4528
      %v4917 = vunpack.c.l.b16 %v4538
      %v4918 = vunpack.c.l.b16 %v4552
      %v4919 = vunpack.c.l.b16 %v4562
      %v4920 = vunpack.c.l.b16 %v4576
      %v4921 = vunpack.c.l.b16 %v4586
      %v4922 = vunpack.c.l.b16 %v4600
      %v4923 = vunpack.c.l.b16 %v4610
      %v4924 = vunpack.c.l.b16 %v4624
      %v4925 = vunpack.c.l.b16 %v4634
      %v4926 = vunpack.c.l.b16 %v4648
      %v4927 = vunpack.c.l.b16 %v4658
      %v4928 = vunpack.c.l.b16 %v4672
      %v4929 = vunpack.c.l.b16 %v4682
      %v4930 = vunpack.c.l.b16 %v4696
      %v4931 = vunpack.c.l.b16 %v4706
      %v4932 = vunpack.c.l.b16 %v4720
      %v4933 = vunpack.c.l.b16 %v4730
      %v4934 = vunpack.c.l.b16 %v4744
      %v4935 = vunpack.c.l.b16 %v4754
      %v4936 = vunpack.c.l.b16 %v4768
      %v4937 = vunpack.c.l.b16 %v4778
      %v4938 = vunpack.c.l.b16 %v4792
      %v4939 = vunpack.c.l.b16 %v4802
      %v4940 = vunpack.c.l.b16 %v4816
      %v4941 = vunpack.c.l.b16 %v4826
      %v4942 = vunpack.c.l.b16 %v4840
      %v4943 = vunpack.c.l.b16 %v4850
      %v4944 = vunpack.c.l.b16 %v4864
      %v4945 = vunpack.c.l.b16 %v4874
      %v4946 = vunpack.c.l.b16 %v4888
      %v4947 = vunpack.c.l.b16 %v4898
      %v4948 = vpack.c.b16 %v4917, %v4916
      %v4949 = vpack.c.b16 %v4919, %v4918
      %v4950 = vpack.c.b16 %v4921, %v4920
      %v4951 = vpack.c.b16 %v4923, %v4922
      %v4952 = vpack.c.b16 %v4925, %v4924
      %v4953 = vpack.c.b16 %v4927, %v4926
      %v4954 = vpack.c.b16 %v4929, %v4928
      %v4955 = vpack.c.b16 %v4931, %v4930
      %v4956 = vpack.c.b16 %v4933, %v4932
      %v4957 = vpack.c.b16 %v4935, %v4934
      %v4958 = vpack.c.b16 %v4937, %v4936
      %v4959 = vpack.c.b16 %v4939, %v4938
      %v4960 = vpack.c.b16 %v4941, %v4940
      %v4961 = vpack.c.b16 %v4943, %v4942
      %v4962 = vpack.c.b16 %v4945, %v4944
      %v4963 = vpack.c.b16 %v4947, %v4946
      %v4996 = vunpack.c.l.b16 %v4900
      %v4997 = vunpack.c.l.b16 %v4901
      %v4998 = vunpack.c.l.b16 %v4902
      %v4999 = vunpack.c.l.b16 %v4903
      %v5000 = vunpack.c.l.b16 %v4904
      %v5001 = vunpack.c.l.b16 %v4905
      %v5002 = vunpack.c.l.b16 %v4906
      %v5003 = vunpack.c.l.b16 %v4907
      %v5004 = vunpack.c.l.b16 %v4908
      %v5005 = vunpack.c.l.b16 %v4909
      %v5006 = vunpack.c.l.b16 %v4910
      %v5007 = vunpack.c.l.b16 %v4911
      %v5008 = vunpack.c.l.b16 %v4912
      %v5009 = vunpack.c.l.b16 %v4913
      %v5010 = vunpack.c.l.b16 %v4914
      %v5011 = vunpack.c.l.b16 %v4915
      %v5012 = vpack.c.b16 %v4997, %v4996
      %v5013 = vpack.c.b16 %v4999, %v4998
      %v5014 = vpack.c.b16 %v5001, %v5000
      %v5015 = vpack.c.b16 %v5003, %v5002
      %v5016 = vpack.c.b16 %v5005, %v5004
      %v5017 = vpack.c.b16 %v5007, %v5006
      %v5018 = vpack.c.b16 %v5009, %v5008
      %v5019 = vpack.c.b16 %v5011, %v5010
      %5028 = vmatprep.subr.bf16.mxu0 0
      %5029 = vmatpush1.bf16.msra.mxu0 %v5012
      %5030 = vmatprep.subr.bf16.mxu0 0
      %5031 = vmatpush1.bf16.msra.mxu0 %v5013
      %5032 = vmatprep.subr.bf16.mxu0 0
      %5033 = vmatpush1.bf16.msra.mxu0 %v5014
      %5034 = vmatprep.subr.bf16.mxu0 0
      %5035 = vmatpush1.bf16.msra.mxu0 %v5015
      %5036 = vmatprep.subr.bf16.mxu0 0
      %5037 = vmatpush1.bf16.msra.mxu0 %v5016
      %5038 = vmatprep.subr.bf16.mxu0 0
      %5039 = vmatpush1.bf16.msra.mxu0 %v5017
      %5040 = vmatprep.subr.bf16.mxu0 0
      %5041 = vmatpush1.bf16.msra.mxu0 %v5018
      %5042 = vmatprep.subr.bf16.mxu0 0
      %5043 = vmatpush1.bf16.msra.mxu0 %v5019
      %5044 = vmatprep.subr.bf16.mxu0 0
      %5045 = vmatpush1.bf16.msra.mxu0 0
      %5046 = vmatprep.subr.bf16.mxu0 0
      %5047 = vmatpush1.bf16.msra.mxu0 0
      %5048 = vmatprep.subr.bf16.mxu0 0
      %5049 = vmatpush1.bf16.msra.mxu0 0
      %5050 = vmatprep.subr.bf16.mxu0 0
      %5051 = vmatpush1.bf16.msra.mxu0 0
      %5052 = vmatprep.subr.bf16.mxu0 0
      %5053 = vmatpush1.bf16.msra.mxu0 0
      %5054 = vmatprep.subr.bf16.mxu0 0
      %5055 = vmatpush1.bf16.msra.mxu0 0
      %5056 = vmatprep.subr.bf16.mxu0 0
      %5057 = vmatpush1.bf16.msra.mxu0 0
      %5058 = vmatprep.subr.bf16.mxu0 0
      %5059 = vmatpush1.bf16.msra.mxu0 0
      %5060 = vmatprep.mubr.bf16.mxu0 0
      %5061 = vmatmul.mubr.bf16.gmra.mrb[0].mxu0 %v4948
      %v5062 = vpop.f32.mrb[0].mxu0
      %v5063 = vadd.f32 0.0, %v5062
      %v5064 = vpop.f32.mrb[0].mxu0
      %v5065 = vpop.f32.mrb[0].mxu0
      %v5066 = vadd.f32 0.0, %v5065
      %v5067 = vpop.f32.mrb[0].mxu0
      %5068 = vmatprep.mubr.bf16.mxu0 0
      %5069 = vmatmul.mubr.bf16.gmra.mrb[0].mxu0 %v4949
      %v5070 = vpop.f32.mrb[0].mxu0
      %v5071 = vadd.f32 0.0, %v5070
      %v5072 = vpop.f32.mrb[0].mxu0
      %v5073 = vpop.f32.mrb[0].mxu0
      %v5074 = vadd.f32 0.0, %v5073
      %v5075 = vpop.f32.mrb[0].mxu0
      %5076 = vmatprep.mubr.bf16.mxu0 0
      %5077 = vmatmul.mubr.bf16.gmra.mrb[0].mxu0 %v4950
      %v5078 = vpop.f32.mrb[0].mxu0
      %v5079 = vadd.f32 0.0, %v5078
      %v5080 = vpop.f32.mrb[0].mxu0
      %v5081 = vpop.f32.mrb[0].mxu0
      %v5082 = vadd.f32 0.0, %v5081
      %v5083 = vpop.f32.mrb[0].mxu0
      %5084 = vmatprep.mubr.bf16.mxu0 0
      %5085 = vmatmul.mubr.bf16.gmra.mrb[0].mxu0 %v4951
      %v5086 = vpop.f32.mrb[0].mxu0
      %v5087 = vadd.f32 0.0, %v5086
      %v5088 = vpop.f32.mrb[0].mxu0
      %v5089 = vpop.f32.mrb[0].mxu0
      %v5090 = vadd.f32 0.0, %v5089
      %v5091 = vpop.f32.mrb[0].mxu0
      %5092 = vmatprep.mubr.bf16.mxu0 0
      %5093 = vmatmul.mubr.bf16.gmra.mrb[0].mxu0 %v4952
      %v5094 = vpop.f32.mrb[0].mxu0
      %v5095 = vadd.f32 0.0, %v5094
      %v5096 = vpop.f32.mrb[0].mxu0
      %v5097 = vpop.f32.mrb[0].mxu0
      %v5098 = vadd.f32 0.0, %v5097
      %v5099 = vpop.f32.mrb[0].mxu0
      %5100 = vmatprep.mubr.bf16.mxu0 0
      %5101 = vmatmul.mubr.bf16.gmra.mrb[0].mxu0 %v4953
      %v5102 = vpop.f32.mrb[0].mxu0
      %v5103 = vadd.f32 0.0, %v5102
      %v5104 = vpop.f32.mrb[0].mxu0
      %v5105 = vpop.f32.mrb[0].mxu0
      %v5106 = vadd.f32 0.0, %v5105
      %v5107 = vpop.f32.mrb[0].mxu0
      %5108 = vmatprep.mubr.bf16.mxu0 0
      %5109 = vmatmul.mubr.bf16.gmra.mrb[0].mxu0 %v4954
      %v5110 = vpop.f32.mrb[0].mxu0
      %v5111 = vadd.f32 0.0, %v5110
      %v5112 = vpop.f32.mrb[0].mxu0
      %v5113 = vpop.f32.mrb[0].mxu0
      %v5114 = vadd.f32 0.0, %v5113
      %v5115 = vpop.f32.mrb[0].mxu0
      %5116 = vmatprep.mubr.bf16.mxu0 0
      %5117 = vmatmul.mubr.bf16.gmra.mrb[0].mxu0 %v4955
      %v5118 = vpop.f32.mrb[0].mxu0
      %v5119 = vadd.f32 0.0, %v5118
      %v5120 = vpop.f32.mrb[0].mxu0
      %v5121 = vpop.f32.mrb[0].mxu0
      %v5122 = vadd.f32 0.0, %v5121
      %v5123 = vpop.f32.mrb[0].mxu0
      %5124 = vmatprep.mubr.bf16.mxu0 0
      %5125 = vmatmul.mubr.bf16.gmra.mrb[0].mxu0 %v4956
      %v5126 = vpop.f32.mrb[0].mxu0
      %v5127 = vadd.f32 0.0, %v5126
      %v5128 = vpop.f32.mrb[0].mxu0
      %v5129 = vpop.f32.mrb[0].mxu0
      %v5130 = vadd.f32 0.0, %v5129
      %v5131 = vpop.f32.mrb[0].mxu0
      %5132 = vmatprep.mubr.bf16.mxu0 0
      %5133 = vmatmul.mubr.bf16.gmra.mrb[0].mxu0 %v4957
      %v5134 = vpop.f32.mrb[0].mxu0
      %v5135 = vadd.f32 0.0, %v5134
      %v5136 = vpop.f32.mrb[0].mxu0
      %v5137 = vpop.f32.mrb[0].mxu0
      %v5138 = vadd.f32 0.0, %v5137
      %v5139 = vpop.f32.mrb[0].mxu0
      %5140 = vmatprep.mubr.bf16.mxu0 0
      %5141 = vmatmul.mubr.bf16.gmra.mrb[0].mxu0 %v4958
      %v5142 = vpop.f32.mrb[0].mxu0
      %v5143 = vadd.f32 0.0, %v5142
      %v5144 = vpop.f32.mrb[0].mxu0
      %v5145 = vpop.f32.mrb[0].mxu0
      %v5146 = vadd.f32 0.0, %v5145
      %v5147 = vpop.f32.mrb[0].mxu0
      %5148 = vmatprep.mubr.bf16.mxu0 0
      %5149 = vmatmul.mubr.bf16.gmra.mrb[0].mxu0 %v4959
      %v5150 = vpop.f32.mrb[0].mxu0
      %v5151 = vadd.f32 0.0, %v5150
      %v5152 = vpop.f32.mrb[0].mxu0
      %v5153 = vpop.f32.mrb[0].mxu0
      %v5154 = vadd.f32 0.0, %v5153
      %v5155 = vpop.f32.mrb[0].mxu0
      %5156 = vmatprep.mubr.bf16.mxu0 0
      %5157 = vmatmul.mubr.bf16.gmra.mrb[0].mxu0 %v4960
      %v5158 = vpop.f32.mrb[0].mxu0
      %v5159 = vadd.f32 0.0, %v5158
      %v5160 = vpop.f32.mrb[0].mxu0
      %v5161 = vpop.f32.mrb[0].mxu0
      %v5162 = vadd.f32 0.0, %v5161
      %v5163 = vpop.f32.mrb[0].mxu0
      %5164 = vmatprep.mubr.bf16.mxu0 0
      %5165 = vmatmul.mubr.bf16.gmra.mrb[0].mxu0 %v4961
      %v5166 = vpop.f32.mrb[0].mxu0
      %v5167 = vadd.f32 0.0, %v5166
      %v5168 = vpop.f32.mrb[0].mxu0
      %v5169 = vpop.f32.mrb[0].mxu0
      %v5170 = vadd.f32 0.0, %v5169
      %v5171 = vpop.f32.mrb[0].mxu0
      %5172 = vmatprep.mubr.bf16.mxu0 0
      %5173 = vmatmul.mubr.bf16.gmra.mrb[0].mxu0 %v4962
      %v5174 = vpop.f32.mrb[0].mxu0
      %v5175 = vadd.f32 0.0, %v5174
      %v5176 = vpop.f32.mrb[0].mxu0
      %v5177 = vpop.f32.mrb[0].mxu0
      %v5178 = vadd.f32 0.0, %v5177
      %v5179 = vpop.f32.mrb[0].mxu0
      %5180 = vmatprep.mubr.bf16.mxu0 0
      %5181 = vmatmul.mubr.bf16.gmra.mrb[0].mxu0 %v4963
      %v5182 = vpop.f32.mrb[0].mxu0
      %v5183 = vadd.f32 0.0, %v5182
      %v5184 = vpop.f32.mrb[0].mxu0
      %v5185 = vpop.f32.mrb[0].mxu0
      %v5186 = vadd.f32 0.0, %v5185
      %v5187 = vpop.f32.mrb[0].mxu0
      %5188 = vdwg.mxu0
      %v5189 = vadd.f32 %v4435, %v5063
      %v5190 = vadd.f32 %v4436, %v5066
      %v5191 = vadd.f32 %v4437, %v5071
      %v5192 = vadd.f32 %v4438, %v5074
      %v5193 = vadd.f32 %v4439, %v5079
      %v5194 = vadd.f32 %v4440, %v5082
      %v5195 = vadd.f32 %v4441, %v5087
      %v5196 = vadd.f32 %v4442, %v5090
      %v5197 = vadd.f32 %v4443, %v5095
      %v5198 = vadd.f32 %v4444, %v5098
      %v5199 = vadd.f32 %v4445, %v5103
      %v5200 = vadd.f32 %v4446, %v5106
      %v5201 = vadd.f32 %v4447, %v5111
      %v5202 = vadd.f32 %v4448, %v5114
      %v5203 = vadd.f32 %v4449, %v5119
      %v5204 = vadd.f32 %v4450, %v5122
      %v5205 = vadd.f32 %v4451, %v5127
      %v5206 = vadd.f32 %v4452, %v5130
      %v5207 = vadd.f32 %v4453, %v5135
      %v5208 = vadd.f32 %v4454, %v5138
      %v5209 = vadd.f32 %v4455, %v5143
      %v5210 = vadd.f32 %v4456, %v5146
      %v5211 = vadd.f32 %v4457, %v5151
      %v5212 = vadd.f32 %v4458, %v5154
      %v5213 = vadd.f32 %v4459, %v5159
      %v5214 = vadd.f32 %v4460, %v5162
      %v5215 = vadd.f32 %v4461, %v5167
      %v5216 = vadd.f32 %v4462, %v5170
      %v5217 = vadd.f32 %v4463, %v5175
      %v5218 = vadd.f32 %v4464, %v5178
      %v5219 = vadd.f32 %v4465, %v5183
      %v5220 = vadd.f32 %v4466, %v5186
      %v5221 = vld [vmem:[%s4080] sm:$0xe]
      %v5222 = vld [vmem:[%s4080 + $0xc] sm:$0xe]
      %v5223 = vld [vmem:[%s4080 + $0x18] sm:$0xe]
      %v5224 = vld [vmem:[%s4080 + $0x24] sm:$0xe]
      %v5225 = vld [vmem:[%s4080 + $0x30] sm:$0xe]
      %v5226 = vld [vmem:[%s4080 + $0x3c] sm:$0xe]
      %v5227 = vld [vmem:[%s4080 + $0x48] sm:$0xe]
      %v5228 = vld [vmem:[%s4080 + $0x54] sm:$0xe]
      %v5229 = vld [vmem:[%s4080 + $0x60] sm:$0xe]
      %v5230 = vld [vmem:[%s4080 + $0x6c] sm:$0xe]
      %v5231 = vld [vmem:[%s4080 + $0x78] sm:$0xe]
      %v5232 = vld [vmem:[%s4080 + $0x84] sm:$0xe]
      %v5233 = vld [vmem:[%s4080 + $0x90] sm:$0xe]
      %v5234 = vld [vmem:[%s4080 + $0x9c] sm:$0xe]
      %v5235 = vld [vmem:[%s4080 + $0xa8] sm:$0xe]
      %v5236 = vld [vmem:[%s4080 + $0xb4] sm:$0xe]
      %v5285 = vrot.slane %v5221, 5
      %v5286 = vrot.slane %v5285, 4
      %v5287 = vrot.slane %v4468, 5
      %v5288 = vsel %vm2007, %v5286, %v5287
      %v5289 = vrot.slane %v5287, 4
      %v5290 = vrot.slane %v4469, 5
      %v5291 = vsel %vm2007, %v5289, %v5290
      %v5292 = vrot.slane %v5222, 5
      %v5293 = vrot.slane %v5292, 4
      %v5294 = vrot.slane %v4471, 5
      %v5295 = vsel %vm2007, %v5293, %v5294
      %v5296 = vrot.slane %v5294, 4
      %v5297 = vrot.slane %v4472, 5
      %v5298 = vsel %vm2007, %v5296, %v5297
      %v5299 = vrot.slane %v5223, 5
      %v5300 = vrot.slane %v5299, 4
      %v5301 = vrot.slane %v4474, 5
      %v5302 = vsel %vm2007, %v5300, %v5301
      %v5303 = vrot.slane %v5301, 4
      %v5304 = vrot.slane %v4475, 5
      %v5305 = vsel %vm2007, %v5303, %v5304
      %v5306 = vrot.slane %v5224, 5
      %v5307 = vrot.slane %v5306, 4
      %v5308 = vrot.slane %v4477, 5
      %v5309 = vsel %vm2007, %v5307, %v5308
      %v5310 = vrot.slane %v5308, 4
      %v5311 = vrot.slane %v4478, 5
      %v5312 = vsel %vm2007, %v5310, %v5311
      %v5313 = vrot.slane %v5225, 5
      %v5314 = vrot.slane %v5313, 4
      %v5315 = vrot.slane %v4480, 5
      %v5316 = vsel %vm2007, %v5314, %v5315
      %v5317 = vrot.slane %v5315, 4
      %v5318 = vrot.slane %v4481, 5
      %v5319 = vsel %vm2007, %v5317, %v5318
      %v5320 = vrot.slane %v5226, 5
      %v5321 = vrot.slane %v5320, 4
      %v5322 = vrot.slane %v4483, 5
      %v5323 = vsel %vm2007, %v5321, %v5322
      %v5324 = vrot.slane %v5322, 4
      %v5325 = vrot.slane %v4484, 5
      %v5326 = vsel %vm2007, %v5324, %v5325
      %v5327 = vrot.slane %v5227, 5
      %v5328 = vrot.slane %v5327, 4
      %v5329 = vrot.slane %v4486, 5
      %v5330 = vsel %vm2007, %v5328, %v5329
      %v5331 = vrot.slane %v5329, 4
      %v5332 = vrot.slane %v4487, 5
      %v5333 = vsel %vm2007, %v5331, %v5332
      %v5334 = vrot.slane %v5228, 5
      %v5335 = vrot.slane %v5334, 4
      %v5336 = vrot.slane %v4489, 5
      %v5337 = vsel %vm2007, %v5335, %v5336
      %v5338 = vrot.slane %v5336, 4
      %v5339 = vrot.slane %v4490, 5
      %v5340 = vsel %vm2007, %v5338, %v5339
      %v5341 = vrot.slane %v5229, 5
      %v5342 = vrot.slane %v5341, 4
      %v5343 = vrot.slane %v4492, 5
      %v5344 = vsel %vm2007, %v5342, %v5343
      %v5345 = vrot.slane %v5343, 4
      %v5346 = vrot.slane %v4493, 5
      %v5347 = vsel %vm2007, %v5345, %v5346
      %v5348 = vrot.slane %v5230, 5
      %v5349 = vrot.slane %v5348, 4
      %v5350 = vrot.slane %v4495, 5
      %v5351 = vsel %vm2007, %v5349, %v5350
      %v5352 = vrot.slane %v5350, 4
      %v5353 = vrot.slane %v4496, 5
      %v5354 = vsel %vm2007, %v5352, %v5353
      %v5355 = vrot.slane %v5231, 5
      %v5356 = vrot.slane %v5355, 4
      %v5357 = vrot.slane %v4498, 5
      %v5358 = vsel %vm2007, %v5356, %v5357
      %v5359 = vrot.slane %v5357, 4
      %v5360 = vrot.slane %v4499, 5
      %v5361 = vsel %vm2007, %v5359, %v5360
      %v5362 = vrot.slane %v5232, 5
      %v5363 = vrot.slane %v5362, 4
      %v5364 = vrot.slane %v4501, 5
      %v5365 = vsel %vm2007, %v5363, %v5364
      %v5366 = vrot.slane %v5364, 4
      %v5367 = vrot.slane %v4502, 5
      %v5368 = vsel %vm2007, %v5366, %v5367
      %v5369 = vrot.slane %v5233, 5
      %v5370 = vrot.slane %v5369, 4
      %v5371 = vrot.slane %v4504, 5
      %v5372 = vsel %vm2007, %v5370, %v5371
      %v5373 = vrot.slane %v5371, 4
      %v5374 = vrot.slane %v4505, 5
      %v5375 = vsel %vm2007, %v5373, %v5374
      %v5376 = vrot.slane %v5234, 5
      %v5377 = vrot.slane %v5376, 4
      %v5378 = vrot.slane %v4507, 5
      %v5379 = vsel %vm2007, %v5377, %v5378
      %v5380 = vrot.slane %v5378, 4
      %v5381 = vrot.slane %v4508, 5
      %v5382 = vsel %vm2007, %v5380, %v5381
      %v5383 = vrot.slane %v5235, 5
      %v5384 = vrot.slane %v5383, 4
      %v5385 = vrot.slane %v4510, 5
      %v5386 = vsel %vm2007, %v5384, %v5385
      %v5387 = vrot.slane %v5385, 4
      %v5388 = vrot.slane %v4511, 5
      %v5389 = vsel %vm2007, %v5387, %v5388
      %v5390 = vrot.slane %v5236, 5
      %v5391 = vrot.slane %v5390, 4
      %v5392 = vrot.slane %v4513, 5
      %v5393 = vsel %vm2007, %v5391, %v5392
      %v5394 = vrot.slane %v5392, 4
      %v5395 = vrot.slane %v4514, 5
      %v5396 = vsel %vm2007, %v5394, %v5395
      %s5397 = scalar_lea.vmem %s1, 512
      %v5398 = vld [vmem:[%s5397] sm:$0xf]
      %v5399 = vld [vmem:[%s5397 + $0x4] sm:$0xf]
      %v5400 = vld [vmem:[%s5397 + $0x8] sm:$0xf]
      %v5401 = vld [vmem:[%s5397 + $0xc] sm:$0xf]
      %v5402 = vld [vmem:[%s5397 + $0x10] sm:$0xf]
      %v5403 = vld [vmem:[%s5397 + $0x14] sm:$0xf]
      %v5404 = vld [vmem:[%s5397 + $0x18] sm:$0xf]
      %v5405 = vld [vmem:[%s5397 + $0x1c] sm:$0xf]
      %v5406 = vld [vmem:[%s5397 + $0x20] sm:$0xf]
      %v5407 = vld [vmem:[%s5397 + $0x24] sm:$0xf]
      %v5408 = vld [vmem:[%s5397 + $0x28] sm:$0xf]
      %v5409 = vld [vmem:[%s5397 + $0x2c] sm:$0xf]
      %v5410 = vld [vmem:[%s5397 + $0x30] sm:$0xf]
      %v5411 = vld [vmem:[%s5397 + $0x34] sm:$0xf]
      %v5412 = vld [vmem:[%s5397 + $0x38] sm:$0xf]
      %v5413 = vld [vmem:[%s5397 + $0x3c] sm:$0xf]
      %v5414 = vunpack.c.l.b16 %v5288
      %v5415 = vunpack.c.l.b16 %v5291
      %v5416 = vunpack.c.l.b16 %v5295
      %v5417 = vunpack.c.l.b16 %v5298
      %v5418 = vunpack.c.l.b16 %v5302
      %v5419 = vunpack.c.l.b16 %v5305
      %v5420 = vunpack.c.l.b16 %v5309
      %v5421 = vunpack.c.l.b16 %v5312
      %v5422 = vunpack.c.l.b16 %v5316
      %v5423 = vunpack.c.l.b16 %v5319
      %v5424 = vunpack.c.l.b16 %v5323
      %v5425 = vunpack.c.l.b16 %v5326
      %v5426 = vunpack.c.l.b16 %v5330
      %v5427 = vunpack.c.l.b16 %v5333
      %v5428 = vunpack.c.l.b16 %v5337
      %v5429 = vunpack.c.l.b16 %v5340
      %v5430 = vunpack.c.l.b16 %v5344
      %v5431 = vunpack.c.l.b16 %v5347
      %v5432 = vunpack.c.l.b16 %v5351
      %v5433 = vunpack.c.l.b16 %v5354
      %v5434 = vunpack.c.l.b16 %v5358
      %v5435 = vunpack.c.l.b16 %v5361
      %v5436 = vunpack.c.l.b16 %v5365
      %v5437 = vunpack.c.l.b16 %v5368
      %v5438 = vunpack.c.l.b16 %v5372
      %v5439 = vunpack.c.l.b16 %v5375
      %v5440 = vunpack.c.l.b16 %v5379
      %v5441 = vunpack.c.l.b16 %v5382
      %v5442 = vunpack.c.l.b16 %v5386
      %v5443 = vunpack.c.l.b16 %v5389
      %v5444 = vunpack.c.l.b16 %v5393
      %v5445 = vunpack.c.l.b16 %v5396
      %v5446 = vpack.c.b16 %v5415, %v5414
      %v5447 = vpack.c.b16 %v5417, %v5416
      %v5448 = vpack.c.b16 %v5419, %v5418
      %v5449 = vpack.c.b16 %v5421, %v5420
      %v5450 = vpack.c.b16 %v5423, %v5422
      %v5451 = vpack.c.b16 %v5425, %v5424
      %v5452 = vpack.c.b16 %v5427, %v5426
      %v5453 = vpack.c.b16 %v5429, %v5428
      %v5454 = vpack.c.b16 %v5431, %v5430
      %v5455 = vpack.c.b16 %v5433, %v5432
      %v5456 = vpack.c.b16 %v5435, %v5434
      %v5457 = vpack.c.b16 %v5437, %v5436
      %v5458 = vpack.c.b16 %v5439, %v5438
      %v5459 = vpack.c.b16 %v5441, %v5440
      %v5460 = vpack.c.b16 %v5443, %v5442
      %v5461 = vpack.c.b16 %v5445, %v5444
      %v5494 = vunpack.c.l.b16 %v5398
      %v5495 = vunpack.c.l.b16 %v5399
      %v5496 = vunpack.c.l.b16 %v5400
      %v5497 = vunpack.c.l.b16 %v5401
      %v5498 = vunpack.c.l.b16 %v5402
      %v5499 = vunpack.c.l.b16 %v5403
      %v5500 = vunpack.c.l.b16 %v5404
      %v5501 = vunpack.c.l.b16 %v5405
      %v5502 = vunpack.c.l.b16 %v5406
      %v5503 = vunpack.c.l.b16 %v5407
      %v5504 = vunpack.c.l.b16 %v5408
      %v5505 = vunpack.c.l.b16 %v5409
      %v5506 = vunpack.c.l.b16 %v5410
      %v5507 = vunpack.c.l.b16 %v5411
      %v5508 = vunpack.c.l.b16 %v5412
      %v5509 = vunpack.c.l.b16 %v5413
      %v5510 = vpack.c.b16 %v5495, %v5494
      %v5511 = vpack.c.b16 %v5497, %v5496
      %v5512 = vpack.c.b16 %v5499, %v5498
      %v5513 = vpack.c.b16 %v5501, %v5500
      %v5514 = vpack.c.b16 %v5503, %v5502
      %v5515 = vpack.c.b16 %v5505, %v5504
      %v5516 = vpack.c.b16 %v5507, %v5506
      %v5517 = vpack.c.b16 %v5509, %v5508
      %5526 = vmatprep.subr.bf16.mxu0 0
      %5527 = vmatpush1.bf16.msra.mxu0 %v5510
      %5528 = vmatprep.subr.bf16.mxu0 0
      %5529 = vmatpush1.bf16.msra.mxu0 %v5511
      %5530 = vmatprep.subr.bf16.mxu0 0
      %5531 = vmatpush1.bf16.msra.mxu0 %v5512
      %5532 = vmatprep.subr.bf16.mxu0 0
      %5533 = vmatpush1.bf16.msra.mxu0 %v5513
      %5534 = vmatprep.subr.bf16.mxu0 0
      %5535 = vmatpush1.bf16.msra.mxu0 %v5514
      %5536 = vmatprep.subr.bf16.mxu0 0
      %5537 = vmatpush1.bf16.msra.mxu0 %v5515
      %5538 = vmatprep.subr.bf16.mxu0 0
      %5539 = vmatpush1.bf16.msra.mxu0 %v5516
      %5540 = vmatprep.subr.bf16.mxu0 0
      %5541 = vmatpush1.bf16.msra.mxu0 %v5517
      %5542 = vmatprep.subr.bf16.mxu0 0
      %5543 = vmatpush1.bf16.msra.mxu0 0
      %5544 = vmatprep.subr.bf16.mxu0 0
      %5545 = vmatpush1.bf16.msra.mxu0 0
      %5546 = vmatprep.subr.bf16.mxu0 0
      %5547 = vmatpush1.bf16.msra.mxu0 0
      %5548 = vmatprep.subr.bf16.mxu0 0
      %5549 = vmatpush1.bf16.msra.mxu0 0
      %5550 = vmatprep.subr.bf16.mxu0 0
      %5551 = vmatpush1.bf16.msra.mxu0 0
      %5552 = vmatprep.subr.bf16.mxu0 0
      %5553 = vmatpush1.bf16.msra.mxu0 0
      %5554 = vmatprep.subr.bf16.mxu0 0
      %5555 = vmatpush1.bf16.msra.mxu0 0
      %5556 = vmatprep.subr.bf16.mxu0 0
      %5557 = vmatpush1.bf16.msra.mxu0 0
      %5558 = vmatprep.mubr.bf16.mxu0 0
      %5559 = vmatmul.mubr.bf16.gmra.mrb[0].mxu0 %v5446
      %v5560 = vpop.f32.mrb[0].mxu0
      %v5561 = vadd.f32 0.0, %v5560
      %v5562 = vpop.f32.mrb[0].mxu0
      %v5563 = vpop.f32.mrb[0].mxu0
      %v5564 = vadd.f32 0.0, %v5563
      %v5565 = vpop.f32.mrb[0].mxu0
      %5566 = vmatprep.mubr.bf16.mxu0 0
      %5567 = vmatmul.mubr.bf16.gmra.mrb[0].mxu0 %v5447
      %v5568 = vpop.f32.mrb[0].mxu0
      %v5569 = vadd.f32 0.0, %v5568
      %v5570 = vpop.f32.mrb[0].mxu0
      %v5571 = vpop.f32.mrb[0].mxu0
      %v5572 = vadd.f32 0.0, %v5571
      %v5573 = vpop.f32.mrb[0].mxu0
      %5574 = vmatprep.mubr.bf16.mxu0 0
      %5575 = vmatmul.mubr.bf16.gmra.mrb[0].mxu0 %v5448
      %v5576 = vpop.f32.mrb[0].mxu0
      %v5577 = vadd.f32 0.0, %v5576
      %v5578 = vpop.f32.mrb[0].mxu0
      %v5579 = vpop.f32.mrb[0].mxu0
      %v5580 = vadd.f32 0.0, %v5579
      %v5581 = vpop.f32.mrb[0].mxu0
      %5582 = vmatprep.mubr.bf16.mxu0 0
      %5583 = vmatmul.mubr.bf16.gmra.mrb[0].mxu0 %v5449
      %v5584 = vpop.f32.mrb[0].mxu0
      %v5585 = vadd.f32 0.0, %v5584
      %v5586 = vpop.f32.mrb[0].mxu0
      %v5587 = vpop.f32.mrb[0].mxu0
      %v5588 = vadd.f32 0.0, %v5587
      %v5589 = vpop.f32.mrb[0].mxu0
      %5590 = vmatprep.mubr.bf16.mxu0 0
      %5591 = vmatmul.mubr.bf16.gmra.mrb[0].mxu0 %v5450
      %v5592 = vpop.f32.mrb[0].mxu0
      %v5593 = vadd.f32 0.0, %v5592
      %v5594 = vpop.f32.mrb[0].mxu0
      %v5595 = vpop.f32.mrb[0].mxu0
      %v5596 = vadd.f32 0.0, %v5595
      %v5597 = vpop.f32.mrb[0].mxu0
      %5598 = vmatprep.mubr.bf16.mxu0 0
      %5599 = vmatmul.mubr.bf16.gmra.mrb[0].mxu0 %v5451
      %v5600 = vpop.f32.mrb[0].mxu0
      %v5601 = vadd.f32 0.0, %v5600
      %v5602 = vpop.f32.mrb[0].mxu0
      %v5603 = vpop.f32.mrb[0].mxu0
      %v5604 = vadd.f32 0.0, %v5603
      %v5605 = vpop.f32.mrb[0].mxu0
      %5606 = vmatprep.mubr.bf16.mxu0 0
      %5607 = vmatmul.mubr.bf16.gmra.mrb[0].mxu0 %v5452
      %v5608 = vpop.f32.mrb[0].mxu0
      %v5609 = vadd.f32 0.0, %v5608
      %v5610 = vpop.f32.mrb[0].mxu0
      %v5611 = vpop.f32.mrb[0].mxu0
      %v5612 = vadd.f32 0.0, %v5611
      %v5613 = vpop.f32.mrb[0].mxu0
      %5614 = vmatprep.mubr.bf16.mxu0 0
      %5615 = vmatmul.mubr.bf16.gmra.mrb[0].mxu0 %v5453
      %v5616 = vpop.f32.mrb[0].mxu0
      %v5617 = vadd.f32 0.0, %v5616
      %v5618 = vpop.f32.mrb[0].mxu0
      %v5619 = vpop.f32.mrb[0].mxu0
      %v5620 = vadd.f32 0.0, %v5619
      %v5621 = vpop.f32.mrb[0].mxu0
      %5622 = vmatprep.mubr.bf16.mxu0 0
      %5623 = vmatmul.mubr.bf16.gmra.mrb[0].mxu0 %v5454
      %v5624 = vpop.f32.mrb[0].mxu0
      %v5625 = vadd.f32 0.0, %v5624
      %v5626 = vpop.f32.mrb[0].mxu0
      %v5627 = vpop.f32.mrb[0].mxu0
      %v5628 = vadd.f32 0.0, %v5627
      %v5629 = vpop.f32.mrb[0].mxu0
      %5630 = vmatprep.mubr.bf16.mxu0 0
      %5631 = vmatmul.mubr.bf16.gmra.mrb[0].mxu0 %v5455
      %v5632 = vpop.f32.mrb[0].mxu0
      %v5633 = vadd.f32 0.0, %v5632
      %v5634 = vpop.f32.mrb[0].mxu0
      %v5635 = vpop.f32.mrb[0].mxu0
      %v5636 = vadd.f32 0.0, %v5635
      %v5637 = vpop.f32.mrb[0].mxu0
      %5638 = vmatprep.mubr.bf16.mxu0 0
      %5639 = vmatmul.mubr.bf16.gmra.mrb[0].mxu0 %v5456
      %v5640 = vpop.f32.mrb[0].mxu0
      %v5641 = vadd.f32 0.0, %v5640
      %v5642 = vpop.f32.mrb[0].mxu0
      %v5643 = vpop.f32.mrb[0].mxu0
      %v5644 = vadd.f32 0.0, %v5643
      %v5645 = vpop.f32.mrb[0].mxu0
      %5646 = vmatprep.mubr.bf16.mxu0 0
      %5647 = vmatmul.mubr.bf16.gmra.mrb[0].mxu0 %v5457
      %v5648 = vpop.f32.mrb[0].mxu0
      %v5649 = vadd.f32 0.0, %v5648
      %v5650 = vpop.f32.mrb[0].mxu0
      %v5651 = vpop.f32.mrb[0].mxu0
      %v5652 = vadd.f32 0.0, %v5651
      %v5653 = vpop.f32.mrb[0].mxu0
      %5654 = vmatprep.mubr.bf16.mxu0 0
      %5655 = vmatmul.mubr.bf16.gmra.mrb[0].mxu0 %v5458
      %v5656 = vpop.f32.mrb[0].mxu0
      %v5657 = vadd.f32 0.0, %v5656
      %v5658 = vpop.f32.mrb[0].mxu0
      %v5659 = vpop.f32.mrb[0].mxu0
      %v5660 = vadd.f32 0.0, %v5659
      %v5661 = vpop.f32.mrb[0].mxu0
      %5662 = vmatprep.mubr.bf16.mxu0 0
      %5663 = vmatmul.mubr.bf16.gmra.mrb[0].mxu0 %v5459
      %v5664 = vpop.f32.mrb[0].mxu0
      %v5665 = vadd.f32 0.0, %v5664
      %v5666 = vpop.f32.mrb[0].mxu0
      %v5667 = vpop.f32.mrb[0].mxu0
      %v5668 = vadd.f32 0.0, %v5667
      %v5669 = vpop.f32.mrb[0].mxu0
      %5670 = vmatprep.mubr.bf16.mxu0 0
      %5671 = vmatmul.mubr.bf16.gmra.mrb[0].mxu0 %v5460
      %v5672 = vpop.f32.mrb[0].mxu0
      %v5673 = vadd.f32 0.0, %v5672
      %v5674 = vpop.f32.mrb[0].mxu0
      %v5675 = vpop.f32.mrb[0].mxu0
      %v5676 = vadd.f32 0.0, %v5675
      %v5677 = vpop.f32.mrb[0].mxu0
      %5678 = vmatprep.mubr.bf16.mxu0 0
      %5679 = vmatmul.mubr.bf16.gmra.mrb[0].mxu0 %v5461
      %v5680 = vpop.f32.mrb[0].mxu0
      %v5681 = vadd.f32 0.0, %v5680
      %v5682 = vpop.f32.mrb[0].mxu0
      %v5683 = vpop.f32.mrb[0].mxu0
      %v5684 = vadd.f32 0.0, %v5683
      %v5685 = vpop.f32.mrb[0].mxu0
      %5686 = vdwg.mxu0
      %v5687 = vadd.f32 %v5189, %v5561
      %v5688 = vadd.f32 %v5190, %v5564
      %v5689 = vadd.f32 %v5191, %v5569
      %v5690 = vadd.f32 %v5192, %v5572
      %v5691 = vadd.f32 %v5193, %v5577
      %v5692 = vadd.f32 %v5194, %v5580
      %v5693 = vadd.f32 %v5195, %v5585
      %v5694 = vadd.f32 %v5196, %v5588
      %v5695 = vadd.f32 %v5197, %v5593
      %v5696 = vadd.f32 %v5198, %v5596
      %v5697 = vadd.f32 %v5199, %v5601
      %v5698 = vadd.f32 %v5200, %v5604
      %v5699 = vadd.f32 %v5201, %v5609
      %v5700 = vadd.f32 %v5202, %v5612
      %v5701 = vadd.f32 %v5203, %v5617
      %v5702 = vadd.f32 %v5204, %v5620
      %v5703 = vadd.f32 %v5205, %v5625
      %v5704 = vadd.f32 %v5206, %v5628
      %v5705 = vadd.f32 %v5207, %v5633
      %v5706 = vadd.f32 %v5208, %v5636
      %v5707 = vadd.f32 %v5209, %v5641
      %v5708 = vadd.f32 %v5210, %v5644
      %v5709 = vadd.f32 %v5211, %v5649
      %v5710 = vadd.f32 %v5212, %v5652
      %v5711 = vadd.f32 %v5213, %v5657
      %v5712 = vadd.f32 %v5214, %v5660
      %v5713 = vadd.f32 %v5215, %v5665
      %v5714 = vadd.f32 %v5216, %v5668
      %v5715 = vadd.f32 %v5217, %v5673
      %v5716 = vadd.f32 %v5218, %v5676
      %v5717 = vadd.f32 %v5219, %v5681
      %v5718 = vadd.f32 %v5220, %v5684
      %v5719 = vld [vmem:[%s2] sm:$0x1]
      %v5721 = vlaneseq
      %v5722 = vshrl.u32 %v5721, 7
      %v5723 = vsub.s32 0, %v5722
      %v5724 = vrot.slane %v5719, %v5723
      %v5726 = vadd.f32 %v5687, %v5724
      %v5727 = vadd.f32 %v5688, %v5724
      %v5728 = vadd.f32 %v5689, %v5724
      %v5729 = vadd.f32 %v5690, %v5724
      %v5730 = vadd.f32 %v5691, %v5724
      %v5731 = vadd.f32 %v5692, %v5724
      %v5732 = vadd.f32 %v5693, %v5724
      %v5733 = vadd.f32 %v5694, %v5724
      %v5734 = vadd.f32 %v5695, %v5724
      %v5735 = vadd.f32 %v5696, %v5724
      %v5736 = vadd.f32 %v5697, %v5724
      %v5737 = vadd.f32 %v5698, %v5724
      %v5738 = vadd.f32 %v5699, %v5724
      %v5739 = vadd.f32 %v5700, %v5724
      %v5740 = vadd.f32 %v5701, %v5724
      %v5741 = vadd.f32 %v5702, %v5724
      %v5742 = vadd.f32 %v5703, %v5724
      %v5743 = vadd.f32 %v5704, %v5724
      %v5744 = vadd.f32 %v5705, %v5724
      %v5745 = vadd.f32 %v5706, %v5724
      %v5746 = vadd.f32 %v5707, %v5724
      %v5747 = vadd.f32 %v5708, %v5724
      %v5748 = vadd.f32 %v5709, %v5724
      %v5749 = vadd.f32 %v5710, %v5724
      %v5750 = vadd.f32 %v5711, %v5724
      %v5751 = vadd.f32 %v5712, %v5724
      %v5752 = vadd.f32 %v5713, %v5724
      %v5753 = vadd.f32 %v5714, %v5724
      %v5754 = vadd.f32 %v5715, %v5724
      %v5755 = vadd.f32 %v5716, %v5724
      %v5756 = vadd.f32 %v5717, %v5724
      %v5757 = vadd.f32 %v5718, %v5724
      %v5758 = vmax.f32 %v5726, 0.0
      %v5759 = vmax.f32 %v5727, 0.0
      %v5760 = vmax.f32 %v5728, 0.0
      %v5761 = vmax.f32 %v5729, 0.0
      %v5762 = vmax.f32 %v5730, 0.0
      %v5763 = vmax.f32 %v5731, 0.0
      %v5764 = vmax.f32 %v5732, 0.0
      %v5765 = vmax.f32 %v5733, 0.0
      %v5766 = vmax.f32 %v5734, 0.0
      %v5767 = vmax.f32 %v5735, 0.0
      %v5768 = vmax.f32 %v5736, 0.0
      %v5769 = vmax.f32 %v5737, 0.0
      %v5770 = vmax.f32 %v5738, 0.0
      %v5771 = vmax.f32 %v5739, 0.0
      %v5772 = vmax.f32 %v5740, 0.0
      %v5773 = vmax.f32 %v5741, 0.0
      %v5774 = vmax.f32 %v5742, 0.0
      %v5775 = vmax.f32 %v5743, 0.0
      %v5776 = vmax.f32 %v5744, 0.0
      %v5777 = vmax.f32 %v5745, 0.0
      %v5778 = vmax.f32 %v5746, 0.0
      %v5779 = vmax.f32 %v5747, 0.0
      %v5780 = vmax.f32 %v5748, 0.0
      %v5781 = vmax.f32 %v5749, 0.0
      %v5782 = vmax.f32 %v5750, 0.0
      %v5783 = vmax.f32 %v5751, 0.0
      %v5784 = vmax.f32 %v5752, 0.0
      %v5785 = vmax.f32 %v5753, 0.0
      %v5786 = vmax.f32 %v5754, 0.0
      %v5787 = vmax.f32 %v5755, 0.0
      %v5788 = vmax.f32 %v5756, 0.0
      %v5789 = vmax.f32 %v5757, 0.0
      %5790 = vst [vmem:[#allocation3] sm:$0xf] 0
      %5791 = vst [vmem:[#allocation3 + $0x4] sm:$0xf] 0
      %5792 = vst [vmem:[#allocation3 + $0x8] sm:$0x1] 0
      %s5793 = scalar_lea.vmem [#allocation3], 204
      %5794 = vst [vmem:[%s5793] sm:$0xf] 0
      %5795 = vst [vmem:[%s5793 + $0x4] sm:$0xf] 0
      %5796 = vst [vmem:[%s5793 + $0x8] sm:$0x1] 0
      %v5797 = vld [vmem:[#allocation3] sm:$0x1]
      %v5798 = vsel %vm267, 0, %v5797
      %5799 = vst [vmem:[#allocation3] sm:$0x1] %v5798
      %v5800 = vld [vmem:[#allocation3 + $0xc] sm:$0x1]
      %v5801 = vsel %vm267, 0, %v5800
      %5802 = vst [vmem:[#allocation3 + $0xc] sm:$0x1] %v5801
      %v5803 = vld [vmem:[#allocation3 + $0x18] sm:$0x1]
      %v5804 = vsel %vm267, 0, %v5803
      %5805 = vst [vmem:[#allocation3 + $0x18] sm:$0x1] %v5804
      %v5806 = vld [vmem:[#allocation3 + $0x24] sm:$0x1]
      %v5807 = vsel %vm267, 0, %v5806
      %5808 = vst [vmem:[#allocation3 + $0x24] sm:$0x1] %v5807
      %v5809 = vld [vmem:[#allocation3 + $0x30] sm:$0x1]
      %v5810 = vsel %vm267, 0, %v5809
      %5811 = vst [vmem:[#allocation3 + $0x30] sm:$0x1] %v5810
      %v5812 = vld [vmem:[#allocation3 + $0x3c] sm:$0x1]
      %v5813 = vsel %vm267, 0, %v5812
      %5814 = vst [vmem:[#allocation3 + $0x3c] sm:$0x1] %v5813
      %v5815 = vld [vmem:[#allocation3 + $0x48] sm:$0x1]
      %v5816 = vsel %vm267, 0, %v5815
      %5817 = vst [vmem:[#allocation3 + $0x48] sm:$0x1] %v5816
      %v5818 = vld [vmem:[#allocation3 + $0x54] sm:$0x1]
      %v5819 = vsel %vm267, 0, %v5818
      %5820 = vst [vmem:[#allocation3 + $0x54] sm:$0x1] %v5819
      %v5821 = vld [vmem:[#allocation3 + $0x60] sm:$0x1]
      %v5822 = vsel %vm267, 0, %v5821
      %5823 = vst [vmem:[#allocation3 + $0x60] sm:$0x1] %v5822
      %v5824 = vld [vmem:[#allocation3 + $0x6c] sm:$0x1]
      %v5825 = vsel %vm267, 0, %v5824
      %5826 = vst [vmem:[#allocation3 + $0x6c] sm:$0x1] %v5825
      %v5827 = vld [vmem:[#allocation3 + $0x78] sm:$0x1]
      %v5828 = vsel %vm267, 0, %v5827
      %5829 = vst [vmem:[#allocation3 + $0x78] sm:$0x1] %v5828
      %v5830 = vld [vmem:[#allocation3 + $0x84] sm:$0x1]
      %v5831 = vsel %vm267, 0, %v5830
      %5832 = vst [vmem:[#allocation3 + $0x84] sm:$0x1] %v5831
      %v5833 = vld [vmem:[#allocation3 + $0x90] sm:$0x1]
      %v5834 = vsel %vm267, 0, %v5833
      %5835 = vst [vmem:[#allocation3 + $0x90] sm:$0x1] %v5834
      %v5836 = vld [vmem:[#allocation3 + $0x9c] sm:$0x1]
      %v5837 = vsel %vm267, 0, %v5836
      %5838 = vst [vmem:[#allocation3 + $0x9c] sm:$0x1] %v5837
      %v5839 = vld [vmem:[#allocation3 + $0xa8] sm:$0x1]
      %v5840 = vsel %vm267, 0, %v5839
      %5841 = vst [vmem:[#allocation3 + $0xa8] sm:$0x1] %v5840
      %v5842 = vld [vmem:[#allocation3 + $0xb4] sm:$0x1]
      %v5843 = vsel %vm267, 0, %v5842
      %5844 = vst [vmem:[#allocation3 + $0xb4] sm:$0x1] %v5843
      %v5845 = vld [vmem:[#allocation3 + $0xc0] sm:$0x1]
      %v5846 = vsel %vm267, 0, %v5845
      %5847 = vst [vmem:[#allocation3 + $0xc0] sm:$0x1] %v5846
      %v5848 = vld [vmem:[#allocation3 + $0xcc] sm:$0x1]
      %v5849 = vsel %vm267, 0, %v5848
      %5850 = vst [vmem:[#allocation3 + $0xcc] sm:$0x1] %v5849
      %v5851 = vld [vmem:[#allocation3 + $0x8] sm:$0x1]
      %v5852 = vsel %vm323, 0, %v5851
      %5853 = vst [vmem:[#allocation3 + $0x8] sm:$0x1] %v5852
      %v5854 = vld [vmem:[#allocation3 + $0x14] sm:$0x1]
      %v5855 = vsel %vm323, 0, %v5854
      %5856 = vst [vmem:[#allocation3 + $0x14] sm:$0x1] %v5855
      %v5857 = vld [vmem:[#allocation3 + $0x20] sm:$0x1]
      %v5858 = vsel %vm323, 0, %v5857
      %5859 = vst [vmem:[#allocation3 + $0x20] sm:$0x1] %v5858
      %v5860 = vld [vmem:[#allocation3 + $0x2c] sm:$0x1]
      %v5861 = vsel %vm323, 0, %v5860
      %5862 = vst [vmem:[#allocation3 + $0x2c] sm:$0x1] %v5861
      %v5863 = vld [vmem:[#allocation3 + $0x38] sm:$0x1]
      %v5864 = vsel %vm323, 0, %v5863
      %5865 = vst [vmem:[#allocation3 + $0x38] sm:$0x1] %v5864
      %v5866 = vld [vmem:[#allocation3 + $0x44] sm:$0x1]
      %v5867 = vsel %vm323, 0, %v5866
      %5868 = vst [vmem:[#allocation3 + $0x44] sm:$0x1] %v5867
      %v5869 = vld [vmem:[#allocation3 + $0x50] sm:$0x1]
      %v5870 = vsel %vm323, 0, %v5869
      %5871 = vst [vmem:[#allocation3 + $0x50] sm:$0x1] %v5870
      %v5872 = vld [vmem:[#allocation3 + $0x5c] sm:$0x1]
      %v5873 = vsel %vm323, 0, %v5872
      %5874 = vst [vmem:[#allocation3 + $0x5c] sm:$0x1] %v5873
      %v5875 = vld [vmem:[#allocation3 + $0x68] sm:$0x1]
      %v5876 = vsel %vm323, 0, %v5875
      %5877 = vst [vmem:[#allocation3 + $0x68] sm:$0x1] %v5876
      %v5878 = vld [vmem:[#allocation3 + $0x74] sm:$0x1]
      %v5879 = vsel %vm323, 0, %v5878
      %5880 = vst [vmem:[#allocation3 + $0x74] sm:$0x1] %v5879
      %v5881 = vld [vmem:[#allocation3 + $0x80] sm:$0x1]
      %v5882 = vsel %vm323, 0, %v5881
      %5883 = vst [vmem:[#allocation3 + $0x80] sm:$0x1] %v5882
      %v5884 = vld [vmem:[#allocation3 + $0x8c] sm:$0x1]
      %v5885 = vsel %vm323, 0, %v5884
      %5886 = vst [vmem:[#allocation3 + $0x8c] sm:$0x1] %v5885
      %v5887 = vld [vmem:[#allocation3 + $0x98] sm:$0x1]
      %v5888 = vsel %vm323, 0, %v5887
      %5889 = vst [vmem:[#allocation3 + $0x98] sm:$0x1] %v5888
      %v5890 = vld [vmem:[#allocation3 + $0xa4] sm:$0x1]
      %v5891 = vsel %vm323, 0, %v5890
      %5892 = vst [vmem:[#allocation3 + $0xa4] sm:$0x1] %v5891
      %v5893 = vld [vmem:[#allocation3 + $0xb0] sm:$0x1]
      %v5894 = vsel %vm323, 0, %v5893
      %5895 = vst [vmem:[#allocation3 + $0xb0] sm:$0x1] %v5894
      %v5896 = vld [vmem:[#allocation3 + $0xbc] sm:$0x1]
      %v5897 = vsel %vm323, 0, %v5896
      %5898 = vst [vmem:[#allocation3 + $0xbc] sm:$0x1] %v5897
      %v5899 = vld [vmem:[#allocation3 + $0xc8] sm:$0x1]
      %v5900 = vsel %vm323, 0, %v5899
      %5901 = vst [vmem:[#allocation3 + $0xc8] sm:$0x1] %v5900
      %v5902 = vld [vmem:[#allocation3 + $0xd4] sm:$0x1]
      %v5903 = vsel %vm323, 0, %v5902
      %5904 = vst [vmem:[#allocation3 + $0xd4] sm:$0x1] %v5903
      %v5905 = vpack.c.bf16 %v5759, %v5758
      %v5906 = vpack.c.bf16 %v5761, %v5760
      %v5907 = vpack.c.bf16 %v5763, %v5762
      %v5908 = vpack.c.bf16 %v5765, %v5764
      %v5909 = vpack.c.bf16 %v5767, %v5766
      %v5910 = vpack.c.bf16 %v5769, %v5768
      %v5911 = vpack.c.bf16 %v5771, %v5770
      %v5912 = vpack.c.bf16 %v5773, %v5772
      %v5913 = vpack.c.bf16 %v5775, %v5774
      %v5914 = vpack.c.bf16 %v5777, %v5776
      %v5915 = vpack.c.bf16 %v5779, %v5778
      %v5916 = vpack.c.bf16 %v5781, %v5780
      %v5917 = vpack.c.bf16 %v5783, %v5782
      %v5918 = vpack.c.bf16 %v5785, %v5784
      %v5919 = vpack.c.bf16 %v5787, %v5786
      %v5920 = vpack.c.bf16 %v5789, %v5788
      %v5937 = vunpack.c.l.b16 %v5905
      %v5938 = vunpack.c.h.b16 %v5905
      %v5939 = vunpack.c.l.b16 %v5906
      %v5940 = vunpack.c.h.b16 %v5906
      %v5941 = vunpack.c.l.b16 %v5907
      %v5942 = vunpack.c.h.b16 %v5907
      %v5943 = vunpack.c.l.b16 %v5908
      %v5944 = vunpack.c.h.b16 %v5908
      %v5945 = vunpack.c.l.b16 %v5909
      %v5946 = vunpack.c.h.b16 %v5909
      %v5947 = vunpack.c.l.b16 %v5910
      %v5948 = vunpack.c.h.b16 %v5910
      %v5949 = vunpack.c.l.b16 %v5911
      %v5950 = vunpack.c.h.b16 %v5911
      %v5951 = vunpack.c.l.b16 %v5912
      %v5952 = vunpack.c.h.b16 %v5912
      %v5953 = vunpack.c.l.b16 %v5913
      %v5954 = vunpack.c.h.b16 %v5913
      %v5955 = vunpack.c.l.b16 %v5914
      %v5956 = vunpack.c.h.b16 %v5914
      %v5957 = vunpack.c.l.b16 %v5915
      %v5958 = vunpack.c.h.b16 %v5915
      %v5959 = vunpack.c.l.b16 %v5916
      %v5960 = vunpack.c.h.b16 %v5916
      %v5961 = vunpack.c.l.b16 %v5917
      %v5962 = vunpack.c.h.b16 %v5917
      %v5963 = vunpack.c.l.b16 %v5918
      %v5964 = vunpack.c.h.b16 %v5918
      %v5965 = vunpack.c.l.b16 %v5919
      %v5966 = vunpack.c.h.b16 %v5919
      %v5967 = vunpack.c.l.b16 %v5920
      %v5968 = vunpack.c.h.b16 %v5920
      %v5969 = vpack.c.b16 %v5937, %v5937
      %v5970 = vpack.c.b16 %v5938, %v5938
      %v5971 = vpack.c.b16 %v5939, %v5939
      %v5972 = vpack.c.b16 %v5940, %v5940
      %v5973 = vpack.c.b16 %v5941, %v5941
      %v5974 = vpack.c.b16 %v5942, %v5942
      %v5975 = vpack.c.b16 %v5943, %v5943
      %v5976 = vpack.c.b16 %v5944, %v5944
      %v5977 = vpack.c.b16 %v5945, %v5945
      %v5978 = vpack.c.b16 %v5946, %v5946
      %v5979 = vpack.c.b16 %v5947, %v5947
      %v5980 = vpack.c.b16 %v5948, %v5948
      %v5981 = vpack.c.b16 %v5949, %v5949
      %v5982 = vpack.c.b16 %v5950, %v5950
      %v5983 = vpack.c.b16 %v5951, %v5951
      %v5984 = vpack.c.b16 %v5952, %v5952
      %v5985 = vpack.c.b16 %v5953, %v5953
      %v5986 = vpack.c.b16 %v5954, %v5954
      %v5987 = vpack.c.b16 %v5955, %v5955
      %v5988 = vpack.c.b16 %v5956, %v5956
      %v5989 = vpack.c.b16 %v5957, %v5957
      %v5990 = vpack.c.b16 %v5958, %v5958
      %v5991 = vpack.c.b16 %v5959, %v5959
      %v5992 = vpack.c.b16 %v5960, %v5960
      %v5993 = vpack.c.b16 %v5961, %v5961
      %v5994 = vpack.c.b16 %v5962, %v5962
      %v5995 = vpack.c.b16 %v5963, %v5963
      %v5996 = vpack.c.b16 %v5964, %v5964
      %v5997 = vpack.c.b16 %v5965, %v5965
      %v5998 = vpack.c.b16 %v5966, %v5966
      %v5999 = vpack.c.b16 %v5967, %v5967
      %v6000 = vpack.c.b16 %v5968, %v5968
      %v6002 = vshrl.u32 %v5969, 16
      %v6004 = vrot.slane %v6002, 7
      %v6005 = vshll.u32 %v5969, 16
      %v6007 = vor.u32 %v6004, %v6005
      %v6008 = vrot.slane %v6004, 4
      %v6010 = vshrl.u32 %v5970, 16
      %v6012 = vrot.slane %v6010, 7
      %v6013 = vshll.u32 %v5970, 16
      %v6015 = vor.u32 %v6012, %v6013
      %v6016 = vsel %vm475, %v6008, %v6015
      %v6017 = vrot.slane %v6012, 4
      %v6019 = vshrl.u32 %v5971, 16
      %v6021 = vrot.slane %v6019, 7
      %v6022 = vshll.u32 %v5971, 16
      %v6024 = vor.u32 %v6021, %v6022
      %v6025 = vrot.slane %v6021, 4
      %v6027 = vshrl.u32 %v5972, 16
      %v6029 = vrot.slane %v6027, 7
      %v6030 = vshll.u32 %v5972, 16
      %v6032 = vor.u32 %v6029, %v6030
      %v6033 = vsel %vm475, %v6025, %v6032
      %v6034 = vrot.slane %v6029, 4
      %v6036 = vshrl.u32 %v5973, 16
      %v6038 = vrot.slane %v6036, 7
      %v6039 = vshll.u32 %v5973, 16
      %v6041 = vor.u32 %v6038, %v6039
      %v6042 = vrot.slane %v6038, 4
      %v6044 = vshrl.u32 %v5974, 16
      %v6046 = vrot.slane %v6044, 7
      %v6047 = vshll.u32 %v5974, 16
      %v6049 = vor.u32 %v6046, %v6047
      %v6050 = vsel %vm475, %v6042, %v6049
      %v6051 = vrot.slane %v6046, 4
      %v6053 = vshrl.u32 %v5975, 16
      %v6055 = vrot.slane %v6053, 7
      %v6056 = vshll.u32 %v5975, 16
      %v6058 = vor.u32 %v6055, %v6056
      %v6059 = vrot.slane %v6055, 4
      %v6061 = vshrl.u32 %v5976, 16
      %v6063 = vrot.slane %v6061, 7
      %v6064 = vshll.u32 %v5976, 16
      %v6066 = vor.u32 %v6063, %v6064
      %v6067 = vsel %vm475, %v6059, %v6066
      %v6068 = vrot.slane %v6063, 4
      %v6070 = vshrl.u32 %v5977, 16
      %v6072 = vrot.slane %v6070, 7
      %v6073 = vshll.u32 %v5977, 16
      %v6075 = vor.u32 %v6072, %v6073
      %v6076 = vrot.slane %v6072, 4
      %v6078 = vshrl.u32 %v5978, 16
      %v6080 = vrot.slane %v6078, 7
      %v6081 = vshll.u32 %v5978, 16
      %v6083 = vor.u32 %v6080, %v6081
      %v6084 = vsel %vm475, %v6076, %v6083
      %v6085 = vrot.slane %v6080, 4
      %v6087 = vshrl.u32 %v5979, 16
      %v6089 = vrot.slane %v6087, 7
      %v6090 = vshll.u32 %v5979, 16
      %v6092 = vor.u32 %v6089, %v6090
      %v6093 = vrot.slane %v6089, 4
      %v6095 = vshrl.u32 %v5980, 16
      %v6097 = vrot.slane %v6095, 7
      %v6098 = vshll.u32 %v5980, 16
      %v6100 = vor.u32 %v6097, %v6098
      %v6101 = vsel %vm475, %v6093, %v6100
      %v6102 = vrot.slane %v6097, 4
      %v6104 = vshrl.u32 %v5981, 16
      %v6106 = vrot.slane %v6104, 7
      %v6107 = vshll.u32 %v5981, 16
      %v6109 = vor.u32 %v6106, %v6107
      %v6110 = vrot.slane %v6106, 4
      %v6112 = vshrl.u32 %v5982, 16
      %v6114 = vrot.slane %v6112, 7
      %v6115 = vshll.u32 %v5982, 16
      %v6117 = vor.u32 %v6114, %v6115
      %v6118 = vsel %vm475, %v6110, %v6117
      %v6119 = vrot.slane %v6114, 4
      %v6121 = vshrl.u32 %v5983, 16
      %v6123 = vrot.slane %v6121, 7
      %v6124 = vshll.u32 %v5983, 16
      %v6126 = vor.u32 %v6123, %v6124
      %v6127 = vrot.slane %v6123, 4
      %v6129 = vshrl.u32 %v5984, 16
      %v6131 = vrot.slane %v6129, 7
      %v6132 = vshll.u32 %v5984, 16
      %v6134 = vor.u32 %v6131, %v6132
      %v6135 = vsel %vm475, %v6127, %v6134
      %v6136 = vrot.slane %v6131, 4
      %v6138 = vshrl.u32 %v5985, 16
      %v6140 = vrot.slane %v6138, 7
      %v6141 = vshll.u32 %v5985, 16
      %v6143 = vor.u32 %v6140, %v6141
      %v6144 = vrot.slane %v6140, 4
      %v6146 = vshrl.u32 %v5986, 16
      %v6148 = vrot.slane %v6146, 7
      %v6149 = vshll.u32 %v5986, 16
      %v6151 = vor.u32 %v6148, %v6149
      %v6152 = vsel %vm475, %v6144, %v6151
      %v6153 = vrot.slane %v6148, 4
      %v6155 = vshrl.u32 %v5987, 16
      %v6157 = vrot.slane %v6155, 7
      %v6158 = vshll.u32 %v5987, 16
      %v6160 = vor.u32 %v6157, %v6158
      %v6161 = vrot.slane %v6157, 4
      %v6163 = vshrl.u32 %v5988, 16
      %v6165 = vrot.slane %v6163, 7
      %v6166 = vshll.u32 %v5988, 16
      %v6168 = vor.u32 %v6165, %v6166
      %v6169 = vsel %vm475, %v6161, %v6168
      %v6170 = vrot.slane %v6165, 4
      %v6172 = vshrl.u32 %v5989, 16
      %v6174 = vrot.slane %v6172, 7
      %v6175 = vshll.u32 %v5989, 16
      %v6177 = vor.u32 %v6174, %v6175
      %v6178 = vrot.slane %v6174, 4
      %v6180 = vshrl.u32 %v5990, 16
      %v6182 = vrot.slane %v6180, 7
      %v6183 = vshll.u32 %v5990, 16
      %v6185 = vor.u32 %v6182, %v6183
      %v6186 = vsel %vm475, %v6178, %v6185
      %v6187 = vrot.slane %v6182, 4
      %v6189 = vshrl.u32 %v5991, 16
      %v6191 = vrot.slane %v6189, 7
      %v6192 = vshll.u32 %v5991, 16
      %v6194 = vor.u32 %v6191, %v6192
      %v6195 = vrot.slane %v6191, 4
      %v6197 = vshrl.u32 %v5992, 16
      %v6199 = vrot.slane %v6197, 7
      %v6200 = vshll.u32 %v5992, 16
      %v6202 = vor.u32 %v6199, %v6200
      %v6203 = vsel %vm475, %v6195, %v6202
      %v6204 = vrot.slane %v6199, 4
      %v6206 = vshrl.u32 %v5993, 16
      %v6208 = vrot.slane %v6206, 7
      %v6209 = vshll.u32 %v5993, 16
      %v6211 = vor.u32 %v6208, %v6209
      %v6212 = vrot.slane %v6208, 4
      %v6214 = vshrl.u32 %v5994, 16
      %v6216 = vrot.slane %v6214, 7
      %v6217 = vshll.u32 %v5994, 16
      %v6219 = vor.u32 %v6216, %v6217
      %v6220 = vsel %vm475, %v6212, %v6219
      %v6221 = vrot.slane %v6216, 4
      %v6223 = vshrl.u32 %v5995, 16
      %v6225 = vrot.slane %v6223, 7
      %v6226 = vshll.u32 %v5995, 16
      %v6228 = vor.u32 %v6225, %v6226
      %v6229 = vrot.slane %v6225, 4
      %v6231 = vshrl.u32 %v5996, 16
      %v6233 = vrot.slane %v6231, 7
      %v6234 = vshll.u32 %v5996, 16
      %v6236 = vor.u32 %v6233, %v6234
      %v6237 = vsel %vm475, %v6229, %v6236
      %v6238 = vrot.slane %v6233, 4
      %v6240 = vshrl.u32 %v5997, 16
      %v6242 = vrot.slane %v6240, 7
      %v6243 = vshll.u32 %v5997, 16
      %v6245 = vor.u32 %v6242, %v6243
      %v6246 = vrot.slane %v6242, 4
      %v6248 = vshrl.u32 %v5998, 16
      %v6250 = vrot.slane %v6248, 7
      %v6251 = vshll.u32 %v5998, 16
      %v6253 = vor.u32 %v6250, %v6251
      %v6254 = vsel %vm475, %v6246, %v6253
      %v6255 = vrot.slane %v6250, 4
      %v6257 = vshrl.u32 %v5999, 16
      %v6259 = vrot.slane %v6257, 7
      %v6260 = vshll.u32 %v5999, 16
      %v6262 = vor.u32 %v6259, %v6260
      %v6263 = vrot.slane %v6259, 4
      %v6265 = vshrl.u32 %v6000, 16
      %v6267 = vrot.slane %v6265, 7
      %v6268 = vshll.u32 %v6000, 16
      %v6270 = vor.u32 %v6267, %v6268
      %v6271 = vsel %vm475, %v6263, %v6270
      %v6272 = vrot.slane %v6267, 4
      %s6321 = scalar_lea.vmem [#allocation3], 12
      %v6322 = vld [vmem:[%s6321] sm:$0xf]
      %v6323 = vsel %vm798, %v6007, %v6322
      %6324 = vst [vmem:[%s6321] sm:$0xf] %v6323
      %6325 = vst [vmem:[%s6321 + $0x4] sm:$0xf] %v6016
      %v6326 = vld [vmem:[%s6321 + $0x8] sm:$0x1]
      %v6327 = vsel %vm267, %v6017, %v6326
      %6328 = vst [vmem:[%s6321 + $0x8] sm:$0x1] %v6327
      %v6329 = vld [vmem:[%s6321 + $0xc] sm:$0xf]
      %v6330 = vsel %vm798, %v6024, %v6329
      %6331 = vst [vmem:[%s6321 + $0xc] sm:$0xf] %v6330
      %6332 = vst [vmem:[%s6321 + $0x10] sm:$0xf] %v6033
      %v6333 = vld [vmem:[%s6321 + $0x14] sm:$0x1]
      %v6334 = vsel %vm267, %v6034, %v6333
      %6335 = vst [vmem:[%s6321 + $0x14] sm:$0x1] %v6334
      %v6336 = vld [vmem:[%s6321 + $0x18] sm:$0xf]
      %v6337 = vsel %vm798, %v6041, %v6336
      %6338 = vst [vmem:[%s6321 + $0x18] sm:$0xf] %v6337
      %6339 = vst [vmem:[%s6321 + $0x1c] sm:$0xf] %v6050
      %v6340 = vld [vmem:[%s6321 + $0x20] sm:$0x1]
      %v6341 = vsel %vm267, %v6051, %v6340
      %6342 = vst [vmem:[%s6321 + $0x20] sm:$0x1] %v6341
      %v6343 = vld [vmem:[%s6321 + $0x24] sm:$0xf]
      %v6344 = vsel %vm798, %v6058, %v6343
      %6345 = vst [vmem:[%s6321 + $0x24] sm:$0xf] %v6344
      %6346 = vst [vmem:[%s6321 + $0x28] sm:$0xf] %v6067
      %v6347 = vld [vmem:[%s6321 + $0x2c] sm:$0x1]
      %v6348 = vsel %vm267, %v6068, %v6347
      %6349 = vst [vmem:[%s6321 + $0x2c] sm:$0x1] %v6348
      %v6350 = vld [vmem:[%s6321 + $0x30] sm:$0xf]
      %v6351 = vsel %vm798, %v6075, %v6350
      %6352 = vst [vmem:[%s6321 + $0x30] sm:$0xf] %v6351
      %6353 = vst [vmem:[%s6321 + $0x34] sm:$0xf] %v6084
      %v6354 = vld [vmem:[%s6321 + $0x38] sm:$0x1]
      %v6355 = vsel %vm267, %v6085, %v6354
      %6356 = vst [vmem:[%s6321 + $0x38] sm:$0x1] %v6355
      %v6357 = vld [vmem:[%s6321 + $0x3c] sm:$0xf]
      %v6358 = vsel %vm798, %v6092, %v6357
      %6359 = vst [vmem:[%s6321 + $0x3c] sm:$0xf] %v6358
      %6360 = vst [vmem:[%s6321 + $0x40] sm:$0xf] %v6101
      %v6361 = vld [vmem:[%s6321 + $0x44] sm:$0x1]
      %v6362 = vsel %vm267, %v6102, %v6361
      %6363 = vst [vmem:[%s6321 + $0x44] sm:$0x1] %v6362
      %v6364 = vld [vmem:[%s6321 + $0x48] sm:$0xf]
      %v6365 = vsel %vm798, %v6109, %v6364
      %6366 = vst [vmem:[%s6321 + $0x48] sm:$0xf] %v6365
      %6367 = vst [vmem:[%s6321 + $0x4c] sm:$0xf] %v6118
      %v6368 = vld [vmem:[%s6321 + $0x50] sm:$0x1]
      %v6369 = vsel %vm267, %v6119, %v6368
      %6370 = vst [vmem:[%s6321 + $0x50] sm:$0x1] %v6369
      %v6371 = vld [vmem:[%s6321 + $0x54] sm:$0xf]
      %v6372 = vsel %vm798, %v6126, %v6371
      %6373 = vst [vmem:[%s6321 + $0x54] sm:$0xf] %v6372
      %6374 = vst [vmem:[%s6321 + $0x58] sm:$0xf] %v6135
      %v6375 = vld [vmem:[%s6321 + $0x5c] sm:$0x1]
      %v6376 = vsel %vm267, %v6136, %v6375
      %6377 = vst [vmem:[%s6321 + $0x5c] sm:$0x1] %v6376
      %v6378 = vld [vmem:[%s6321 + $0x60] sm:$0xf]
      %v6379 = vsel %vm798, %v6143, %v6378
      %6380 = vst [vmem:[%s6321 + $0x60] sm:$0xf] %v6379
      %6381 = vst [vmem:[%s6321 + $0x64] sm:$0xf] %v6152
      %v6382 = vld [vmem:[%s6321 + $0x68] sm:$0x1]
      %v6383 = vsel %vm267, %v6153, %v6382
      %6384 = vst [vmem:[%s6321 + $0x68] sm:$0x1] %v6383
      %v6385 = vld [vmem:[%s6321 + $0x6c] sm:$0xf]
      %v6386 = vsel %vm798, %v6160, %v6385
      %6387 = vst [vmem:[%s6321 + $0x6c] sm:$0xf] %v6386
      %6388 = vst [vmem:[%s6321 + $0x70] sm:$0xf] %v6169
      %v6389 = vld [vmem:[%s6321 + $0x74] sm:$0x1]
      %v6390 = vsel %vm267, %v6170, %v6389
      %6391 = vst [vmem:[%s6321 + $0x74] sm:$0x1] %v6390
      %v6392 = vld [vmem:[%s6321 + $0x78] sm:$0xf]
      %v6393 = vsel %vm798, %v6177, %v6392
      %6394 = vst [vmem:[%s6321 + $0x78] sm:$0xf] %v6393
      %6395 = vst [vmem:[%s6321 + $0x7c] sm:$0xf] %v6186
      %v6396 = vld [vmem:[%s6321 + $0x80] sm:$0x1]
      %v6397 = vsel %vm267, %v6187, %v6396
      %6398 = vst [vmem:[%s6321 + $0x80] sm:$0x1] %v6397
      %v6399 = vld [vmem:[%s6321 + $0x84] sm:$0xf]
      %v6400 = vsel %vm798, %v6194, %v6399
      %6401 = vst [vmem:[%s6321 + $0x84] sm:$0xf] %v6400
      %6402 = vst [vmem:[%s6321 + $0x88] sm:$0xf] %v6203
      %v6403 = vld [vmem:[%s6321 + $0x8c] sm:$0x1]
      %v6404 = vsel %vm267, %v6204, %v6403
      %6405 = vst [vmem:[%s6321 + $0x8c] sm:$0x1] %v6404
      %v6406 = vld [vmem:[%s6321 + $0x90] sm:$0xf]
      %v6407 = vsel %vm798, %v6211, %v6406
      %6408 = vst [vmem:[%s6321 + $0x90] sm:$0xf] %v6407
      %6409 = vst [vmem:[%s6321 + $0x94] sm:$0xf] %v6220
      %v6410 = vld [vmem:[%s6321 + $0x98] sm:$0x1]
      %v6411 = vsel %vm267, %v6221, %v6410
      %6412 = vst [vmem:[%s6321 + $0x98] sm:$0x1] %v6411
      %v6413 = vld [vmem:[%s6321 + $0x9c] sm:$0xf]
      %v6414 = vsel %vm798, %v6228, %v6413
      %6415 = vst [vmem:[%s6321 + $0x9c] sm:$0xf] %v6414
      %6416 = vst [vmem:[%s6321 + $0xa0] sm:$0xf] %v6237
      %v6417 = vld [vmem:[%s6321 + $0xa4] sm:$0x1]
      %v6418 = vsel %vm267, %v6238, %v6417
      %6419 = vst [vmem:[%s6321 + $0xa4] sm:$0x1] %v6418
      %v6420 = vld [vmem:[%s6321 + $0xa8] sm:$0xf]
      %v6421 = vsel %vm798, %v6245, %v6420
      %6422 = vst [vmem:[%s6321 + $0xa8] sm:$0xf] %v6421
      %6423 = vst [vmem:[%s6321 + $0xac] sm:$0xf] %v6254
      %v6424 = vld [vmem:[%s6321 + $0xb0] sm:$0x1]
      %v6425 = vsel %vm267, %v6255, %v6424
      %6426 = vst [vmem:[%s6321 + $0xb0] sm:$0x1] %v6425
      %v6427 = vld [vmem:[%s6321 + $0xb4] sm:$0xf]
      %v6428 = vsel %vm798, %v6262, %v6427
      %6429 = vst [vmem:[%s6321 + $0xb4] sm:$0xf] %v6428
      %6430 = vst [vmem:[%s6321 + $0xb8] sm:$0xf] %v6271
      %v6431 = vld [vmem:[%s6321 + $0xbc] sm:$0x1]
      %v6432 = vsel %vm267, %v6272, %v6431
      %6433 = vst [vmem:[%s6321 + $0xbc] sm:$0x1] %v6432
      %v6434 = vld [vmem:[#allocation3] sm:$0xf]
      %v6435 = vld [vmem:[#allocation3 + $0x4] sm:$0xf]
      %v6436 = vld [vmem:[#allocation3 + $0xc] sm:$0xf]
      %v6437 = vld [vmem:[#allocation3 + $0x10] sm:$0xf]
      %v6438 = vld [vmem:[#allocation3 + $0x18] sm:$0xf]
      %v6439 = vld [vmem:[#allocation3 + $0x1c] sm:$0xf]
      %v6440 = vld [vmem:[#allocation3 + $0x24] sm:$0xf]
      %v6441 = vld [vmem:[#allocation3 + $0x28] sm:$0xf]
      %v6442 = vld [vmem:[#allocation3 + $0x30] sm:$0xf]
      %v6443 = vld [vmem:[#allocation3 + $0x34] sm:$0xf]
      %v6444 = vld [vmem:[#allocation3 + $0x3c] sm:$0xf]
      %v6445 = vld [vmem:[#allocation3 + $0x40] sm:$0xf]
      %v6446 = vld [vmem:[#allocation3 + $0x48] sm:$0xf]
      %v6447 = vld [vmem:[#allocation3 + $0x4c] sm:$0xf]
      %v6448 = vld [vmem:[#allocation3 + $0x54] sm:$0xf]
      %v6449 = vld [vmem:[#allocation3 + $0x58] sm:$0xf]
      %v6450 = vld [vmem:[#allocation3 + $0x60] sm:$0xf]
      %v6451 = vld [vmem:[#allocation3 + $0x64] sm:$0xf]
      %v6452 = vld [vmem:[#allocation3 + $0x6c] sm:$0xf]
      %v6453 = vld [vmem:[#allocation3 + $0x70] sm:$0xf]
      %v6454 = vld [vmem:[#allocation3 + $0x78] sm:$0xf]
      %v6455 = vld [vmem:[#allocation3 + $0x7c] sm:$0xf]
      %v6456 = vld [vmem:[#allocation3 + $0x84] sm:$0xf]
      %v6457 = vld [vmem:[#allocation3 + $0x88] sm:$0xf]
      %v6458 = vld [vmem:[#allocation3 + $0x90] sm:$0xf]
      %v6459 = vld [vmem:[#allocation3 + $0x94] sm:$0xf]
      %v6460 = vld [vmem:[#allocation3 + $0x9c] sm:$0xf]
      %v6461 = vld [vmem:[#allocation3 + $0xa0] sm:$0xf]
      %v6462 = vld [vmem:[#allocation3 + $0xa8] sm:$0xf]
      %v6463 = vld [vmem:[#allocation3 + $0xac] sm:$0xf]
      %v6464 = vld [vmem:[#allocation3 + $0xb4] sm:$0xf]
      %v6465 = vld [vmem:[#allocation3 + $0xb8] sm:$0xf]
      %v6466 = vld [vmem:[%s3] sm:$0xf]
      %v6467 = vld [vmem:[%s3 + $0x4] sm:$0xf]
      %v6468 = vld [vmem:[%s3 + $0x8] sm:$0xf]
      %v6469 = vld [vmem:[%s3 + $0xc] sm:$0xf]
      %v6470 = vld [vmem:[%s3 + $0x10] sm:$0xf]
      %v6471 = vld [vmem:[%s3 + $0x14] sm:$0xf]
      %v6472 = vld [vmem:[%s3 + $0x18] sm:$0xf]
      %v6473 = vld [vmem:[%s3 + $0x1c] sm:$0xf]
      %v6474 = vld [vmem:[%s3 + $0x20] sm:$0xf]
      %v6475 = vld [vmem:[%s3 + $0x24] sm:$0xf]
      %v6476 = vld [vmem:[%s3 + $0x28] sm:$0xf]
      %v6477 = vld [vmem:[%s3 + $0x2c] sm:$0xf]
      %v6478 = vld [vmem:[%s3 + $0x30] sm:$0xf]
      %v6479 = vld [vmem:[%s3 + $0x34] sm:$0xf]
      %v6480 = vld [vmem:[%s3 + $0x38] sm:$0xf]
      %v6481 = vld [vmem:[%s3 + $0x3c] sm:$0xf]
      %v6482 = vld [vmem:[#allocation3 + $0x8] sm:$0x1]
      %v6483 = vld [vmem:[#allocation3 + $0x14] sm:$0x1]
      %v6484 = vld [vmem:[#allocation3 + $0x20] sm:$0x1]
      %v6485 = vld [vmem:[#allocation3 + $0x2c] sm:$0x1]
      %v6486 = vld [vmem:[#allocation3 + $0x38] sm:$0x1]
      %v6487 = vld [vmem:[#allocation3 + $0x44] sm:$0x1]
      %v6488 = vld [vmem:[#allocation3 + $0x50] sm:$0x1]
      %v6489 = vld [vmem:[#allocation3 + $0x5c] sm:$0x1]
      %v6490 = vld [vmem:[#allocation3 + $0x68] sm:$0x1]
      %v6491 = vld [vmem:[#allocation3 + $0x74] sm:$0x1]
      %v6492 = vld [vmem:[#allocation3 + $0x80] sm:$0x1]
      %v6493 = vld [vmem:[#allocation3 + $0x8c] sm:$0x1]
      %v6494 = vld [vmem:[#allocation3 + $0x98] sm:$0x1]
      %v6495 = vld [vmem:[#allocation3 + $0xa4] sm:$0x1]
      %v6496 = vld [vmem:[#allocation3 + $0xb0] sm:$0x1]
      %v6497 = vld [vmem:[#allocation3 + $0xbc] sm:$0x1]
      %v6499 = vshrl.u32 %v6434, 16
      %v6501 = vrot.slane %v6499, 4
      %v6502 = vshll.u32 %v6434, 16
      %v6504 = vrot.slane %v6502, 5
      %v6505 = vor.u32 %v6501, %v6504
      %v6506 = vrot.slane %v6505, 4
      %v6508 = vshll.u32 %v6435, 16
      %v6510 = vrot.slane %v6508, 5
      %v6511 = vsel %vm977, %v6506, %v6510
      %v6512 = vshrl.u32 %v6435, 16
      %v6514 = vrot.slane %v6512, 4
      %v6515 = vor.u32 %v6514, %v6510
      %v6516 = vrot.slane %v6515, 4
      %v6518 = vshll.u32 %v6482, 16
      %v6520 = vrot.slane %v6518, 5
      %v6521 = vsel %vm977, %v6516, %v6520
      %v6523 = vshrl.u32 %v6436, 16
      %v6525 = vrot.slane %v6523, 4
      %v6526 = vshll.u32 %v6436, 16
      %v6528 = vrot.slane %v6526, 5
      %v6529 = vor.u32 %v6525, %v6528
      %v6530 = vrot.slane %v6529, 4
      %v6532 = vshll.u32 %v6437, 16
      %v6534 = vrot.slane %v6532, 5
      %v6535 = vsel %vm977, %v6530, %v6534
      %v6536 = vshrl.u32 %v6437, 16
      %v6538 = vrot.slane %v6536, 4
      %v6539 = vor.u32 %v6538, %v6534
      %v6540 = vrot.slane %v6539, 4
      %v6542 = vshll.u32 %v6483, 16
      %v6544 = vrot.slane %v6542, 5
      %v6545 = vsel %vm977, %v6540, %v6544
      %v6547 = vshrl.u32 %v6438, 16
      %v6549 = vrot.slane %v6547, 4
      %v6550 = vshll.u32 %v6438, 16
      %v6552 = vrot.slane %v6550, 5
      %v6553 = vor.u32 %v6549, %v6552
      %v6554 = vrot.slane %v6553, 4
      %v6556 = vshll.u32 %v6439, 16
      %v6558 = vrot.slane %v6556, 5
      %v6559 = vsel %vm977, %v6554, %v6558
      %v6560 = vshrl.u32 %v6439, 16
      %v6562 = vrot.slane %v6560, 4
      %v6563 = vor.u32 %v6562, %v6558
      %v6564 = vrot.slane %v6563, 4
      %v6566 = vshll.u32 %v6484, 16
      %v6568 = vrot.slane %v6566, 5
      %v6569 = vsel %vm977, %v6564, %v6568
      %v6571 = vshrl.u32 %v6440, 16
      %v6573 = vrot.slane %v6571, 4
      %v6574 = vshll.u32 %v6440, 16
      %v6576 = vrot.slane %v6574, 5
      %v6577 = vor.u32 %v6573, %v6576
      %v6578 = vrot.slane %v6577, 4
      %v6580 = vshll.u32 %v6441, 16
      %v6582 = vrot.slane %v6580, 5
      %v6583 = vsel %vm977, %v6578, %v6582
      %v6584 = vshrl.u32 %v6441, 16
      %v6586 = vrot.slane %v6584, 4
      %v6587 = vor.u32 %v6586, %v6582
      %v6588 = vrot.slane %v6587, 4
      %v6590 = vshll.u32 %v6485, 16
      %v6592 = vrot.slane %v6590, 5
      %v6593 = vsel %vm977, %v6588, %v6592
      %v6595 = vshrl.u32 %v6442, 16
      %v6597 = vrot.slane %v6595, 4
      %v6598 = vshll.u32 %v6442, 16
      %v6600 = vrot.slane %v6598, 5
      %v6601 = vor.u32 %v6597, %v6600
      %v6602 = vrot.slane %v6601, 4
      %v6604 = vshll.u32 %v6443, 16
      %v6606 = vrot.slane %v6604, 5
      %v6607 = vsel %vm977, %v6602, %v6606
      %v6608 = vshrl.u32 %v6443, 16
      %v6610 = vrot.slane %v6608, 4
      %v6611 = vor.u32 %v6610, %v6606
      %v6612 = vrot.slane %v6611, 4
      %v6614 = vshll.u32 %v6486, 16
      %v6616 = vrot.slane %v6614, 5
      %v6617 = vsel %vm977, %v6612, %v6616
      %v6619 = vshrl.u32 %v6444, 16
      %v6621 = vrot.slane %v6619, 4
      %v6622 = vshll.u32 %v6444, 16
      %v6624 = vrot.slane %v6622, 5
      %v6625 = vor.u32 %v6621, %v6624
      %v6626 = vrot.slane %v6625, 4
      %v6628 = vshll.u32 %v6445, 16
      %v6630 = vrot.slane %v6628, 5
      %v6631 = vsel %vm977, %v6626, %v6630
      %v6632 = vshrl.u32 %v6445, 16
      %v6634 = vrot.slane %v6632, 4
      %v6635 = vor.u32 %v6634, %v6630
      %v6636 = vrot.slane %v6635, 4
      %v6638 = vshll.u32 %v6487, 16
      %v6640 = vrot.slane %v6638, 5
      %v6641 = vsel %vm977, %v6636, %v6640
      %v6643 = vshrl.u32 %v6446, 16
      %v6645 = vrot.slane %v6643, 4
      %v6646 = vshll.u32 %v6446, 16
      %v6648 = vrot.slane %v6646, 5
      %v6649 = vor.u32 %v6645, %v6648
      %v6650 = vrot.slane %v6649, 4
      %v6652 = vshll.u32 %v6447, 16
      %v6654 = vrot.slane %v6652, 5
      %v6655 = vsel %vm977, %v6650, %v6654
      %v6656 = vshrl.u32 %v6447, 16
      %v6658 = vrot.slane %v6656, 4
      %v6659 = vor.u32 %v6658, %v6654
      %v6660 = vrot.slane %v6659, 4
      %v6662 = vshll.u32 %v6488, 16
      %v6664 = vrot.slane %v6662, 5
      %v6665 = vsel %vm977, %v6660, %v6664
      %v6667 = vshrl.u32 %v6448, 16
      %v6669 = vrot.slane %v6667, 4
      %v6670 = vshll.u32 %v6448, 16
      %v6672 = vrot.slane %v6670, 5
      %v6673 = vor.u32 %v6669, %v6672
      %v6674 = vrot.slane %v6673, 4
      %v6676 = vshll.u32 %v6449, 16
      %v6678 = vrot.slane %v6676, 5
      %v6679 = vsel %vm977, %v6674, %v6678
      %v6680 = vshrl.u32 %v6449, 16
      %v6682 = vrot.slane %v6680, 4
      %v6683 = vor.u32 %v6682, %v6678
      %v6684 = vrot.slane %v6683, 4
      %v6686 = vshll.u32 %v6489, 16
      %v6688 = vrot.slane %v6686, 5
      %v6689 = vsel %vm977, %v6684, %v6688
      %v6691 = vshrl.u32 %v6450, 16
      %v6693 = vrot.slane %v6691, 4
      %v6694 = vshll.u32 %v6450, 16
      %v6696 = vrot.slane %v6694, 5
      %v6697 = vor.u32 %v6693, %v6696
      %v6698 = vrot.slane %v6697, 4
      %v6700 = vshll.u32 %v6451, 16
      %v6702 = vrot.slane %v6700, 5
      %v6703 = vsel %vm977, %v6698, %v6702
      %v6704 = vshrl.u32 %v6451, 16
      %v6706 = vrot.slane %v6704, 4
      %v6707 = vor.u32 %v6706, %v6702
      %v6708 = vrot.slane %v6707, 4
      %v6710 = vshll.u32 %v6490, 16
      %v6712 = vrot.slane %v6710, 5
      %v6713 = vsel %vm977, %v6708, %v6712
      %v6715 = vshrl.u32 %v6452, 16
      %v6717 = vrot.slane %v6715, 4
      %v6718 = vshll.u32 %v6452, 16
      %v6720 = vrot.slane %v6718, 5
      %v6721 = vor.u32 %v6717, %v6720
      %v6722 = vrot.slane %v6721, 4
      %v6724 = vshll.u32 %v6453, 16
      %v6726 = vrot.slane %v6724, 5
      %v6727 = vsel %vm977, %v6722, %v6726
      %v6728 = vshrl.u32 %v6453, 16
      %v6730 = vrot.slane %v6728, 4
      %v6731 = vor.u32 %v6730, %v6726
      %v6732 = vrot.slane %v6731, 4
      %v6734 = vshll.u32 %v6491, 16
      %v6736 = vrot.slane %v6734, 5
      %v6737 = vsel %vm977, %v6732, %v6736
      %v6739 = vshrl.u32 %v6454, 16
      %v6741 = vrot.slane %v6739, 4
      %v6742 = vshll.u32 %v6454, 16
      %v6744 = vrot.slane %v6742, 5
      %v6745 = vor.u32 %v6741, %v6744
      %v6746 = vrot.slane %v6745, 4
      %v6748 = vshll.u32 %v6455, 16
      %v6750 = vrot.slane %v6748, 5
      %v6751 = vsel %vm977, %v6746, %v6750
      %v6752 = vshrl.u32 %v6455, 16
      %v6754 = vrot.slane %v6752, 4
      %v6755 = vor.u32 %v6754, %v6750
      %v6756 = vrot.slane %v6755, 4
      %v6758 = vshll.u32 %v6492, 16
      %v6760 = vrot.slane %v6758, 5
      %v6761 = vsel %vm977, %v6756, %v6760
      %v6763 = vshrl.u32 %v6456, 16
      %v6765 = vrot.slane %v6763, 4
      %v6766 = vshll.u32 %v6456, 16
      %v6768 = vrot.slane %v6766, 5
      %v6769 = vor.u32 %v6765, %v6768
      %v6770 = vrot.slane %v6769, 4
      %v6772 = vshll.u32 %v6457, 16
      %v6774 = vrot.slane %v6772, 5
      %v6775 = vsel %vm977, %v6770, %v6774
      %v6776 = vshrl.u32 %v6457, 16
      %v6778 = vrot.slane %v6776, 4
      %v6779 = vor.u32 %v6778, %v6774
      %v6780 = vrot.slane %v6779, 4
      %v6782 = vshll.u32 %v6493, 16
      %v6784 = vrot.slane %v6782, 5
      %v6785 = vsel %vm977, %v6780, %v6784
      %v6787 = vshrl.u32 %v6458, 16
      %v6789 = vrot.slane %v6787, 4
      %v6790 = vshll.u32 %v6458, 16
      %v6792 = vrot.slane %v6790, 5
      %v6793 = vor.u32 %v6789, %v6792
      %v6794 = vrot.slane %v6793, 4
      %v6796 = vshll.u32 %v6459, 16
      %v6798 = vrot.slane %v6796, 5
      %v6799 = vsel %vm977, %v6794, %v6798
      %v6800 = vshrl.u32 %v6459, 16
      %v6802 = vrot.slane %v6800, 4
      %v6803 = vor.u32 %v6802, %v6798
      %v6804 = vrot.slane %v6803, 4
      %v6806 = vshll.u32 %v6494, 16
      %v6808 = vrot.slane %v6806, 5
      %v6809 = vsel %vm977, %v6804, %v6808
      %v6811 = vshrl.u32 %v6460, 16
      %v6813 = vrot.slane %v6811, 4
      %v6814 = vshll.u32 %v6460, 16
      %v6816 = vrot.slane %v6814, 5
      %v6817 = vor.u32 %v6813, %v6816
      %v6818 = vrot.slane %v6817, 4
      %v6820 = vshll.u32 %v6461, 16
      %v6822 = vrot.slane %v6820, 5
      %v6823 = vsel %vm977, %v6818, %v6822
      %v6824 = vshrl.u32 %v6461, 16
      %v6826 = vrot.slane %v6824, 4
      %v6827 = vor.u32 %v6826, %v6822
      %v6828 = vrot.slane %v6827, 4
      %v6830 = vshll.u32 %v6495, 16
      %v6832 = vrot.slane %v6830, 5
      %v6833 = vsel %vm977, %v6828, %v6832
      %v6835 = vshrl.u32 %v6462, 16
      %v6837 = vrot.slane %v6835, 4
      %v6838 = vshll.u32 %v6462, 16
      %v6840 = vrot.slane %v6838, 5
      %v6841 = vor.u32 %v6837, %v6840
      %v6842 = vrot.slane %v6841, 4
      %v6844 = vshll.u32 %v6463, 16
      %v6846 = vrot.slane %v6844, 5
      %v6847 = vsel %vm977, %v6842, %v6846
      %v6848 = vshrl.u32 %v6463, 16
      %v6850 = vrot.slane %v6848, 4
      %v6851 = vor.u32 %v6850, %v6846
      %v6852 = vrot.slane %v6851, 4
      %v6854 = vshll.u32 %v6496, 16
      %v6856 = vrot.slane %v6854, 5
      %v6857 = vsel %vm977, %v6852, %v6856
      %v6859 = vshrl.u32 %v6464, 16
      %v6861 = vrot.slane %v6859, 4
      %v6862 = vshll.u32 %v6464, 16
      %v6864 = vrot.slane %v6862, 5
      %v6865 = vor.u32 %v6861, %v6864
      %v6866 = vrot.slane %v6865, 4
      %v6868 = vshll.u32 %v6465, 16
      %v6870 = vrot.slane %v6868, 5
      %v6871 = vsel %vm977, %v6866, %v6870
      %v6872 = vshrl.u32 %v6465, 16
      %v6874 = vrot.slane %v6872, 4
      %v6875 = vor.u32 %v6874, %v6870
      %v6876 = vrot.slane %v6875, 4
      %v6878 = vshll.u32 %v6497, 16
      %v6880 = vrot.slane %v6878, 5
      %v6881 = vsel %vm977, %v6876, %v6880
      %s6882 = scalar_lea.vmem %s3, 64
      %v6883 = vld [vmem:[%s6882] sm:$0xf]
      %v6884 = vld [vmem:[%s6882 + $0x4] sm:$0xf]
      %v6885 = vld [vmem:[%s6882 + $0x8] sm:$0xf]
      %v6886 = vld [vmem:[%s6882 + $0xc] sm:$0xf]
      %v6887 = vld [vmem:[%s6882 + $0x10] sm:$0xf]
      %v6888 = vld [vmem:[%s6882 + $0x14] sm:$0xf]
      %v6889 = vld [vmem:[%s6882 + $0x18] sm:$0xf]
      %v6890 = vld [vmem:[%s6882 + $0x1c] sm:$0xf]
      %v6891 = vld [vmem:[%s6882 + $0x20] sm:$0xf]
      %v6892 = vld [vmem:[%s6882 + $0x24] sm:$0xf]
      %v6893 = vld [vmem:[%s6882 + $0x28] sm:$0xf]
      %v6894 = vld [vmem:[%s6882 + $0x2c] sm:$0xf]
      %v6895 = vld [vmem:[%s6882 + $0x30] sm:$0xf]
      %v6896 = vld [vmem:[%s6882 + $0x34] sm:$0xf]
      %v6897 = vld [vmem:[%s6882 + $0x38] sm:$0xf]
      %v6898 = vld [vmem:[%s6882 + $0x3c] sm:$0xf]
      %v6899 = vunpack.c.l.b16 %v6511
      %v6900 = vunpack.c.l.b16 %v6521
      %v6901 = vunpack.c.l.b16 %v6535
      %v6902 = vunpack.c.l.b16 %v6545
      %v6903 = vunpack.c.l.b16 %v6559
      %v6904 = vunpack.c.l.b16 %v6569
      %v6905 = vunpack.c.l.b16 %v6583
      %v6906 = vunpack.c.l.b16 %v6593
      %v6907 = vunpack.c.l.b16 %v6607
      %v6908 = vunpack.c.l.b16 %v6617
      %v6909 = vunpack.c.l.b16 %v6631
      %v6910 = vunpack.c.l.b16 %v6641
      %v6911 = vunpack.c.l.b16 %v6655
      %v6912 = vunpack.c.l.b16 %v6665
      %v6913 = vunpack.c.l.b16 %v6679
      %v6914 = vunpack.c.l.b16 %v6689
      %v6915 = vunpack.c.l.b16 %v6703
      %v6916 = vunpack.c.l.b16 %v6713
      %v6917 = vunpack.c.l.b16 %v6727
      %v6918 = vunpack.c.l.b16 %v6737
      %v6919 = vunpack.c.l.b16 %v6751
      %v6920 = vunpack.c.l.b16 %v6761
      %v6921 = vunpack.c.l.b16 %v6775
      %v6922 = vunpack.c.l.b16 %v6785
      %v6923 = vunpack.c.l.b16 %v6799
      %v6924 = vunpack.c.l.b16 %v6809
      %v6925 = vunpack.c.l.b16 %v6823
      %v6926 = vunpack.c.l.b16 %v6833
      %v6927 = vunpack.c.l.b16 %v6847
      %v6928 = vunpack.c.l.b16 %v6857
      %v6929 = vunpack.c.l.b16 %v6871
      %v6930 = vunpack.c.l.b16 %v6881
      %v6931 = vpack.c.b16 %v6900, %v6899
      %v6932 = vpack.c.b16 %v6902, %v6901
      %v6933 = vpack.c.b16 %v6904, %v6903
      %v6934 = vpack.c.b16 %v6906, %v6905
      %v6935 = vpack.c.b16 %v6908, %v6907
      %v6936 = vpack.c.b16 %v6910, %v6909
      %v6937 = vpack.c.b16 %v6912, %v6911
      %v6938 = vpack.c.b16 %v6914, %v6913
      %v6939 = vpack.c.b16 %v6916, %v6915
      %v6940 = vpack.c.b16 %v6918, %v6917
      %v6941 = vpack.c.b16 %v6920, %v6919
      %v6942 = vpack.c.b16 %v6922, %v6921
      %v6943 = vpack.c.b16 %v6924, %v6923
      %v6944 = vpack.c.b16 %v6926, %v6925
      %v6945 = vpack.c.b16 %v6928, %v6927
      %v6946 = vpack.c.b16 %v6930, %v6929
      %v6979 = vunpack.c.l.b16 %v6883
      %v6980 = vunpack.c.l.b16 %v6884
      %v6981 = vunpack.c.l.b16 %v6885
      %v6982 = vunpack.c.l.b16 %v6886
      %v6983 = vunpack.c.l.b16 %v6887
      %v6984 = vunpack.c.l.b16 %v6888
      %v6985 = vunpack.c.l.b16 %v6889
      %v6986 = vunpack.c.l.b16 %v6890
      %v6987 = vunpack.c.l.b16 %v6891
      %v6988 = vunpack.c.l.b16 %v6892
      %v6989 = vunpack.c.l.b16 %v6893
      %v6990 = vunpack.c.l.b16 %v6894
      %v6991 = vunpack.c.l.b16 %v6895
      %v6992 = vunpack.c.l.b16 %v6896
      %v6993 = vunpack.c.l.b16 %v6897
      %v6994 = vunpack.c.l.b16 %v6898
      %v6995 = vpack.c.b16 %v6980, %v6979
      %v6996 = vpack.c.b16 %v6982, %v6981
      %v6997 = vpack.c.b16 %v6984, %v6983
      %v6998 = vpack.c.b16 %v6986, %v6985
      %v6999 = vpack.c.b16 %v6988, %v6987
      %v7000 = vpack.c.b16 %v6990, %v6989
      %v7001 = vpack.c.b16 %v6992, %v6991
      %v7002 = vpack.c.b16 %v6994, %v6993
      %7011 = vmatprep.subr.bf16.mxu0 0
      %7012 = vmatpush1.bf16.msra.mxu0 %v6995
      %7013 = vmatprep.subr.bf16.mxu0 0
      %7014 = vmatpush1.bf16.msra.mxu0 %v6996
      %7015 = vmatprep.subr.bf16.mxu0 0
      %7016 = vmatpush1.bf16.msra.mxu0 %v6997
      %7017 = vmatprep.subr.bf16.mxu0 0
      %7018 = vmatpush1.bf16.msra.mxu0 %v6998
      %7019 = vmatprep.subr.bf16.mxu0 0
      %7020 = vmatpush1.bf16.msra.mxu0 %v6999
      %7021 = vmatprep.subr.bf16.mxu0 0
      %7022 = vmatpush1.bf16.msra.mxu0 %v7000
      %7023 = vmatprep.subr.bf16.mxu0 0
      %7024 = vmatpush1.bf16.msra.mxu0 %v7001
      %7025 = vmatprep.subr.bf16.mxu0 0
      %7026 = vmatpush1.bf16.msra.mxu0 %v7002
      %7027 = vmatprep.subr.bf16.mxu0 0
      %7028 = vmatpush1.bf16.msra.mxu0 0
      %7029 = vmatprep.subr.bf16.mxu0 0
      %7030 = vmatpush1.bf16.msra.mxu0 0
      %7031 = vmatprep.subr.bf16.mxu0 0
      %7032 = vmatpush1.bf16.msra.mxu0 0
      %7033 = vmatprep.subr.bf16.mxu0 0
      %7034 = vmatpush1.bf16.msra.mxu0 0
      %7035 = vmatprep.subr.bf16.mxu0 0
      %7036 = vmatpush1.bf16.msra.mxu0 0
      %7037 = vmatprep.subr.bf16.mxu0 0
      %7038 = vmatpush1.bf16.msra.mxu0 0
      %7039 = vmatprep.subr.bf16.mxu0 0
      %7040 = vmatpush1.bf16.msra.mxu0 0
      %7041 = vmatprep.subr.bf16.mxu0 0
      %7042 = vmatpush1.bf16.msra.mxu0 0
      %7043 = vmatprep.mubr.bf16.mxu0 0
      %7044 = vmatmul.mubr.bf16.gmra.mrb[0].mxu0 %v6931
      %v7045 = vpop.f32.mrb[0].mxu0
      %v7046 = vadd.f32 0.0, %v7045
      %v7047 = vpop.f32.mrb[0].mxu0
      %v7048 = vpop.f32.mrb[0].mxu0
      %v7049 = vadd.f32 0.0, %v7048
      %v7050 = vpop.f32.mrb[0].mxu0
      %7051 = vmatprep.mubr.bf16.mxu0 0
      %7052 = vmatmul.mubr.bf16.gmra.mrb[0].mxu0 %v6932
      %v7053 = vpop.f32.mrb[0].mxu0
      %v7054 = vadd.f32 0.0, %v7053
      %v7055 = vpop.f32.mrb[0].mxu0
      %v7056 = vpop.f32.mrb[0].mxu0
      %v7057 = vadd.f32 0.0, %v7056
      %v7058 = vpop.f32.mrb[0].mxu0
      %7059 = vmatprep.mubr.bf16.mxu0 0
      %7060 = vmatmul.mubr.bf16.gmra.mrb[0].mxu0 %v6933
      %v7061 = vpop.f32.mrb[0].mxu0
      %v7062 = vadd.f32 0.0, %v7061
      %v7063 = vpop.f32.mrb[0].mxu0
      %v7064 = vpop.f32.mrb[0].mxu0
      %v7065 = vadd.f32 0.0, %v7064
      %v7066 = vpop.f32.mrb[0].mxu0
      %7067 = vmatprep.mubr.bf16.mxu0 0
      %7068 = vmatmul.mubr.bf16.gmra.mrb[0].mxu0 %v6934
      %v7069 = vpop.f32.mrb[0].mxu0
      %v7070 = vadd.f32 0.0, %v7069
      %v7071 = vpop.f32.mrb[0].mxu0
      %v7072 = vpop.f32.mrb[0].mxu0
      %v7073 = vadd.f32 0.0, %v7072
      %v7074 = vpop.f32.mrb[0].mxu0
      %7075 = vmatprep.mubr.bf16.mxu0 0
      %7076 = vmatmul.mubr.bf16.gmra.mrb[0].mxu0 %v6935
      %v7077 = vpop.f32.mrb[0].mxu0
      %v7078 = vadd.f32 0.0, %v7077
      %v7079 = vpop.f32.mrb[0].mxu0
      %v7080 = vpop.f32.mrb[0].mxu0
      %v7081 = vadd.f32 0.0, %v7080
      %v7082 = vpop.f32.mrb[0].mxu0
      %7083 = vmatprep.mubr.bf16.mxu0 0
      %7084 = vmatmul.mubr.bf16.gmra.mrb[0].mxu0 %v6936
      %v7085 = vpop.f32.mrb[0].mxu0
      %v7086 = vadd.f32 0.0, %v7085
      %v7087 = vpop.f32.mrb[0].mxu0
      %v7088 = vpop.f32.mrb[0].mxu0
      %v7089 = vadd.f32 0.0, %v7088
      %v7090 = vpop.f32.mrb[0].mxu0
      %7091 = vmatprep.mubr.bf16.mxu0 0
      %7092 = vmatmul.mubr.bf16.gmra.mrb[0].mxu0 %v6937
      %v7093 = vpop.f32.mrb[0].mxu0
      %v7094 = vadd.f32 0.0, %v7093
      %v7095 = vpop.f32.mrb[0].mxu0
      %v7096 = vpop.f32.mrb[0].mxu0
      %v7097 = vadd.f32 0.0, %v7096
      %v7098 = vpop.f32.mrb[0].mxu0
      %7099 = vmatprep.mubr.bf16.mxu0 0
      %7100 = vmatmul.mubr.bf16.gmra.mrb[0].mxu0 %v6938
      %v7101 = vpop.f32.mrb[0].mxu0
      %v7102 = vadd.f32 0.0, %v7101
      %v7103 = vpop.f32.mrb[0].mxu0
      %v7104 = vpop.f32.mrb[0].mxu0
      %v7105 = vadd.f32 0.0, %v7104
      %v7106 = vpop.f32.mrb[0].mxu0
      %7107 = vmatprep.mubr.bf16.mxu0 0
      %7108 = vmatmul.mubr.bf16.gmra.mrb[0].mxu0 %v6939
      %v7109 = vpop.f32.mrb[0].mxu0
      %v7110 = vadd.f32 0.0, %v7109
      %v7111 = vpop.f32.mrb[0].mxu0
      %v7112 = vpop.f32.mrb[0].mxu0
      %v7113 = vadd.f32 0.0, %v7112
      %v7114 = vpop.f32.mrb[0].mxu0
      %7115 = vmatprep.mubr.bf16.mxu0 0
      %7116 = vmatmul.mubr.bf16.gmra.mrb[0].mxu0 %v6940
      %v7117 = vpop.f32.mrb[0].mxu0
      %v7118 = vadd.f32 0.0, %v7117
      %v7119 = vpop.f32.mrb[0].mxu0
      %v7120 = vpop.f32.mrb[0].mxu0
      %v7121 = vadd.f32 0.0, %v7120
      %v7122 = vpop.f32.mrb[0].mxu0
      %7123 = vmatprep.mubr.bf16.mxu0 0
      %7124 = vmatmul.mubr.bf16.gmra.mrb[0].mxu0 %v6941
      %v7125 = vpop.f32.mrb[0].mxu0
      %v7126 = vadd.f32 0.0, %v7125
      %v7127 = vpop.f32.mrb[0].mxu0
      %v7128 = vpop.f32.mrb[0].mxu0
      %v7129 = vadd.f32 0.0, %v7128
      %v7130 = vpop.f32.mrb[0].mxu0
      %7131 = vmatprep.mubr.bf16.mxu0 0
      %7132 = vmatmul.mubr.bf16.gmra.mrb[0].mxu0 %v6942
      %v7133 = vpop.f32.mrb[0].mxu0
      %v7134 = vadd.f32 0.0, %v7133
      %v7135 = vpop.f32.mrb[0].mxu0
      %v7136 = vpop.f32.mrb[0].mxu0
      %v7137 = vadd.f32 0.0, %v7136
      %v7138 = vpop.f32.mrb[0].mxu0
      %7139 = vmatprep.mubr.bf16.mxu0 0
      %7140 = vmatmul.mubr.bf16.gmra.mrb[0].mxu0 %v6943
      %v7141 = vpop.f32.mrb[0].mxu0
      %v7142 = vadd.f32 0.0, %v7141
      %v7143 = vpop.f32.mrb[0].mxu0
      %v7144 = vpop.f32.mrb[0].mxu0
      %v7145 = vadd.f32 0.0, %v7144
      %v7146 = vpop.f32.mrb[0].mxu0
      %7147 = vmatprep.mubr.bf16.mxu0 0
      %7148 = vmatmul.mubr.bf16.gmra.mrb[0].mxu0 %v6944
      %v7149 = vpop.f32.mrb[0].mxu0
      %v7150 = vadd.f32 0.0, %v7149
      %v7151 = vpop.f32.mrb[0].mxu0
      %v7152 = vpop.f32.mrb[0].mxu0
      %v7153 = vadd.f32 0.0, %v7152
      %v7154 = vpop.f32.mrb[0].mxu0
      %7155 = vmatprep.mubr.bf16.mxu0 0
      %7156 = vmatmul.mubr.bf16.gmra.mrb[0].mxu0 %v6945
      %v7157 = vpop.f32.mrb[0].mxu0
      %v7158 = vadd.f32 0.0, %v7157
      %v7159 = vpop.f32.mrb[0].mxu0
      %v7160 = vpop.f32.mrb[0].mxu0
      %v7161 = vadd.f32 0.0, %v7160
      %v7162 = vpop.f32.mrb[0].mxu0
      %7163 = vmatprep.mubr.bf16.mxu0 0
      %7164 = vmatmul.mubr.bf16.gmra.mrb[0].mxu0 %v6946
      %v7165 = vpop.f32.mrb[0].mxu0
      %v7166 = vadd.f32 0.0, %v7165
      %v7167 = vpop.f32.mrb[0].mxu0
      %v7168 = vpop.f32.mrb[0].mxu0
      %v7169 = vadd.f32 0.0, %v7168
      %v7170 = vpop.f32.mrb[0].mxu0
      %7171 = vdwg.mxu0
      %v7204 = vunpack.c.l.b16 %v6434
      %v7205 = vunpack.c.l.b16 %v6435
      %v7206 = vunpack.c.l.b16 %v6436
      %v7207 = vunpack.c.l.b16 %v6437
      %v7208 = vunpack.c.l.b16 %v6438
      %v7209 = vunpack.c.l.b16 %v6439
      %v7210 = vunpack.c.l.b16 %v6440
      %v7211 = vunpack.c.l.b16 %v6441
      %v7212 = vunpack.c.l.b16 %v6442
      %v7213 = vunpack.c.l.b16 %v6443
      %v7214 = vunpack.c.l.b16 %v6444
      %v7215 = vunpack.c.l.b16 %v6445
      %v7216 = vunpack.c.l.b16 %v6446
      %v7217 = vunpack.c.l.b16 %v6447
      %v7218 = vunpack.c.l.b16 %v6448
      %v7219 = vunpack.c.l.b16 %v6449
      %v7220 = vunpack.c.l.b16 %v6450
      %v7221 = vunpack.c.l.b16 %v6451
      %v7222 = vunpack.c.l.b16 %v6452
      %v7223 = vunpack.c.l.b16 %v6453
      %v7224 = vunpack.c.l.b16 %v6454
      %v7225 = vunpack.c.l.b16 %v6455
      %v7226 = vunpack.c.l.b16 %v6456
      %v7227 = vunpack.c.l.b16 %v6457
      %v7228 = vunpack.c.l.b16 %v6458
      %v7229 = vunpack.c.l.b16 %v6459
      %v7230 = vunpack.c.l.b16 %v6460
      %v7231 = vunpack.c.l.b16 %v6461
      %v7232 = vunpack.c.l.b16 %v6462
      %v7233 = vunpack.c.l.b16 %v6463
      %v7234 = vunpack.c.l.b16 %v6464
      %v7235 = vunpack.c.l.b16 %v6465
      %v7236 = vpack.c.b16 %v7205, %v7204
      %v7237 = vpack.c.b16 %v7207, %v7206
      %v7238 = vpack.c.b16 %v7209, %v7208
      %v7239 = vpack.c.b16 %v7211, %v7210
      %v7240 = vpack.c.b16 %v7213, %v7212
      %v7241 = vpack.c.b16 %v7215, %v7214
      %v7242 = vpack.c.b16 %v7217, %v7216
      %v7243 = vpack.c.b16 %v7219, %v7218
      %v7244 = vpack.c.b16 %v7221, %v7220
      %v7245 = vpack.c.b16 %v7223, %v7222
      %v7246 = vpack.c.b16 %v7225, %v7224
      %v7247 = vpack.c.b16 %v7227, %v7226
      %v7248 = vpack.c.b16 %v7229, %v7228
      %v7249 = vpack.c.b16 %v7231, %v7230
      %v7250 = vpack.c.b16 %v7233, %v7232
      %v7251 = vpack.c.b16 %v7235, %v7234
      %v7284 = vunpack.c.l.b16 %v6466
      %v7285 = vunpack.c.l.b16 %v6467
      %v7286 = vunpack.c.l.b16 %v6468
      %v7287 = vunpack.c.l.b16 %v6469
      %v7288 = vunpack.c.l.b16 %v6470
      %v7289 = vunpack.c.l.b16 %v6471
      %v7290 = vunpack.c.l.b16 %v6472
      %v7291 = vunpack.c.l.b16 %v6473
      %v7292 = vunpack.c.l.b16 %v6474
      %v7293 = vunpack.c.l.b16 %v6475
      %v7294 = vunpack.c.l.b16 %v6476
      %v7295 = vunpack.c.l.b16 %v6477
      %v7296 = vunpack.c.l.b16 %v6478
      %v7297 = vunpack.c.l.b16 %v6479
      %v7298 = vunpack.c.l.b16 %v6480
      %v7299 = vunpack.c.l.b16 %v6481
      %v7300 = vpack.c.b16 %v7285, %v7284
      %v7301 = vpack.c.b16 %v7287, %v7286
      %v7302 = vpack.c.b16 %v7289, %v7288
      %v7303 = vpack.c.b16 %v7291, %v7290
      %v7304 = vpack.c.b16 %v7293, %v7292
      %v7305 = vpack.c.b16 %v7295, %v7294
      %v7306 = vpack.c.b16 %v7297, %v7296
      %v7307 = vpack.c.b16 %v7299, %v7298
      %7316 = vmatprep.subr.bf16.mxu0 0
      %7317 = vmatpush1.bf16.msra.mxu0 %v7300
      %7318 = vmatprep.subr.bf16.mxu0 0
      %7319 = vmatpush1.bf16.msra.mxu0 %v7301
      %7320 = vmatprep.subr.bf16.mxu0 0
      %7321 = vmatpush1.bf16.msra.mxu0 %v7302
      %7322 = vmatprep.subr.bf16.mxu0 0
      %7323 = vmatpush1.bf16.msra.mxu0 %v7303
      %7324 = vmatprep.subr.bf16.mxu0 0
      %7325 = vmatpush1.bf16.msra.mxu0 %v7304
      %7326 = vmatprep.subr.bf16.mxu0 0
      %7327 = vmatpush1.bf16.msra.mxu0 %v7305
      %7328 = vmatprep.subr.bf16.mxu0 0
      %7329 = vmatpush1.bf16.msra.mxu0 %v7306
      %7330 = vmatprep.subr.bf16.mxu0 0
      %7331 = vmatpush1.bf16.msra.mxu0 %v7307
      %7332 = vmatprep.subr.bf16.mxu0 0
      %7333 = vmatpush1.bf16.msra.mxu0 0
      %7334 = vmatprep.subr.bf16.mxu0 0
      %7335 = vmatpush1.bf16.msra.mxu0 0
      %7336 = vmatprep.subr.bf16.mxu0 0
      %7337 = vmatpush1.bf16.msra.mxu0 0
      %7338 = vmatprep.subr.bf16.mxu0 0
      %7339 = vmatpush1.bf16.msra.mxu0 0
      %7340 = vmatprep.subr.bf16.mxu0 0
      %7341 = vmatpush1.bf16.msra.mxu0 0
      %7342 = vmatprep.subr.bf16.mxu0 0
      %7343 = vmatpush1.bf16.msra.mxu0 0
      %7344 = vmatprep.subr.bf16.mxu0 0
      %7345 = vmatpush1.bf16.msra.mxu0 0
      %7346 = vmatprep.subr.bf16.mxu0 0
      %7347 = vmatpush1.bf16.msra.mxu0 0
      %7348 = vmatprep.mubr.bf16.mxu0 0
      %7349 = vmatmul.mubr.bf16.gmra.mrb[0].mxu0 %v7236
      %v7350 = vpop.f32.mrb[0].mxu0
      %v7351 = vadd.f32 %v7046, %v7350
      %v7352 = vpop.f32.mrb[0].mxu0
      %v7353 = vpop.f32.mrb[0].mxu0
      %v7354 = vadd.f32 %v7049, %v7353
      %v7355 = vpop.f32.mrb[0].mxu0
      %7356 = vmatprep.mubr.bf16.mxu0 0
      %7357 = vmatmul.mubr.bf16.gmra.mrb[0].mxu0 %v7237
      %v7358 = vpop.f32.mrb[0].mxu0
      %v7359 = vadd.f32 %v7054, %v7358
      %v7360 = vpop.f32.mrb[0].mxu0
      %v7361 = vpop.f32.mrb[0].mxu0
      %v7362 = vadd.f32 %v7057, %v7361
      %v7363 = vpop.f32.mrb[0].mxu0
      %7364 = vmatprep.mubr.bf16.mxu0 0
      %7365 = vmatmul.mubr.bf16.gmra.mrb[0].mxu0 %v7238
      %v7366 = vpop.f32.mrb[0].mxu0
      %v7367 = vadd.f32 %v7062, %v7366
      %v7368 = vpop.f32.mrb[0].mxu0
      %v7369 = vpop.f32.mrb[0].mxu0
      %v7370 = vadd.f32 %v7065, %v7369
      %v7371 = vpop.f32.mrb[0].mxu0
      %7372 = vmatprep.mubr.bf16.mxu0 0
      %7373 = vmatmul.mubr.bf16.gmra.mrb[0].mxu0 %v7239
      %v7374 = vpop.f32.mrb[0].mxu0
      %v7375 = vadd.f32 %v7070, %v7374
      %v7376 = vpop.f32.mrb[0].mxu0
      %v7377 = vpop.f32.mrb[0].mxu0
      %v7378 = vadd.f32 %v7073, %v7377
      %v7379 = vpop.f32.mrb[0].mxu0
      %7380 = vmatprep.mubr.bf16.mxu0 0
      %7381 = vmatmul.mubr.bf16.gmra.mrb[0].mxu0 %v7240
      %v7382 = vpop.f32.mrb[0].mxu0
      %v7383 = vadd.f32 %v7078, %v7382
      %v7384 = vpop.f32.mrb[0].mxu0
      %v7385 = vpop.f32.mrb[0].mxu0
      %v7386 = vadd.f32 %v7081, %v7385
      %v7387 = vpop.f32.mrb[0].mxu0
      %7388 = vmatprep.mubr.bf16.mxu0 0
      %7389 = vmatmul.mubr.bf16.gmra.mrb[0].mxu0 %v7241
      %v7390 = vpop.f32.mrb[0].mxu0
      %v7391 = vadd.f32 %v7086, %v7390
      %v7392 = vpop.f32.mrb[0].mxu0
      %v7393 = vpop.f32.mrb[0].mxu0
      %v7394 = vadd.f32 %v7089, %v7393
      %v7395 = vpop.f32.mrb[0].mxu0
      %7396 = vmatprep.mubr.bf16.mxu0 0
      %7397 = vmatmul.mubr.bf16.gmra.mrb[0].mxu0 %v7242
      %v7398 = vpop.f32.mrb[0].mxu0
      %v7399 = vadd.f32 %v7094, %v7398
      %v7400 = vpop.f32.mrb[0].mxu0
      %v7401 = vpop.f32.mrb[0].mxu0
      %v7402 = vadd.f32 %v7097, %v7401
      %v7403 = vpop.f32.mrb[0].mxu0
      %7404 = vmatprep.mubr.bf16.mxu0 0
      %7405 = vmatmul.mubr.bf16.gmra.mrb[0].mxu0 %v7243
      %v7406 = vpop.f32.mrb[0].mxu0
      %v7407 = vadd.f32 %v7102, %v7406
      %v7408 = vpop.f32.mrb[0].mxu0
      %v7409 = vpop.f32.mrb[0].mxu0
      %v7410 = vadd.f32 %v7105, %v7409
      %v7411 = vpop.f32.mrb[0].mxu0
      %7412 = vmatprep.mubr.bf16.mxu0 0
      %7413 = vmatmul.mubr.bf16.gmra.mrb[0].mxu0 %v7244
      %v7414 = vpop.f32.mrb[0].mxu0
      %v7415 = vadd.f32 %v7110, %v7414
      %v7416 = vpop.f32.mrb[0].mxu0
      %v7417 = vpop.f32.mrb[0].mxu0
      %v7418 = vadd.f32 %v7113, %v7417
      %v7419 = vpop.f32.mrb[0].mxu0
      %7420 = vmatprep.mubr.bf16.mxu0 0
      %7421 = vmatmul.mubr.bf16.gmra.mrb[0].mxu0 %v7245
      %v7422 = vpop.f32.mrb[0].mxu0
      %v7423 = vadd.f32 %v7118, %v7422
      %v7424 = vpop.f32.mrb[0].mxu0
      %v7425 = vpop.f32.mrb[0].mxu0
      %v7426 = vadd.f32 %v7121, %v7425
      %v7427 = vpop.f32.mrb[0].mxu0
      %7428 = vmatprep.mubr.bf16.mxu0 0
      %7429 = vmatmul.mubr.bf16.gmra.mrb[0].mxu0 %v7246
      %v7430 = vpop.f32.mrb[0].mxu0
      %v7431 = vadd.f32 %v7126, %v7430
      %v7432 = vpop.f32.mrb[0].mxu0
      %v7433 = vpop.f32.mrb[0].mxu0
      %v7434 = vadd.f32 %v7129, %v7433
      %v7435 = vpop.f32.mrb[0].mxu0
      %7436 = vmatprep.mubr.bf16.mxu0 0
      %7437 = vmatmul.mubr.bf16.gmra.mrb[0].mxu0 %v7247
      %v7438 = vpop.f32.mrb[0].mxu0
      %v7439 = vadd.f32 %v7134, %v7438
      %v7440 = vpop.f32.mrb[0].mxu0
      %v7441 = vpop.f32.mrb[0].mxu0
      %v7442 = vadd.f32 %v7137, %v7441
      %v7443 = vpop.f32.mrb[0].mxu0
      %7444 = vmatprep.mubr.bf16.mxu0 0
      %7445 = vmatmul.mubr.bf16.gmra.mrb[0].mxu0 %v7248
      %v7446 = vpop.f32.mrb[0].mxu0
      %v7447 = vadd.f32 %v7142, %v7446
      %v7448 = vpop.f32.mrb[0].mxu0
      %v7449 = vpop.f32.mrb[0].mxu0
      %v7450 = vadd.f32 %v7145, %v7449
      %v7451 = vpop.f32.mrb[0].mxu0
      %7452 = vmatprep.mubr.bf16.mxu0 0
      %7453 = vmatmul.mubr.bf16.gmra.mrb[0].mxu0 %v7249
      %v7454 = vpop.f32.mrb[0].mxu0
      %v7455 = vadd.f32 %v7150, %v7454
      %v7456 = vpop.f32.mrb[0].mxu0
      %v7457 = vpop.f32.mrb[0].mxu0
      %v7458 = vadd.f32 %v7153, %v7457
      %v7459 = vpop.f32.mrb[0].mxu0
      %7460 = vmatprep.mubr.bf16.mxu0 0
      %7461 = vmatmul.mubr.bf16.gmra.mrb[0].mxu0 %v7250
      %v7462 = vpop.f32.mrb[0].mxu0
      %v7463 = vadd.f32 %v7158, %v7462
      %v7464 = vpop.f32.mrb[0].mxu0
      %v7465 = vpop.f32.mrb[0].mxu0
      %v7466 = vadd.f32 %v7161, %v7465
      %v7467 = vpop.f32.mrb[0].mxu0
      %7468 = vmatprep.mubr.bf16.mxu0 0
      %7469 = vmatmul.mubr.bf16.gmra.mrb[0].mxu0 %v7251
      %v7470 = vpop.f32.mrb[0].mxu0
      %v7471 = vadd.f32 %v7166, %v7470
      %v7472 = vpop.f32.mrb[0].mxu0
      %v7473 = vpop.f32.mrb[0].mxu0
      %v7474 = vadd.f32 %v7169, %v7473
      %v7475 = vpop.f32.mrb[0].mxu0
      %7476 = vdwg.mxu0
      %v7477 = vld [vmem:[#allocation3] sm:$0xe]
      %v7478 = vld [vmem:[#allocation3 + $0xc] sm:$0xe]
      %v7479 = vld [vmem:[#allocation3 + $0x18] sm:$0xe]
      %v7480 = vld [vmem:[#allocation3 + $0x24] sm:$0xe]
      %v7481 = vld [vmem:[#allocation3 + $0x30] sm:$0xe]
      %v7482 = vld [vmem:[#allocation3 + $0x3c] sm:$0xe]
      %v7483 = vld [vmem:[#allocation3 + $0x48] sm:$0xe]
      %v7484 = vld [vmem:[#allocation3 + $0x54] sm:$0xe]
      %v7485 = vld [vmem:[#allocation3 + $0x60] sm:$0xe]
      %v7486 = vld [vmem:[#allocation3 + $0x6c] sm:$0xe]
      %v7487 = vld [vmem:[#allocation3 + $0x78] sm:$0xe]
      %v7488 = vld [vmem:[#allocation3 + $0x84] sm:$0xe]
      %v7489 = vld [vmem:[#allocation3 + $0x90] sm:$0xe]
      %v7490 = vld [vmem:[#allocation3 + $0x9c] sm:$0xe]
      %v7491 = vld [vmem:[#allocation3 + $0xa8] sm:$0xe]
      %v7492 = vld [vmem:[#allocation3 + $0xb4] sm:$0xe]
      %v7525 = vrot.slane %v7477, 5
      %v7526 = vrot.slane %v7525, 4
      %v7527 = vrot.slane %v6435, 5
      %v7528 = vsel %vm2007, %v7526, %v7527
      %v7529 = vrot.slane %v7527, 4
      %v7530 = vrot.slane %v6482, 5
      %v7531 = vsel %vm2007, %v7529, %v7530
      %v7532 = vrot.slane %v7478, 5
      %v7533 = vrot.slane %v7532, 4
      %v7534 = vrot.slane %v6437, 5
      %v7535 = vsel %vm2007, %v7533, %v7534
      %v7536 = vrot.slane %v7534, 4
      %v7537 = vrot.slane %v6483, 5
      %v7538 = vsel %vm2007, %v7536, %v7537
      %v7539 = vrot.slane %v7479, 5
      %v7540 = vrot.slane %v7539, 4
      %v7541 = vrot.slane %v6439, 5
      %v7542 = vsel %vm2007, %v7540, %v7541
      %v7543 = vrot.slane %v7541, 4
      %v7544 = vrot.slane %v6484, 5
      %v7545 = vsel %vm2007, %v7543, %v7544
      %v7546 = vrot.slane %v7480, 5
      %v7547 = vrot.slane %v7546, 4
      %v7548 = vrot.slane %v6441, 5
      %v7549 = vsel %vm2007, %v7547, %v7548
      %v7550 = vrot.slane %v7548, 4
      %v7551 = vrot.slane %v6485, 5
      %v7552 = vsel %vm2007, %v7550, %v7551
      %v7553 = vrot.slane %v7481, 5
      %v7554 = vrot.slane %v7553, 4
      %v7555 = vrot.slane %v6443, 5
      %v7556 = vsel %vm2007, %v7554, %v7555
      %v7557 = vrot.slane %v7555, 4
      %v7558 = vrot.slane %v6486, 5
      %v7559 = vsel %vm2007, %v7557, %v7558
      %v7560 = vrot.slane %v7482, 5
      %v7561 = vrot.slane %v7560, 4
      %v7562 = vrot.slane %v6445, 5
      %v7563 = vsel %vm2007, %v7561, %v7562
      %v7564 = vrot.slane %v7562, 4
      %v7565 = vrot.slane %v6487, 5
      %v7566 = vsel %vm2007, %v7564, %v7565
      %v7567 = vrot.slane %v7483, 5
      %v7568 = vrot.slane %v7567, 4
      %v7569 = vrot.slane %v6447, 5
      %v7570 = vsel %vm2007, %v7568, %v7569
      %v7571 = vrot.slane %v7569, 4
      %v7572 = vrot.slane %v6488, 5
      %v7573 = vsel %vm2007, %v7571, %v7572
      %v7574 = vrot.slane %v7484, 5
      %v7575 = vrot.slane %v7574, 4
      %v7576 = vrot.slane %v6449, 5
      %v7577 = vsel %vm2007, %v7575, %v7576
      %v7578 = vrot.slane %v7576, 4
      %v7579 = vrot.slane %v6489, 5
      %v7580 = vsel %vm2007, %v7578, %v7579
      %v7581 = vrot.slane %v7485, 5
      %v7582 = vrot.slane %v7581, 4
      %v7583 = vrot.slane %v6451, 5
      %v7584 = vsel %vm2007, %v7582, %v7583
      %v7585 = vrot.slane %v7583, 4
      %v7586 = vrot.slane %v6490, 5
      %v7587 = vsel %vm2007, %v7585, %v7586
      %v7588 = vrot.slane %v7486, 5
      %v7589 = vrot.slane %v7588, 4
      %v7590 = vrot.slane %v6453, 5
      %v7591 = vsel %vm2007, %v7589, %v7590
      %v7592 = vrot.slane %v7590, 4
      %v7593 = vrot.slane %v6491, 5
      %v7594 = vsel %vm2007, %v7592, %v7593
      %v7595 = vrot.slane %v7487, 5
      %v7596 = vrot.slane %v7595, 4
      %v7597 = vrot.slane %v6455, 5
      %v7598 = vsel %vm2007, %v7596, %v7597
      %v7599 = vrot.slane %v7597, 4
      %v7600 = vrot.slane %v6492, 5
      %v7601 = vsel %vm2007, %v7599, %v7600
      %v7602 = vrot.slane %v7488, 5
      %v7603 = vrot.slane %v7602, 4
      %v7604 = vrot.slane %v6457, 5
      %v7605 = vsel %vm2007, %v7603, %v7604
      %v7606 = vrot.slane %v7604, 4
      %v7607 = vrot.slane %v6493, 5
      %v7608 = vsel %vm2007, %v7606, %v7607
      %v7609 = vrot.slane %v7489, 5
      %v7610 = vrot.slane %v7609, 4
      %v7611 = vrot.slane %v6459, 5
      %v7612 = vsel %vm2007, %v7610, %v7611
      %v7613 = vrot.slane %v7611, 4
      %v7614 = vrot.slane %v6494, 5
      %v7615 = vsel %vm2007, %v7613, %v7614
      %v7616 = vrot.slane %v7490, 5
      %v7617 = vrot.slane %v7616, 4
      %v7618 = vrot.slane %v6461, 5
      %v7619 = vsel %vm2007, %v7617, %v7618
      %v7620 = vrot.slane %v7618, 4
      %v7621 = vrot.slane %v6495, 5
      %v7622 = vsel %vm2007, %v7620, %v7621
      %v7623 = vrot.slane %v7491, 5
      %v7624 = vrot.slane %v7623, 4
      %v7625 = vrot.slane %v6463, 5
      %v7626 = vsel %vm2007, %v7624, %v7625
      %v7627 = vrot.slane %v7625, 4
      %v7628 = vrot.slane %v6496, 5
      %v7629 = vsel %vm2007, %v7627, %v7628
      %v7630 = vrot.slane %v7492, 5
      %v7631 = vrot.slane %v7630, 4
      %v7632 = vrot.slane %v6465, 5
      %v7633 = vsel %vm2007, %v7631, %v7632
      %v7634 = vrot.slane %v7632, 4
      %v7635 = vrot.slane %v6497, 5
      %v7636 = vsel %vm2007, %v7634, %v7635
      %s7637 = scalar_lea.vmem %s3, 128
      %v7638 = vld [vmem:[%s7637] sm:$0xf]
      %v7639 = vld [vmem:[%s7637 + $0x4] sm:$0xf]
      %v7640 = vld [vmem:[%s7637 + $0x8] sm:$0xf]
      %v7641 = vld [vmem:[%s7637 + $0xc] sm:$0xf]
      %v7642 = vld [vmem:[%s7637 + $0x10] sm:$0xf]
      %v7643 = vld [vmem:[%s7637 + $0x14] sm:$0xf]
      %v7644 = vld [vmem:[%s7637 + $0x18] sm:$0xf]
      %v7645 = vld [vmem:[%s7637 + $0x1c] sm:$0xf]
      %v7646 = vld [vmem:[%s7637 + $0x20] sm:$0xf]
      %v7647 = vld [vmem:[%s7637 + $0x24] sm:$0xf]
      %v7648 = vld [vmem:[%s7637 + $0x28] sm:$0xf]
      %v7649 = vld [vmem:[%s7637 + $0x2c] sm:$0xf]
      %v7650 = vld [vmem:[%s7637 + $0x30] sm:$0xf]
      %v7651 = vld [vmem:[%s7637 + $0x34] sm:$0xf]
      %v7652 = vld [vmem:[%s7637 + $0x38] sm:$0xf]
      %v7653 = vld [vmem:[%s7637 + $0x3c] sm:$0xf]
      %v7654 = vunpack.c.l.b16 %v7528
      %v7655 = vunpack.c.l.b16 %v7531
      %v7656 = vunpack.c.l.b16 %v7535
      %v7657 = vunpack.c.l.b16 %v7538
      %v7658 = vunpack.c.l.b16 %v7542
      %v7659 = vunpack.c.l.b16 %v7545
      %v7660 = vunpack.c.l.b16 %v7549
      %v7661 = vunpack.c.l.b16 %v7552
      %v7662 = vunpack.c.l.b16 %v7556
      %v7663 = vunpack.c.l.b16 %v7559
      %v7664 = vunpack.c.l.b16 %v7563
      %v7665 = vunpack.c.l.b16 %v7566
      %v7666 = vunpack.c.l.b16 %v7570
      %v7667 = vunpack.c.l.b16 %v7573
      %v7668 = vunpack.c.l.b16 %v7577
      %v7669 = vunpack.c.l.b16 %v7580
      %v7670 = vunpack.c.l.b16 %v7584
      %v7671 = vunpack.c.l.b16 %v7587
      %v7672 = vunpack.c.l.b16 %v7591
      %v7673 = vunpack.c.l.b16 %v7594
      %v7674 = vunpack.c.l.b16 %v7598
      %v7675 = vunpack.c.l.b16 %v7601
      %v7676 = vunpack.c.l.b16 %v7605
      %v7677 = vunpack.c.l.b16 %v7608
      %v7678 = vunpack.c.l.b16 %v7612
      %v7679 = vunpack.c.l.b16 %v7615
      %v7680 = vunpack.c.l.b16 %v7619
      %v7681 = vunpack.c.l.b16 %v7622
      %v7682 = vunpack.c.l.b16 %v7626
      %v7683 = vunpack.c.l.b16 %v7629
      %v7684 = vunpack.c.l.b16 %v7633
      %v7685 = vunpack.c.l.b16 %v7636
      %v7686 = vpack.c.b16 %v7655, %v7654
      %v7687 = vpack.c.b16 %v7657, %v7656
      %v7688 = vpack.c.b16 %v7659, %v7658
      %v7689 = vpack.c.b16 %v7661, %v7660
      %v7690 = vpack.c.b16 %v7663, %v7662
      %v7691 = vpack.c.b16 %v7665, %v7664
      %v7692 = vpack.c.b16 %v7667, %v7666
      %v7693 = vpack.c.b16 %v7669, %v7668
      %v7694 = vpack.c.b16 %v7671, %v7670
      %v7695 = vpack.c.b16 %v7673, %v7672
      %v7696 = vpack.c.b16 %v7675, %v7674
      %v7697 = vpack.c.b16 %v7677, %v7676
      %v7698 = vpack.c.b16 %v7679, %v7678
      %v7699 = vpack.c.b16 %v7681, %v7680
      %v7700 = vpack.c.b16 %v7683, %v7682
      %v7701 = vpack.c.b16 %v7685, %v7684
      %v7734 = vunpack.c.l.b16 %v7638
      %v7735 = vunpack.c.l.b16 %v7639
      %v7736 = vunpack.c.l.b16 %v7640
      %v7737 = vunpack.c.l.b16 %v7641
      %v7738 = vunpack.c.l.b16 %v7642
      %v7739 = vunpack.c.l.b16 %v7643
      %v7740 = vunpack.c.l.b16 %v7644
      %v7741 = vunpack.c.l.b16 %v7645
      %v7742 = vunpack.c.l.b16 %v7646
      %v7743 = vunpack.c.l.b16 %v7647
      %v7744 = vunpack.c.l.b16 %v7648
      %v7745 = vunpack.c.l.b16 %v7649
      %v7746 = vunpack.c.l.b16 %v7650
      %v7747 = vunpack.c.l.b16 %v7651
      %v7748 = vunpack.c.l.b16 %v7652
      %v7749 = vunpack.c.l.b16 %v7653
      %v7750 = vpack.c.b16 %v7735, %v7734
      %v7751 = vpack.c.b16 %v7737, %v7736
      %v7752 = vpack.c.b16 %v7739, %v7738
      %v7753 = vpack.c.b16 %v7741, %v7740
      %v7754 = vpack.c.b16 %v7743, %v7742
      %v7755 = vpack.c.b16 %v7745, %v7744
      %v7756 = vpack.c.b16 %v7747, %v7746
      %v7757 = vpack.c.b16 %v7749, %v7748
      %7766 = vmatprep.subr.bf16.mxu0 0
      %7767 = vmatpush1.bf16.msra.mxu0 %v7750
      %7768 = vmatprep.subr.bf16.mxu0 0
      %7769 = vmatpush1.bf16.msra.mxu0 %v7751
      %7770 = vmatprep.subr.bf16.mxu0 0
      %7771 = vmatpush1.bf16.msra.mxu0 %v7752
      %7772 = vmatprep.subr.bf16.mxu0 0
      %7773 = vmatpush1.bf16.msra.mxu0 %v7753
      %7774 = vmatprep.subr.bf16.mxu0 0
      %7775 = vmatpush1.bf16.msra.mxu0 %v7754
      %7776 = vmatprep.subr.bf16.mxu0 0
      %7777 = vmatpush1.bf16.msra.mxu0 %v7755
      %7778 = vmatprep.subr.bf16.mxu0 0
      %7779 = vmatpush1.bf16.msra.mxu0 %v7756
      %7780 = vmatprep.subr.bf16.mxu0 0
      %7781 = vmatpush1.bf16.msra.mxu0 %v7757
      %7782 = vmatprep.subr.bf16.mxu0 0
      %7783 = vmatpush1.bf16.msra.mxu0 0
      %7784 = vmatprep.subr.bf16.mxu0 0
      %7785 = vmatpush1.bf16.msra.mxu0 0
      %7786 = vmatprep.subr.bf16.mxu0 0
      %7787 = vmatpush1.bf16.msra.mxu0 0
      %7788 = vmatprep.subr.bf16.mxu0 0
      %7789 = vmatpush1.bf16.msra.mxu0 0
      %7790 = vmatprep.subr.bf16.mxu0 0
      %7791 = vmatpush1.bf16.msra.mxu0 0
      %7792 = vmatprep.subr.bf16.mxu0 0
      %7793 = vmatpush1.bf16.msra.mxu0 0
      %7794 = vmatprep.subr.bf16.mxu0 0
      %7795 = vmatpush1.bf16.msra.mxu0 0
      %7796 = vmatprep.subr.bf16.mxu0 0
      %7797 = vmatpush1.bf16.msra.mxu0 0
      %7798 = vmatprep.mubr.bf16.mxu0 0
      %7799 = vmatmul.mubr.bf16.gmra.mrb[0].mxu0 %v7686
      %v7800 = vpop.f32.mrb[0].mxu0
      %v7801 = vadd.f32 0.0, %v7800
      %v7802 = vpop.f32.mrb[0].mxu0
      %v7803 = vpop.f32.mrb[0].mxu0
      %v7804 = vadd.f32 0.0, %v7803
      %v7805 = vpop.f32.mrb[0].mxu0
      %7806 = vmatprep.mubr.bf16.mxu0 0
      %7807 = vmatmul.mubr.bf16.gmra.mrb[0].mxu0 %v7687
      %v7808 = vpop.f32.mrb[0].mxu0
      %v7809 = vadd.f32 0.0, %v7808
      %v7810 = vpop.f32.mrb[0].mxu0
      %v7811 = vpop.f32.mrb[0].mxu0
      %v7812 = vadd.f32 0.0, %v7811
      %v7813 = vpop.f32.mrb[0].mxu0
      %7814 = vmatprep.mubr.bf16.mxu0 0
      %7815 = vmatmul.mubr.bf16.gmra.mrb[0].mxu0 %v7688
      %v7816 = vpop.f32.mrb[0].mxu0
      %v7817 = vadd.f32 0.0, %v7816
      %v7818 = vpop.f32.mrb[0].mxu0
      %v7819 = vpop.f32.mrb[0].mxu0
      %v7820 = vadd.f32 0.0, %v7819
      %v7821 = vpop.f32.mrb[0].mxu0
      %7822 = vmatprep.mubr.bf16.mxu0 0
      %7823 = vmatmul.mubr.bf16.gmra.mrb[0].mxu0 %v7689
      %v7824 = vpop.f32.mrb[0].mxu0
      %v7825 = vadd.f32 0.0, %v7824
      %v7826 = vpop.f32.mrb[0].mxu0
      %v7827 = vpop.f32.mrb[0].mxu0
      %v7828 = vadd.f32 0.0, %v7827
      %v7829 = vpop.f32.mrb[0].mxu0
      %7830 = vmatprep.mubr.bf16.mxu0 0
      %7831 = vmatmul.mubr.bf16.gmra.mrb[0].mxu0 %v7690
      %v7832 = vpop.f32.mrb[0].mxu0
      %v7833 = vadd.f32 0.0, %v7832
      %v7834 = vpop.f32.mrb[0].mxu0
      %v7835 = vpop.f32.mrb[0].mxu0
      %v7836 = vadd.f32 0.0, %v7835
      %v7837 = vpop.f32.mrb[0].mxu0
      %7838 = vmatprep.mubr.bf16.mxu0 0
      %7839 = vmatmul.mubr.bf16.gmra.mrb[0].mxu0 %v7691
      %v7840 = vpop.f32.mrb[0].mxu0
      %v7841 = vadd.f32 0.0, %v7840
      %v7842 = vpop.f32.mrb[0].mxu0
      %v7843 = vpop.f32.mrb[0].mxu0
      %v7844 = vadd.f32 0.0, %v7843
      %v7845 = vpop.f32.mrb[0].mxu0
      %7846 = vmatprep.mubr.bf16.mxu0 0
      %7847 = vmatmul.mubr.bf16.gmra.mrb[0].mxu0 %v7692
      %v7848 = vpop.f32.mrb[0].mxu0
      %v7849 = vadd.f32 0.0, %v7848
      %v7850 = vpop.f32.mrb[0].mxu0
      %v7851 = vpop.f32.mrb[0].mxu0
      %v7852 = vadd.f32 0.0, %v7851
      %v7853 = vpop.f32.mrb[0].mxu0
      %7854 = vmatprep.mubr.bf16.mxu0 0
      %7855 = vmatmul.mubr.bf16.gmra.mrb[0].mxu0 %v7693
      %v7856 = vpop.f32.mrb[0].mxu0
      %v7857 = vadd.f32 0.0, %v7856
      %v7858 = vpop.f32.mrb[0].mxu0
      %v7859 = vpop.f32.mrb[0].mxu0
      %v7860 = vadd.f32 0.0, %v7859
      %v7861 = vpop.f32.mrb[0].mxu0
      %7862 = vmatprep.mubr.bf16.mxu0 0
      %7863 = vmatmul.mubr.bf16.gmra.mrb[0].mxu0 %v7694
      %v7864 = vpop.f32.mrb[0].mxu0
      %v7865 = vadd.f32 0.0, %v7864
      %v7866 = vpop.f32.mrb[0].mxu0
      %v7867 = vpop.f32.mrb[0].mxu0
      %v7868 = vadd.f32 0.0, %v7867
      %v7869 = vpop.f32.mrb[0].mxu0
      %7870 = vmatprep.mubr.bf16.mxu0 0
      %7871 = vmatmul.mubr.bf16.gmra.mrb[0].mxu0 %v7695
      %v7872 = vpop.f32.mrb[0].mxu0
      %v7873 = vadd.f32 0.0, %v7872
      %v7874 = vpop.f32.mrb[0].mxu0
      %v7875 = vpop.f32.mrb[0].mxu0
      %v7876 = vadd.f32 0.0, %v7875
      %v7877 = vpop.f32.mrb[0].mxu0
      %7878 = vmatprep.mubr.bf16.mxu0 0
      %7879 = vmatmul.mubr.bf16.gmra.mrb[0].mxu0 %v7696
      %v7880 = vpop.f32.mrb[0].mxu0
      %v7881 = vadd.f32 0.0, %v7880
      %v7882 = vpop.f32.mrb[0].mxu0
      %v7883 = vpop.f32.mrb[0].mxu0
      %v7884 = vadd.f32 0.0, %v7883
      %v7885 = vpop.f32.mrb[0].mxu0
      %7886 = vmatprep.mubr.bf16.mxu0 0
      %7887 = vmatmul.mubr.bf16.gmra.mrb[0].mxu0 %v7697
      %v7888 = vpop.f32.mrb[0].mxu0
      %v7889 = vadd.f32 0.0, %v7888
      %v7890 = vpop.f32.mrb[0].mxu0
      %v7891 = vpop.f32.mrb[0].mxu0
      %v7892 = vadd.f32 0.0, %v7891
      %v7893 = vpop.f32.mrb[0].mxu0
      %7894 = vmatprep.mubr.bf16.mxu0 0
      %7895 = vmatmul.mubr.bf16.gmra.mrb[0].mxu0 %v7698
      %v7896 = vpop.f32.mrb[0].mxu0
      %v7897 = vadd.f32 0.0, %v7896
      %v7898 = vpop.f32.mrb[0].mxu0
      %v7899 = vpop.f32.mrb[0].mxu0
      %v7900 = vadd.f32 0.0, %v7899
      %v7901 = vpop.f32.mrb[0].mxu0
      %7902 = vmatprep.mubr.bf16.mxu0 0
      %7903 = vmatmul.mubr.bf16.gmra.mrb[0].mxu0 %v7699
      %v7904 = vpop.f32.mrb[0].mxu0
      %v7905 = vadd.f32 0.0, %v7904
      %v7906 = vpop.f32.mrb[0].mxu0
      %v7907 = vpop.f32.mrb[0].mxu0
      %v7908 = vadd.f32 0.0, %v7907
      %v7909 = vpop.f32.mrb[0].mxu0
      %7910 = vmatprep.mubr.bf16.mxu0 0
      %7911 = vmatmul.mubr.bf16.gmra.mrb[0].mxu0 %v7700
      %v7912 = vpop.f32.mrb[0].mxu0
      %v7913 = vadd.f32 0.0, %v7912
      %v7914 = vpop.f32.mrb[0].mxu0
      %v7915 = vpop.f32.mrb[0].mxu0
      %v7916 = vadd.f32 0.0, %v7915
      %v7917 = vpop.f32.mrb[0].mxu0
      %7918 = vmatprep.mubr.bf16.mxu0 0
      %7919 = vmatmul.mubr.bf16.gmra.mrb[0].mxu0 %v7701
      %v7920 = vpop.f32.mrb[0].mxu0
      %v7921 = vadd.f32 0.0, %v7920
      %v7922 = vpop.f32.mrb[0].mxu0
      %v7923 = vpop.f32.mrb[0].mxu0
      %v7924 = vadd.f32 0.0, %v7923
      %v7925 = vpop.f32.mrb[0].mxu0
      %7926 = vdwg.mxu0
      %v7927 = vadd.f32 %v7351, %v7801
      %v7928 = vadd.f32 %v7354, %v7804
      %v7929 = vadd.f32 %v7359, %v7809
      %v7930 = vadd.f32 %v7362, %v7812
      %v7931 = vadd.f32 %v7367, %v7817
      %v7932 = vadd.f32 %v7370, %v7820
      %v7933 = vadd.f32 %v7375, %v7825
      %v7934 = vadd.f32 %v7378, %v7828
      %v7935 = vadd.f32 %v7383, %v7833
      %v7936 = vadd.f32 %v7386, %v7836
      %v7937 = vadd.f32 %v7391, %v7841
      %v7938 = vadd.f32 %v7394, %v7844
      %v7939 = vadd.f32 %v7399, %v7849
      %v7940 = vadd.f32 %v7402, %v7852
      %v7941 = vadd.f32 %v7407, %v7857
      %v7942 = vadd.f32 %v7410, %v7860
      %v7943 = vadd.f32 %v7415, %v7865
      %v7944 = vadd.f32 %v7418, %v7868
      %v7945 = vadd.f32 %v7423, %v7873
      %v7946 = vadd.f32 %v7426, %v7876
      %v7947 = vadd.f32 %v7431, %v7881
      %v7948 = vadd.f32 %v7434, %v7884
      %v7949 = vadd.f32 %v7439, %v7889
      %v7950 = vadd.f32 %v7442, %v7892
      %v7951 = vadd.f32 %v7447, %v7897
      %v7952 = vadd.f32 %v7450, %v7900
      %v7953 = vadd.f32 %v7455, %v7905
      %v7954 = vadd.f32 %v7458, %v7908
      %v7955 = vadd.f32 %v7463, %v7913
      %v7956 = vadd.f32 %v7466, %v7916
      %v7957 = vadd.f32 %v7471, %v7921
      %v7958 = vadd.f32 %v7474, %v7924
      %v7959 = vld [vmem:[%s6321] sm:$0xf]
      %v7960 = vld [vmem:[%s6321 + $0x4] sm:$0xf]
      %v7961 = vld [vmem:[%s6321 + $0xc] sm:$0xf]
      %v7962 = vld [vmem:[%s6321 + $0x10] sm:$0xf]
      %v7963 = vld [vmem:[%s6321 + $0x18] sm:$0xf]
      %v7964 = vld [vmem:[%s6321 + $0x1c] sm:$0xf]
      %v7965 = vld [vmem:[%s6321 + $0x24] sm:$0xf]
      %v7966 = vld [vmem:[%s6321 + $0x28] sm:$0xf]
      %v7967 = vld [vmem:[%s6321 + $0x30] sm:$0xf]
      %v7968 = vld [vmem:[%s6321 + $0x34] sm:$0xf]
      %v7969 = vld [vmem:[%s6321 + $0x3c] sm:$0xf]
      %v7970 = vld [vmem:[%s6321 + $0x40] sm:$0xf]
      %v7971 = vld [vmem:[%s6321 + $0x48] sm:$0xf]
      %v7972 = vld [vmem:[%s6321 + $0x4c] sm:$0xf]
      %v7973 = vld [vmem:[%s6321 + $0x54] sm:$0xf]
      %v7974 = vld [vmem:[%s6321 + $0x58] sm:$0xf]
      %v7975 = vld [vmem:[%s6321 + $0x60] sm:$0xf]
      %v7976 = vld [vmem:[%s6321 + $0x64] sm:$0xf]
      %v7977 = vld [vmem:[%s6321 + $0x6c] sm:$0xf]
      %v7978 = vld [vmem:[%s6321 + $0x70] sm:$0xf]
      %v7979 = vld [vmem:[%s6321 + $0x78] sm:$0xf]
      %v7980 = vld [vmem:[%s6321 + $0x7c] sm:$0xf]
      %v7981 = vld [vmem:[%s6321 + $0x84] sm:$0xf]
      %v7982 = vld [vmem:[%s6321 + $0x88] sm:$0xf]
      %v7983 = vld [vmem:[%s6321 + $0x90] sm:$0xf]
      %v7984 = vld [vmem:[%s6321 + $0x94] sm:$0xf]
      %v7985 = vld [vmem:[%s6321 + $0x9c] sm:$0xf]
      %v7986 = vld [vmem:[%s6321 + $0xa0] sm:$0xf]
      %v7987 = vld [vmem:[%s6321 + $0xa8] sm:$0xf]
      %v7988 = vld [vmem:[%s6321 + $0xac] sm:$0xf]
      %v7989 = vld [vmem:[%s6321 + $0xb4] sm:$0xf]
      %v7990 = vld [vmem:[%s6321 + $0xb8] sm:$0xf]
      %s7991 = scalar_lea.vmem %s3, 192
      %v7992 = vld [vmem:[%s7991] sm:$0xf]
      %v7993 = vld [vmem:[%s7991 + $0x4] sm:$0xf]
      %v7994 = vld [vmem:[%s7991 + $0x8] sm:$0xf]
      %v7995 = vld [vmem:[%s7991 + $0xc] sm:$0xf]
      %v7996 = vld [vmem:[%s7991 + $0x10] sm:$0xf]
      %v7997 = vld [vmem:[%s7991 + $0x14] sm:$0xf]
      %v7998 = vld [vmem:[%s7991 + $0x18] sm:$0xf]
      %v7999 = vld [vmem:[%s7991 + $0x1c] sm:$0xf]
      %v8000 = vld [vmem:[%s7991 + $0x20] sm:$0xf]
      %v8001 = vld [vmem:[%s7991 + $0x24] sm:$0xf]
      %v8002 = vld [vmem:[%s7991 + $0x28] sm:$0xf]
      %v8003 = vld [vmem:[%s7991 + $0x2c] sm:$0xf]
      %v8004 = vld [vmem:[%s7991 + $0x30] sm:$0xf]
      %v8005 = vld [vmem:[%s7991 + $0x34] sm:$0xf]
      %v8006 = vld [vmem:[%s7991 + $0x38] sm:$0xf]
      %v8007 = vld [vmem:[%s7991 + $0x3c] sm:$0xf]
      %v8040 = vunpack.c.l.b16 %v7959
      %v8041 = vunpack.c.l.b16 %v7960
      %v8042 = vunpack.c.l.b16 %v7961
      %v8043 = vunpack.c.l.b16 %v7962
      %v8044 = vunpack.c.l.b16 %v7963
      %v8045 = vunpack.c.l.b16 %v7964
      %v8046 = vunpack.c.l.b16 %v7965
      %v8047 = vunpack.c.l.b16 %v7966
      %v8048 = vunpack.c.l.b16 %v7967
      %v8049 = vunpack.c.l.b16 %v7968
      %v8050 = vunpack.c.l.b16 %v7969
      %v8051 = vunpack.c.l.b16 %v7970
      %v8052 = vunpack.c.l.b16 %v7971
      %v8053 = vunpack.c.l.b16 %v7972
      %v8054 = vunpack.c.l.b16 %v7973
      %v8055 = vunpack.c.l.b16 %v7974
      %v8056 = vunpack.c.l.b16 %v7975
      %v8057 = vunpack.c.l.b16 %v7976
      %v8058 = vunpack.c.l.b16 %v7977
      %v8059 = vunpack.c.l.b16 %v7978
      %v8060 = vunpack.c.l.b16 %v7979
      %v8061 = vunpack.c.l.b16 %v7980
      %v8062 = vunpack.c.l.b16 %v7981
      %v8063 = vunpack.c.l.b16 %v7982
      %v8064 = vunpack.c.l.b16 %v7983
      %v8065 = vunpack.c.l.b16 %v7984
      %v8066 = vunpack.c.l.b16 %v7985
      %v8067 = vunpack.c.l.b16 %v7986
      %v8068 = vunpack.c.l.b16 %v7987
      %v8069 = vunpack.c.l.b16 %v7988
      %v8070 = vunpack.c.l.b16 %v7989
      %v8071 = vunpack.c.l.b16 %v7990
      %v8072 = vpack.c.b16 %v8041, %v8040
      %v8073 = vpack.c.b16 %v8043, %v8042
      %v8074 = vpack.c.b16 %v8045, %v8044
      %v8075 = vpack.c.b16 %v8047, %v8046
      %v8076 = vpack.c.b16 %v8049, %v8048
      %v8077 = vpack.c.b16 %v8051, %v8050
      %v8078 = vpack.c.b16 %v8053, %v8052
      %v8079 = vpack.c.b16 %v8055, %v8054
      %v8080 = vpack.c.b16 %v8057, %v8056
      %v8081 = vpack.c.b16 %v8059, %v8058
      %v8082 = vpack.c.b16 %v8061, %v8060
      %v8083 = vpack.c.b16 %v8063, %v8062
      %v8084 = vpack.c.b16 %v8065, %v8064
      %v8085 = vpack.c.b16 %v8067, %v8066
      %v8086 = vpack.c.b16 %v8069, %v8068
      %v8087 = vpack.c.b16 %v8071, %v8070
      %v8120 = vunpack.c.l.b16 %v7992
      %v8121 = vunpack.c.l.b16 %v7993
      %v8122 = vunpack.c.l.b16 %v7994
      %v8123 = vunpack.c.l.b16 %v7995
      %v8124 = vunpack.c.l.b16 %v7996
      %v8125 = vunpack.c.l.b16 %v7997
      %v8126 = vunpack.c.l.b16 %v7998
      %v8127 = vunpack.c.l.b16 %v7999
      %v8128 = vunpack.c.l.b16 %v8000
      %v8129 = vunpack.c.l.b16 %v8001
      %v8130 = vunpack.c.l.b16 %v8002
      %v8131 = vunpack.c.l.b16 %v8003
      %v8132 = vunpack.c.l.b16 %v8004
      %v8133 = vunpack.c.l.b16 %v8005
      %v8134 = vunpack.c.l.b16 %v8006
      %v8135 = vunpack.c.l.b16 %v8007
      %v8136 = vpack.c.b16 %v8121, %v8120
      %v8137 = vpack.c.b16 %v8123, %v8122
      %v8138 = vpack.c.b16 %v8125, %v8124
      %v8139 = vpack.c.b16 %v8127, %v8126
      %v8140 = vpack.c.b16 %v8129, %v8128
      %v8141 = vpack.c.b16 %v8131, %v8130
      %v8142 = vpack.c.b16 %v8133, %v8132
      %v8143 = vpack.c.b16 %v8135, %v8134
      %8152 = vmatprep.subr.bf16.mxu0 0
      %8153 = vmatpush1.bf16.msra.mxu0 %v8136
      %8154 = vmatprep.subr.bf16.mxu0 0
      %8155 = vmatpush1.bf16.msra.mxu0 %v8137
      %8156 = vmatprep.subr.bf16.mxu0 0
      %8157 = vmatpush1.bf16.msra.mxu0 %v8138
      %8158 = vmatprep.subr.bf16.mxu0 0
      %8159 = vmatpush1.bf16.msra.mxu0 %v8139
      %8160 = vmatprep.subr.bf16.mxu0 0
      %8161 = vmatpush1.bf16.msra.mxu0 %v8140
      %8162 = vmatprep.subr.bf16.mxu0 0
      %8163 = vmatpush1.bf16.msra.mxu0 %v8141
      %8164 = vmatprep.subr.bf16.mxu0 0
      %8165 = vmatpush1.bf16.msra.mxu0 %v8142
      %8166 = vmatprep.subr.bf16.mxu0 0
      %8167 = vmatpush1.bf16.msra.mxu0 %v8143
      %8168 = vmatprep.subr.bf16.mxu0 0
      %8169 = vmatpush1.bf16.msra.mxu0 0
      %8170 = vmatprep.subr.bf16.mxu0 0
      %8171 = vmatpush1.bf16.msra.mxu0 0
      %8172 = vmatprep.subr.bf16.mxu0 0
      %8173 = vmatpush1.bf16.msra.mxu0 0
      %8174 = vmatprep.subr.bf16.mxu0 0
      %8175 = vmatpush1.bf16.msra.mxu0 0
      %8176 = vmatprep.subr.bf16.mxu0 0
      %8177 = vmatpush1.bf16.msra.mxu0 0
      %8178 = vmatprep.subr.bf16.mxu0 0
      %8179 = vmatpush1.bf16.msra.mxu0 0
      %8180 = vmatprep.subr.bf16.mxu0 0
      %8181 = vmatpush1.bf16.msra.mxu0 0
      %8182 = vmatprep.subr.bf16.mxu0 0
      %8183 = vmatpush1.bf16.msra.mxu0 0
      %8184 = vmatprep.mubr.bf16.mxu0 0
      %8185 = vmatmul.mubr.bf16.gmra.mrb[0].mxu0 %v8072
      %v8186 = vpop.f32.mrb[0].mxu0
      %v8187 = vadd.f32 0.0, %v8186
      %v8188 = vpop.f32.mrb[0].mxu0
      %v8189 = vpop.f32.mrb[0].mxu0
      %v8190 = vadd.f32 0.0, %v8189
      %v8191 = vpop.f32.mrb[0].mxu0
      %8192 = vmatprep.mubr.bf16.mxu0 0
      %8193 = vmatmul.mubr.bf16.gmra.mrb[0].mxu0 %v8073
      %v8194 = vpop.f32.mrb[0].mxu0
      %v8195 = vadd.f32 0.0, %v8194
      %v8196 = vpop.f32.mrb[0].mxu0
      %v8197 = vpop.f32.mrb[0].mxu0
      %v8198 = vadd.f32 0.0, %v8197
      %v8199 = vpop.f32.mrb[0].mxu0
      %8200 = vmatprep.mubr.bf16.mxu0 0
      %8201 = vmatmul.mubr.bf16.gmra.mrb[0].mxu0 %v8074
      %v8202 = vpop.f32.mrb[0].mxu0
      %v8203 = vadd.f32 0.0, %v8202
      %v8204 = vpop.f32.mrb[0].mxu0
      %v8205 = vpop.f32.mrb[0].mxu0
      %v8206 = vadd.f32 0.0, %v8205
      %v8207 = vpop.f32.mrb[0].mxu0
      %8208 = vmatprep.mubr.bf16.mxu0 0
      %8209 = vmatmul.mubr.bf16.gmra.mrb[0].mxu0 %v8075
      %v8210 = vpop.f32.mrb[0].mxu0
      %v8211 = vadd.f32 0.0, %v8210
      %v8212 = vpop.f32.mrb[0].mxu0
      %v8213 = vpop.f32.mrb[0].mxu0
      %v8214 = vadd.f32 0.0, %v8213
      %v8215 = vpop.f32.mrb[0].mxu0
      %8216 = vmatprep.mubr.bf16.mxu0 0
      %8217 = vmatmul.mubr.bf16.gmra.mrb[0].mxu0 %v8076
      %v8218 = vpop.f32.mrb[0].mxu0
      %v8219 = vadd.f32 0.0, %v8218
      %v8220 = vpop.f32.mrb[0].mxu0
      %v8221 = vpop.f32.mrb[0].mxu0
      %v8222 = vadd.f32 0.0, %v8221
      %v8223 = vpop.f32.mrb[0].mxu0
      %8224 = vmatprep.mubr.bf16.mxu0 0
      %8225 = vmatmul.mubr.bf16.gmra.mrb[0].mxu0 %v8077
      %v8226 = vpop.f32.mrb[0].mxu0
      %v8227 = vadd.f32 0.0, %v8226
      %v8228 = vpop.f32.mrb[0].mxu0
      %v8229 = vpop.f32.mrb[0].mxu0
      %v8230 = vadd.f32 0.0, %v8229
      %v8231 = vpop.f32.mrb[0].mxu0
      %8232 = vmatprep.mubr.bf16.mxu0 0
      %8233 = vmatmul.mubr.bf16.gmra.mrb[0].mxu0 %v8078
      %v8234 = vpop.f32.mrb[0].mxu0
      %v8235 = vadd.f32 0.0, %v8234
      %v8236 = vpop.f32.mrb[0].mxu0
      %v8237 = vpop.f32.mrb[0].mxu0
      %v8238 = vadd.f32 0.0, %v8237
      %v8239 = vpop.f32.mrb[0].mxu0
      %8240 = vmatprep.mubr.bf16.mxu0 0
      %8241 = vmatmul.mubr.bf16.gmra.mrb[0].mxu0 %v8079
      %v8242 = vpop.f32.mrb[0].mxu0
      %v8243 = vadd.f32 0.0, %v8242
      %v8244 = vpop.f32.mrb[0].mxu0
      %v8245 = vpop.f32.mrb[0].mxu0
      %v8246 = vadd.f32 0.0, %v8245
      %v8247 = vpop.f32.mrb[0].mxu0
      %8248 = vmatprep.mubr.bf16.mxu0 0
      %8249 = vmatmul.mubr.bf16.gmra.mrb[0].mxu0 %v8080
      %v8250 = vpop.f32.mrb[0].mxu0
      %v8251 = vadd.f32 0.0, %v8250
      %v8252 = vpop.f32.mrb[0].mxu0
      %v8253 = vpop.f32.mrb[0].mxu0
      %v8254 = vadd.f32 0.0, %v8253
      %v8255 = vpop.f32.mrb[0].mxu0
      %8256 = vmatprep.mubr.bf16.mxu0 0
      %8257 = vmatmul.mubr.bf16.gmra.mrb[0].mxu0 %v8081
      %v8258 = vpop.f32.mrb[0].mxu0
      %v8259 = vadd.f32 0.0, %v8258
      %v8260 = vpop.f32.mrb[0].mxu0
      %v8261 = vpop.f32.mrb[0].mxu0
      %v8262 = vadd.f32 0.0, %v8261
      %v8263 = vpop.f32.mrb[0].mxu0
      %8264 = vmatprep.mubr.bf16.mxu0 0
      %8265 = vmatmul.mubr.bf16.gmra.mrb[0].mxu0 %v8082
      %v8266 = vpop.f32.mrb[0].mxu0
      %v8267 = vadd.f32 0.0, %v8266
      %v8268 = vpop.f32.mrb[0].mxu0
      %v8269 = vpop.f32.mrb[0].mxu0
      %v8270 = vadd.f32 0.0, %v8269
      %v8271 = vpop.f32.mrb[0].mxu0
      %8272 = vmatprep.mubr.bf16.mxu0 0
      %8273 = vmatmul.mubr.bf16.gmra.mrb[0].mxu0 %v8083
      %v8274 = vpop.f32.mrb[0].mxu0
      %v8275 = vadd.f32 0.0, %v8274
      %v8276 = vpop.f32.mrb[0].mxu0
      %v8277 = vpop.f32.mrb[0].mxu0
      %v8278 = vadd.f32 0.0, %v8277
      %v8279 = vpop.f32.mrb[0].mxu0
      %8280 = vmatprep.mubr.bf16.mxu0 0
      %8281 = vmatmul.mubr.bf16.gmra.mrb[0].mxu0 %v8084
      %v8282 = vpop.f32.mrb[0].mxu0
      %v8283 = vadd.f32 0.0, %v8282
      %v8284 = vpop.f32.mrb[0].mxu0
      %v8285 = vpop.f32.mrb[0].mxu0
      %v8286 = vadd.f32 0.0, %v8285
      %v8287 = vpop.f32.mrb[0].mxu0
      %8288 = vmatprep.mubr.bf16.mxu0 0
      %8289 = vmatmul.mubr.bf16.gmra.mrb[0].mxu0 %v8085
      %v8290 = vpop.f32.mrb[0].mxu0
      %v8291 = vadd.f32 0.0, %v8290
      %v8292 = vpop.f32.mrb[0].mxu0
      %v8293 = vpop.f32.mrb[0].mxu0
      %v8294 = vadd.f32 0.0, %v8293
      %v8295 = vpop.f32.mrb[0].mxu0
      %8296 = vmatprep.mubr.bf16.mxu0 0
      %8297 = vmatmul.mubr.bf16.gmra.mrb[0].mxu0 %v8086
      %v8298 = vpop.f32.mrb[0].mxu0
      %v8299 = vadd.f32 0.0, %v8298
      %v8300 = vpop.f32.mrb[0].mxu0
      %v8301 = vpop.f32.mrb[0].mxu0
      %v8302 = vadd.f32 0.0, %v8301
      %v8303 = vpop.f32.mrb[0].mxu0
      %8304 = vmatprep.mubr.bf16.mxu0 0
      %8305 = vmatmul.mubr.bf16.gmra.mrb[0].mxu0 %v8087
      %v8306 = vpop.f32.mrb[0].mxu0
      %v8307 = vadd.f32 0.0, %v8306
      %v8308 = vpop.f32.mrb[0].mxu0
      %v8309 = vpop.f32.mrb[0].mxu0
      %v8310 = vadd.f32 0.0, %v8309
      %v8311 = vpop.f32.mrb[0].mxu0
      %8312 = vdwg.mxu0
      %v8313 = vadd.f32 %v7927, %v8187
      %v8314 = vadd.f32 %v7928, %v8190
      %v8315 = vadd.f32 %v7929, %v8195
      %v8316 = vadd.f32 %v7930, %v8198
      %v8317 = vadd.f32 %v7931, %v8203
      %v8318 = vadd.f32 %v7932, %v8206
      %v8319 = vadd.f32 %v7933, %v8211
      %v8320 = vadd.f32 %v7934, %v8214
      %v8321 = vadd.f32 %v7935, %v8219
      %v8322 = vadd.f32 %v7936, %v8222
      %v8323 = vadd.f32 %v7937, %v8227
      %v8324 = vadd.f32 %v7938, %v8230
      %v8325 = vadd.f32 %v7939, %v8235
      %v8326 = vadd.f32 %v7940, %v8238
      %v8327 = vadd.f32 %v7941, %v8243
      %v8328 = vadd.f32 %v7942, %v8246
      %v8329 = vadd.f32 %v7943, %v8251
      %v8330 = vadd.f32 %v7944, %v8254
      %v8331 = vadd.f32 %v7945, %v8259
      %v8332 = vadd.f32 %v7946, %v8262
      %v8333 = vadd.f32 %v7947, %v8267
      %v8334 = vadd.f32 %v7948, %v8270
      %v8335 = vadd.f32 %v7949, %v8275
      %v8336 = vadd.f32 %v7950, %v8278
      %v8337 = vadd.f32 %v7951, %v8283
      %v8338 = vadd.f32 %v7952, %v8286
      %v8339 = vadd.f32 %v7953, %v8291
      %v8340 = vadd.f32 %v7954, %v8294
      %v8341 = vadd.f32 %v7955, %v8299
      %v8342 = vadd.f32 %v7956, %v8302
      %v8343 = vadd.f32 %v7957, %v8307
      %v8344 = vadd.f32 %v7958, %v8310
      %v8345 = vld [vmem:[%s6321] sm:$0xf]
      %v8346 = vld [vmem:[%s6321 + $0x4] sm:$0xf]
      %v8347 = vld [vmem:[%s6321 + $0x8] sm:$0x1]
      %v8348 = vld [vmem:[%s6321 + $0xc] sm:$0xf]
      %v8349 = vld [vmem:[%s6321 + $0x10] sm:$0xf]
      %v8350 = vld [vmem:[%s6321 + $0x14] sm:$0x1]
      %v8351 = vld [vmem:[%s6321 + $0x18] sm:$0xf]
      %v8352 = vld [vmem:[%s6321 + $0x1c] sm:$0xf]
      %v8353 = vld [vmem:[%s6321 + $0x20] sm:$0x1]
      %v8354 = vld [vmem:[%s6321 + $0x24] sm:$0xf]
      %v8355 = vld [vmem:[%s6321 + $0x28] sm:$0xf]
      %v8356 = vld [vmem:[%s6321 + $0x2c] sm:$0x1]
      %v8357 = vld [vmem:[%s6321 + $0x30] sm:$0xf]
      %v8358 = vld [vmem:[%s6321 + $0x34] sm:$0xf]
      %v8359 = vld [vmem:[%s6321 + $0x38] sm:$0x1]
      %v8360 = vld [vmem:[%s6321 + $0x3c] sm:$0xf]
      %v8361 = vld [vmem:[%s6321 + $0x40] sm:$0xf]
      %v8362 = vld [vmem:[%s6321 + $0x44] sm:$0x1]
      %v8363 = vld [vmem:[%s6321 + $0x48] sm:$0xf]
      %v8364 = vld [vmem:[%s6321 + $0x4c] sm:$0xf]
      %v8365 = vld [vmem:[%s6321 + $0x50] sm:$0x1]
      %v8366 = vld [vmem:[%s6321 + $0x54] sm:$0xf]
      %v8367 = vld [vmem:[%s6321 + $0x58] sm:$0xf]
      %v8368 = vld [vmem:[%s6321 + $0x5c] sm:$0x1]
      %v8369 = vld [vmem:[%s6321 + $0x60] sm:$0xf]
      %v8370 = vld [vmem:[%s6321 + $0x64] sm:$0xf]
      %v8371 = vld [vmem:[%s6321 + $0x68] sm:$0x1]
      %v8372 = vld [vmem:[%s6321 + $0x6c] sm:$0xf]
      %v8373 = vld [vmem:[%s6321 + $0x70] sm:$0xf]
      %v8374 = vld [vmem:[%s6321 + $0x74] sm:$0x1]
      %v8375 = vld [vmem:[%s6321 + $0x78] sm:$0xf]
      %v8376 = vld [vmem:[%s6321 + $0x7c] sm:$0xf]
      %v8377 = vld [vmem:[%s6321 + $0x80] sm:$0x1]
      %v8378 = vld [vmem:[%s6321 + $0x84] sm:$0xf]
      %v8379 = vld [vmem:[%s6321 + $0x88] sm:$0xf]
      %v8380 = vld [vmem:[%s6321 + $0x8c] sm:$0x1]
      %v8381 = vld [vmem:[%s6321 + $0x90] sm:$0xf]
      %v8382 = vld [vmem:[%s6321 + $0x94] sm:$0xf]
      %v8383 = vld [vmem:[%s6321 + $0x98] sm:$0x1]
      %v8384 = vld [vmem:[%s6321 + $0x9c] sm:$0xf]
      %v8385 = vld [vmem:[%s6321 + $0xa0] sm:$0xf]
      %v8386 = vld [vmem:[%s6321 + $0xa4] sm:$0x1]
      %v8387 = vld [vmem:[%s6321 + $0xa8] sm:$0xf]
      %v8388 = vld [vmem:[%s6321 + $0xac] sm:$0xf]
      %v8389 = vld [vmem:[%s6321 + $0xb0] sm:$0x1]
      %v8390 = vld [vmem:[%s6321 + $0xb4] sm:$0xf]
      %v8391 = vld [vmem:[%s6321 + $0xb8] sm:$0xf]
      %v8392 = vld [vmem:[%s6321 + $0xbc] sm:$0x1]
      %v8394 = vshrl.u32 %v8345, 16
      %v8396 = vrot.slane %v8394, 4
      %v8397 = vshll.u32 %v8345, 16
      %v8399 = vrot.slane %v8397, 5
      %v8400 = vor.u32 %v8396, %v8399
      %v8401 = vrot.slane %v8400, 4
      %v8403 = vshll.u32 %v8346, 16
      %v8405 = vrot.slane %v8403, 5
      %v8406 = vsel %vm977, %v8401, %v8405
      %v8407 = vshrl.u32 %v8346, 16
      %v8409 = vrot.slane %v8407, 4
      %v8410 = vor.u32 %v8409, %v8405
      %v8411 = vrot.slane %v8410, 4
      %v8413 = vshll.u32 %v8347, 16
      %v8415 = vrot.slane %v8413, 5
      %v8416 = vsel %vm977, %v8411, %v8415
      %v8418 = vshrl.u32 %v8348, 16
      %v8420 = vrot.slane %v8418, 4
      %v8421 = vshll.u32 %v8348, 16
      %v8423 = vrot.slane %v8421, 5
      %v8424 = vor.u32 %v8420, %v8423
      %v8425 = vrot.slane %v8424, 4
      %v8427 = vshll.u32 %v8349, 16
      %v8429 = vrot.slane %v8427, 5
      %v8430 = vsel %vm977, %v8425, %v8429
      %v8431 = vshrl.u32 %v8349, 16
      %v8433 = vrot.slane %v8431, 4
      %v8434 = vor.u32 %v8433, %v8429
      %v8435 = vrot.slane %v8434, 4
      %v8437 = vshll.u32 %v8350, 16
      %v8439 = vrot.slane %v8437, 5
      %v8440 = vsel %vm977, %v8435, %v8439
      %v8442 = vshrl.u32 %v8351, 16
      %v8444 = vrot.slane %v8442, 4
      %v8445 = vshll.u32 %v8351, 16
      %v8447 = vrot.slane %v8445, 5
      %v8448 = vor.u32 %v8444, %v8447
      %v8449 = vrot.slane %v8448, 4
      %v8451 = vshll.u32 %v8352, 16
      %v8453 = vrot.slane %v8451, 5
      %v8454 = vsel %vm977, %v8449, %v8453
      %v8455 = vshrl.u32 %v8352, 16
      %v8457 = vrot.slane %v8455, 4
      %v8458 = vor.u32 %v8457, %v8453
      %v8459 = vrot.slane %v8458, 4
      %v8461 = vshll.u32 %v8353, 16
      %v8463 = vrot.slane %v8461, 5
      %v8464 = vsel %vm977, %v8459, %v8463
      %v8466 = vshrl.u32 %v8354, 16
      %v8468 = vrot.slane %v8466, 4
      %v8469 = vshll.u32 %v8354, 16
      %v8471 = vrot.slane %v8469, 5
      %v8472 = vor.u32 %v8468, %v8471
      %v8473 = vrot.slane %v8472, 4
      %v8475 = vshll.u32 %v8355, 16
      %v8477 = vrot.slane %v8475, 5
      %v8478 = vsel %vm977, %v8473, %v8477
      %v8479 = vshrl.u32 %v8355, 16
      %v8481 = vrot.slane %v8479, 4
      %v8482 = vor.u32 %v8481, %v8477
      %v8483 = vrot.slane %v8482, 4
      %v8485 = vshll.u32 %v8356, 16
      %v8487 = vrot.slane %v8485, 5
      %v8488 = vsel %vm977, %v8483, %v8487
      %v8490 = vshrl.u32 %v8357, 16
      %v8492 = vrot.slane %v8490, 4
      %v8493 = vshll.u32 %v8357, 16
      %v8495 = vrot.slane %v8493, 5
      %v8496 = vor.u32 %v8492, %v8495
      %v8497 = vrot.slane %v8496, 4
      %v8499 = vshll.u32 %v8358, 16
      %v8501 = vrot.slane %v8499, 5
      %v8502 = vsel %vm977, %v8497, %v8501
      %v8503 = vshrl.u32 %v8358, 16
      %v8505 = vrot.slane %v8503, 4
      %v8506 = vor.u32 %v8505, %v8501
      %v8507 = vrot.slane %v8506, 4
      %v8509 = vshll.u32 %v8359, 16
      %v8511 = vrot.slane %v8509, 5
      %v8512 = vsel %vm977, %v8507, %v8511
      %v8514 = vshrl.u32 %v8360, 16
      %v8516 = vrot.slane %v8514, 4
      %v8517 = vshll.u32 %v8360, 16
      %v8519 = vrot.slane %v8517, 5
      %v8520 = vor.u32 %v8516, %v8519
      %v8521 = vrot.slane %v8520, 4
      %v8523 = vshll.u32 %v8361, 16
      %v8525 = vrot.slane %v8523, 5
      %v8526 = vsel %vm977, %v8521, %v8525
      %v8527 = vshrl.u32 %v8361, 16
      %v8529 = vrot.slane %v8527, 4
      %v8530 = vor.u32 %v8529, %v8525
      %v8531 = vrot.slane %v8530, 4
      %v8533 = vshll.u32 %v8362, 16
      %v8535 = vrot.slane %v8533, 5
      %v8536 = vsel %vm977, %v8531, %v8535
      %v8538 = vshrl.u32 %v8363, 16
      %v8540 = vrot.slane %v8538, 4
      %v8541 = vshll.u32 %v8363, 16
      %v8543 = vrot.slane %v8541, 5
      %v8544 = vor.u32 %v8540, %v8543
      %v8545 = vrot.slane %v8544, 4
      %v8547 = vshll.u32 %v8364, 16
      %v8549 = vrot.slane %v8547, 5
      %v8550 = vsel %vm977, %v8545, %v8549
      %v8551 = vshrl.u32 %v8364, 16
      %v8553 = vrot.slane %v8551, 4
      %v8554 = vor.u32 %v8553, %v8549
      %v8555 = vrot.slane %v8554, 4
      %v8557 = vshll.u32 %v8365, 16
      %v8559 = vrot.slane %v8557, 5
      %v8560 = vsel %vm977, %v8555, %v8559
      %v8562 = vshrl.u32 %v8366, 16
      %v8564 = vrot.slane %v8562, 4
      %v8565 = vshll.u32 %v8366, 16
      %v8567 = vrot.slane %v8565, 5
      %v8568 = vor.u32 %v8564, %v8567
      %v8569 = vrot.slane %v8568, 4
      %v8571 = vshll.u32 %v8367, 16
      %v8573 = vrot.slane %v8571, 5
      %v8574 = vsel %vm977, %v8569, %v8573
      %v8575 = vshrl.u32 %v8367, 16
      %v8577 = vrot.slane %v8575, 4
      %v8578 = vor.u32 %v8577, %v8573
      %v8579 = vrot.slane %v8578, 4
      %v8581 = vshll.u32 %v8368, 16
      %v8583 = vrot.slane %v8581, 5
      %v8584 = vsel %vm977, %v8579, %v8583
      %v8586 = vshrl.u32 %v8369, 16
      %v8588 = vrot.slane %v8586, 4
      %v8589 = vshll.u32 %v8369, 16
      %v8591 = vrot.slane %v8589, 5
      %v8592 = vor.u32 %v8588, %v8591
      %v8593 = vrot.slane %v8592, 4
      %v8595 = vshll.u32 %v8370, 16
      %v8597 = vrot.slane %v8595, 5
      %v8598 = vsel %vm977, %v8593, %v8597
      %v8599 = vshrl.u32 %v8370, 16
      %v8601 = vrot.slane %v8599, 4
      %v8602 = vor.u32 %v8601, %v8597
      %v8603 = vrot.slane %v8602, 4
      %v8605 = vshll.u32 %v8371, 16
      %v8607 = vrot.slane %v8605, 5
      %v8608 = vsel %vm977, %v8603, %v8607
      %v8610 = vshrl.u32 %v8372, 16
      %v8612 = vrot.slane %v8610, 4
      %v8613 = vshll.u32 %v8372, 16
      %v8615 = vrot.slane %v8613, 5
      %v8616 = vor.u32 %v8612, %v8615
      %v8617 = vrot.slane %v8616, 4
      %v8619 = vshll.u32 %v8373, 16
      %v8621 = vrot.slane %v8619, 5
      %v8622 = vsel %vm977, %v8617, %v8621
      %v8623 = vshrl.u32 %v8373, 16
      %v8625 = vrot.slane %v8623, 4
      %v8626 = vor.u32 %v8625, %v8621
      %v8627 = vrot.slane %v8626, 4
      %v8629 = vshll.u32 %v8374, 16
      %v8631 = vrot.slane %v8629, 5
      %v8632 = vsel %vm977, %v8627, %v8631
      %v8634 = vshrl.u32 %v8375, 16
      %v8636 = vrot.slane %v8634, 4
      %v8637 = vshll.u32 %v8375, 16
      %v8639 = vrot.slane %v8637, 5
      %v8640 = vor.u32 %v8636, %v8639
      %v8641 = vrot.slane %v8640, 4
      %v8643 = vshll.u32 %v8376, 16
      %v8645 = vrot.slane %v8643, 5
      %v8646 = vsel %vm977, %v8641, %v8645
      %v8647 = vshrl.u32 %v8376, 16
      %v8649 = vrot.slane %v8647, 4
      %v8650 = vor.u32 %v8649, %v8645
      %v8651 = vrot.slane %v8650, 4
      %v8653 = vshll.u32 %v8377, 16
      %v8655 = vrot.slane %v8653, 5
      %v8656 = vsel %vm977, %v8651, %v8655
      %v8658 = vshrl.u32 %v8378, 16
      %v8660 = vrot.slane %v8658, 4
      %v8661 = vshll.u32 %v8378, 16
      %v8663 = vrot.slane %v8661, 5
      %v8664 = vor.u32 %v8660, %v8663
      %v8665 = vrot.slane %v8664, 4
      %v8667 = vshll.u32 %v8379, 16
      %v8669 = vrot.slane %v8667, 5
      %v8670 = vsel %vm977, %v8665, %v8669
      %v8671 = vshrl.u32 %v8379, 16
      %v8673 = vrot.slane %v8671, 4
      %v8674 = vor.u32 %v8673, %v8669
      %v8675 = vrot.slane %v8674, 4
      %v8677 = vshll.u32 %v8380, 16
      %v8679 = vrot.slane %v8677, 5
      %v8680 = vsel %vm977, %v8675, %v8679
      %v8682 = vshrl.u32 %v8381, 16
      %v8684 = vrot.slane %v8682, 4
      %v8685 = vshll.u32 %v8381, 16
      %v8687 = vrot.slane %v8685, 5
      %v8688 = vor.u32 %v8684, %v8687
      %v8689 = vrot.slane %v8688, 4
      %v8691 = vshll.u32 %v8382, 16
      %v8693 = vrot.slane %v8691, 5
      %v8694 = vsel %vm977, %v8689, %v8693
      %v8695 = vshrl.u32 %v8382, 16
      %v8697 = vrot.slane %v8695, 4
      %v8698 = vor.u32 %v8697, %v8693
      %v8699 = vrot.slane %v8698, 4
      %v8701 = vshll.u32 %v8383, 16
      %v8703 = vrot.slane %v8701, 5
      %v8704 = vsel %vm977, %v8699, %v8703
      %v8706 = vshrl.u32 %v8384, 16
      %v8708 = vrot.slane %v8706, 4
      %v8709 = vshll.u32 %v8384, 16
      %v8711 = vrot.slane %v8709, 5
      %v8712 = vor.u32 %v8708, %v8711
      %v8713 = vrot.slane %v8712, 4
      %v8715 = vshll.u32 %v8385, 16
      %v8717 = vrot.slane %v8715, 5
      %v8718 = vsel %vm977, %v8713, %v8717
      %v8719 = vshrl.u32 %v8385, 16
      %v8721 = vrot.slane %v8719, 4
      %v8722 = vor.u32 %v8721, %v8717
      %v8723 = vrot.slane %v8722, 4
      %v8725 = vshll.u32 %v8386, 16
      %v8727 = vrot.slane %v8725, 5
      %v8728 = vsel %vm977, %v8723, %v8727
      %v8730 = vshrl.u32 %v8387, 16
      %v8732 = vrot.slane %v8730, 4
      %v8733 = vshll.u32 %v8387, 16
      %v8735 = vrot.slane %v8733, 5
      %v8736 = vor.u32 %v8732, %v8735
      %v8737 = vrot.slane %v8736, 4
      %v8739 = vshll.u32 %v8388, 16
      %v8741 = vrot.slane %v8739, 5
      %v8742 = vsel %vm977, %v8737, %v8741
      %v8743 = vshrl.u32 %v8388, 16
      %v8745 = vrot.slane %v8743, 4
      %v8746 = vor.u32 %v8745, %v8741
      %v8747 = vrot.slane %v8746, 4
      %v8749 = vshll.u32 %v8389, 16
      %v8751 = vrot.slane %v8749, 5
      %v8752 = vsel %vm977, %v8747, %v8751
      %v8754 = vshrl.u32 %v8390, 16
      %v8756 = vrot.slane %v8754, 4
      %v8757 = vshll.u32 %v8390, 16
      %v8759 = vrot.slane %v8757, 5
      %v8760 = vor.u32 %v8756, %v8759
      %v8761 = vrot.slane %v8760, 4
      %v8763 = vshll.u32 %v8391, 16
      %v8765 = vrot.slane %v8763, 5
      %v8766 = vsel %vm977, %v8761, %v8765
      %v8767 = vshrl.u32 %v8391, 16
      %v8769 = vrot.slane %v8767, 4
      %v8770 = vor.u32 %v8769, %v8765
      %v8771 = vrot.slane %v8770, 4
      %v8773 = vshll.u32 %v8392, 16
      %v8775 = vrot.slane %v8773, 5
      %v8776 = vsel %vm977, %v8771, %v8775
      %s8777 = scalar_lea.vmem %s3, 256
      %v8778 = vld [vmem:[%s8777] sm:$0xf]
      %v8779 = vld [vmem:[%s8777 + $0x4] sm:$0xf]
      %v8780 = vld [vmem:[%s8777 + $0x8] sm:$0xf]
      %v8781 = vld [vmem:[%s8777 + $0xc] sm:$0xf]
      %v8782 = vld [vmem:[%s8777 + $0x10] sm:$0xf]
      %v8783 = vld [vmem:[%s8777 + $0x14] sm:$0xf]
      %v8784 = vld [vmem:[%s8777 + $0x18] sm:$0xf]
      %v8785 = vld [vmem:[%s8777 + $0x1c] sm:$0xf]
      %v8786 = vld [vmem:[%s8777 + $0x20] sm:$0xf]
      %v8787 = vld [vmem:[%s8777 + $0x24] sm:$0xf]
      %v8788 = vld [vmem:[%s8777 + $0x28] sm:$0xf]
      %v8789 = vld [vmem:[%s8777 + $0x2c] sm:$0xf]
      %v8790 = vld [vmem:[%s8777 + $0x30] sm:$0xf]
      %v8791 = vld [vmem:[%s8777 + $0x34] sm:$0xf]
      %v8792 = vld [vmem:[%s8777 + $0x38] sm:$0xf]
      %v8793 = vld [vmem:[%s8777 + $0x3c] sm:$0xf]
      %v8794 = vunpack.c.l.b16 %v8406
      %v8795 = vunpack.c.l.b16 %v8416
      %v8796 = vunpack.c.l.b16 %v8430
      %v8797 = vunpack.c.l.b16 %v8440
      %v8798 = vunpack.c.l.b16 %v8454
      %v8799 = vunpack.c.l.b16 %v8464
      %v8800 = vunpack.c.l.b16 %v8478
      %v8801 = vunpack.c.l.b16 %v8488
      %v8802 = vunpack.c.l.b16 %v8502
      %v8803 = vunpack.c.l.b16 %v8512
      %v8804 = vunpack.c.l.b16 %v8526
      %v8805 = vunpack.c.l.b16 %v8536
      %v8806 = vunpack.c.l.b16 %v8550
      %v8807 = vunpack.c.l.b16 %v8560
      %v8808 = vunpack.c.l.b16 %v8574
      %v8809 = vunpack.c.l.b16 %v8584
      %v8810 = vunpack.c.l.b16 %v8598
      %v8811 = vunpack.c.l.b16 %v8608
      %v8812 = vunpack.c.l.b16 %v8622
      %v8813 = vunpack.c.l.b16 %v8632
      %v8814 = vunpack.c.l.b16 %v8646
      %v8815 = vunpack.c.l.b16 %v8656
      %v8816 = vunpack.c.l.b16 %v8670
      %v8817 = vunpack.c.l.b16 %v8680
      %v8818 = vunpack.c.l.b16 %v8694
      %v8819 = vunpack.c.l.b16 %v8704
      %v8820 = vunpack.c.l.b16 %v8718
      %v8821 = vunpack.c.l.b16 %v8728
      %v8822 = vunpack.c.l.b16 %v8742
      %v8823 = vunpack.c.l.b16 %v8752
      %v8824 = vunpack.c.l.b16 %v8766
      %v8825 = vunpack.c.l.b16 %v8776
      %v8826 = vpack.c.b16 %v8795, %v8794
      %v8827 = vpack.c.b16 %v8797, %v8796
      %v8828 = vpack.c.b16 %v8799, %v8798
      %v8829 = vpack.c.b16 %v8801, %v8800
      %v8830 = vpack.c.b16 %v8803, %v8802
      %v8831 = vpack.c.b16 %v8805, %v8804
      %v8832 = vpack.c.b16 %v8807, %v8806
      %v8833 = vpack.c.b16 %v8809, %v8808
      %v8834 = vpack.c.b16 %v8811, %v8810
      %v8835 = vpack.c.b16 %v8813, %v8812
      %v8836 = vpack.c.b16 %v8815, %v8814
      %v8837 = vpack.c.b16 %v8817, %v8816
      %v8838 = vpack.c.b16 %v8819, %v8818
      %v8839 = vpack.c.b16 %v8821, %v8820
      %v8840 = vpack.c.b16 %v8823, %v8822
      %v8841 = vpack.c.b16 %v8825, %v8824
      %v8874 = vunpack.c.l.b16 %v8778
      %v8875 = vunpack.c.l.b16 %v8779
      %v8876 = vunpack.c.l.b16 %v8780
      %v8877 = vunpack.c.l.b16 %v8781
      %v8878 = vunpack.c.l.b16 %v8782
      %v8879 = vunpack.c.l.b16 %v8783
      %v8880 = vunpack.c.l.b16 %v8784
      %v8881 = vunpack.c.l.b16 %v8785
      %v8882 = vunpack.c.l.b16 %v8786
      %v8883 = vunpack.c.l.b16 %v8787
      %v8884 = vunpack.c.l.b16 %v8788
      %v8885 = vunpack.c.l.b16 %v8789
      %v8886 = vunpack.c.l.b16 %v8790
      %v8887 = vunpack.c.l.b16 %v8791
      %v8888 = vunpack.c.l.b16 %v8792
      %v8889 = vunpack.c.l.b16 %v8793
      %v8890 = vpack.c.b16 %v8875, %v8874
      %v8891 = vpack.c.b16 %v8877, %v8876
      %v8892 = vpack.c.b16 %v8879, %v8878
      %v8893 = vpack.c.b16 %v8881, %v8880
      %v8894 = vpack.c.b16 %v8883, %v8882
      %v8895 = vpack.c.b16 %v8885, %v8884
      %v8896 = vpack.c.b16 %v8887, %v8886
      %v8897 = vpack.c.b16 %v8889, %v8888
      %8906 = vmatprep.subr.bf16.mxu0 0
      %8907 = vmatpush1.bf16.msra.mxu0 %v8890
      %8908 = vmatprep.subr.bf16.mxu0 0
      %8909 = vmatpush1.bf16.msra.mxu0 %v8891
      %8910 = vmatprep.subr.bf16.mxu0 0
      %8911 = vmatpush1.bf16.msra.mxu0 %v8892
      %8912 = vmatprep.subr.bf16.mxu0 0
      %8913 = vmatpush1.bf16.msra.mxu0 %v8893
      %8914 = vmatprep.subr.bf16.mxu0 0
      %8915 = vmatpush1.bf16.msra.mxu0 %v8894
      %8916 = vmatprep.subr.bf16.mxu0 0
      %8917 = vmatpush1.bf16.msra.mxu0 %v8895
      %8918 = vmatprep.subr.bf16.mxu0 0
      %8919 = vmatpush1.bf16.msra.mxu0 %v8896
      %8920 = vmatprep.subr.bf16.mxu0 0
      %8921 = vmatpush1.bf16.msra.mxu0 %v8897
      %8922 = vmatprep.subr.bf16.mxu0 0
      %8923 = vmatpush1.bf16.msra.mxu0 0
      %8924 = vmatprep.subr.bf16.mxu0 0
      %8925 = vmatpush1.bf16.msra.mxu0 0
      %8926 = vmatprep.subr.bf16.mxu0 0
      %8927 = vmatpush1.bf16.msra.mxu0 0
      %8928 = vmatprep.subr.bf16.mxu0 0
      %8929 = vmatpush1.bf16.msra.mxu0 0
      %8930 = vmatprep.subr.bf16.mxu0 0
      %8931 = vmatpush1.bf16.msra.mxu0 0
      %8932 = vmatprep.subr.bf16.mxu0 0
      %8933 = vmatpush1.bf16.msra.mxu0 0
      %8934 = vmatprep.subr.bf16.mxu0 0
      %8935 = vmatpush1.bf16.msra.mxu0 0
      %8936 = vmatprep.subr.bf16.mxu0 0
      %8937 = vmatpush1.bf16.msra.mxu0 0
      %8938 = vmatprep.mubr.bf16.mxu0 0
      %8939 = vmatmul.mubr.bf16.gmra.mrb[0].mxu0 %v8826
      %v8940 = vpop.f32.mrb[0].mxu0
      %v8941 = vadd.f32 0.0, %v8940
      %v8942 = vpop.f32.mrb[0].mxu0
      %v8943 = vpop.f32.mrb[0].mxu0
      %v8944 = vadd.f32 0.0, %v8943
      %v8945 = vpop.f32.mrb[0].mxu0
      %8946 = vmatprep.mubr.bf16.mxu0 0
      %8947 = vmatmul.mubr.bf16.gmra.mrb[0].mxu0 %v8827
      %v8948 = vpop.f32.mrb[0].mxu0
      %v8949 = vadd.f32 0.0, %v8948
      %v8950 = vpop.f32.mrb[0].mxu0
      %v8951 = vpop.f32.mrb[0].mxu0
      %v8952 = vadd.f32 0.0, %v8951
      %v8953 = vpop.f32.mrb[0].mxu0
      %8954 = vmatprep.mubr.bf16.mxu0 0
      %8955 = vmatmul.mubr.bf16.gmra.mrb[0].mxu0 %v8828
      %v8956 = vpop.f32.mrb[0].mxu0
      %v8957 = vadd.f32 0.0, %v8956
      %v8958 = vpop.f32.mrb[0].mxu0
      %v8959 = vpop.f32.mrb[0].mxu0
      %v8960 = vadd.f32 0.0, %v8959
      %v8961 = vpop.f32.mrb[0].mxu0
      %8962 = vmatprep.mubr.bf16.mxu0 0
      %8963 = vmatmul.mubr.bf16.gmra.mrb[0].mxu0 %v8829
      %v8964 = vpop.f32.mrb[0].mxu0
      %v8965 = vadd.f32 0.0, %v8964
      %v8966 = vpop.f32.mrb[0].mxu0
      %v8967 = vpop.f32.mrb[0].mxu0
      %v8968 = vadd.f32 0.0, %v8967
      %v8969 = vpop.f32.mrb[0].mxu0
      %8970 = vmatprep.mubr.bf16.mxu0 0
      %8971 = vmatmul.mubr.bf16.gmra.mrb[0].mxu0 %v8830
      %v8972 = vpop.f32.mrb[0].mxu0
      %v8973 = vadd.f32 0.0, %v8972
      %v8974 = vpop.f32.mrb[0].mxu0
      %v8975 = vpop.f32.mrb[0].mxu0
      %v8976 = vadd.f32 0.0, %v8975
      %v8977 = vpop.f32.mrb[0].mxu0
      %8978 = vmatprep.mubr.bf16.mxu0 0
      %8979 = vmatmul.mubr.bf16.gmra.mrb[0].mxu0 %v8831
      %v8980 = vpop.f32.mrb[0].mxu0
      %v8981 = vadd.f32 0.0, %v8980
      %v8982 = vpop.f32.mrb[0].mxu0
      %v8983 = vpop.f32.mrb[0].mxu0
      %v8984 = vadd.f32 0.0, %v8983
      %v8985 = vpop.f32.mrb[0].mxu0
      %8986 = vmatprep.mubr.bf16.mxu0 0
      %8987 = vmatmul.mubr.bf16.gmra.mrb[0].mxu0 %v8832
      %v8988 = vpop.f32.mrb[0].mxu0
      %v8989 = vadd.f32 0.0, %v8988
      %v8990 = vpop.f32.mrb[0].mxu0
      %v8991 = vpop.f32.mrb[0].mxu0
      %v8992 = vadd.f32 0.0, %v8991
      %v8993 = vpop.f32.mrb[0].mxu0
      %8994 = vmatprep.mubr.bf16.mxu0 0
      %8995 = vmatmul.mubr.bf16.gmra.mrb[0].mxu0 %v8833
      %v8996 = vpop.f32.mrb[0].mxu0
      %v8997 = vadd.f32 0.0, %v8996
      %v8998 = vpop.f32.mrb[0].mxu0
      %v8999 = vpop.f32.mrb[0].mxu0
      %v9000 = vadd.f32 0.0, %v8999
      %v9001 = vpop.f32.mrb[0].mxu0
      %9002 = vmatprep.mubr.bf16.mxu0 0
      %9003 = vmatmul.mubr.bf16.gmra.mrb[0].mxu0 %v8834
      %v9004 = vpop.f32.mrb[0].mxu0
      %v9005 = vadd.f32 0.0, %v9004
      %v9006 = vpop.f32.mrb[0].mxu0
      %v9007 = vpop.f32.mrb[0].mxu0
      %v9008 = vadd.f32 0.0, %v9007
      %v9009 = vpop.f32.mrb[0].mxu0
      %9010 = vmatprep.mubr.bf16.mxu0 0
      %9011 = vmatmul.mubr.bf16.gmra.mrb[0].mxu0 %v8835
      %v9012 = vpop.f32.mrb[0].mxu0
      %v9013 = vadd.f32 0.0, %v9012
      %v9014 = vpop.f32.mrb[0].mxu0
      %v9015 = vpop.f32.mrb[0].mxu0
      %v9016 = vadd.f32 0.0, %v9015
      %v9017 = vpop.f32.mrb[0].mxu0
      %9018 = vmatprep.mubr.bf16.mxu0 0
      %9019 = vmatmul.mubr.bf16.gmra.mrb[0].mxu0 %v8836
      %v9020 = vpop.f32.mrb[0].mxu0
      %v9021 = vadd.f32 0.0, %v9020
      %v9022 = vpop.f32.mrb[0].mxu0
      %v9023 = vpop.f32.mrb[0].mxu0
      %v9024 = vadd.f32 0.0, %v9023
      %v9025 = vpop.f32.mrb[0].mxu0
      %9026 = vmatprep.mubr.bf16.mxu0 0
      %9027 = vmatmul.mubr.bf16.gmra.mrb[0].mxu0 %v8837
      %v9028 = vpop.f32.mrb[0].mxu0
      %v9029 = vadd.f32 0.0, %v9028
      %v9030 = vpop.f32.mrb[0].mxu0
      %v9031 = vpop.f32.mrb[0].mxu0
      %v9032 = vadd.f32 0.0, %v9031
      %v9033 = vpop.f32.mrb[0].mxu0
      %9034 = vmatprep.mubr.bf16.mxu0 0
      %9035 = vmatmul.mubr.bf16.gmra.mrb[0].mxu0 %v8838
      %v9036 = vpop.f32.mrb[0].mxu0
      %v9037 = vadd.f32 0.0, %v9036
      %v9038 = vpop.f32.mrb[0].mxu0
      %v9039 = vpop.f32.mrb[0].mxu0
      %v9040 = vadd.f32 0.0, %v9039
      %v9041 = vpop.f32.mrb[0].mxu0
      %9042 = vmatprep.mubr.bf16.mxu0 0
      %9043 = vmatmul.mubr.bf16.gmra.mrb[0].mxu0 %v8839
      %v9044 = vpop.f32.mrb[0].mxu0
      %v9045 = vadd.f32 0.0, %v9044
      %v9046 = vpop.f32.mrb[0].mxu0
      %v9047 = vpop.f32.mrb[0].mxu0
      %v9048 = vadd.f32 0.0, %v9047
      %v9049 = vpop.f32.mrb[0].mxu0
      %9050 = vmatprep.mubr.bf16.mxu0 0
      %9051 = vmatmul.mubr.bf16.gmra.mrb[0].mxu0 %v8840
      %v9052 = vpop.f32.mrb[0].mxu0
      %v9053 = vadd.f32 0.0, %v9052
      %v9054 = vpop.f32.mrb[0].mxu0
      %v9055 = vpop.f32.mrb[0].mxu0
      %v9056 = vadd.f32 0.0, %v9055
      %v9057 = vpop.f32.mrb[0].mxu0
      %9058 = vmatprep.mubr.bf16.mxu0 0
      %9059 = vmatmul.mubr.bf16.gmra.mrb[0].mxu0 %v8841
      %v9060 = vpop.f32.mrb[0].mxu0
      %v9061 = vadd.f32 0.0, %v9060
      %v9062 = vpop.f32.mrb[0].mxu0
      %v9063 = vpop.f32.mrb[0].mxu0
      %v9064 = vadd.f32 0.0, %v9063
      %v9065 = vpop.f32.mrb[0].mxu0
      %9066 = vdwg.mxu0
      %v9067 = vadd.f32 %v8313, %v8941
      %v9068 = vadd.f32 %v8314, %v8944
      %v9069 = vadd.f32 %v8315, %v8949
      %v9070 = vadd.f32 %v8316, %v8952
      %v9071 = vadd.f32 %v8317, %v8957
      %v9072 = vadd.f32 %v8318, %v8960
      %v9073 = vadd.f32 %v8319, %v8965
      %v9074 = vadd.f32 %v8320, %v8968
      %v9075 = vadd.f32 %v8321, %v8973
      %v9076 = vadd.f32 %v8322, %v8976
      %v9077 = vadd.f32 %v8323, %v8981
      %v9078 = vadd.f32 %v8324, %v8984
      %v9079 = vadd.f32 %v8325, %v8989
      %v9080 = vadd.f32 %v8326, %v8992
      %v9081 = vadd.f32 %v8327, %v8997
      %v9082 = vadd.f32 %v8328, %v9000
      %v9083 = vadd.f32 %v8329, %v9005
      %v9084 = vadd.f32 %v8330, %v9008
      %v9085 = vadd.f32 %v8331, %v9013
      %v9086 = vadd.f32 %v8332, %v9016
      %v9087 = vadd.f32 %v8333, %v9021
      %v9088 = vadd.f32 %v8334, %v9024
      %v9089 = vadd.f32 %v8335, %v9029
      %v9090 = vadd.f32 %v8336, %v9032
      %v9091 = vadd.f32 %v8337, %v9037
      %v9092 = vadd.f32 %v8338, %v9040
      %v9093 = vadd.f32 %v8339, %v9045
      %v9094 = vadd.f32 %v8340, %v9048
      %v9095 = vadd.f32 %v8341, %v9053
      %v9096 = vadd.f32 %v8342, %v9056
      %v9097 = vadd.f32 %v8343, %v9061
      %v9098 = vadd.f32 %v8344, %v9064
      %v9099 = vld [vmem:[%s6321] sm:$0xe]
      %v9100 = vld [vmem:[%s6321 + $0xc] sm:$0xe]
      %v9101 = vld [vmem:[%s6321 + $0x18] sm:$0xe]
      %v9102 = vld [vmem:[%s6321 + $0x24] sm:$0xe]
      %v9103 = vld [vmem:[%s6321 + $0x30] sm:$0xe]
      %v9104 = vld [vmem:[%s6321 + $0x3c] sm:$0xe]
      %v9105 = vld [vmem:[%s6321 + $0x48] sm:$0xe]
      %v9106 = vld [vmem:[%s6321 + $0x54] sm:$0xe]
      %v9107 = vld [vmem:[%s6321 + $0x60] sm:$0xe]
      %v9108 = vld [vmem:[%s6321 + $0x6c] sm:$0xe]
      %v9109 = vld [vmem:[%s6321 + $0x78] sm:$0xe]
      %v9110 = vld [vmem:[%s6321 + $0x84] sm:$0xe]
      %v9111 = vld [vmem:[%s6321 + $0x90] sm:$0xe]
      %v9112 = vld [vmem:[%s6321 + $0x9c] sm:$0xe]
      %v9113 = vld [vmem:[%s6321 + $0xa8] sm:$0xe]
      %v9114 = vld [vmem:[%s6321 + $0xb4] sm:$0xe]
      %v9163 = vrot.slane %v9099, 5
      %v9164 = vrot.slane %v9163, 4
      %v9165 = vrot.slane %v8346, 5
      %v9166 = vsel %vm2007, %v9164, %v9165
      %v9167 = vrot.slane %v9165, 4
      %v9168 = vrot.slane %v8347, 5
      %v9169 = vsel %vm2007, %v9167, %v9168
      %v9170 = vrot.slane %v9100, 5
      %v9171 = vrot.slane %v9170, 4
      %v9172 = vrot.slane %v8349, 5
      %v9173 = vsel %vm2007, %v9171, %v9172
      %v9174 = vrot.slane %v9172, 4
      %v9175 = vrot.slane %v8350, 5
      %v9176 = vsel %vm2007, %v9174, %v9175
      %v9177 = vrot.slane %v9101, 5
      %v9178 = vrot.slane %v9177, 4
      %v9179 = vrot.slane %v8352, 5
      %v9180 = vsel %vm2007, %v9178, %v9179
      %v9181 = vrot.slane %v9179, 4
      %v9182 = vrot.slane %v8353, 5
      %v9183 = vsel %vm2007, %v9181, %v9182
      %v9184 = vrot.slane %v9102, 5
      %v9185 = vrot.slane %v9184, 4
      %v9186 = vrot.slane %v8355, 5
      %v9187 = vsel %vm2007, %v9185, %v9186
      %v9188 = vrot.slane %v9186, 4
      %v9189 = vrot.slane %v8356, 5
      %v9190 = vsel %vm2007, %v9188, %v9189
      %v9191 = vrot.slane %v9103, 5
      %v9192 = vrot.slane %v9191, 4
      %v9193 = vrot.slane %v8358, 5
      %v9194 = vsel %vm2007, %v9192, %v9193
      %v9195 = vrot.slane %v9193, 4
      %v9196 = vrot.slane %v8359, 5
      %v9197 = vsel %vm2007, %v9195, %v9196
      %v9198 = vrot.slane %v9104, 5
      %v9199 = vrot.slane %v9198, 4
      %v9200 = vrot.slane %v8361, 5
      %v9201 = vsel %vm2007, %v9199, %v9200
      %v9202 = vrot.slane %v9200, 4
      %v9203 = vrot.slane %v8362, 5
      %v9204 = vsel %vm2007, %v9202, %v9203
      %v9205 = vrot.slane %v9105, 5
      %v9206 = vrot.slane %v9205, 4
      %v9207 = vrot.slane %v8364, 5
      %v9208 = vsel %vm2007, %v9206, %v9207
      %v9209 = vrot.slane %v9207, 4
      %v9210 = vrot.slane %v8365, 5
      %v9211 = vsel %vm2007, %v9209, %v9210
      %v9212 = vrot.slane %v9106, 5
      %v9213 = vrot.slane %v9212, 4
      %v9214 = vrot.slane %v8367, 5
      %v9215 = vsel %vm2007, %v9213, %v9214
      %v9216 = vrot.slane %v9214, 4
      %v9217 = vrot.slane %v8368, 5
      %v9218 = vsel %vm2007, %v9216, %v9217
      %v9219 = vrot.slane %v9107, 5
      %v9220 = vrot.slane %v9219, 4
      %v9221 = vrot.slane %v8370, 5
      %v9222 = vsel %vm2007, %v9220, %v9221
      %v9223 = vrot.slane %v9221, 4
      %v9224 = vrot.slane %v8371, 5
      %v9225 = vsel %vm2007, %v9223, %v9224
      %v9226 = vrot.slane %v9108, 5
      %v9227 = vrot.slane %v9226, 4
      %v9228 = vrot.slane %v8373, 5
      %v9229 = vsel %vm2007, %v9227, %v9228
      %v9230 = vrot.slane %v9228, 4
      %v9231 = vrot.slane %v8374, 5
      %v9232 = vsel %vm2007, %v9230, %v9231
      %v9233 = vrot.slane %v9109, 5
      %v9234 = vrot.slane %v9233, 4
      %v9235 = vrot.slane %v8376, 5
      %v9236 = vsel %vm2007, %v9234, %v9235
      %v9237 = vrot.slane %v9235, 4
      %v9238 = vrot.slane %v8377, 5
      %v9239 = vsel %vm2007, %v9237, %v9238
      %v9240 = vrot.slane %v9110, 5
      %v9241 = vrot.slane %v9240, 4
      %v9242 = vrot.slane %v8379, 5
      %v9243 = vsel %vm2007, %v9241, %v9242
      %v9244 = vrot.slane %v9242, 4
      %v9245 = vrot.slane %v8380, 5
      %v9246 = vsel %vm2007, %v9244, %v9245
      %v9247 = vrot.slane %v9111, 5
      %v9248 = vrot.slane %v9247, 4
      %v9249 = vrot.slane %v8382, 5
      %v9250 = vsel %vm2007, %v9248, %v9249
      %v9251 = vrot.slane %v9249, 4
      %v9252 = vrot.slane %v8383, 5
      %v9253 = vsel %vm2007, %v9251, %v9252
      %v9254 = vrot.slane %v9112, 5
      %v9255 = vrot.slane %v9254, 4
      %v9256 = vrot.slane %v8385, 5
      %v9257 = vsel %vm2007, %v9255, %v9256
      %v9258 = vrot.slane %v9256, 4
      %v9259 = vrot.slane %v8386, 5
      %v9260 = vsel %vm2007, %v9258, %v9259
      %v9261 = vrot.slane %v9113, 5
      %v9262 = vrot.slane %v9261, 4
      %v9263 = vrot.slane %v8388, 5
      %v9264 = vsel %vm2007, %v9262, %v9263
      %v9265 = vrot.slane %v9263, 4
      %v9266 = vrot.slane %v8389, 5
      %v9267 = vsel %vm2007, %v9265, %v9266
      %v9268 = vrot.slane %v9114, 5
      %v9269 = vrot.slane %v9268, 4
      %v9270 = vrot.slane %v8391, 5
      %v9271 = vsel %vm2007, %v9269, %v9270
      %v9272 = vrot.slane %v9270, 4
      %v9273 = vrot.slane %v8392, 5
      %v9274 = vsel %vm2007, %v9272, %v9273
      %s9275 = scalar_lea.vmem %s3, 320
      %v9276 = vld [vmem:[%s9275] sm:$0xf]
      %v9277 = vld [vmem:[%s9275 + $0x4] sm:$0xf]
      %v9278 = vld [vmem:[%s9275 + $0x8] sm:$0xf]
      %v9279 = vld [vmem:[%s9275 + $0xc] sm:$0xf]
      %v9280 = vld [vmem:[%s9275 + $0x10] sm:$0xf]
      %v9281 = vld [vmem:[%s9275 + $0x14] sm:$0xf]
      %v9282 = vld [vmem:[%s9275 + $0x18] sm:$0xf]
      %v9283 = vld [vmem:[%s9275 + $0x1c] sm:$0xf]
      %v9284 = vld [vmem:[%s9275 + $0x20] sm:$0xf]
      %v9285 = vld [vmem:[%s9275 + $0x24] sm:$0xf]
      %v9286 = vld [vmem:[%s9275 + $0x28] sm:$0xf]
      %v9287 = vld [vmem:[%s9275 + $0x2c] sm:$0xf]
      %v9288 = vld [vmem:[%s9275 + $0x30] sm:$0xf]
      %v9289 = vld [vmem:[%s9275 + $0x34] sm:$0xf]
      %v9290 = vld [vmem:[%s9275 + $0x38] sm:$0xf]
      %v9291 = vld [vmem:[%s9275 + $0x3c] sm:$0xf]
      %v9292 = vunpack.c.l.b16 %v9166
      %v9293 = vunpack.c.l.b16 %v9169
      %v9294 = vunpack.c.l.b16 %v9173
      %v9295 = vunpack.c.l.b16 %v9176
      %v9296 = vunpack.c.l.b16 %v9180
      %v9297 = vunpack.c.l.b16 %v9183
      %v9298 = vunpack.c.l.b16 %v9187
      %v9299 = vunpack.c.l.b16 %v9190
      %v9300 = vunpack.c.l.b16 %v9194
      %v9301 = vunpack.c.l.b16 %v9197
      %v9302 = vunpack.c.l.b16 %v9201
      %v9303 = vunpack.c.l.b16 %v9204
      %v9304 = vunpack.c.l.b16 %v9208
      %v9305 = vunpack.c.l.b16 %v9211
      %v9306 = vunpack.c.l.b16 %v9215
      %v9307 = vunpack.c.l.b16 %v9218
      %v9308 = vunpack.c.l.b16 %v9222
      %v9309 = vunpack.c.l.b16 %v9225
      %v9310 = vunpack.c.l.b16 %v9229
      %v9311 = vunpack.c.l.b16 %v9232
      %v9312 = vunpack.c.l.b16 %v9236
      %v9313 = vunpack.c.l.b16 %v9239
      %v9314 = vunpack.c.l.b16 %v9243
      %v9315 = vunpack.c.l.b16 %v9246
      %v9316 = vunpack.c.l.b16 %v9250
      %v9317 = vunpack.c.l.b16 %v9253
      %v9318 = vunpack.c.l.b16 %v9257
      %v9319 = vunpack.c.l.b16 %v9260
      %v9320 = vunpack.c.l.b16 %v9264
      %v9321 = vunpack.c.l.b16 %v9267
      %v9322 = vunpack.c.l.b16 %v9271
      %v9323 = vunpack.c.l.b16 %v9274
      %v9324 = vpack.c.b16 %v9293, %v9292
      %v9325 = vpack.c.b16 %v9295, %v9294
      %v9326 = vpack.c.b16 %v9297, %v9296
      %v9327 = vpack.c.b16 %v9299, %v9298
      %v9328 = vpack.c.b16 %v9301, %v9300
      %v9329 = vpack.c.b16 %v9303, %v9302
      %v9330 = vpack.c.b16 %v9305, %v9304
      %v9331 = vpack.c.b16 %v9307, %v9306
      %v9332 = vpack.c.b16 %v9309, %v9308
      %v9333 = vpack.c.b16 %v9311, %v9310
      %v9334 = vpack.c.b16 %v9313, %v9312
      %v9335 = vpack.c.b16 %v9315, %v9314
      %v9336 = vpack.c.b16 %v9317, %v9316
      %v9337 = vpack.c.b16 %v9319, %v9318
      %v9338 = vpack.c.b16 %v9321, %v9320
      %v9339 = vpack.c.b16 %v9323, %v9322
      %v9372 = vunpack.c.l.b16 %v9276
      %v9373 = vunpack.c.l.b16 %v9277
      %v9374 = vunpack.c.l.b16 %v9278
      %v9375 = vunpack.c.l.b16 %v9279
      %v9376 = vunpack.c.l.b16 %v9280
      %v9377 = vunpack.c.l.b16 %v9281
      %v9378 = vunpack.c.l.b16 %v9282
      %v9379 = vunpack.c.l.b16 %v9283
      %v9380 = vunpack.c.l.b16 %v9284
      %v9381 = vunpack.c.l.b16 %v9285
      %v9382 = vunpack.c.l.b16 %v9286
      %v9383 = vunpack.c.l.b16 %v9287
      %v9384 = vunpack.c.l.b16 %v9288
      %v9385 = vunpack.c.l.b16 %v9289
      %v9386 = vunpack.c.l.b16 %v9290
      %v9387 = vunpack.c.l.b16 %v9291
      %v9388 = vpack.c.b16 %v9373, %v9372
      %v9389 = vpack.c.b16 %v9375, %v9374
      %v9390 = vpack.c.b16 %v9377, %v9376
      %v9391 = vpack.c.b16 %v9379, %v9378
      %v9392 = vpack.c.b16 %v9381, %v9380
      %v9393 = vpack.c.b16 %v9383, %v9382
      %v9394 = vpack.c.b16 %v9385, %v9384
      %v9395 = vpack.c.b16 %v9387, %v9386
      %9404 = vmatprep.subr.bf16.mxu0 0
      %9405 = vmatpush1.bf16.msra.mxu0 %v9388
      %9406 = vmatprep.subr.bf16.mxu0 0
      %9407 = vmatpush1.bf16.msra.mxu0 %v9389
      %9408 = vmatprep.subr.bf16.mxu0 0
      %9409 = vmatpush1.bf16.msra.mxu0 %v9390
      %9410 = vmatprep.subr.bf16.mxu0 0
      %9411 = vmatpush1.bf16.msra.mxu0 %v9391
      %9412 = vmatprep.subr.bf16.mxu0 0
      %9413 = vmatpush1.bf16.msra.mxu0 %v9392
      %9414 = vmatprep.subr.bf16.mxu0 0
      %9415 = vmatpush1.bf16.msra.mxu0 %v9393
      %9416 = vmatprep.subr.bf16.mxu0 0
      %9417 = vmatpush1.bf16.msra.mxu0 %v9394
      %9418 = vmatprep.subr.bf16.mxu0 0
      %9419 = vmatpush1.bf16.msra.mxu0 %v9395
      %9420 = vmatprep.subr.bf16.mxu0 0
      %9421 = vmatpush1.bf16.msra.mxu0 0
      %9422 = vmatprep.subr.bf16.mxu0 0
      %9423 = vmatpush1.bf16.msra.mxu0 0
      %9424 = vmatprep.subr.bf16.mxu0 0
      %9425 = vmatpush1.bf16.msra.mxu0 0
      %9426 = vmatprep.subr.bf16.mxu0 0
      %9427 = vmatpush1.bf16.msra.mxu0 0
      %9428 = vmatprep.subr.bf16.mxu0 0
      %9429 = vmatpush1.bf16.msra.mxu0 0
      %9430 = vmatprep.subr.bf16.mxu0 0
      %9431 = vmatpush1.bf16.msra.mxu0 0
      %9432 = vmatprep.subr.bf16.mxu0 0
      %9433 = vmatpush1.bf16.msra.mxu0 0
      %9434 = vmatprep.subr.bf16.mxu0 0
      %9435 = vmatpush1.bf16.msra.mxu0 0
      %9436 = vmatprep.mubr.bf16.mxu0 0
      %9437 = vmatmul.mubr.bf16.gmra.mrb[0].mxu0 %v9324
      %v9438 = vpop.f32.mrb[0].mxu0
      %v9439 = vadd.f32 0.0, %v9438
      %v9440 = vpop.f32.mrb[0].mxu0
      %v9441 = vpop.f32.mrb[0].mxu0
      %v9442 = vadd.f32 0.0, %v9441
      %v9443 = vpop.f32.mrb[0].mxu0
      %9444 = vmatprep.mubr.bf16.mxu0 0
      %9445 = vmatmul.mubr.bf16.gmra.mrb[0].mxu0 %v9325
      %v9446 = vpop.f32.mrb[0].mxu0
      %v9447 = vadd.f32 0.0, %v9446
      %v9448 = vpop.f32.mrb[0].mxu0
      %v9449 = vpop.f32.mrb[0].mxu0
      %v9450 = vadd.f32 0.0, %v9449
      %v9451 = vpop.f32.mrb[0].mxu0
      %9452 = vmatprep.mubr.bf16.mxu0 0
      %9453 = vmatmul.mubr.bf16.gmra.mrb[0].mxu0 %v9326
      %v9454 = vpop.f32.mrb[0].mxu0
      %v9455 = vadd.f32 0.0, %v9454
      %v9456 = vpop.f32.mrb[0].mxu0
      %v9457 = vpop.f32.mrb[0].mxu0
      %v9458 = vadd.f32 0.0, %v9457
      %v9459 = vpop.f32.mrb[0].mxu0
      %9460 = vmatprep.mubr.bf16.mxu0 0
      %9461 = vmatmul.mubr.bf16.gmra.mrb[0].mxu0 %v9327
      %v9462 = vpop.f32.mrb[0].mxu0
      %v9463 = vadd.f32 0.0, %v9462
      %v9464 = vpop.f32.mrb[0].mxu0
      %v9465 = vpop.f32.mrb[0].mxu0
      %v9466 = vadd.f32 0.0, %v9465
      %v9467 = vpop.f32.mrb[0].mxu0
      %9468 = vmatprep.mubr.bf16.mxu0 0
      %9469 = vmatmul.mubr.bf16.gmra.mrb[0].mxu0 %v9328
      %v9470 = vpop.f32.mrb[0].mxu0
      %v9471 = vadd.f32 0.0, %v9470
      %v9472 = vpop.f32.mrb[0].mxu0
      %v9473 = vpop.f32.mrb[0].mxu0
      %v9474 = vadd.f32 0.0, %v9473
      %v9475 = vpop.f32.mrb[0].mxu0
      %9476 = vmatprep.mubr.bf16.mxu0 0
      %9477 = vmatmul.mubr.bf16.gmra.mrb[0].mxu0 %v9329
      %v9478 = vpop.f32.mrb[0].mxu0
      %v9479 = vadd.f32 0.0, %v9478
      %v9480 = vpop.f32.mrb[0].mxu0
      %v9481 = vpop.f32.mrb[0].mxu0
      %v9482 = vadd.f32 0.0, %v9481
      %v9483 = vpop.f32.mrb[0].mxu0
      %9484 = vmatprep.mubr.bf16.mxu0 0
      %9485 = vmatmul.mubr.bf16.gmra.mrb[0].mxu0 %v9330
      %v9486 = vpop.f32.mrb[0].mxu0
      %v9487 = vadd.f32 0.0, %v9486
      %v9488 = vpop.f32.mrb[0].mxu0
      %v9489 = vpop.f32.mrb[0].mxu0
      %v9490 = vadd.f32 0.0, %v9489
      %v9491 = vpop.f32.mrb[0].mxu0
      %9492 = vmatprep.mubr.bf16.mxu0 0
      %9493 = vmatmul.mubr.bf16.gmra.mrb[0].mxu0 %v9331
      %v9494 = vpop.f32.mrb[0].mxu0
      %v9495 = vadd.f32 0.0, %v9494
      %v9496 = vpop.f32.mrb[0].mxu0
      %v9497 = vpop.f32.mrb[0].mxu0
      %v9498 = vadd.f32 0.0, %v9497
      %v9499 = vpop.f32.mrb[0].mxu0
      %9500 = vmatprep.mubr.bf16.mxu0 0
      %9501 = vmatmul.mubr.bf16.gmra.mrb[0].mxu0 %v9332
      %v9502 = vpop.f32.mrb[0].mxu0
      %v9503 = vadd.f32 0.0, %v9502
      %v9504 = vpop.f32.mrb[0].mxu0
      %v9505 = vpop.f32.mrb[0].mxu0
      %v9506 = vadd.f32 0.0, %v9505
      %v9507 = vpop.f32.mrb[0].mxu0
      %9508 = vmatprep.mubr.bf16.mxu0 0
      %9509 = vmatmul.mubr.bf16.gmra.mrb[0].mxu0 %v9333
      %v9510 = vpop.f32.mrb[0].mxu0
      %v9511 = vadd.f32 0.0, %v9510
      %v9512 = vpop.f32.mrb[0].mxu0
      %v9513 = vpop.f32.mrb[0].mxu0
      %v9514 = vadd.f32 0.0, %v9513
      %v9515 = vpop.f32.mrb[0].mxu0
      %9516 = vmatprep.mubr.bf16.mxu0 0
      %9517 = vmatmul.mubr.bf16.gmra.mrb[0].mxu0 %v9334
      %v9518 = vpop.f32.mrb[0].mxu0
      %v9519 = vadd.f32 0.0, %v9518
      %v9520 = vpop.f32.mrb[0].mxu0
      %v9521 = vpop.f32.mrb[0].mxu0
      %v9522 = vadd.f32 0.0, %v9521
      %v9523 = vpop.f32.mrb[0].mxu0
      %9524 = vmatprep.mubr.bf16.mxu0 0
      %9525 = vmatmul.mubr.bf16.gmra.mrb[0].mxu0 %v9335
      %v9526 = vpop.f32.mrb[0].mxu0
      %v9527 = vadd.f32 0.0, %v9526
      %v9528 = vpop.f32.mrb[0].mxu0
      %v9529 = vpop.f32.mrb[0].mxu0
      %v9530 = vadd.f32 0.0, %v9529
      %v9531 = vpop.f32.mrb[0].mxu0
      %9532 = vmatprep.mubr.bf16.mxu0 0
      %9533 = vmatmul.mubr.bf16.gmra.mrb[0].mxu0 %v9336
      %v9534 = vpop.f32.mrb[0].mxu0
      %v9535 = vadd.f32 0.0, %v9534
      %v9536 = vpop.f32.mrb[0].mxu0
      %v9537 = vpop.f32.mrb[0].mxu0
      %v9538 = vadd.f32 0.0, %v9537
      %v9539 = vpop.f32.mrb[0].mxu0
      %9540 = vmatprep.mubr.bf16.mxu0 0
      %9541 = vmatmul.mubr.bf16.gmra.mrb[0].mxu0 %v9337
      %v9542 = vpop.f32.mrb[0].mxu0
      %v9543 = vadd.f32 0.0, %v9542
      %v9544 = vpop.f32.mrb[0].mxu0
      %v9545 = vpop.f32.mrb[0].mxu0
      %v9546 = vadd.f32 0.0, %v9545
      %v9547 = vpop.f32.mrb[0].mxu0
      %9548 = vmatprep.mubr.bf16.mxu0 0
      %9549 = vmatmul.mubr.bf16.gmra.mrb[0].mxu0 %v9338
      %v9550 = vpop.f32.mrb[0].mxu0
      %v9551 = vadd.f32 0.0, %v9550
      %v9552 = vpop.f32.mrb[0].mxu0
      %v9553 = vpop.f32.mrb[0].mxu0
      %v9554 = vadd.f32 0.0, %v9553
      %v9555 = vpop.f32.mrb[0].mxu0
      %9556 = vmatprep.mubr.bf16.mxu0 0
      %9557 = vmatmul.mubr.bf16.gmra.mrb[0].mxu0 %v9339
      %v9558 = vpop.f32.mrb[0].mxu0
      %v9559 = vadd.f32 0.0, %v9558
      %v9560 = vpop.f32.mrb[0].mxu0
      %v9561 = vpop.f32.mrb[0].mxu0
      %v9562 = vadd.f32 0.0, %v9561
      %v9563 = vpop.f32.mrb[0].mxu0
      %9564 = vdwg.mxu0
      %v9565 = vadd.f32 %v9067, %v9439
      %v9566 = vadd.f32 %v9068, %v9442
      %v9567 = vadd.f32 %v9069, %v9447
      %v9568 = vadd.f32 %v9070, %v9450
      %v9569 = vadd.f32 %v9071, %v9455
      %v9570 = vadd.f32 %v9072, %v9458
      %v9571 = vadd.f32 %v9073, %v9463
      %v9572 = vadd.f32 %v9074, %v9466
      %v9573 = vadd.f32 %v9075, %v9471
      %v9574 = vadd.f32 %v9076, %v9474
      %v9575 = vadd.f32 %v9077, %v9479
      %v9576 = vadd.f32 %v9078, %v9482
      %v9577 = vadd.f32 %v9079, %v9487
      %v9578 = vadd.f32 %v9080, %v9490
      %v9579 = vadd.f32 %v9081, %v9495
      %v9580 = vadd.f32 %v9082, %v9498
      %v9581 = vadd.f32 %v9083, %v9503
      %v9582 = vadd.f32 %v9084, %v9506
      %v9583 = vadd.f32 %v9085, %v9511
      %v9584 = vadd.f32 %v9086, %v9514
      %v9585 = vadd.f32 %v9087, %v9519
      %v9586 = vadd.f32 %v9088, %v9522
      %v9587 = vadd.f32 %v9089, %v9527
      %v9588 = vadd.f32 %v9090, %v9530
      %v9589 = vadd.f32 %v9091, %v9535
      %v9590 = vadd.f32 %v9092, %v9538
      %v9591 = vadd.f32 %v9093, %v9543
      %v9592 = vadd.f32 %v9094, %v9546
      %v9593 = vadd.f32 %v9095, %v9551
      %v9594 = vadd.f32 %v9096, %v9554
      %v9595 = vadd.f32 %v9097, %v9559
      %v9596 = vadd.f32 %v9098, %v9562
      %s9597 = scalar_lea.vmem [#allocation3], 24
      %v9598 = vld [vmem:[%s9597] sm:$0xf]
      %v9599 = vld [vmem:[%s9597 + $0x4] sm:$0xf]
      %v9600 = vld [vmem:[%s9597 + $0xc] sm:$0xf]
      %v9601 = vld [vmem:[%s9597 + $0x10] sm:$0xf]
      %v9602 = vld [vmem:[%s9597 + $0x18] sm:$0xf]
      %v9603 = vld [vmem:[%s9597 + $0x1c] sm:$0xf]
      %v9604 = vld [vmem:[%s9597 + $0x24] sm:$0xf]
      %v9605 = vld [vmem:[%s9597 + $0x28] sm:$0xf]
      %v9606 = vld [vmem:[%s9597 + $0x30] sm:$0xf]
      %v9607 = vld [vmem:[%s9597 + $0x34] sm:$0xf]
      %v9608 = vld [vmem:[%s9597 + $0x3c] sm:$0xf]
      %v9609 = vld [vmem:[%s9597 + $0x40] sm:$0xf]
      %v9610 = vld [vmem:[%s9597 + $0x48] sm:$0xf]
      %v9611 = vld [vmem:[%s9597 + $0x4c] sm:$0xf]
      %v9612 = vld [vmem:[%s9597 + $0x54] sm:$0xf]
      %v9613 = vld [vmem:[%s9597 + $0x58] sm:$0xf]
      %v9614 = vld [vmem:[%s9597 + $0x60] sm:$0xf]
      %v9615 = vld [vmem:[%s9597 + $0x64] sm:$0xf]
      %v9616 = vld [vmem:[%s9597 + $0x6c] sm:$0xf]
      %v9617 = vld [vmem:[%s9597 + $0x70] sm:$0xf]
      %v9618 = vld [vmem:[%s9597 + $0x78] sm:$0xf]
      %v9619 = vld [vmem:[%s9597 + $0x7c] sm:$0xf]
      %v9620 = vld [vmem:[%s9597 + $0x84] sm:$0xf]
      %v9621 = vld [vmem:[%s9597 + $0x88] sm:$0xf]
      %v9622 = vld [vmem:[%s9597 + $0x90] sm:$0xf]
      %v9623 = vld [vmem:[%s9597 + $0x94] sm:$0xf]
      %v9624 = vld [vmem:[%s9597 + $0x9c] sm:$0xf]
      %v9625 = vld [vmem:[%s9597 + $0xa0] sm:$0xf]
      %v9626 = vld [vmem:[%s9597 + $0xa8] sm:$0xf]
      %v9627 = vld [vmem:[%s9597 + $0xac] sm:$0xf]
      %v9628 = vld [vmem:[%s9597 + $0xb4] sm:$0xf]
      %v9629 = vld [vmem:[%s9597 + $0xb8] sm:$0xf]
      %s9630 = scalar_lea.vmem %s3, 384
      %v9631 = vld [vmem:[%s9630] sm:$0xf]
      %v9632 = vld [vmem:[%s9630 + $0x4] sm:$0xf]
      %v9633 = vld [vmem:[%s9630 + $0x8] sm:$0xf]
      %v9634 = vld [vmem:[%s9630 + $0xc] sm:$0xf]
      %v9635 = vld [vmem:[%s9630 + $0x10] sm:$0xf]
      %v9636 = vld [vmem:[%s9630 + $0x14] sm:$0xf]
      %v9637 = vld [vmem:[%s9630 + $0x18] sm:$0xf]
      %v9638 = vld [vmem:[%s9630 + $0x1c] sm:$0xf]
      %v9639 = vld [vmem:[%s9630 + $0x20] sm:$0xf]
      %v9640 = vld [vmem:[%s9630 + $0x24] sm:$0xf]
      %v9641 = vld [vmem:[%s9630 + $0x28] sm:$0xf]
      %v9642 = vld [vmem:[%s9630 + $0x2c] sm:$0xf]
      %v9643 = vld [vmem:[%s9630 + $0x30] sm:$0xf]
      %v9644 = vld [vmem:[%s9630 + $0x34] sm:$0xf]
      %v9645 = vld [vmem:[%s9630 + $0x38] sm:$0xf]
      %v9646 = vld [vmem:[%s9630 + $0x3c] sm:$0xf]
      %v9679 = vunpack.c.l.b16 %v9598
      %v9680 = vunpack.c.l.b16 %v9599
      %v9681 = vunpack.c.l.b16 %v9600
      %v9682 = vunpack.c.l.b16 %v9601
      %v9683 = vunpack.c.l.b16 %v9602
      %v9684 = vunpack.c.l.b16 %v9603
      %v9685 = vunpack.c.l.b16 %v9604
      %v9686 = vunpack.c.l.b16 %v9605
      %v9687 = vunpack.c.l.b16 %v9606
      %v9688 = vunpack.c.l.b16 %v9607
      %v9689 = vunpack.c.l.b16 %v9608
      %v9690 = vunpack.c.l.b16 %v9609
      %v9691 = vunpack.c.l.b16 %v9610
      %v9692 = vunpack.c.l.b16 %v9611
      %v9693 = vunpack.c.l.b16 %v9612
      %v9694 = vunpack.c.l.b16 %v9613
      %v9695 = vunpack.c.l.b16 %v9614
      %v9696 = vunpack.c.l.b16 %v9615
      %v9697 = vunpack.c.l.b16 %v9616
      %v9698 = vunpack.c.l.b16 %v9617
      %v9699 = vunpack.c.l.b16 %v9618
      %v9700 = vunpack.c.l.b16 %v9619
      %v9701 = vunpack.c.l.b16 %v9620
      %v9702 = vunpack.c.l.b16 %v9621
      %v9703 = vunpack.c.l.b16 %v9622
      %v9704 = vunpack.c.l.b16 %v9623
      %v9705 = vunpack.c.l.b16 %v9624
      %v9706 = vunpack.c.l.b16 %v9625
      %v9707 = vunpack.c.l.b16 %v9626
      %v9708 = vunpack.c.l.b16 %v9627
      %v9709 = vunpack.c.l.b16 %v9628
      %v9710 = vunpack.c.l.b16 %v9629
      %v9711 = vpack.c.b16 %v9680, %v9679
      %v9712 = vpack.c.b16 %v9682, %v9681
      %v9713 = vpack.c.b16 %v9684, %v9683
      %v9714 = vpack.c.b16 %v9686, %v9685
      %v9715 = vpack.c.b16 %v9688, %v9687
      %v9716 = vpack.c.b16 %v9690, %v9689
      %v9717 = vpack.c.b16 %v9692, %v9691
      %v9718 = vpack.c.b16 %v9694, %v9693
      %v9719 = vpack.c.b16 %v9696, %v9695
      %v9720 = vpack.c.b16 %v9698, %v9697
      %v9721 = vpack.c.b16 %v9700, %v9699
      %v9722 = vpack.c.b16 %v9702, %v9701
      %v9723 = vpack.c.b16 %v9704, %v9703
      %v9724 = vpack.c.b16 %v9706, %v9705
      %v9725 = vpack.c.b16 %v9708, %v9707
      %v9726 = vpack.c.b16 %v9710, %v9709
      %v9759 = vunpack.c.l.b16 %v9631
      %v9760 = vunpack.c.l.b16 %v9632
      %v9761 = vunpack.c.l.b16 %v9633
      %v9762 = vunpack.c.l.b16 %v9634
      %v9763 = vunpack.c.l.b16 %v9635
      %v9764 = vunpack.c.l.b16 %v9636
      %v9765 = vunpack.c.l.b16 %v9637
      %v9766 = vunpack.c.l.b16 %v9638
      %v9767 = vunpack.c.l.b16 %v9639
      %v9768 = vunpack.c.l.b16 %v9640
      %v9769 = vunpack.c.l.b16 %v9641
      %v9770 = vunpack.c.l.b16 %v9642
      %v9771 = vunpack.c.l.b16 %v9643
      %v9772 = vunpack.c.l.b16 %v9644
      %v9773 = vunpack.c.l.b16 %v9645
      %v9774 = vunpack.c.l.b16 %v9646
      %v9775 = vpack.c.b16 %v9760, %v9759
      %v9776 = vpack.c.b16 %v9762, %v9761
      %v9777 = vpack.c.b16 %v9764, %v9763
      %v9778 = vpack.c.b16 %v9766, %v9765
      %v9779 = vpack.c.b16 %v9768, %v9767
      %v9780 = vpack.c.b16 %v9770, %v9769
      %v9781 = vpack.c.b16 %v9772, %v9771
      %v9782 = vpack.c.b16 %v9774, %v9773
      %9791 = vmatprep.subr.bf16.mxu0 0
      %9792 = vmatpush1.bf16.msra.mxu0 %v9775
      %9793 = vmatprep.subr.bf16.mxu0 0
      %9794 = vmatpush1.bf16.msra.mxu0 %v9776
      %9795 = vmatprep.subr.bf16.mxu0 0
      %9796 = vmatpush1.bf16.msra.mxu0 %v9777
      %9797 = vmatprep.subr.bf16.mxu0 0
      %9798 = vmatpush1.bf16.msra.mxu0 %v9778
      %9799 = vmatprep.subr.bf16.mxu0 0
      %9800 = vmatpush1.bf16.msra.mxu0 %v9779
      %9801 = vmatprep.subr.bf16.mxu0 0
      %9802 = vmatpush1.bf16.msra.mxu0 %v9780
      %9803 = vmatprep.subr.bf16.mxu0 0
      %9804 = vmatpush1.bf16.msra.mxu0 %v9781
      %9805 = vmatprep.subr.bf16.mxu0 0
      %9806 = vmatpush1.bf16.msra.mxu0 %v9782
      %9807 = vmatprep.subr.bf16.mxu0 0
      %9808 = vmatpush1.bf16.msra.mxu0 0
      %9809 = vmatprep.subr.bf16.mxu0 0
      %9810 = vmatpush1.bf16.msra.mxu0 0
      %9811 = vmatprep.subr.bf16.mxu0 0
      %9812 = vmatpush1.bf16.msra.mxu0 0
      %9813 = vmatprep.subr.bf16.mxu0 0
      %9814 = vmatpush1.bf16.msra.mxu0 0
      %9815 = vmatprep.subr.bf16.mxu0 0
      %9816 = vmatpush1.bf16.msra.mxu0 0
      %9817 = vmatprep.subr.bf16.mxu0 0
      %9818 = vmatpush1.bf16.msra.mxu0 0
      %9819 = vmatprep.subr.bf16.mxu0 0
      %9820 = vmatpush1.bf16.msra.mxu0 0
      %9821 = vmatprep.subr.bf16.mxu0 0
      %9822 = vmatpush1.bf16.msra.mxu0 0
      %9823 = vmatprep.mubr.bf16.mxu0 0
      %9824 = vmatmul.mubr.bf16.gmra.mrb[0].mxu0 %v9711
      %v9825 = vpop.f32.mrb[0].mxu0
      %v9826 = vadd.f32 0.0, %v9825
      %v9827 = vpop.f32.mrb[0].mxu0
      %v9828 = vpop.f32.mrb[0].mxu0
      %v9829 = vadd.f32 0.0, %v9828
      %v9830 = vpop.f32.mrb[0].mxu0
      %9831 = vmatprep.mubr.bf16.mxu0 0
      %9832 = vmatmul.mubr.bf16.gmra.mrb[0].mxu0 %v9712
      %v9833 = vpop.f32.mrb[0].mxu0
      %v9834 = vadd.f32 0.0, %v9833
      %v9835 = vpop.f32.mrb[0].mxu0
      %v9836 = vpop.f32.mrb[0].mxu0
      %v9837 = vadd.f32 0.0, %v9836
      %v9838 = vpop.f32.mrb[0].mxu0
      %9839 = vmatprep.mubr.bf16.mxu0 0
      %9840 = vmatmul.mubr.bf16.gmra.mrb[0].mxu0 %v9713
      %v9841 = vpop.f32.mrb[0].mxu0
      %v9842 = vadd.f32 0.0, %v9841
      %v9843 = vpop.f32.mrb[0].mxu0
      %v9844 = vpop.f32.mrb[0].mxu0
      %v9845 = vadd.f32 0.0, %v9844
      %v9846 = vpop.f32.mrb[0].mxu0
      %9847 = vmatprep.mubr.bf16.mxu0 0
      %9848 = vmatmul.mubr.bf16.gmra.mrb[0].mxu0 %v9714
      %v9849 = vpop.f32.mrb[0].mxu0
      %v9850 = vadd.f32 0.0, %v9849
      %v9851 = vpop.f32.mrb[0].mxu0
      %v9852 = vpop.f32.mrb[0].mxu0
      %v9853 = vadd.f32 0.0, %v9852
      %v9854 = vpop.f32.mrb[0].mxu0
      %9855 = vmatprep.mubr.bf16.mxu0 0
      %9856 = vmatmul.mubr.bf16.gmra.mrb[0].mxu0 %v9715
      %v9857 = vpop.f32.mrb[0].mxu0
      %v9858 = vadd.f32 0.0, %v9857
      %v9859 = vpop.f32.mrb[0].mxu0
      %v9860 = vpop.f32.mrb[0].mxu0
      %v9861 = vadd.f32 0.0, %v9860
      %v9862 = vpop.f32.mrb[0].mxu0
      %9863 = vmatprep.mubr.bf16.mxu0 0
      %9864 = vmatmul.mubr.bf16.gmra.mrb[0].mxu0 %v9716
      %v9865 = vpop.f32.mrb[0].mxu0
      %v9866 = vadd.f32 0.0, %v9865
      %v9867 = vpop.f32.mrb[0].mxu0
      %v9868 = vpop.f32.mrb[0].mxu0
      %v9869 = vadd.f32 0.0, %v9868
      %v9870 = vpop.f32.mrb[0].mxu0
      %9871 = vmatprep.mubr.bf16.mxu0 0
      %9872 = vmatmul.mubr.bf16.gmra.mrb[0].mxu0 %v9717
      %v9873 = vpop.f32.mrb[0].mxu0
      %v9874 = vadd.f32 0.0, %v9873
      %v9875 = vpop.f32.mrb[0].mxu0
      %v9876 = vpop.f32.mrb[0].mxu0
      %v9877 = vadd.f32 0.0, %v9876
      %v9878 = vpop.f32.mrb[0].mxu0
      %9879 = vmatprep.mubr.bf16.mxu0 0
      %9880 = vmatmul.mubr.bf16.gmra.mrb[0].mxu0 %v9718
      %v9881 = vpop.f32.mrb[0].mxu0
      %v9882 = vadd.f32 0.0, %v9881
      %v9883 = vpop.f32.mrb[0].mxu0
      %v9884 = vpop.f32.mrb[0].mxu0
      %v9885 = vadd.f32 0.0, %v9884
      %v9886 = vpop.f32.mrb[0].mxu0
      %9887 = vmatprep.mubr.bf16.mxu0 0
      %9888 = vmatmul.mubr.bf16.gmra.mrb[0].mxu0 %v9719
      %v9889 = vpop.f32.mrb[0].mxu0
      %v9890 = vadd.f32 0.0, %v9889
      %v9891 = vpop.f32.mrb[0].mxu0
      %v9892 = vpop.f32.mrb[0].mxu0
      %v9893 = vadd.f32 0.0, %v9892
      %v9894 = vpop.f32.mrb[0].mxu0
      %9895 = vmatprep.mubr.bf16.mxu0 0
      %9896 = vmatmul.mubr.bf16.gmra.mrb[0].mxu0 %v9720
      %v9897 = vpop.f32.mrb[0].mxu0
      %v9898 = vadd.f32 0.0, %v9897
      %v9899 = vpop.f32.mrb[0].mxu0
      %v9900 = vpop.f32.mrb[0].mxu0
      %v9901 = vadd.f32 0.0, %v9900
      %v9902 = vpop.f32.mrb[0].mxu0
      %9903 = vmatprep.mubr.bf16.mxu0 0
      %9904 = vmatmul.mubr.bf16.gmra.mrb[0].mxu0 %v9721
      %v9905 = vpop.f32.mrb[0].mxu0
      %v9906 = vadd.f32 0.0, %v9905
      %v9907 = vpop.f32.mrb[0].mxu0
      %v9908 = vpop.f32.mrb[0].mxu0
      %v9909 = vadd.f32 0.0, %v9908
      %v9910 = vpop.f32.mrb[0].mxu0
      %9911 = vmatprep.mubr.bf16.mxu0 0
      %9912 = vmatmul.mubr.bf16.gmra.mrb[0].mxu0 %v9722
      %v9913 = vpop.f32.mrb[0].mxu0
      %v9914 = vadd.f32 0.0, %v9913
      %v9915 = vpop.f32.mrb[0].mxu0
      %v9916 = vpop.f32.mrb[0].mxu0
      %v9917 = vadd.f32 0.0, %v9916
      %v9918 = vpop.f32.mrb[0].mxu0
      %9919 = vmatprep.mubr.bf16.mxu0 0
      %9920 = vmatmul.mubr.bf16.gmra.mrb[0].mxu0 %v9723
      %v9921 = vpop.f32.mrb[0].mxu0
      %v9922 = vadd.f32 0.0, %v9921
      %v9923 = vpop.f32.mrb[0].mxu0
      %v9924 = vpop.f32.mrb[0].mxu0
      %v9925 = vadd.f32 0.0, %v9924
      %v9926 = vpop.f32.mrb[0].mxu0
      %9927 = vmatprep.mubr.bf16.mxu0 0
      %9928 = vmatmul.mubr.bf16.gmra.mrb[0].mxu0 %v9724
      %v9929 = vpop.f32.mrb[0].mxu0
      %v9930 = vadd.f32 0.0, %v9929
      %v9931 = vpop.f32.mrb[0].mxu0
      %v9932 = vpop.f32.mrb[0].mxu0
      %v9933 = vadd.f32 0.0, %v9932
      %v9934 = vpop.f32.mrb[0].mxu0
      %9935 = vmatprep.mubr.bf16.mxu0 0
      %9936 = vmatmul.mubr.bf16.gmra.mrb[0].mxu0 %v9725
      %v9937 = vpop.f32.mrb[0].mxu0
      %v9938 = vadd.f32 0.0, %v9937
      %v9939 = vpop.f32.mrb[0].mxu0
      %v9940 = vpop.f32.mrb[0].mxu0
      %v9941 = vadd.f32 0.0, %v9940
      %v9942 = vpop.f32.mrb[0].mxu0
      %9943 = vmatprep.mubr.bf16.mxu0 0
      %9944 = vmatmul.mubr.bf16.gmra.mrb[0].mxu0 %v9726
      %v9945 = vpop.f32.mrb[0].mxu0
      %v9946 = vadd.f32 0.0, %v9945
      %v9947 = vpop.f32.mrb[0].mxu0
      %v9948 = vpop.f32.mrb[0].mxu0
      %v9949 = vadd.f32 0.0, %v9948
      %v9950 = vpop.f32.mrb[0].mxu0
      %9951 = vdwg.mxu0
      %v9952 = vadd.f32 %v9565, %v9826
      %v9953 = vadd.f32 %v9566, %v9829
      %v9954 = vadd.f32 %v9567, %v9834
      %v9955 = vadd.f32 %v9568, %v9837
      %v9956 = vadd.f32 %v9569, %v9842
      %v9957 = vadd.f32 %v9570, %v9845
      %v9958 = vadd.f32 %v9571, %v9850
      %v9959 = vadd.f32 %v9572, %v9853
      %v9960 = vadd.f32 %v9573, %v9858
      %v9961 = vadd.f32 %v9574, %v9861
      %v9962 = vadd.f32 %v9575, %v9866
      %v9963 = vadd.f32 %v9576, %v9869
      %v9964 = vadd.f32 %v9577, %v9874
      %v9965 = vadd.f32 %v9578, %v9877
      %v9966 = vadd.f32 %v9579, %v9882
      %v9967 = vadd.f32 %v9580, %v9885
      %v9968 = vadd.f32 %v9581, %v9890
      %v9969 = vadd.f32 %v9582, %v9893
      %v9970 = vadd.f32 %v9583, %v9898
      %v9971 = vadd.f32 %v9584, %v9901
      %v9972 = vadd.f32 %v9585, %v9906
      %v9973 = vadd.f32 %v9586, %v9909
      %v9974 = vadd.f32 %v9587, %v9914
      %v9975 = vadd.f32 %v9588, %v9917
      %v9976 = vadd.f32 %v9589, %v9922
      %v9977 = vadd.f32 %v9590, %v9925
      %v9978 = vadd.f32 %v9591, %v9930
      %v9979 = vadd.f32 %v9592, %v9933
      %v9980 = vadd.f32 %v9593, %v9938
      %v9981 = vadd.f32 %v9594, %v9941
      %v9982 = vadd.f32 %v9595, %v9946
      %v9983 = vadd.f32 %v9596, %v9949
      %v9984 = vld [vmem:[%s9597] sm:$0xf]
      %v9985 = vld [vmem:[%s9597 + $0x4] sm:$0xf]
      %v9986 = vld [vmem:[%s9597 + $0x8] sm:$0x1]
      %v9987 = vld [vmem:[%s9597 + $0xc] sm:$0xf]
      %v9988 = vld [vmem:[%s9597 + $0x10] sm:$0xf]
      %v9989 = vld [vmem:[%s9597 + $0x14] sm:$0x1]
      %v9990 = vld [vmem:[%s9597 + $0x18] sm:$0xf]
      %v9991 = vld [vmem:[%s9597 + $0x1c] sm:$0xf]
      %v9992 = vld [vmem:[%s9597 + $0x20] sm:$0x1]
      %v9993 = vld [vmem:[%s9597 + $0x24] sm:$0xf]
      %v9994 = vld [vmem:[%s9597 + $0x28] sm:$0xf]
      %v9995 = vld [vmem:[%s9597 + $0x2c] sm:$0x1]
      %v9996 = vld [vmem:[%s9597 + $0x30] sm:$0xf]
      %v9997 = vld [vmem:[%s9597 + $0x34] sm:$0xf]
      %v9998 = vld [vmem:[%s9597 + $0x38] sm:$0x1]
      %v9999 = vld [vmem:[%s9597 + $0x3c] sm:$0xf]
      %v10000 = vld [vmem:[%s9597 + $0x40] sm:$0xf]
      %v10001 = vld [vmem:[%s9597 + $0x44] sm:$0x1]
      %v10002 = vld [vmem:[%s9597 + $0x48] sm:$0xf]
      %v10003 = vld [vmem:[%s9597 + $0x4c] sm:$0xf]
      %v10004 = vld [vmem:[%s9597 + $0x50] sm:$0x1]
      %v10005 = vld [vmem:[%s9597 + $0x54] sm:$0xf]
      %v10006 = vld [vmem:[%s9597 + $0x58] sm:$0xf]
      %v10007 = vld [vmem:[%s9597 + $0x5c] sm:$0x1]
      %v10008 = vld [vmem:[%s9597 + $0x60] sm:$0xf]
      %v10009 = vld [vmem:[%s9597 + $0x64] sm:$0xf]
      %v10010 = vld [vmem:[%s9597 + $0x68] sm:$0x1]
      %v10011 = vld [vmem:[%s9597 + $0x6c] sm:$0xf]
      %v10012 = vld [vmem:[%s9597 + $0x70] sm:$0xf]
      %v10013 = vld [vmem:[%s9597 + $0x74] sm:$0x1]
      %v10014 = vld [vmem:[%s9597 + $0x78] sm:$0xf]
      %v10015 = vld [vmem:[%s9597 + $0x7c] sm:$0xf]
      %v10016 = vld [vmem:[%s9597 + $0x80] sm:$0x1]
      %v10017 = vld [vmem:[%s9597 + $0x84] sm:$0xf]
      %v10018 = vld [vmem:[%s9597 + $0x88] sm:$0xf]
      %v10019 = vld [vmem:[%s9597 + $0x8c] sm:$0x1]
      %v10020 = vld [vmem:[%s9597 + $0x90] sm:$0xf]
      %v10021 = vld [vmem:[%s9597 + $0x94] sm:$0xf]
      %v10022 = vld [vmem:[%s9597 + $0x98] sm:$0x1]
      %v10023 = vld [vmem:[%s9597 + $0x9c] sm:$0xf]
      %v10024 = vld [vmem:[%s9597 + $0xa0] sm:$0xf]
      %v10025 = vld [vmem:[%s9597 + $0xa4] sm:$0x1]
      %v10026 = vld [vmem:[%s9597 + $0xa8] sm:$0xf]
      %v10027 = vld [vmem:[%s9597 + $0xac] sm:$0xf]
      %v10028 = vld [vmem:[%s9597 + $0xb0] sm:$0x1]
      %v10029 = vld [vmem:[%s9597 + $0xb4] sm:$0xf]
      %v10030 = vld [vmem:[%s9597 + $0xb8] sm:$0xf]
      %v10031 = vld [vmem:[%s9597 + $0xbc] sm:$0x1]
      %v10033 = vshrl.u32 %v9984, 16
      %v10035 = vrot.slane %v10033, 4
      %v10036 = vshll.u32 %v9984, 16
      %v10038 = vrot.slane %v10036, 5
      %v10039 = vor.u32 %v10035, %v10038
      %v10040 = vrot.slane %v10039, 4
      %v10042 = vshll.u32 %v9985, 16
      %v10044 = vrot.slane %v10042, 5
      %v10045 = vsel %vm977, %v10040, %v10044
      %v10046 = vshrl.u32 %v9985, 16
      %v10048 = vrot.slane %v10046, 4
      %v10049 = vor.u32 %v10048, %v10044
      %v10050 = vrot.slane %v10049, 4
      %v10052 = vshll.u32 %v9986, 16
      %v10054 = vrot.slane %v10052, 5
      %v10055 = vsel %vm977, %v10050, %v10054
      %v10057 = vshrl.u32 %v9987, 16
      %v10059 = vrot.slane %v10057, 4
      %v10060 = vshll.u32 %v9987, 16
      %v10062 = vrot.slane %v10060, 5
      %v10063 = vor.u32 %v10059, %v10062
      %v10064 = vrot.slane %v10063, 4
      %v10066 = vshll.u32 %v9988, 16
      %v10068 = vrot.slane %v10066, 5
      %v10069 = vsel %vm977, %v10064, %v10068
      %v10070 = vshrl.u32 %v9988, 16
      %v10072 = vrot.slane %v10070, 4
      %v10073 = vor.u32 %v10072, %v10068
      %v10074 = vrot.slane %v10073, 4
      %v10076 = vshll.u32 %v9989, 16
      %v10078 = vrot.slane %v10076, 5
      %v10079 = vsel %vm977, %v10074, %v10078
      %v10081 = vshrl.u32 %v9990, 16
      %v10083 = vrot.slane %v10081, 4
      %v10084 = vshll.u32 %v9990, 16
      %v10086 = vrot.slane %v10084, 5
      %v10087 = vor.u32 %v10083, %v10086
      %v10088 = vrot.slane %v10087, 4
      %v10090 = vshll.u32 %v9991, 16
      %v10092 = vrot.slane %v10090, 5
      %v10093 = vsel %vm977, %v10088, %v10092
      %v10094 = vshrl.u32 %v9991, 16
      %v10096 = vrot.slane %v10094, 4
      %v10097 = vor.u32 %v10096, %v10092
      %v10098 = vrot.slane %v10097, 4
      %v10100 = vshll.u32 %v9992, 16
      %v10102 = vrot.slane %v10100, 5
      %v10103 = vsel %vm977, %v10098, %v10102
      %v10105 = vshrl.u32 %v9993, 16
      %v10107 = vrot.slane %v10105, 4
      %v10108 = vshll.u32 %v9993, 16
      %v10110 = vrot.slane %v10108, 5
      %v10111 = vor.u32 %v10107, %v10110
      %v10112 = vrot.slane %v10111, 4
      %v10114 = vshll.u32 %v9994, 16
      %v10116 = vrot.slane %v10114, 5
      %v10117 = vsel %vm977, %v10112, %v10116
      %v10118 = vshrl.u32 %v9994, 16
      %v10120 = vrot.slane %v10118, 4
      %v10121 = vor.u32 %v10120, %v10116
      %v10122 = vrot.slane %v10121, 4
      %v10124 = vshll.u32 %v9995, 16
      %v10126 = vrot.slane %v10124, 5
      %v10127 = vsel %vm977, %v10122, %v10126
      %v10129 = vshrl.u32 %v9996, 16
      %v10131 = vrot.slane %v10129, 4
      %v10132 = vshll.u32 %v9996, 16
      %v10134 = vrot.slane %v10132, 5
      %v10135 = vor.u32 %v10131, %v10134
      %v10136 = vrot.slane %v10135, 4
      %v10138 = vshll.u32 %v9997, 16
      %v10140 = vrot.slane %v10138, 5
      %v10141 = vsel %vm977, %v10136, %v10140
      %v10142 = vshrl.u32 %v9997, 16
      %v10144 = vrot.slane %v10142, 4
      %v10145 = vor.u32 %v10144, %v10140
      %v10146 = vrot.slane %v10145, 4
      %v10148 = vshll.u32 %v9998, 16
      %v10150 = vrot.slane %v10148, 5
      %v10151 = vsel %vm977, %v10146, %v10150
      %v10153 = vshrl.u32 %v9999, 16
      %v10155 = vrot.slane %v10153, 4
      %v10156 = vshll.u32 %v9999, 16
      %v10158 = vrot.slane %v10156, 5
      %v10159 = vor.u32 %v10155, %v10158
      %v10160 = vrot.slane %v10159, 4
      %v10162 = vshll.u32 %v10000, 16
      %v10164 = vrot.slane %v10162, 5
      %v10165 = vsel %vm977, %v10160, %v10164
      %v10166 = vshrl.u32 %v10000, 16
      %v10168 = vrot.slane %v10166, 4
      %v10169 = vor.u32 %v10168, %v10164
      %v10170 = vrot.slane %v10169, 4
      %v10172 = vshll.u32 %v10001, 16
      %v10174 = vrot.slane %v10172, 5
      %v10175 = vsel %vm977, %v10170, %v10174
      %v10177 = vshrl.u32 %v10002, 16
      %v10179 = vrot.slane %v10177, 4
      %v10180 = vshll.u32 %v10002, 16
      %v10182 = vrot.slane %v10180, 5
      %v10183 = vor.u32 %v10179, %v10182
      %v10184 = vrot.slane %v10183, 4
      %v10186 = vshll.u32 %v10003, 16
      %v10188 = vrot.slane %v10186, 5
      %v10189 = vsel %vm977, %v10184, %v10188
      %v10190 = vshrl.u32 %v10003, 16
      %v10192 = vrot.slane %v10190, 4
      %v10193 = vor.u32 %v10192, %v10188
      %v10194 = vrot.slane %v10193, 4
      %v10196 = vshll.u32 %v10004, 16
      %v10198 = vrot.slane %v10196, 5
      %v10199 = vsel %vm977, %v10194, %v10198
      %v10201 = vshrl.u32 %v10005, 16
      %v10203 = vrot.slane %v10201, 4
      %v10204 = vshll.u32 %v10005, 16
      %v10206 = vrot.slane %v10204, 5
      %v10207 = vor.u32 %v10203, %v10206
      %v10208 = vrot.slane %v10207, 4
      %v10210 = vshll.u32 %v10006, 16
      %v10212 = vrot.slane %v10210, 5
      %v10213 = vsel %vm977, %v10208, %v10212
      %v10214 = vshrl.u32 %v10006, 16
      %v10216 = vrot.slane %v10214, 4
      %v10217 = vor.u32 %v10216, %v10212
      %v10218 = vrot.slane %v10217, 4
      %v10220 = vshll.u32 %v10007, 16
      %v10222 = vrot.slane %v10220, 5
      %v10223 = vsel %vm977, %v10218, %v10222
      %v10225 = vshrl.u32 %v10008, 16
      %v10227 = vrot.slane %v10225, 4
      %v10228 = vshll.u32 %v10008, 16
      %v10230 = vrot.slane %v10228, 5
      %v10231 = vor.u32 %v10227, %v10230
      %v10232 = vrot.slane %v10231, 4
      %v10234 = vshll.u32 %v10009, 16
      %v10236 = vrot.slane %v10234, 5
      %v10237 = vsel %vm977, %v10232, %v10236
      %v10238 = vshrl.u32 %v10009, 16
      %v10240 = vrot.slane %v10238, 4
      %v10241 = vor.u32 %v10240, %v10236
      %v10242 = vrot.slane %v10241, 4
      %v10244 = vshll.u32 %v10010, 16
      %v10246 = vrot.slane %v10244, 5
      %v10247 = vsel %vm977, %v10242, %v10246
      %v10249 = vshrl.u32 %v10011, 16
      %v10251 = vrot.slane %v10249, 4
      %v10252 = vshll.u32 %v10011, 16
      %v10254 = vrot.slane %v10252, 5
      %v10255 = vor.u32 %v10251, %v10254
      %v10256 = vrot.slane %v10255, 4
      %v10258 = vshll.u32 %v10012, 16
      %v10260 = vrot.slane %v10258, 5
      %v10261 = vsel %vm977, %v10256, %v10260
      %v10262 = vshrl.u32 %v10012, 16
      %v10264 = vrot.slane %v10262, 4
      %v10265 = vor.u32 %v10264, %v10260
      %v10266 = vrot.slane %v10265, 4
      %v10268 = vshll.u32 %v10013, 16
      %v10270 = vrot.slane %v10268, 5
      %v10271 = vsel %vm977, %v10266, %v10270
      %v10273 = vshrl.u32 %v10014, 16
      %v10275 = vrot.slane %v10273, 4
      %v10276 = vshll.u32 %v10014, 16
      %v10278 = vrot.slane %v10276, 5
      %v10279 = vor.u32 %v10275, %v10278
      %v10280 = vrot.slane %v10279, 4
      %v10282 = vshll.u32 %v10015, 16
      %v10284 = vrot.slane %v10282, 5
      %v10285 = vsel %vm977, %v10280, %v10284
      %v10286 = vshrl.u32 %v10015, 16
      %v10288 = vrot.slane %v10286, 4
      %v10289 = vor.u32 %v10288, %v10284
      %v10290 = vrot.slane %v10289, 4
      %v10292 = vshll.u32 %v10016, 16
      %v10294 = vrot.slane %v10292, 5
      %v10295 = vsel %vm977, %v10290, %v10294
      %v10297 = vshrl.u32 %v10017, 16
      %v10299 = vrot.slane %v10297, 4
      %v10300 = vshll.u32 %v10017, 16
      %v10302 = vrot.slane %v10300, 5
      %v10303 = vor.u32 %v10299, %v10302
      %v10304 = vrot.slane %v10303, 4
      %v10306 = vshll.u32 %v10018, 16
      %v10308 = vrot.slane %v10306, 5
      %v10309 = vsel %vm977, %v10304, %v10308
      %v10310 = vshrl.u32 %v10018, 16
      %v10312 = vrot.slane %v10310, 4
      %v10313 = vor.u32 %v10312, %v10308
      %v10314 = vrot.slane %v10313, 4
      %v10316 = vshll.u32 %v10019, 16
      %v10318 = vrot.slane %v10316, 5
      %v10319 = vsel %vm977, %v10314, %v10318
      %v10321 = vshrl.u32 %v10020, 16
      %v10323 = vrot.slane %v10321, 4
      %v10324 = vshll.u32 %v10020, 16
      %v10326 = vrot.slane %v10324, 5
      %v10327 = vor.u32 %v10323, %v10326
      %v10328 = vrot.slane %v10327, 4
      %v10330 = vshll.u32 %v10021, 16
      %v10332 = vrot.slane %v10330, 5
      %v10333 = vsel %vm977, %v10328, %v10332
      %v10334 = vshrl.u32 %v10021, 16
      %v10336 = vrot.slane %v10334, 4
      %v10337 = vor.u32 %v10336, %v10332
      %v10338 = vrot.slane %v10337, 4
      %v10340 = vshll.u32 %v10022, 16
      %v10342 = vrot.slane %v10340, 5
      %v10343 = vsel %vm977, %v10338, %v10342
      %v10345 = vshrl.u32 %v10023, 16
      %v10347 = vrot.slane %v10345, 4
      %v10348 = vshll.u32 %v10023, 16
      %v10350 = vrot.slane %v10348, 5
      %v10351 = vor.u32 %v10347, %v10350
      %v10352 = vrot.slane %v10351, 4
      %v10354 = vshll.u32 %v10024, 16
      %v10356 = vrot.slane %v10354, 5
      %v10357 = vsel %vm977, %v10352, %v10356
      %v10358 = vshrl.u32 %v10024, 16
      %v10360 = vrot.slane %v10358, 4
      %v10361 = vor.u32 %v10360, %v10356
      %v10362 = vrot.slane %v10361, 4
      %v10364 = vshll.u32 %v10025, 16
      %v10366 = vrot.slane %v10364, 5
      %v10367 = vsel %vm977, %v10362, %v10366
      %v10369 = vshrl.u32 %v10026, 16
      %v10371 = vrot.slane %v10369, 4
      %v10372 = vshll.u32 %v10026, 16
      %v10374 = vrot.slane %v10372, 5
      %v10375 = vor.u32 %v10371, %v10374
      %v10376 = vrot.slane %v10375, 4
      %v10378 = vshll.u32 %v10027, 16
      %v10380 = vrot.slane %v10378, 5
      %v10381 = vsel %vm977, %v10376, %v10380
      %v10382 = vshrl.u32 %v10027, 16
      %v10384 = vrot.slane %v10382, 4
      %v10385 = vor.u32 %v10384, %v10380
      %v10386 = vrot.slane %v10385, 4
      %v10388 = vshll.u32 %v10028, 16
      %v10390 = vrot.slane %v10388, 5
      %v10391 = vsel %vm977, %v10386, %v10390
      %v10393 = vshrl.u32 %v10029, 16
      %v10395 = vrot.slane %v10393, 4
      %v10396 = vshll.u32 %v10029, 16
      %v10398 = vrot.slane %v10396, 5
      %v10399 = vor.u32 %v10395, %v10398
      %v10400 = vrot.slane %v10399, 4
      %v10402 = vshll.u32 %v10030, 16
      %v10404 = vrot.slane %v10402, 5
      %v10405 = vsel %vm977, %v10400, %v10404
      %v10406 = vshrl.u32 %v10030, 16
      %v10408 = vrot.slane %v10406, 4
      %v10409 = vor.u32 %v10408, %v10404
      %v10410 = vrot.slane %v10409, 4
      %v10412 = vshll.u32 %v10031, 16
      %v10414 = vrot.slane %v10412, 5
      %v10415 = vsel %vm977, %v10410, %v10414
      %s10416 = scalar_lea.vmem %s3, 448
      %v10417 = vld [vmem:[%s10416] sm:$0xf]
      %v10418 = vld [vmem:[%s10416 + $0x4] sm:$0xf]
      %v10419 = vld [vmem:[%s10416 + $0x8] sm:$0xf]
      %v10420 = vld [vmem:[%s10416 + $0xc] sm:$0xf]
      %v10421 = vld [vmem:[%s10416 + $0x10] sm:$0xf]
      %v10422 = vld [vmem:[%s10416 + $0x14] sm:$0xf]
      %v10423 = vld [vmem:[%s10416 + $0x18] sm:$0xf]
      %v10424 = vld [vmem:[%s10416 + $0x1c] sm:$0xf]
      %v10425 = vld [vmem:[%s10416 + $0x20] sm:$0xf]
      %v10426 = vld [vmem:[%s10416 + $0x24] sm:$0xf]
      %v10427 = vld [vmem:[%s10416 + $0x28] sm:$0xf]
      %v10428 = vld [vmem:[%s10416 + $0x2c] sm:$0xf]
      %v10429 = vld [vmem:[%s10416 + $0x30] sm:$0xf]
      %v10430 = vld [vmem:[%s10416 + $0x34] sm:$0xf]
      %v10431 = vld [vmem:[%s10416 + $0x38] sm:$0xf]
      %v10432 = vld [vmem:[%s10416 + $0x3c] sm:$0xf]
      %v10433 = vunpack.c.l.b16 %v10045
      %v10434 = vunpack.c.l.b16 %v10055
      %v10435 = vunpack.c.l.b16 %v10069
      %v10436 = vunpack.c.l.b16 %v10079
      %v10437 = vunpack.c.l.b16 %v10093
      %v10438 = vunpack.c.l.b16 %v10103
      %v10439 = vunpack.c.l.b16 %v10117
      %v10440 = vunpack.c.l.b16 %v10127
      %v10441 = vunpack.c.l.b16 %v10141
      %v10442 = vunpack.c.l.b16 %v10151
      %v10443 = vunpack.c.l.b16 %v10165
      %v10444 = vunpack.c.l.b16 %v10175
      %v10445 = vunpack.c.l.b16 %v10189
      %v10446 = vunpack.c.l.b16 %v10199
      %v10447 = vunpack.c.l.b16 %v10213
      %v10448 = vunpack.c.l.b16 %v10223
      %v10449 = vunpack.c.l.b16 %v10237
      %v10450 = vunpack.c.l.b16 %v10247
      %v10451 = vunpack.c.l.b16 %v10261
      %v10452 = vunpack.c.l.b16 %v10271
      %v10453 = vunpack.c.l.b16 %v10285
      %v10454 = vunpack.c.l.b16 %v10295
      %v10455 = vunpack.c.l.b16 %v10309
      %v10456 = vunpack.c.l.b16 %v10319
      %v10457 = vunpack.c.l.b16 %v10333
      %v10458 = vunpack.c.l.b16 %v10343
      %v10459 = vunpack.c.l.b16 %v10357
      %v10460 = vunpack.c.l.b16 %v10367
      %v10461 = vunpack.c.l.b16 %v10381
      %v10462 = vunpack.c.l.b16 %v10391
      %v10463 = vunpack.c.l.b16 %v10405
      %v10464 = vunpack.c.l.b16 %v10415
      %v10465 = vpack.c.b16 %v10434, %v10433
      %v10466 = vpack.c.b16 %v10436, %v10435
      %v10467 = vpack.c.b16 %v10438, %v10437
      %v10468 = vpack.c.b16 %v10440, %v10439
      %v10469 = vpack.c.b16 %v10442, %v10441
      %v10470 = vpack.c.b16 %v10444, %v10443
      %v10471 = vpack.c.b16 %v10446, %v10445
      %v10472 = vpack.c.b16 %v10448, %v10447
      %v10473 = vpack.c.b16 %v10450, %v10449
      %v10474 = vpack.c.b16 %v10452, %v10451
      %v10475 = vpack.c.b16 %v10454, %v10453
      %v10476 = vpack.c.b16 %v10456, %v10455
      %v10477 = vpack.c.b16 %v10458, %v10457
      %v10478 = vpack.c.b16 %v10460, %v10459
      %v10479 = vpack.c.b16 %v10462, %v10461
      %v10480 = vpack.c.b16 %v10464, %v10463
      %v10513 = vunpack.c.l.b16 %v10417
      %v10514 = vunpack.c.l.b16 %v10418
      %v10515 = vunpack.c.l.b16 %v10419
      %v10516 = vunpack.c.l.b16 %v10420
      %v10517 = vunpack.c.l.b16 %v10421
      %v10518 = vunpack.c.l.b16 %v10422
      %v10519 = vunpack.c.l.b16 %v10423
      %v10520 = vunpack.c.l.b16 %v10424
      %v10521 = vunpack.c.l.b16 %v10425
      %v10522 = vunpack.c.l.b16 %v10426
      %v10523 = vunpack.c.l.b16 %v10427
      %v10524 = vunpack.c.l.b16 %v10428
      %v10525 = vunpack.c.l.b16 %v10429
      %v10526 = vunpack.c.l.b16 %v10430
      %v10527 = vunpack.c.l.b16 %v10431
      %v10528 = vunpack.c.l.b16 %v10432
      %v10529 = vpack.c.b16 %v10514, %v10513
      %v10530 = vpack.c.b16 %v10516, %v10515
      %v10531 = vpack.c.b16 %v10518, %v10517
      %v10532 = vpack.c.b16 %v10520, %v10519
      %v10533 = vpack.c.b16 %v10522, %v10521
      %v10534 = vpack.c.b16 %v10524, %v10523
      %v10535 = vpack.c.b16 %v10526, %v10525
      %v10536 = vpack.c.b16 %v10528, %v10527
      %10545 = vmatprep.subr.bf16.mxu0 0
      %10546 = vmatpush1.bf16.msra.mxu0 %v10529
      %10547 = vmatprep.subr.bf16.mxu0 0
      %10548 = vmatpush1.bf16.msra.mxu0 %v10530
      %10549 = vmatprep.subr.bf16.mxu0 0
      %10550 = vmatpush1.bf16.msra.mxu0 %v10531
      %10551 = vmatprep.subr.bf16.mxu0 0
      %10552 = vmatpush1.bf16.msra.mxu0 %v10532
      %10553 = vmatprep.subr.bf16.mxu0 0
      %10554 = vmatpush1.bf16.msra.mxu0 %v10533
      %10555 = vmatprep.subr.bf16.mxu0 0
      %10556 = vmatpush1.bf16.msra.mxu0 %v10534
      %10557 = vmatprep.subr.bf16.mxu0 0
      %10558 = vmatpush1.bf16.msra.mxu0 %v10535
      %10559 = vmatprep.subr.bf16.mxu0 0
      %10560 = vmatpush1.bf16.msra.mxu0 %v10536
      %10561 = vmatprep.subr.bf16.mxu0 0
      %10562 = vmatpush1.bf16.msra.mxu0 0
      %10563 = vmatprep.subr.bf16.mxu0 0
      %10564 = vmatpush1.bf16.msra.mxu0 0
      %10565 = vmatprep.subr.bf16.mxu0 0
      %10566 = vmatpush1.bf16.msra.mxu0 0
      %10567 = vmatprep.subr.bf16.mxu0 0
      %10568 = vmatpush1.bf16.msra.mxu0 0
      %10569 = vmatprep.subr.bf16.mxu0 0
      %10570 = vmatpush1.bf16.msra.mxu0 0
      %10571 = vmatprep.subr.bf16.mxu0 0
      %10572 = vmatpush1.bf16.msra.mxu0 0
      %10573 = vmatprep.subr.bf16.mxu0 0
      %10574 = vmatpush1.bf16.msra.mxu0 0
      %10575 = vmatprep.subr.bf16.mxu0 0
      %10576 = vmatpush1.bf16.msra.mxu0 0
      %10577 = vmatprep.mubr.bf16.mxu0 0
      %10578 = vmatmul.mubr.bf16.gmra.mrb[0].mxu0 %v10465
      %v10579 = vpop.f32.mrb[0].mxu0
      %v10580 = vadd.f32 0.0, %v10579
      %v10581 = vpop.f32.mrb[0].mxu0
      %v10582 = vpop.f32.mrb[0].mxu0
      %v10583 = vadd.f32 0.0, %v10582
      %v10584 = vpop.f32.mrb[0].mxu0
      %10585 = vmatprep.mubr.bf16.mxu0 0
      %10586 = vmatmul.mubr.bf16.gmra.mrb[0].mxu0 %v10466
      %v10587 = vpop.f32.mrb[0].mxu0
      %v10588 = vadd.f32 0.0, %v10587
      %v10589 = vpop.f32.mrb[0].mxu0
      %v10590 = vpop.f32.mrb[0].mxu0
      %v10591 = vadd.f32 0.0, %v10590
      %v10592 = vpop.f32.mrb[0].mxu0
      %10593 = vmatprep.mubr.bf16.mxu0 0
      %10594 = vmatmul.mubr.bf16.gmra.mrb[0].mxu0 %v10467
      %v10595 = vpop.f32.mrb[0].mxu0
      %v10596 = vadd.f32 0.0, %v10595
      %v10597 = vpop.f32.mrb[0].mxu0
      %v10598 = vpop.f32.mrb[0].mxu0
      %v10599 = vadd.f32 0.0, %v10598
      %v10600 = vpop.f32.mrb[0].mxu0
      %10601 = vmatprep.mubr.bf16.mxu0 0
      %10602 = vmatmul.mubr.bf16.gmra.mrb[0].mxu0 %v10468
      %v10603 = vpop.f32.mrb[0].mxu0
      %v10604 = vadd.f32 0.0, %v10603
      %v10605 = vpop.f32.mrb[0].mxu0
      %v10606 = vpop.f32.mrb[0].mxu0
      %v10607 = vadd.f32 0.0, %v10606
      %v10608 = vpop.f32.mrb[0].mxu0
      %10609 = vmatprep.mubr.bf16.mxu0 0
      %10610 = vmatmul.mubr.bf16.gmra.mrb[0].mxu0 %v10469
      %v10611 = vpop.f32.mrb[0].mxu0
      %v10612 = vadd.f32 0.0, %v10611
      %v10613 = vpop.f32.mrb[0].mxu0
      %v10614 = vpop.f32.mrb[0].mxu0
      %v10615 = vadd.f32 0.0, %v10614
      %v10616 = vpop.f32.mrb[0].mxu0
      %10617 = vmatprep.mubr.bf16.mxu0 0
      %10618 = vmatmul.mubr.bf16.gmra.mrb[0].mxu0 %v10470
      %v10619 = vpop.f32.mrb[0].mxu0
      %v10620 = vadd.f32 0.0, %v10619
      %v10621 = vpop.f32.mrb[0].mxu0
      %v10622 = vpop.f32.mrb[0].mxu0
      %v10623 = vadd.f32 0.0, %v10622
      %v10624 = vpop.f32.mrb[0].mxu0
      %10625 = vmatprep.mubr.bf16.mxu0 0
      %10626 = vmatmul.mubr.bf16.gmra.mrb[0].mxu0 %v10471
      %v10627 = vpop.f32.mrb[0].mxu0
      %v10628 = vadd.f32 0.0, %v10627
      %v10629 = vpop.f32.mrb[0].mxu0
      %v10630 = vpop.f32.mrb[0].mxu0
      %v10631 = vadd.f32 0.0, %v10630
      %v10632 = vpop.f32.mrb[0].mxu0
      %10633 = vmatprep.mubr.bf16.mxu0 0
      %10634 = vmatmul.mubr.bf16.gmra.mrb[0].mxu0 %v10472
      %v10635 = vpop.f32.mrb[0].mxu0
      %v10636 = vadd.f32 0.0, %v10635
      %v10637 = vpop.f32.mrb[0].mxu0
      %v10638 = vpop.f32.mrb[0].mxu0
      %v10639 = vadd.f32 0.0, %v10638
      %v10640 = vpop.f32.mrb[0].mxu0
      %10641 = vmatprep.mubr.bf16.mxu0 0
      %10642 = vmatmul.mubr.bf16.gmra.mrb[0].mxu0 %v10473
      %v10643 = vpop.f32.mrb[0].mxu0
      %v10644 = vadd.f32 0.0, %v10643
      %v10645 = vpop.f32.mrb[0].mxu0
      %v10646 = vpop.f32.mrb[0].mxu0
      %v10647 = vadd.f32 0.0, %v10646
      %v10648 = vpop.f32.mrb[0].mxu0
      %10649 = vmatprep.mubr.bf16.mxu0 0
      %10650 = vmatmul.mubr.bf16.gmra.mrb[0].mxu0 %v10474
      %v10651 = vpop.f32.mrb[0].mxu0
      %v10652 = vadd.f32 0.0, %v10651
      %v10653 = vpop.f32.mrb[0].mxu0
      %v10654 = vpop.f32.mrb[0].mxu0
      %v10655 = vadd.f32 0.0, %v10654
      %v10656 = vpop.f32.mrb[0].mxu0
      %10657 = vmatprep.mubr.bf16.mxu0 0
      %10658 = vmatmul.mubr.bf16.gmra.mrb[0].mxu0 %v10475
      %v10659 = vpop.f32.mrb[0].mxu0
      %v10660 = vadd.f32 0.0, %v10659
      %v10661 = vpop.f32.mrb[0].mxu0
      %v10662 = vpop.f32.mrb[0].mxu0
      %v10663 = vadd.f32 0.0, %v10662
      %v10664 = vpop.f32.mrb[0].mxu0
      %10665 = vmatprep.mubr.bf16.mxu0 0
      %10666 = vmatmul.mubr.bf16.gmra.mrb[0].mxu0 %v10476
      %v10667 = vpop.f32.mrb[0].mxu0
      %v10668 = vadd.f32 0.0, %v10667
      %v10669 = vpop.f32.mrb[0].mxu0
      %v10670 = vpop.f32.mrb[0].mxu0
      %v10671 = vadd.f32 0.0, %v10670
      %v10672 = vpop.f32.mrb[0].mxu0
      %10673 = vmatprep.mubr.bf16.mxu0 0
      %10674 = vmatmul.mubr.bf16.gmra.mrb[0].mxu0 %v10477
      %v10675 = vpop.f32.mrb[0].mxu0
      %v10676 = vadd.f32 0.0, %v10675
      %v10677 = vpop.f32.mrb[0].mxu0
      %v10678 = vpop.f32.mrb[0].mxu0
      %v10679 = vadd.f32 0.0, %v10678
      %v10680 = vpop.f32.mrb[0].mxu0
      %10681 = vmatprep.mubr.bf16.mxu0 0
      %10682 = vmatmul.mubr.bf16.gmra.mrb[0].mxu0 %v10478
      %v10683 = vpop.f32.mrb[0].mxu0
      %v10684 = vadd.f32 0.0, %v10683
      %v10685 = vpop.f32.mrb[0].mxu0
      %v10686 = vpop.f32.mrb[0].mxu0
      %v10687 = vadd.f32 0.0, %v10686
      %v10688 = vpop.f32.mrb[0].mxu0
      %10689 = vmatprep.mubr.bf16.mxu0 0
      %10690 = vmatmul.mubr.bf16.gmra.mrb[0].mxu0 %v10479
      %v10691 = vpop.f32.mrb[0].mxu0
      %v10692 = vadd.f32 0.0, %v10691
      %v10693 = vpop.f32.mrb[0].mxu0
      %v10694 = vpop.f32.mrb[0].mxu0
      %v10695 = vadd.f32 0.0, %v10694
      %v10696 = vpop.f32.mrb[0].mxu0
      %10697 = vmatprep.mubr.bf16.mxu0 0
      %10698 = vmatmul.mubr.bf16.gmra.mrb[0].mxu0 %v10480
      %v10699 = vpop.f32.mrb[0].mxu0
      %v10700 = vadd.f32 0.0, %v10699
      %v10701 = vpop.f32.mrb[0].mxu0
      %v10702 = vpop.f32.mrb[0].mxu0
      %v10703 = vadd.f32 0.0, %v10702
      %v10704 = vpop.f32.mrb[0].mxu0
      %10705 = vdwg.mxu0
      %v10706 = vadd.f32 %v9952, %v10580
      %v10707 = vadd.f32 %v9953, %v10583
      %v10708 = vadd.f32 %v9954, %v10588
      %v10709 = vadd.f32 %v9955, %v10591
      %v10710 = vadd.f32 %v9956, %v10596
      %v10711 = vadd.f32 %v9957, %v10599
      %v10712 = vadd.f32 %v9958, %v10604
      %v10713 = vadd.f32 %v9959, %v10607
      %v10714 = vadd.f32 %v9960, %v10612
      %v10715 = vadd.f32 %v9961, %v10615
      %v10716 = vadd.f32 %v9962, %v10620
      %v10717 = vadd.f32 %v9963, %v10623
      %v10718 = vadd.f32 %v9964, %v10628
      %v10719 = vadd.f32 %v9965, %v10631
      %v10720 = vadd.f32 %v9966, %v10636
      %v10721 = vadd.f32 %v9967, %v10639
      %v10722 = vadd.f32 %v9968, %v10644
      %v10723 = vadd.f32 %v9969, %v10647
      %v10724 = vadd.f32 %v9970, %v10652
      %v10725 = vadd.f32 %v9971, %v10655
      %v10726 = vadd.f32 %v9972, %v10660
      %v10727 = vadd.f32 %v9973, %v10663
      %v10728 = vadd.f32 %v9974, %v10668
      %v10729 = vadd.f32 %v9975, %v10671
      %v10730 = vadd.f32 %v9976, %v10676
      %v10731 = vadd.f32 %v9977, %v10679
      %v10732 = vadd.f32 %v9978, %v10684
      %v10733 = vadd.f32 %v9979, %v10687
      %v10734 = vadd.f32 %v9980, %v10692
      %v10735 = vadd.f32 %v9981, %v10695
      %v10736 = vadd.f32 %v9982, %v10700
      %v10737 = vadd.f32 %v9983, %v10703
      %v10738 = vld [vmem:[%s9597] sm:$0xe]
      %v10739 = vld [vmem:[%s9597 + $0xc] sm:$0xe]
      %v10740 = vld [vmem:[%s9597 + $0x18] sm:$0xe]
      %v10741 = vld [vmem:[%s9597 + $0x24] sm:$0xe]
      %v10742 = vld [vmem:[%s9597 + $0x30] sm:$0xe]
      %v10743 = vld [vmem:[%s9597 + $0x3c] sm:$0xe]
      %v10744 = vld [vmem:[%s9597 + $0x48] sm:$0xe]
      %v10745 = vld [vmem:[%s9597 + $0x54] sm:$0xe]
      %v10746 = vld [vmem:[%s9597 + $0x60] sm:$0xe]
      %v10747 = vld [vmem:[%s9597 + $0x6c] sm:$0xe]
      %v10748 = vld [vmem:[%s9597 + $0x78] sm:$0xe]
      %v10749 = vld [vmem:[%s9597 + $0x84] sm:$0xe]
      %v10750 = vld [vmem:[%s9597 + $0x90] sm:$0xe]
      %v10751 = vld [vmem:[%s9597 + $0x9c] sm:$0xe]
      %v10752 = vld [vmem:[%s9597 + $0xa8] sm:$0xe]
      %v10753 = vld [vmem:[%s9597 + $0xb4] sm:$0xe]
      %v10802 = vrot.slane %v10738, 5
      %v10803 = vrot.slane %v10802, 4
      %v10804 = vrot.slane %v9985, 5
      %v10805 = vsel %vm2007, %v10803, %v10804
      %v10806 = vrot.slane %v10804, 4
      %v10807 = vrot.slane %v9986, 5
      %v10808 = vsel %vm2007, %v10806, %v10807
      %v10809 = vrot.slane %v10739, 5
      %v10810 = vrot.slane %v10809, 4
      %v10811 = vrot.slane %v9988, 5
      %v10812 = vsel %vm2007, %v10810, %v10811
      %v10813 = vrot.slane %v10811, 4
      %v10814 = vrot.slane %v9989, 5
      %v10815 = vsel %vm2007, %v10813, %v10814
      %v10816 = vrot.slane %v10740, 5
      %v10817 = vrot.slane %v10816, 4
      %v10818 = vrot.slane %v9991, 5
      %v10819 = vsel %vm2007, %v10817, %v10818
      %v10820 = vrot.slane %v10818, 4
      %v10821 = vrot.slane %v9992, 5
      %v10822 = vsel %vm2007, %v10820, %v10821
      %v10823 = vrot.slane %v10741, 5
      %v10824 = vrot.slane %v10823, 4
      %v10825 = vrot.slane %v9994, 5
      %v10826 = vsel %vm2007, %v10824, %v10825
      %v10827 = vrot.slane %v10825, 4
      %v10828 = vrot.slane %v9995, 5
      %v10829 = vsel %vm2007, %v10827, %v10828
      %v10830 = vrot.slane %v10742, 5
      %v10831 = vrot.slane %v10830, 4
      %v10832 = vrot.slane %v9997, 5
      %v10833 = vsel %vm2007, %v10831, %v10832
      %v10834 = vrot.slane %v10832, 4
      %v10835 = vrot.slane %v9998, 5
      %v10836 = vsel %vm2007, %v10834, %v10835
      %v10837 = vrot.slane %v10743, 5
      %v10838 = vrot.slane %v10837, 4
      %v10839 = vrot.slane %v10000, 5
      %v10840 = vsel %vm2007, %v10838, %v10839
      %v10841 = vrot.slane %v10839, 4
      %v10842 = vrot.slane %v10001, 5
      %v10843 = vsel %vm2007, %v10841, %v10842
      %v10844 = vrot.slane %v10744, 5
      %v10845 = vrot.slane %v10844, 4
      %v10846 = vrot.slane %v10003, 5
      %v10847 = vsel %vm2007, %v10845, %v10846
      %v10848 = vrot.slane %v10846, 4
      %v10849 = vrot.slane %v10004, 5
      %v10850 = vsel %vm2007, %v10848, %v10849
      %v10851 = vrot.slane %v10745, 5
      %v10852 = vrot.slane %v10851, 4
      %v10853 = vrot.slane %v10006, 5
      %v10854 = vsel %vm2007, %v10852, %v10853
      %v10855 = vrot.slane %v10853, 4
      %v10856 = vrot.slane %v10007, 5
      %v10857 = vsel %vm2007, %v10855, %v10856
      %v10858 = vrot.slane %v10746, 5
      %v10859 = vrot.slane %v10858, 4
      %v10860 = vrot.slane %v10009, 5
      %v10861 = vsel %vm2007, %v10859, %v10860
      %v10862 = vrot.slane %v10860, 4
      %v10863 = vrot.slane %v10010, 5
      %v10864 = vsel %vm2007, %v10862, %v10863
      %v10865 = vrot.slane %v10747, 5
      %v10866 = vrot.slane %v10865, 4
      %v10867 = vrot.slane %v10012, 5
      %v10868 = vsel %vm2007, %v10866, %v10867
      %v10869 = vrot.slane %v10867, 4
      %v10870 = vrot.slane %v10013, 5
      %v10871 = vsel %vm2007, %v10869, %v10870
      %v10872 = vrot.slane %v10748, 5
      %v10873 = vrot.slane %v10872, 4
      %v10874 = vrot.slane %v10015, 5
      %v10875 = vsel %vm2007, %v10873, %v10874
      %v10876 = vrot.slane %v10874, 4
      %v10877 = vrot.slane %v10016, 5
      %v10878 = vsel %vm2007, %v10876, %v10877
      %v10879 = vrot.slane %v10749, 5
      %v10880 = vrot.slane %v10879, 4
      %v10881 = vrot.slane %v10018, 5
      %v10882 = vsel %vm2007, %v10880, %v10881
      %v10883 = vrot.slane %v10881, 4
      %v10884 = vrot.slane %v10019, 5
      %v10885 = vsel %vm2007, %v10883, %v10884
      %v10886 = vrot.slane %v10750, 5
      %v10887 = vrot.slane %v10886, 4
      %v10888 = vrot.slane %v10021, 5
      %v10889 = vsel %vm2007, %v10887, %v10888
      %v10890 = vrot.slane %v10888, 4
      %v10891 = vrot.slane %v10022, 5
      %v10892 = vsel %vm2007, %v10890, %v10891
      %v10893 = vrot.slane %v10751, 5
      %v10894 = vrot.slane %v10893, 4
      %v10895 = vrot.slane %v10024, 5
      %v10896 = vsel %vm2007, %v10894, %v10895
      %v10897 = vrot.slane %v10895, 4
      %v10898 = vrot.slane %v10025, 5
      %v10899 = vsel %vm2007, %v10897, %v10898
      %v10900 = vrot.slane %v10752, 5
      %v10901 = vrot.slane %v10900, 4
      %v10902 = vrot.slane %v10027, 5
      %v10903 = vsel %vm2007, %v10901, %v10902
      %v10904 = vrot.slane %v10902, 4
      %v10905 = vrot.slane %v10028, 5
      %v10906 = vsel %vm2007, %v10904, %v10905
      %v10907 = vrot.slane %v10753, 5
      %v10908 = vrot.slane %v10907, 4
      %v10909 = vrot.slane %v10030, 5
      %v10910 = vsel %vm2007, %v10908, %v10909
      %v10911 = vrot.slane %v10909, 4
      %v10912 = vrot.slane %v10031, 5
      %v10913 = vsel %vm2007, %v10911, %v10912
      %s10914 = scalar_lea.vmem %s3, 512
      %v10915 = vld [vmem:[%s10914] sm:$0xf]
      %v10916 = vld [vmem:[%s10914 + $0x4] sm:$0xf]
      %v10917 = vld [vmem:[%s10914 + $0x8] sm:$0xf]
      %v10918 = vld [vmem:[%s10914 + $0xc] sm:$0xf]
      %v10919 = vld [vmem:[%s10914 + $0x10] sm:$0xf]
      %v10920 = vld [vmem:[%s10914 + $0x14] sm:$0xf]
      %v10921 = vld [vmem:[%s10914 + $0x18] sm:$0xf]
      %v10922 = vld [vmem:[%s10914 + $0x1c] sm:$0xf]
      %v10923 = vld [vmem:[%s10914 + $0x20] sm:$0xf]
      %v10924 = vld [vmem:[%s10914 + $0x24] sm:$0xf]
      %v10925 = vld [vmem:[%s10914 + $0x28] sm:$0xf]
      %v10926 = vld [vmem:[%s10914 + $0x2c] sm:$0xf]
      %v10927 = vld [vmem:[%s10914 + $0x30] sm:$0xf]
      %v10928 = vld [vmem:[%s10914 + $0x34] sm:$0xf]
      %v10929 = vld [vmem:[%s10914 + $0x38] sm:$0xf]
      %v10930 = vld [vmem:[%s10914 + $0x3c] sm:$0xf]
      %v10931 = vunpack.c.l.b16 %v10805
      %v10932 = vunpack.c.l.b16 %v10808
      %v10933 = vunpack.c.l.b16 %v10812
      %v10934 = vunpack.c.l.b16 %v10815
      %v10935 = vunpack.c.l.b16 %v10819
      %v10936 = vunpack.c.l.b16 %v10822
      %v10937 = vunpack.c.l.b16 %v10826
      %v10938 = vunpack.c.l.b16 %v10829
      %v10939 = vunpack.c.l.b16 %v10833
      %v10940 = vunpack.c.l.b16 %v10836
      %v10941 = vunpack.c.l.b16 %v10840
      %v10942 = vunpack.c.l.b16 %v10843
      %v10943 = vunpack.c.l.b16 %v10847
      %v10944 = vunpack.c.l.b16 %v10850
      %v10945 = vunpack.c.l.b16 %v10854
      %v10946 = vunpack.c.l.b16 %v10857
      %v10947 = vunpack.c.l.b16 %v10861
      %v10948 = vunpack.c.l.b16 %v10864
      %v10949 = vunpack.c.l.b16 %v10868
      %v10950 = vunpack.c.l.b16 %v10871
      %v10951 = vunpack.c.l.b16 %v10875
      %v10952 = vunpack.c.l.b16 %v10878
      %v10953 = vunpack.c.l.b16 %v10882
      %v10954 = vunpack.c.l.b16 %v10885
      %v10955 = vunpack.c.l.b16 %v10889
      %v10956 = vunpack.c.l.b16 %v10892
      %v10957 = vunpack.c.l.b16 %v10896
      %v10958 = vunpack.c.l.b16 %v10899
      %v10959 = vunpack.c.l.b16 %v10903
      %v10960 = vunpack.c.l.b16 %v10906
      %v10961 = vunpack.c.l.b16 %v10910
      %v10962 = vunpack.c.l.b16 %v10913
      %v10963 = vpack.c.b16 %v10932, %v10931
      %v10964 = vpack.c.b16 %v10934, %v10933
      %v10965 = vpack.c.b16 %v10936, %v10935
      %v10966 = vpack.c.b16 %v10938, %v10937
      %v10967 = vpack.c.b16 %v10940, %v10939
      %v10968 = vpack.c.b16 %v10942, %v10941
      %v10969 = vpack.c.b16 %v10944, %v10943
      %v10970 = vpack.c.b16 %v10946, %v10945
      %v10971 = vpack.c.b16 %v10948, %v10947
      %v10972 = vpack.c.b16 %v10950, %v10949
      %v10973 = vpack.c.b16 %v10952, %v10951
      %v10974 = vpack.c.b16 %v10954, %v10953
      %v10975 = vpack.c.b16 %v10956, %v10955
      %v10976 = vpack.c.b16 %v10958, %v10957
      %v10977 = vpack.c.b16 %v10960, %v10959
      %v10978 = vpack.c.b16 %v10962, %v10961
      %v11011 = vunpack.c.l.b16 %v10915
      %v11012 = vunpack.c.l.b16 %v10916
      %v11013 = vunpack.c.l.b16 %v10917
      %v11014 = vunpack.c.l.b16 %v10918
      %v11015 = vunpack.c.l.b16 %v10919
      %v11016 = vunpack.c.l.b16 %v10920
      %v11017 = vunpack.c.l.b16 %v10921
      %v11018 = vunpack.c.l.b16 %v10922
      %v11019 = vunpack.c.l.b16 %v10923
      %v11020 = vunpack.c.l.b16 %v10924
      %v11021 = vunpack.c.l.b16 %v10925
      %v11022 = vunpack.c.l.b16 %v10926
      %v11023 = vunpack.c.l.b16 %v10927
      %v11024 = vunpack.c.l.b16 %v10928
      %v11025 = vunpack.c.l.b16 %v10929
      %v11026 = vunpack.c.l.b16 %v10930
      %v11027 = vpack.c.b16 %v11012, %v11011
      %v11028 = vpack.c.b16 %v11014, %v11013
      %v11029 = vpack.c.b16 %v11016, %v11015
      %v11030 = vpack.c.b16 %v11018, %v11017
      %v11031 = vpack.c.b16 %v11020, %v11019
      %v11032 = vpack.c.b16 %v11022, %v11021
      %v11033 = vpack.c.b16 %v11024, %v11023
      %v11034 = vpack.c.b16 %v11026, %v11025
      %11043 = vmatprep.subr.bf16.mxu0 0
      %11044 = vmatpush1.bf16.msra.mxu0 %v11027
      %11045 = vmatprep.subr.bf16.mxu0 0
      %11046 = vmatpush1.bf16.msra.mxu0 %v11028
      %11047 = vmatprep.subr.bf16.mxu0 0
      %11048 = vmatpush1.bf16.msra.mxu0 %v11029
      %11049 = vmatprep.subr.bf16.mxu0 0
      %11050 = vmatpush1.bf16.msra.mxu0 %v11030
      %11051 = vmatprep.subr.bf16.mxu0 0
      %11052 = vmatpush1.bf16.msra.mxu0 %v11031
      %11053 = vmatprep.subr.bf16.mxu0 0
      %11054 = vmatpush1.bf16.msra.mxu0 %v11032
      %11055 = vmatprep.subr.bf16.mxu0 0
      %11056 = vmatpush1.bf16.msra.mxu0 %v11033
      %11057 = vmatprep.subr.bf16.mxu0 0
      %11058 = vmatpush1.bf16.msra.mxu0 %v11034
      %11059 = vmatprep.subr.bf16.mxu0 0
      %11060 = vmatpush1.bf16.msra.mxu0 0
      %11061 = vmatprep.subr.bf16.mxu0 0
      %11062 = vmatpush1.bf16.msra.mxu0 0
      %11063 = vmatprep.subr.bf16.mxu0 0
      %11064 = vmatpush1.bf16.msra.mxu0 0
      %11065 = vmatprep.subr.bf16.mxu0 0
      %11066 = vmatpush1.bf16.msra.mxu0 0
      %11067 = vmatprep.subr.bf16.mxu0 0
      %11068 = vmatpush1.bf16.msra.mxu0 0
      %11069 = vmatprep.subr.bf16.mxu0 0
      %11070 = vmatpush1.bf16.msra.mxu0 0
      %11071 = vmatprep.subr.bf16.mxu0 0
      %11072 = vmatpush1.bf16.msra.mxu0 0
      %11073 = vmatprep.subr.bf16.mxu0 0
      %11074 = vmatpush1.bf16.msra.mxu0 0
      %11075 = vmatprep.mubr.bf16.mxu0 0
      %11076 = vmatmul.mubr.bf16.gmra.mrb[0].mxu0 %v10963
      %v11077 = vpop.f32.mrb[0].mxu0
      %v11078 = vadd.f32 0.0, %v11077
      %v11079 = vpop.f32.mrb[0].mxu0
      %v11080 = vpop.f32.mrb[0].mxu0
      %v11081 = vadd.f32 0.0, %v11080
      %v11082 = vpop.f32.mrb[0].mxu0
      %11083 = vmatprep.mubr.bf16.mxu0 0
      %11084 = vmatmul.mubr.bf16.gmra.mrb[0].mxu0 %v10964
      %v11085 = vpop.f32.mrb[0].mxu0
      %v11086 = vadd.f32 0.0, %v11085
      %v11087 = vpop.f32.mrb[0].mxu0
      %v11088 = vpop.f32.mrb[0].mxu0
      %v11089 = vadd.f32 0.0, %v11088
      %v11090 = vpop.f32.mrb[0].mxu0
      %11091 = vmatprep.mubr.bf16.mxu0 0
      %11092 = vmatmul.mubr.bf16.gmra.mrb[0].mxu0 %v10965
      %v11093 = vpop.f32.mrb[0].mxu0
      %v11094 = vadd.f32 0.0, %v11093
      %v11095 = vpop.f32.mrb[0].mxu0
      %v11096 = vpop.f32.mrb[0].mxu0
      %v11097 = vadd.f32 0.0, %v11096
      %v11098 = vpop.f32.mrb[0].mxu0
      %11099 = vmatprep.mubr.bf16.mxu0 0
      %11100 = vmatmul.mubr.bf16.gmra.mrb[0].mxu0 %v10966
      %v11101 = vpop.f32.mrb[0].mxu0
      %v11102 = vadd.f32 0.0, %v11101
      %v11103 = vpop.f32.mrb[0].mxu0
      %v11104 = vpop.f32.mrb[0].mxu0
      %v11105 = vadd.f32 0.0, %v11104
      %v11106 = vpop.f32.mrb[0].mxu0
      %11107 = vmatprep.mubr.bf16.mxu0 0
      %11108 = vmatmul.mubr.bf16.gmra.mrb[0].mxu0 %v10967
      %v11109 = vpop.f32.mrb[0].mxu0
      %v11110 = vadd.f32 0.0, %v11109
      %v11111 = vpop.f32.mrb[0].mxu0
      %v11112 = vpop.f32.mrb[0].mxu0
      %v11113 = vadd.f32 0.0, %v11112
      %v11114 = vpop.f32.mrb[0].mxu0
      %11115 = vmatprep.mubr.bf16.mxu0 0
      %11116 = vmatmul.mubr.bf16.gmra.mrb[0].mxu0 %v10968
      %v11117 = vpop.f32.mrb[0].mxu0
      %v11118 = vadd.f32 0.0, %v11117
      %v11119 = vpop.f32.mrb[0].mxu0
      %v11120 = vpop.f32.mrb[0].mxu0
      %v11121 = vadd.f32 0.0, %v11120
      %v11122 = vpop.f32.mrb[0].mxu0
      %11123 = vmatprep.mubr.bf16.mxu0 0
      %11124 = vmatmul.mubr.bf16.gmra.mrb[0].mxu0 %v10969
      %v11125 = vpop.f32.mrb[0].mxu0
      %v11126 = vadd.f32 0.0, %v11125
      %v11127 = vpop.f32.mrb[0].mxu0
      %v11128 = vpop.f32.mrb[0].mxu0
      %v11129 = vadd.f32 0.0, %v11128
      %v11130 = vpop.f32.mrb[0].mxu0
      %11131 = vmatprep.mubr.bf16.mxu0 0
      %11132 = vmatmul.mubr.bf16.gmra.mrb[0].mxu0 %v10970
      %v11133 = vpop.f32.mrb[0].mxu0
      %v11134 = vadd.f32 0.0, %v11133
      %v11135 = vpop.f32.mrb[0].mxu0
      %v11136 = vpop.f32.mrb[0].mxu0
      %v11137 = vadd.f32 0.0, %v11136
      %v11138 = vpop.f32.mrb[0].mxu0
      %11139 = vmatprep.mubr.bf16.mxu0 0
      %11140 = vmatmul.mubr.bf16.gmra.mrb[0].mxu0 %v10971
      %v11141 = vpop.f32.mrb[0].mxu0
      %v11142 = vadd.f32 0.0, %v11141
      %v11143 = vpop.f32.mrb[0].mxu0
      %v11144 = vpop.f32.mrb[0].mxu0
      %v11145 = vadd.f32 0.0, %v11144
      %v11146 = vpop.f32.mrb[0].mxu0
      %11147 = vmatprep.mubr.bf16.mxu0 0
      %11148 = vmatmul.mubr.bf16.gmra.mrb[0].mxu0 %v10972
      %v11149 = vpop.f32.mrb[0].mxu0
      %v11150 = vadd.f32 0.0, %v11149
      %v11151 = vpop.f32.mrb[0].mxu0
      %v11152 = vpop.f32.mrb[0].mxu0
      %v11153 = vadd.f32 0.0, %v11152
      %v11154 = vpop.f32.mrb[0].mxu0
      %11155 = vmatprep.mubr.bf16.mxu0 0
      %11156 = vmatmul.mubr.bf16.gmra.mrb[0].mxu0 %v10973
      %v11157 = vpop.f32.mrb[0].mxu0
      %v11158 = vadd.f32 0.0, %v11157
      %v11159 = vpop.f32.mrb[0].mxu0
      %v11160 = vpop.f32.mrb[0].mxu0
      %v11161 = vadd.f32 0.0, %v11160
      %v11162 = vpop.f32.mrb[0].mxu0
      %11163 = vmatprep.mubr.bf16.mxu0 0
      %11164 = vmatmul.mubr.bf16.gmra.mrb[0].mxu0 %v10974
      %v11165 = vpop.f32.mrb[0].mxu0
      %v11166 = vadd.f32 0.0, %v11165
      %v11167 = vpop.f32.mrb[0].mxu0
      %v11168 = vpop.f32.mrb[0].mxu0
      %v11169 = vadd.f32 0.0, %v11168
      %v11170 = vpop.f32.mrb[0].mxu0
      %11171 = vmatprep.mubr.bf16.mxu0 0
      %11172 = vmatmul.mubr.bf16.gmra.mrb[0].mxu0 %v10975
      %v11173 = vpop.f32.mrb[0].mxu0
      %v11174 = vadd.f32 0.0, %v11173
      %v11175 = vpop.f32.mrb[0].mxu0
      %v11176 = vpop.f32.mrb[0].mxu0
      %v11177 = vadd.f32 0.0, %v11176
      %v11178 = vpop.f32.mrb[0].mxu0
      %11179 = vmatprep.mubr.bf16.mxu0 0
      %11180 = vmatmul.mubr.bf16.gmra.mrb[0].mxu0 %v10976
      %v11181 = vpop.f32.mrb[0].mxu0
      %v11182 = vadd.f32 0.0, %v11181
      %v11183 = vpop.f32.mrb[0].mxu0
      %v11184 = vpop.f32.mrb[0].mxu0
      %v11185 = vadd.f32 0.0, %v11184
      %v11186 = vpop.f32.mrb[0].mxu0
      %11187 = vmatprep.mubr.bf16.mxu0 0
      %11188 = vmatmul.mubr.bf16.gmra.mrb[0].mxu0 %v10977
      %v11189 = vpop.f32.mrb[0].mxu0
      %v11190 = vadd.f32 0.0, %v11189
      %v11191 = vpop.f32.mrb[0].mxu0
      %v11192 = vpop.f32.mrb[0].mxu0
      %v11193 = vadd.f32 0.0, %v11192
      %v11194 = vpop.f32.mrb[0].mxu0
      %11195 = vmatprep.mubr.bf16.mxu0 0
      %11196 = vmatmul.mubr.bf16.gmra.mrb[0].mxu0 %v10978
      %v11197 = vpop.f32.mrb[0].mxu0
      %v11198 = vadd.f32 0.0, %v11197
      %v11199 = vpop.f32.mrb[0].mxu0
      %v11200 = vpop.f32.mrb[0].mxu0
      %v11201 = vadd.f32 0.0, %v11200
      %v11202 = vpop.f32.mrb[0].mxu0
      %11203 = vdwg.mxu0
      %v11204 = vadd.f32 %v10706, %v11078
      %v11205 = vadd.f32 %v10707, %v11081
      %v11206 = vadd.f32 %v10708, %v11086
      %v11207 = vadd.f32 %v10709, %v11089
      %v11208 = vadd.f32 %v10710, %v11094
      %v11209 = vadd.f32 %v10711, %v11097
      %v11210 = vadd.f32 %v10712, %v11102
      %v11211 = vadd.f32 %v10713, %v11105
      %v11212 = vadd.f32 %v10714, %v11110
      %v11213 = vadd.f32 %v10715, %v11113
      %v11214 = vadd.f32 %v10716, %v11118
      %v11215 = vadd.f32 %v10717, %v11121
      %v11216 = vadd.f32 %v10718, %v11126
      %v11217 = vadd.f32 %v10719, %v11129
      %v11218 = vadd.f32 %v10720, %v11134
      %v11219 = vadd.f32 %v10721, %v11137
      %v11220 = vadd.f32 %v10722, %v11142
      %v11221 = vadd.f32 %v10723, %v11145
      %v11222 = vadd.f32 %v10724, %v11150
      %v11223 = vadd.f32 %v10725, %v11153
      %v11224 = vadd.f32 %v10726, %v11158
      %v11225 = vadd.f32 %v10727, %v11161
      %v11226 = vadd.f32 %v10728, %v11166
      %v11227 = vadd.f32 %v10729, %v11169
      %v11228 = vadd.f32 %v10730, %v11174
      %v11229 = vadd.f32 %v10731, %v11177
      %v11230 = vadd.f32 %v10732, %v11182
      %v11231 = vadd.f32 %v10733, %v11185
      %v11232 = vadd.f32 %v10734, %v11190
      %v11233 = vadd.f32 %v10735, %v11193
      %v11234 = vadd.f32 %v10736, %v11198
      %v11235 = vadd.f32 %v10737, %v11201
      %v11236 = vld [vmem:[%s4] sm:$0x1]
      %v11238 = vlaneseq
      %v11239 = vshrl.u32 %v11238, 7
      %v11240 = vsub.s32 0, %v11239
      %v11241 = vrot.slane %v11236, %v11240
      %v11243 = vadd.f32 %v11204, %v11241
      %v11244 = vadd.f32 %v11205, %v11241
      %v11245 = vadd.f32 %v11206, %v11241
      %v11246 = vadd.f32 %v11207, %v11241
      %v11247 = vadd.f32 %v11208, %v11241
      %v11248 = vadd.f32 %v11209, %v11241
      %v11249 = vadd.f32 %v11210, %v11241
      %v11250 = vadd.f32 %v11211, %v11241
      %v11251 = vadd.f32 %v11212, %v11241
      %v11252 = vadd.f32 %v11213, %v11241
      %v11253 = vadd.f32 %v11214, %v11241
      %v11254 = vadd.f32 %v11215, %v11241
      %v11255 = vadd.f32 %v11216, %v11241
      %v11256 = vadd.f32 %v11217, %v11241
      %v11257 = vadd.f32 %v11218, %v11241
      %v11258 = vadd.f32 %v11219, %v11241
      %v11259 = vadd.f32 %v11220, %v11241
      %v11260 = vadd.f32 %v11221, %v11241
      %v11261 = vadd.f32 %v11222, %v11241
      %v11262 = vadd.f32 %v11223, %v11241
      %v11263 = vadd.f32 %v11224, %v11241
      %v11264 = vadd.f32 %v11225, %v11241
      %v11265 = vadd.f32 %v11226, %v11241
      %v11266 = vadd.f32 %v11227, %v11241
      %v11267 = vadd.f32 %v11228, %v11241
      %v11268 = vadd.f32 %v11229, %v11241
      %v11269 = vadd.f32 %v11230, %v11241
      %v11270 = vadd.f32 %v11231, %v11241
      %v11271 = vadd.f32 %v11232, %v11241
      %v11272 = vadd.f32 %v11233, %v11241
      %v11273 = vadd.f32 %v11234, %v11241
      %v11274 = vadd.f32 %v11235, %v11241
      %v11275 = vadd.f32 %v11243, %v226
      %v11276 = vadd.f32 %v11244, %v227
      %v11277 = vadd.f32 %v11245, %v228
      %v11278 = vadd.f32 %v11246, %v229
      %v11279 = vadd.f32 %v11247, %v230
      %v11280 = vadd.f32 %v11248, %v231
      %v11281 = vadd.f32 %v11249, %v232
      %v11282 = vadd.f32 %v11250, %v233
      %v11283 = vadd.f32 %v11251, %v234
      %v11284 = vadd.f32 %v11252, %v235
      %v11285 = vadd.f32 %v11253, %v236
      %v11286 = vadd.f32 %v11254, %v237
      %v11287 = vadd.f32 %v11255, %v238
      %v11288 = vadd.f32 %v11256, %v239
      %v11289 = vadd.f32 %v11257, %v240
      %v11290 = vadd.f32 %v11258, %v241
      %v11291 = vadd.f32 %v11259, %v242
      %v11292 = vadd.f32 %v11260, %v243
      %v11293 = vadd.f32 %v11261, %v244
      %v11294 = vadd.f32 %v11262, %v245
      %v11295 = vadd.f32 %v11263, %v246
      %v11296 = vadd.f32 %v11264, %v247
      %v11297 = vadd.f32 %v11265, %v248
      %v11298 = vadd.f32 %v11266, %v249
      %v11299 = vadd.f32 %v11267, %v250
      %v11300 = vadd.f32 %v11268, %v251
      %v11301 = vadd.f32 %v11269, %v252
      %v11302 = vadd.f32 %v11270, %v253
      %v11303 = vadd.f32 %v11271, %v254
      %v11304 = vadd.f32 %v11272, %v255
      %v11305 = vadd.f32 %v11273, %v256
      %v11306 = vadd.f32 %v11274, %v257
      %v11307 = vmax.f32 %v11275, 0.0
      %v11308 = vmax.f32 %v11276, 0.0
      %v11309 = vmax.f32 %v11277, 0.0
      %v11310 = vmax.f32 %v11278, 0.0
      %v11311 = vmax.f32 %v11279, 0.0
      %v11312 = vmax.f32 %v11280, 0.0
      %v11313 = vmax.f32 %v11281, 0.0
      %v11314 = vmax.f32 %v11282, 0.0
      %v11315 = vmax.f32 %v11283, 0.0
      %v11316 = vmax.f32 %v11284, 0.0
      %v11317 = vmax.f32 %v11285, 0.0
      %v11318 = vmax.f32 %v11286, 0.0
      %v11319 = vmax.f32 %v11287, 0.0
      %v11320 = vmax.f32 %v11288, 0.0
      %v11321 = vmax.f32 %v11289, 0.0
      %v11322 = vmax.f32 %v11290, 0.0
      %v11323 = vmax.f32 %v11291, 0.0
      %v11324 = vmax.f32 %v11292, 0.0
      %v11325 = vmax.f32 %v11293, 0.0
      %v11326 = vmax.f32 %v11294, 0.0
      %v11327 = vmax.f32 %v11295, 0.0
      %v11328 = vmax.f32 %v11296, 0.0
      %v11329 = vmax.f32 %v11297, 0.0
      %v11330 = vmax.f32 %v11298, 0.0
      %v11331 = vmax.f32 %v11299, 0.0
      %v11332 = vmax.f32 %v11300, 0.0
      %v11333 = vmax.f32 %v11301, 0.0
      %v11334 = vmax.f32 %v11302, 0.0
      %v11335 = vmax.f32 %v11303, 0.0
      %v11336 = vmax.f32 %v11304, 0.0
      %v11337 = vmax.f32 %v11305, 0.0
      %v11338 = vmax.f32 %v11306, 0.0
      %11339 = vst [vmem:[%s224] sm:$0xff] %v11307
      %11340 = vst [vmem:[%s224 + $0x8] sm:$0xff] %v11308
      %11341 = vst [vmem:[%s224 + $0x10] sm:$0xff] %v11309
      %11342 = vst [vmem:[%s224 + $0x18] sm:$0xff] %v11310
      %11343 = vst [vmem:[%s224 + $0x20] sm:$0xff] %v11311
      %11344 = vst [vmem:[%s224 + $0x28] sm:$0xff] %v11312
      %11345 = vst [vmem:[%s224 + $0x30] sm:$0xff] %v11313
      %11346 = vst [vmem:[%s224 + $0x38] sm:$0xff] %v11314
      %11347 = vst [vmem:[%s224 + $0x40] sm:$0xff] %v11315
      %11348 = vst [vmem:[%s224 + $0x48] sm:$0xff] %v11316
      %11349 = vst [vmem:[%s224 + $0x50] sm:$0xff] %v11317
      %11350 = vst [vmem:[%s224 + $0x58] sm:$0xff] %v11318
      %11351 = vst [vmem:[%s224 + $0x60] sm:$0xff] %v11319
      %11352 = vst [vmem:[%s224 + $0x68] sm:$0xff] %v11320
      %11353 = vst [vmem:[%s224 + $0x70] sm:$0xff] %v11321
      %11354 = vst [vmem:[%s224 + $0x78] sm:$0xff] %v11322
      %11355 = vst [vmem:[%s224 + $0x80] sm:$0xff] %v11323
      %11356 = vst [vmem:[%s224 + $0x88] sm:$0xff] %v11324
      %11357 = vst [vmem:[%s224 + $0x90] sm:$0xff] %v11325
      %11358 = vst [vmem:[%s224 + $0x98] sm:$0xff] %v11326
      %11359 = vst [vmem:[%s224 + $0xa0] sm:$0xff] %v11327
      %11360 = vst [vmem:[%s224 + $0xa8] sm:$0xff] %v11328
      %11361 = vst [vmem:[%s224 + $0xb0] sm:$0xff] %v11329
      %11362 = vst [vmem:[%s224 + $0xb8] sm:$0xff] %v11330
      %11363 = vst [vmem:[%s224 + $0xc0] sm:$0xff] %v11331
      %11364 = vst [vmem:[%s224 + $0xc8] sm:$0xff] %v11332
      %11365 = vst [vmem:[%s224 + $0xd0] sm:$0xff] %v11333
      %11366 = vst [vmem:[%s224 + $0xd8] sm:$0xff] %v11334
      %11367 = vst [vmem:[%s224 + $0xe0] sm:$0xff] %v11335
      %11368 = vst [vmem:[%s224 + $0xe8] sm:$0xff] %v11336
      %11369 = vst [vmem:[%s224 + $0xf0] sm:$0xff] %v11337
      %11370 = vst [vmem:[%s224 + $0xf8] sm:$0xff] %v11338
      %p11371 = scmp.lt.s32.totalorder %s16, 1
      %s11372 = scalar_select %p11371, %s16, 1
      %s11373 = smul.addr %s11372, 32
      %s11374 = smul.addr %s11373, 8
      %s11375 = scalar_lea.vmem %s5, %s11374
      // Predicated region
      $region41: #{basic_block_forward.1} parent=39 // pred_check
        %p11376 = pneg %p144
      $region42: #{basic_block_forward.1} parent=39 // pred_check_branch
        %11378 = sbr.rel (%p11376) target = $region44
      $region43: #{basic_block_forward.1} parent=39 // pred_region
        _
      $region44: #{basic_block_forward.1} parent=39 // pred_fallthru
        _
    $region40: #{basic_block_forward.1} parent=5 // pred_fallthru
      _
    %p11379 = scmp.le.s32.totalorder 2, %s11
    // Predicated region
    $region45: #{basic_block_forward.1} parent=5 // pred_check
      %p11380 = pneg %p11379
    $region46: #{basic_block_forward.1} parent=5 // pred_check_branch
      %11382 = sbr.rel (%p11380) target = $region48
    $region47: #{basic_block_forward.1} parent=5 // pred_region
      %s11383 = ssub.s32 %s11, 2
      // Predicated region
      $region49: #{basic_block_forward.1} parent=47 // pred_check
        %p11384 = pneg %p150
      $region50: #{basic_block_forward.1} parent=47 // pred_check_branch
        %11386 = sbr.rel (%p11384) target = $region52
      $region51: #{basic_block_forward.1} parent=47 // pred_region
        %p11387 = scmp.lt.s32.totalorder %s17, 1
        %s11388 = scalar_select %p11387, %s17, 1
        %s11389 = smul.addr %s11388, 32
        %s11390 = smul.addr %s11389, 8
        %s11391 = scalar_lea.vmem %s5, %s11390
      $region52: #{basic_block_forward.1} parent=47 // pred_fallthru
        _
    $region48: #{basic_block_forward.1} parent=5 // pred_fallthru
      _
  $region6: #{basic_block_forward.1} parent=0 // loop_footer
    %s15 = sadd.s32 1, %s11
  $region7: #{basic_block_forward.1} parent=0 // loop_footer_branch
    %10 = sbr.rel target = $region3
  $region8: #{basic_block_forward.1} parent=0 // loop_exit
    _

</llo_original>
